<compile_context>
chip_gen: v7x
topology: tpu7x:2x2x1
jax: 0.10.0
libtpu: 0.0.40
codegen_flags: <defaults>
</compile_context>

<pallas_src>
import math

import numpy as np
import jax
import jax.numpy as jnp
from jax.experimental import pallas as pl
from jax.experimental.pallas import tpu as pltpu


def _layer_norm(x, gamma, beta, eps=1e-5):
    """nn.LayerNorm over the last dim (eps matches PyTorch default)."""
    mu = jnp.mean(x, axis=-1, keepdims=True)
    var = jnp.mean(jnp.square(x - mu), axis=-1, keepdims=True)
    return (x - mu) * jax.lax.rsqrt(var + eps) * gamma + beta


# ---------------------------------------------------------------------------
# Fused Pallas kernel: one batch tile of the full Hyper_SAGNN forward.
# ---------------------------------------------------------------------------
def _make_kernel(tile_b, L, Db, Dm, H, dk, dv, diag_mask_flag):
    inv_temp = 1.0 / math.sqrt(dk)
    NEG = -1e32  # masked_softmax(memory_efficient=True) fill value

    def kernel(npm_ref, emb_ref,
               ln1_g_ref, ln1_b_ref, ln2_g_ref, ln2_b_ref, ln3_g_ref, ln3_b_ref,
               wq_ref, wk_ref, wv_ref, wfc1_ref, wfc2_ref,
               pff_g_ref, pff_b_ref, w0_ref, b0_ref, w1_ref, b1_ref, alpha_ref,
               t1_g_ref, t1_b_ref, t2_g_ref, t2_b_ref,
               wcls_ref, bcls_ref,
               out_ref):
        npm = npm_ref[...]                       # (TB, L, 1)  non-pad mask
        x = emb_ref[...]                         # (TB, L, Db) node embeddings (f32)

        # ---- MultiHeadAttention: three LayerNorms of the same embeddings ----
        qn = _layer_norm(x, ln1_g_ref[...], ln1_b_ref[...])
        kn = _layer_norm(x, ln2_g_ref[...], ln2_b_ref[...])
        vn = _layer_norm(x, ln3_g_ref[...], ln3_b_ref[...])

        # bf16 MXU inputs, f32 accumulation.
        qn_f = qn.reshape(tile_b * L, Db).astype(jnp.bfloat16)
        kn_f = kn.reshape(tile_b * L, Db).astype(jnp.bfloat16)
        vn_f = vn.reshape(tile_b * L, Db).astype(jnp.bfloat16)

        row = jax.lax.broadcasted_iota(jnp.int32, (L, L), 0)
        col = jax.lax.broadcasted_iota(jnp.int32, (L, L), 1)
        is_diag = row == col

        dyn_acc = jnp.zeros((tile_b * L, Dm), jnp.float32)   # concat(heads) @ Wfc1
        sta_acc = jnp.zeros((tile_b * L, Dm), jnp.float32)   # concat(V heads) @ Wfc2

        for h in range(H):                                   # static unroll over heads
            qh = jnp.dot(qn_f, wq_ref[h], preferred_element_type=jnp.float32)
            kh = jnp.dot(kn_f, wk_ref[h], preferred_element_type=jnp.float32)
            vh = jnp.dot(vn_f, wv_ref[h], preferred_element_type=jnp.float32)
            vh_b = vh.astype(jnp.bfloat16)                   # (TB*L, dv)

            q3 = qh.reshape(tile_b, L, dk).astype(jnp.bfloat16)
            k3 = kh.reshape(tile_b, L, dk).astype(jnp.bfloat16)
            v3 = vh_b.reshape(tile_b, L, dv)

            # scaled dot-product attention with diagonal mask
            s = jnp.einsum("bld,bmd->blm", q3, k3,
                           preferred_element_type=jnp.float32) * inv_temp
            if diag_mask_flag:
                s = jnp.where(is_diag[None, :, :], NEG, s)
            m = jnp.max(s, axis=-1, keepdims=True)
            e = jnp.exp(s - m)
            denom = jnp.sum(e, axis=-1, keepdims=True)
            a = (e * pl.reciprocal(denom, approx=False)).astype(jnp.bfloat16)

            oh = jnp.einsum("blm,bmd->bld", a, v3,
                            preferred_element_type=jnp.float32)  # (TB, L, dv)

            dyn_acc = dyn_acc + jnp.dot(
                oh.reshape(tile_b * L, dv).astype(jnp.bfloat16), wfc1_ref[h],
                preferred_element_type=jnp.float32)
            sta_acc = sta_acc + jnp.dot(
                vh_b, wfc2_ref[h], preferred_element_type=jnp.float32)

        dynamic = dyn_acc.reshape(tile_b, L, Dm)
        static = sta_acc.reshape(tile_b, L, Dm)

        # ---- pff_n1([d_model, d_model, d_model], residual=True, layer_norm=True) ----
        d_in = dynamic * npm
        hl = _layer_norm(d_in, pff_g_ref[...], pff_b_ref[...])
        h0 = jnp.dot(hl.reshape(tile_b * L, Dm).astype(jnp.bfloat16), w0_ref[...],
                     preferred_element_type=jnp.float32) + b0_ref[...]
        h0 = h0 * jax.nn.sigmoid(h0)                       # swish
        h1 = jnp.dot(h0.astype(jnp.bfloat16), w1_ref[...],
                     preferred_element_type=jnp.float32) + b1_ref[...]
        dynamic = (alpha_ref[...] * h1.reshape(tile_b, L, Dm) + d_in) * npm

        # ---- top-level LayerNorms + (dynamic - static)^2 ----
        dynamic = _layer_norm(dynamic, t1_g_ref[...], t1_b_ref[...])
        static = _layer_norm(static, t2_g_ref[...], t2_b_ref[...])
        outp = jnp.square(dynamic - static) if diag_mask_flag else dynamic

        # ---- pff_classifier ([d_model, 1]) + masked sum over positions ----
        cls = jnp.sum(outp * wcls_ref[...], axis=-1, keepdims=True) + bcls_ref[...]
        out_ref[...] = jnp.sum(cls * npm, axis=1)          # (TB, 1)

    return kernel


# ---------------------------------------------------------------------------
# Wrapper: embedding gather (JAX glue) + pallas_call with a batch grid.
# ---------------------------------------------------------------------------
def hyper_sagnn_forward(ids, emb_table, params, *, n_head, d_k, d_v,
                        diag_mask=True, tile_b=8):
    B, L = ids.shape
    Db = emb_table.shape[1]
    Dm = params["w0"].shape[0]
    assert B % tile_b == 0

    # JAX glue: node_embedding lookup + get_non_pad_mask (see TODO at top of file)
    emb = jnp.take(emb_table, ids, axis=0).astype(jnp.float32)        # (B, L, Db)
    npm = (ids != 0).astype(jnp.float32)[:, :, None]                  # (B, L, 1)

    weight_order = ["ln1_g", "ln1_b", "ln2_g", "ln2_b", "ln3_g", "ln3_b",
                    "wq", "wk", "wv", "wfc1", "wfc2",
                    "pff_g", "pff_b", "w0", "b0", "w1", "b1", "alpha",
                    "t1_g", "t1_b", "t2_g", "t2_b", "wcls", "bcls"]
    weights = [params[k] for k in weight_order]

    def batch_spec(shape):
        zeros = (0,) * (len(shape) - 1)
        return pl.BlockSpec(shape, lambda i: (i,) + zeros)

    def shared_spec(arr):
        zeros = (0,) * arr.ndim
        return pl.BlockSpec(arr.shape, lambda i: zeros)

    in_specs = [batch_spec((tile_b, L, 1)),
                batch_spec((tile_b, L, Db))] + [shared_spec(w) for w in weights]

    kernel = _make_kernel(tile_b, L, Db, Dm, n_head, d_k, d_v, diag_mask)

    flops = (2 * B * L * Db * n_head * (2 * d_k + d_v)      # q/k/v projections
             + 2 * B * n_head * L * L * (d_k + d_v)         # scores + attn@V
             + 2 * B * L * n_head * d_v * Dm * 2            # fc1 + fc2
             + 2 * B * L * Dm * Dm * 2                      # pff_n1 1x1 convs
             + 2 * B * L * Dm)                              # classifier
    transcendentals = B * n_head * L * L + B * L * Dm       # exp + sigmoid
    bytes_accessed = int(sum(int(np.prod(a.shape)) * a.dtype.itemsize
                             for a in [emb, npm] + weights) + B * 4)

    return pl.pallas_call(
        kernel,
        out_shape=jax.ShapeDtypeStruct((B, 1), jnp.float32),
        grid_spec=pltpu.PrefetchScalarGridSpec(
            num_scalar_prefetch=0,
            grid=(B // tile_b,),
            in_specs=in_specs,
            out_specs=pl.BlockSpec((tile_b, 1), lambda i: (i, 0)),
        ),
        compiler_params=pltpu.CompilerParams(
            dimension_semantics=("parallel",),
            vmem_limit_bytes=64 * 1024 * 1024),
        cost_estimate=pl.CostEstimate(flops=flops,
                                      transcendentals=transcendentals,
                                      bytes_accessed=bytes_accessed),
    )(npm, emb, *weights)


# ---------------------------------------------------------------------------
# Plain-JAX reference of the same (inference) forward, for correctness checks.
# ---------------------------------------------------------------------------
def reference_forward(emb, npm, p, *, n_head, d_k, d_v, diag_mask=True):
    f32, bf16 = jnp.float32, jnp.bfloat16
    B, L, Db = emb.shape

    qn = _layer_norm(emb, p["ln1_g"], p["ln1_b"]).astype(bf16)
    kn = _layer_norm(emb, p["ln2_g"], p["ln2_b"]).astype(bf16)
    vn = _layer_norm(emb, p["ln3_g"], p["ln3_b"]).astype(bf16)

    q = jnp.einsum("bld,hdo->bhlo", qn, p["wq"], preferred_element_type=f32).astype(bf16)
    k = jnp.einsum("bld,hdo->bhlo", kn, p["wk"], preferred_element_type=f32).astype(bf16)
    v = jnp.einsum("bld,hdo->bhlo", vn, p["wv"], preferred_element_type=f32).astype(bf16)

    s = jnp.einsum("bhlo,bhmo->bhlm", q, k, preferred_element_type=f32) / math.sqrt(d_k)
    if diag_mask:
        eye = jnp.eye(L, dtype=bool)
        s = jnp.where(eye[None, None], -1e32, s)
    m = jnp.max(s, axis=-1, keepdims=True)
    e = jnp.exp(s - m)
    a = (e / jnp.sum(e, axis=-1, keepdims=True)).astype(bf16)

    o = jnp.einsum("bhlm,bhmo->bhlo", a, v, preferred_element_type=f32).astype(bf16)
    dynamic = jnp.einsum("bhlo,hom->blm", o, p["wfc1"], preferred_element_type=f32)
    static = jnp.einsum("bhlo,hom->blm", v, p["wfc2"], preferred_element_type=f32)

    d_in = dynamic * npm
    hl = _layer_norm(d_in, p["pff_g"], p["pff_b"]).astype(bf16)
    h0 = jnp.einsum("bld,do->blo", hl, p["w0"], preferred_element_type=f32) + p["b0"]
    h0 = h0 * jax.nn.sigmoid(h0)
    h1 = jnp.einsum("bld,do->blo", h0.astype(bf16), p["w1"],
                    preferred_element_type=f32) + p["b1"]
    dynamic = (p["alpha"] * h1 + d_in) * npm

    dynamic = _layer_norm(dynamic, p["t1_g"], p["t1_b"])
    static = _layer_norm(static, p["t2_g"], p["t2_b"])
    outp = jnp.square(dynamic - static) if diag_mask else dynamic

    cls = jnp.sum(outp * p["wcls"], axis=-1, keepdims=True) + p["bcls"]
    return jnp.sum(cls * npm, axis=1)


if __name__ == "__main__":
    # ---- small, lane-dense shapes ----
    B, L = 16, 8                 # batch of hyperedges, tuple length (seq)
    N_NODES = 50                 # node vocabulary (0 = pad)
    BOTTLE = 128                 # bottle_neck (embedding dim / encoder input_dim)
    D_MODEL = 128                # d_model
    N_HEAD, D_K, D_V = 4, 32, 32
    TILE_B = 8
    DIAG = True                  # diag_mask == 'True'

    key = jax.random.PRNGKey(0)
    kit = iter(jax.random.split(key, 32))

    def nrm(shape, scale=0.1, dtype=jnp.float32):
        return (jax.random.normal(next(kit), shape, dtype=jnp.float32) * scale).astype(dtype)

    emb_table = nrm((N_NODES, BOTTLE), 1.0)
    ids = jax.random.randint(next(kit), (B, L), 1, N_NODES, dtype=jnp.int32)
    pad_len = jax.random.randint(next(kit), (B, 1), 0, 3)           # a few pads per row
    ids = jnp.where(jnp.arange(L)[None, :] >= (L - pad_len), 0, ids)

    bf16 = jnp.bfloat16
    params = {
        # MultiHeadAttention layer norms (over bottle_neck)
        "ln1_g": 1.0 + nrm((1, BOTTLE)), "ln1_b": nrm((1, BOTTLE)),
        "ln2_g": 1.0 + nrm((1, BOTTLE)), "ln2_b": nrm((1, BOTTLE)),
        "ln3_g": 1.0 + nrm((1, BOTTLE)), "ln3_b": nrm((1, BOTTLE)),
        # per-head projection weights, stored (H, in, out); bf16 MXU operands
        "wq": nrm((N_HEAD, BOTTLE, D_K), 0.1, bf16),
        "wk": nrm((N_HEAD, BOTTLE, D_K), 0.1, bf16),
        "wv": nrm((N_HEAD, BOTTLE, D_V), 0.1, bf16),
        # fc1/fc2: Linear(n_head*d_v -> d_model, no bias), stored per head (H, d_v, d_model)
        "wfc1": nrm((N_HEAD, D_V, D_MODEL), 0.1, bf16),
        "wfc2": nrm((N_HEAD, D_V, D_MODEL), 0.1, bf16),
        # pff_n1 ([d_model, d_model, d_model], residual=True, layer_norm=True)
        "pff_g": 1.0 + nrm((1, D_MODEL)), "pff_b": nrm((1, D_MODEL)),
        "w0": nrm((D_MODEL, D_MODEL), 0.08, bf16), "b0": nrm((1, D_MODEL)),
        "w1": nrm((D_MODEL, D_MODEL), 0.08, bf16), "b1": nrm((1, D_MODEL)),
        "alpha": jnp.full((1, 1), 0.5, jnp.float32),
        # Hyper_SAGNN.layer_norm1 / layer_norm2
        "t1_g": 1.0 + nrm((1, D_MODEL)), "t1_b": nrm((1, D_MODEL)),
        "t2_g": 1.0 + nrm((1, D_MODEL)), "t2_b": nrm((1, D_MODEL)),
        # pff_classifier ([d_model, 1]): Conv1d(d_model, 1, 1) with bias
        "wcls": nrm((1, D_MODEL), 0.1), "bcls": nrm((1, 1), 0.1),
    }

    out = hyper_sagnn_forward(ids, emb_table, params,
                              n_head=N_HEAD, d_k=D_K, d_v=D_V,
                              diag_mask=DIAG, tile_b=TILE_B)
    out = jax.block_until_ready(out)
    assert out.shape == (B, 1)

    ref = reference_forward(jnp.take(emb_table, ids, axis=0).astype(jnp.float32),
                            (ids != 0).astype(jnp.float32)[:, :, None],
                            params, n_head=N_HEAD, d_k=D_K, d_v=D_V, diag_mask=DIAG)
    ref = jax.block_until_ready(ref)

    np.testing.assert_allclose(np.asarray(out), np.asarray(ref), rtol=2e-2, atol=2e-2)
    print("KERNEL_OK")
</pallas_src>

<mosaic_0001>
module attributes {stable_mosaic.version = 11 : i64} {
  func.func @kernel(%arg0: i32, %arg1: memref<8x8x1xf32, #tpu.memory_space<vmem>>, %arg2: memref<8x8x128xf32, #tpu.memory_space<vmem>>, %arg3: memref<1x128xf32, #tpu.memory_space<vmem>>, %arg4: memref<1x128xf32, #tpu.memory_space<vmem>>, %arg5: memref<1x128xf32, #tpu.memory_space<vmem>>, %arg6: memref<1x128xf32, #tpu.memory_space<vmem>>, %arg7: memref<1x128xf32, #tpu.memory_space<vmem>>, %arg8: memref<1x128xf32, #tpu.memory_space<vmem>>, %arg9: memref<4x128x32xbf16, #tpu.memory_space<vmem>>, %arg10: memref<4x128x32xbf16, #tpu.memory_space<vmem>>, %arg11: memref<4x128x32xbf16, #tpu.memory_space<vmem>>, %arg12: memref<4x32x128xbf16, #tpu.memory_space<vmem>>, %arg13: memref<4x32x128xbf16, #tpu.memory_space<vmem>>, %arg14: memref<1x128xf32, #tpu.memory_space<vmem>>, %arg15: memref<1x128xf32, #tpu.memory_space<vmem>>, %arg16: memref<128x128xbf16, #tpu.memory_space<vmem>>, %arg17: memref<1x128xf32, #tpu.memory_space<vmem>>, %arg18: memref<128x128xbf16, #tpu.memory_space<vmem>>, %arg19: memref<1x128xf32, #tpu.memory_space<vmem>>, %arg20: memref<1x1xf32, #tpu.memory_space<vmem>>, %arg21: memref<1x128xf32, #tpu.memory_space<vmem>>, %arg22: memref<1x128xf32, #tpu.memory_space<vmem>>, %arg23: memref<1x128xf32, #tpu.memory_space<vmem>>, %arg24: memref<1x128xf32, #tpu.memory_space<vmem>>, %arg25: memref<1x128xf32, #tpu.memory_space<vmem>>, %arg26: memref<1x1xf32, #tpu.memory_space<vmem>>, %arg27: memref<8x1xf32, #tpu.memory_space<vmem>>) attributes {dimension_semantics = [#tpu.dimension_semantics<parallel>], iteration_bounds = array<i64: 2>, scalar_prefetch = 0 : i64, scratch_operands = 0 : i64, tpu.core_type = #tpu.core_type<tc>, window_params = [{transform_indices = @transform_0, window_bounds = array<i64: 8, 8, 1>}, {transform_indices = @transform_1, window_bounds = array<i64: 8, 8, 128>}, {pipeline_mode = #tpu.pipeline_mode<synchronous>, transform_indices = @transform_2, window_bounds = array<i64: 1, 128>}, {pipeline_mode = #tpu.pipeline_mode<synchronous>, transform_indices = @transform_3, window_bounds = array<i64: 1, 128>}, {pipeline_mode = #tpu.pipeline_mode<synchronous>, transform_indices = @transform_4, window_bounds = array<i64: 1, 128>}, {pipeline_mode = #tpu.pipeline_mode<synchronous>, transform_indices = @transform_5, window_bounds = array<i64: 1, 128>}, {pipeline_mode = #tpu.pipeline_mode<synchronous>, transform_indices = @transform_6, window_bounds = array<i64: 1, 128>}, {pipeline_mode = #tpu.pipeline_mode<synchronous>, transform_indices = @transform_7, window_bounds = array<i64: 1, 128>}, {pipeline_mode = #tpu.pipeline_mode<synchronous>, transform_indices = @transform_8, window_bounds = array<i64: 4, 128, 32>}, {pipeline_mode = #tpu.pipeline_mode<synchronous>, transform_indices = @transform_9, window_bounds = array<i64: 4, 128, 32>}, {pipeline_mode = #tpu.pipeline_mode<synchronous>, transform_indices = @transform_10, window_bounds = array<i64: 4, 128, 32>}, {pipeline_mode = #tpu.pipeline_mode<synchronous>, transform_indices = @transform_11, window_bounds = array<i64: 4, 32, 128>}, {pipeline_mode = #tpu.pipeline_mode<synchronous>, transform_indices = @transform_12, window_bounds = array<i64: 4, 32, 128>}, {pipeline_mode = #tpu.pipeline_mode<synchronous>, transform_indices = @transform_13, window_bounds = array<i64: 1, 128>}, {pipeline_mode = #tpu.pipeline_mode<synchronous>, transform_indices = @transform_14, window_bounds = array<i64: 1, 128>}, {pipeline_mode = #tpu.pipeline_mode<synchronous>, transform_indices = @transform_15, window_bounds = array<i64: 128, 128>}, {pipeline_mode = #tpu.pipeline_mode<synchronous>, transform_indices = @transform_16, window_bounds = array<i64: 1, 128>}, {pipeline_mode = #tpu.pipeline_mode<synchronous>, transform_indices = @transform_17, window_bounds = array<i64: 128, 128>}, {pipeline_mode = #tpu.pipeline_mode<synchronous>, transform_indices = @transform_18, window_bounds = array<i64: 1, 128>}, {pipeline_mode = #tpu.pipeline_mode<synchronous>, transform_indices = @transform_19, window_bounds = array<i64: 1, 1>}, {pipeline_mode = #tpu.pipeline_mode<synchronous>, transform_indices = @transform_20, window_bounds = array<i64: 1, 128>}, {pipeline_mode = #tpu.pipeline_mode<synchronous>, transform_indices = @transform_21, window_bounds = array<i64: 1, 128>}, {pipeline_mode = #tpu.pipeline_mode<synchronous>, transform_indices = @transform_22, window_bounds = array<i64: 1, 128>}, {pipeline_mode = #tpu.pipeline_mode<synchronous>, transform_indices = @transform_23, window_bounds = array<i64: 1, 128>}, {pipeline_mode = #tpu.pipeline_mode<synchronous>, transform_indices = @transform_24, window_bounds = array<i64: 1, 128>}, {pipeline_mode = #tpu.pipeline_mode<synchronous>, transform_indices = @transform_25, window_bounds = array<i64: 1, 1>}, {transform_indices = @transform_26, window_bounds = array<i64: 8, 1>}]} {
    %c0 = arith.constant 0 : index
    %c0_0 = arith.constant 0 : index
    %c0_1 = arith.constant 0 : index
    %0 = vector.load %arg1[%c0, %c0_0, %c0_1] : memref<8x8x1xf32, #tpu.memory_space<vmem>>, vector<8x8x1xf32>
    %c0_2 = arith.constant 0 : index
    %c0_3 = arith.constant 0 : index
    %c0_4 = arith.constant 0 : index
    %1 = vector.load %arg2[%c0_2, %c0_3, %c0_4] : memref<8x8x128xf32, #tpu.memory_space<vmem>>, vector<8x8x128xf32>
    %c0_5 = arith.constant 0 : index
    %c0_6 = arith.constant 0 : index
    %2 = vector.load %arg3[%c0_5, %c0_6] : memref<1x128xf32, #tpu.memory_space<vmem>>, vector<1x128xf32>
    %c0_7 = arith.constant 0 : index
    %c0_8 = arith.constant 0 : index
    %3 = vector.load %arg4[%c0_7, %c0_8] : memref<1x128xf32, #tpu.memory_space<vmem>>, vector<1x128xf32>
    %cst = arith.constant dense<0.000000e+00> : vector<8x8xf32>
    %4 = vector.multi_reduction <add>, %1, %cst [2] : vector<8x8x128xf32> to vector<8x8xf32>
    %5 = vector.shape_cast %4 : vector<8x8xf32> to vector<8x8x1xf32>
    %cst_9 = arith.constant 1.280000e+02 : f32
    %6 = vector.broadcast %cst_9 : f32 to vector<8x8x1xf32>
    %7 = arith.divf %5, %6 : vector<8x8x1xf32>
    %8 = vector.broadcast %7 : vector<8x8x1xf32> to vector<8x8x128xf32>
    %9 = arith.subf %1, %8 : vector<8x8x128xf32>
    %10 = arith.mulf %9, %9 : vector<8x8x128xf32>
    %cst_10 = arith.constant dense<0.000000e+00> : vector<8x8xf32>
    %11 = vector.multi_reduction <add>, %10, %cst_10 [2] : vector<8x8x128xf32> to vector<8x8xf32>
    %12 = vector.shape_cast %11 : vector<8x8xf32> to vector<8x8x1xf32>
    %cst_11 = arith.constant 1.280000e+02 : f32
    %13 = vector.broadcast %cst_11 : f32 to vector<8x8x1xf32>
    %14 = arith.divf %12, %13 : vector<8x8x1xf32>
    %15 = vector.broadcast %7 : vector<8x8x1xf32> to vector<8x8x128xf32>
    %16 = arith.subf %1, %15 : vector<8x8x128xf32>
    %cst_12 = arith.constant 9.99999974E-6 : f32
    %17 = vector.broadcast %cst_12 : f32 to vector<8x8x1xf32>
    %18 = arith.addf %14, %17 : vector<8x8x1xf32>
    %19 = math.rsqrt %18 : vector<8x8x1xf32>
    %20 = vector.broadcast %19 : vector<8x8x1xf32> to vector<8x8x128xf32>
    %21 = arith.mulf %16, %20 : vector<8x8x128xf32>
    %22 = vector.shape_cast %2 : vector<1x128xf32> to vector<1x1x128xf32>
    %23 = vector.broadcast %22 : vector<1x1x128xf32> to vector<8x8x128xf32>
    %24 = arith.mulf %21, %23 : vector<8x8x128xf32>
    %25 = vector.shape_cast %3 : vector<1x128xf32> to vector<1x1x128xf32>
    %26 = vector.broadcast %25 : vector<1x1x128xf32> to vector<8x8x128xf32>
    %27 = arith.addf %24, %26 : vector<8x8x128xf32>
    %c0_13 = arith.constant 0 : index
    %c0_14 = arith.constant 0 : index
    %28 = vector.load %arg5[%c0_13, %c0_14] : memref<1x128xf32, #tpu.memory_space<vmem>>, vector<1x128xf32>
    %c0_15 = arith.constant 0 : index
    %c0_16 = arith.constant 0 : index
    %29 = vector.load %arg6[%c0_15, %c0_16] : memref<1x128xf32, #tpu.memory_space<vmem>>, vector<1x128xf32>
    %cst_17 = arith.constant dense<0.000000e+00> : vector<8x8xf32>
    %30 = vector.multi_reduction <add>, %1, %cst_17 [2] : vector<8x8x128xf32> to vector<8x8xf32>
    %31 = vector.shape_cast %30 : vector<8x8xf32> to vector<8x8x1xf32>
    %cst_18 = arith.constant 1.280000e+02 : f32
    %32 = vector.broadcast %cst_18 : f32 to vector<8x8x1xf32>
    %33 = arith.divf %31, %32 : vector<8x8x1xf32>
    %34 = vector.broadcast %33 : vector<8x8x1xf32> to vector<8x8x128xf32>
    %35 = arith.subf %1, %34 : vector<8x8x128xf32>
    %36 = arith.mulf %35, %35 : vector<8x8x128xf32>
    %cst_19 = arith.constant dense<0.000000e+00> : vector<8x8xf32>
    %37 = vector.multi_reduction <add>, %36, %cst_19 [2] : vector<8x8x128xf32> to vector<8x8xf32>
    %38 = vector.shape_cast %37 : vector<8x8xf32> to vector<8x8x1xf32>
    %cst_20 = arith.constant 1.280000e+02 : f32
    %39 = vector.broadcast %cst_20 : f32 to vector<8x8x1xf32>
    %40 = arith.divf %38, %39 : vector<8x8x1xf32>
    %41 = vector.broadcast %33 : vector<8x8x1xf32> to vector<8x8x128xf32>
    %42 = arith.subf %1, %41 : vector<8x8x128xf32>
    %cst_21 = arith.constant 9.99999974E-6 : f32
    %43 = vector.broadcast %cst_21 : f32 to vector<8x8x1xf32>
    %44 = arith.addf %40, %43 : vector<8x8x1xf32>
    %45 = math.rsqrt %44 : vector<8x8x1xf32>
    %46 = vector.broadcast %45 : vector<8x8x1xf32> to vector<8x8x128xf32>
    %47 = arith.mulf %42, %46 : vector<8x8x128xf32>
    %48 = vector.shape_cast %28 : vector<1x128xf32> to vector<1x1x128xf32>
    %49 = vector.broadcast %48 : vector<1x1x128xf32> to vector<8x8x128xf32>
    %50 = arith.mulf %47, %49 : vector<8x8x128xf32>
    %51 = vector.shape_cast %29 : vector<1x128xf32> to vector<1x1x128xf32>
    %52 = vector.broadcast %51 : vector<1x1x128xf32> to vector<8x8x128xf32>
    %53 = arith.addf %50, %52 : vector<8x8x128xf32>
    %c0_22 = arith.constant 0 : index
    %c0_23 = arith.constant 0 : index
    %54 = vector.load %arg7[%c0_22, %c0_23] : memref<1x128xf32, #tpu.memory_space<vmem>>, vector<1x128xf32>
    %c0_24 = arith.constant 0 : index
    %c0_25 = arith.constant 0 : index
    %55 = vector.load %arg8[%c0_24, %c0_25] : memref<1x128xf32, #tpu.memory_space<vmem>>, vector<1x128xf32>
    %cst_26 = arith.constant dense<0.000000e+00> : vector<8x8xf32>
    %56 = vector.multi_reduction <add>, %1, %cst_26 [2] : vector<8x8x128xf32> to vector<8x8xf32>
    %57 = vector.shape_cast %56 : vector<8x8xf32> to vector<8x8x1xf32>
    %cst_27 = arith.constant 1.280000e+02 : f32
    %58 = vector.broadcast %cst_27 : f32 to vector<8x8x1xf32>
    %59 = arith.divf %57, %58 : vector<8x8x1xf32>
    %60 = vector.broadcast %59 : vector<8x8x1xf32> to vector<8x8x128xf32>
    %61 = arith.subf %1, %60 : vector<8x8x128xf32>
    %62 = arith.mulf %61, %61 : vector<8x8x128xf32>
    %cst_28 = arith.constant dense<0.000000e+00> : vector<8x8xf32>
    %63 = vector.multi_reduction <add>, %62, %cst_28 [2] : vector<8x8x128xf32> to vector<8x8xf32>
    %64 = vector.shape_cast %63 : vector<8x8xf32> to vector<8x8x1xf32>
    %cst_29 = arith.constant 1.280000e+02 : f32
    %65 = vector.broadcast %cst_29 : f32 to vector<8x8x1xf32>
    %66 = arith.divf %64, %65 : vector<8x8x1xf32>
    %67 = vector.broadcast %59 : vector<8x8x1xf32> to vector<8x8x128xf32>
    %68 = arith.subf %1, %67 : vector<8x8x128xf32>
    %cst_30 = arith.constant 9.99999974E-6 : f32
    %69 = vector.broadcast %cst_30 : f32 to vector<8x8x1xf32>
    %70 = arith.addf %66, %69 : vector<8x8x1xf32>
    %71 = math.rsqrt %70 : vector<8x8x1xf32>
    %72 = vector.broadcast %71 : vector<8x8x1xf32> to vector<8x8x128xf32>
    %73 = arith.mulf %68, %72 : vector<8x8x128xf32>
    %74 = vector.shape_cast %54 : vector<1x128xf32> to vector<1x1x128xf32>
    %75 = vector.broadcast %74 : vector<1x1x128xf32> to vector<8x8x128xf32>
    %76 = arith.mulf %73, %75 : vector<8x8x128xf32>
    %77 = vector.shape_cast %55 : vector<1x128xf32> to vector<1x1x128xf32>
    %78 = vector.broadcast %77 : vector<1x1x128xf32> to vector<8x8x128xf32>
    %79 = arith.addf %76, %78 : vector<8x8x128xf32>
    %80 = vector.shape_cast %27 : vector<8x8x128xf32> to vector<64x128xf32>
    %81 = arith.truncf %80 : vector<64x128xf32> to vector<64x128xbf16>
    %82 = vector.shape_cast %53 : vector<8x8x128xf32> to vector<64x128xf32>
    %83 = arith.truncf %82 : vector<64x128xf32> to vector<64x128xbf16>
    %84 = vector.shape_cast %79 : vector<8x8x128xf32> to vector<64x128xf32>
    %85 = arith.truncf %84 : vector<64x128xf32> to vector<64x128xbf16>
    %86 = tpu.iota {dimensions = array<i32: 0>} : vector<8x8xi32>
    %87 = tpu.iota {dimensions = array<i32: 1>} : vector<8x8xi32>
    %88 = arith.cmpi eq, %86, %87 : vector<8x8xi32>
    %cst_31 = arith.constant 0.000000e+00 : f32
    %89 = vector.broadcast %cst_31 : f32 to vector<64x128xf32>
    %cst_32 = arith.constant 0.000000e+00 : f32
    %90 = vector.broadcast %cst_32 : f32 to vector<64x128xf32>
    %c0_33 = arith.constant 0 : index
    %c0_34 = arith.constant 0 : index
    %c0_35 = arith.constant 0 : index
    %91 = vector.load %arg9[%c0_33, %c0_34, %c0_35] : memref<4x128x32xbf16, #tpu.memory_space<vmem>>, vector<1x128x32xbf16>
    %92 = vector.shape_cast %91 : vector<1x128x32xbf16> to vector<128x32xbf16>
    %cst_36 = arith.constant dense<0.000000e+00> : vector<64x32xf32>
    %93 = tpu.matmul %81, %92, %cst_36 {dimension_numbers = #tpu.dot_dimension_numbers<[1], [0], [0], [1], [0, 0, 1, 1], [], []>} : vector<64x128xbf16>, vector<128x32xbf16>, vector<64x32xf32> -> vector<64x32xf32>
    %c0_37 = arith.constant 0 : index
    %c0_38 = arith.constant 0 : index
    %c0_39 = arith.constant 0 : index
    %94 = vector.load %arg10[%c0_37, %c0_38, %c0_39] : memref<4x128x32xbf16, #tpu.memory_space<vmem>>, vector<1x128x32xbf16>
    %95 = vector.shape_cast %94 : vector<1x128x32xbf16> to vector<128x32xbf16>
    %cst_40 = arith.constant dense<0.000000e+00> : vector<64x32xf32>
    %96 = tpu.matmul %83, %95, %cst_40 {dimension_numbers = #tpu.dot_dimension_numbers<[1], [0], [0], [1], [0, 0, 1, 1], [], []>} : vector<64x128xbf16>, vector<128x32xbf16>, vector<64x32xf32> -> vector<64x32xf32>
    %c0_41 = arith.constant 0 : index
    %c0_42 = arith.constant 0 : index
    %c0_43 = arith.constant 0 : index
    %97 = vector.load %arg11[%c0_41, %c0_42, %c0_43] : memref<4x128x32xbf16, #tpu.memory_space<vmem>>, vector<1x128x32xbf16>
    %98 = vector.shape_cast %97 : vector<1x128x32xbf16> to vector<128x32xbf16>
    %cst_44 = arith.constant dense<0.000000e+00> : vector<64x32xf32>
    %99 = tpu.matmul %85, %98, %cst_44 {dimension_numbers = #tpu.dot_dimension_numbers<[1], [0], [0], [1], [0, 0, 1, 1], [], []>} : vector<64x128xbf16>, vector<128x32xbf16>, vector<64x32xf32> -> vector<64x32xf32>
    %100 = arith.truncf %99 : vector<64x32xf32> to vector<64x32xbf16>
    %101 = vector.shape_cast %93 : vector<64x32xf32> to vector<8x8x32xf32>
    %102 = arith.truncf %101 : vector<8x8x32xf32> to vector<8x8x32xbf16>
    %103 = vector.shape_cast %96 : vector<64x32xf32> to vector<8x8x32xf32>
    %104 = arith.truncf %103 : vector<8x8x32xf32> to vector<8x8x32xbf16>
    %105 = vector.shape_cast %100 : vector<64x32xbf16> to vector<8x8x32xbf16>
    "tpu.trace_start"() <{level = 10 : i32, message = "bld,bmd->blm"}> : () -> ()
    %cst_45 = arith.constant dense<0.000000e+00> : vector<8x8x8xf32>
    %106 = tpu.matmul %102, %104, %cst_45 {dimension_numbers = #tpu.dot_dimension_numbers<[2], [2], [1], [1], [0, 0, 0, 1, 1, 1], [0], [0]>} : vector<8x8x32xbf16>, vector<8x8x32xbf16>, vector<8x8x8xf32> -> vector<8x8x8xf32>
    "tpu.trace_stop"() : () -> ()
    %cst_46 = arith.constant 0.176776692 : f32
    %107 = vector.broadcast %cst_46 : f32 to vector<8x8x8xf32>
    %108 = arith.mulf %106, %107 : vector<8x8x8xf32>
    %109 = vector.shape_cast %88 : vector<8x8xi1> to vector<1x8x8xi1>
    %cst_47 = arith.constant -1.000000e+32 : f32
    %110 = vector.shape_cast %109 : vector<1x8x8xi1> to vector<1x8x8xi1>
    %111 = vector.broadcast %110 : vector<1x8x8xi1> to vector<8x8x8xi1>
    %112 = vector.broadcast %cst_47 : f32 to vector<8x8x8xf32>
    %113 = arith.select %111, %112, %108 : vector<8x8x8xi1>, vector<8x8x8xf32>
    %cst_48 = arith.constant dense<0xFF800000> : vector<8x8xf32>
    %114 = vector.multi_reduction <maximumf>, %113, %cst_48 [2] : vector<8x8x8xf32> to vector<8x8xf32>
    %115 = vector.shape_cast %114 : vector<8x8xf32> to vector<8x8x1xf32>
    %116 = vector.broadcast %115 : vector<8x8x1xf32> to vector<8x8x8xf32>
    %117 = arith.subf %113, %116 : vector<8x8x8xf32>
    %118 = math.exp %117 : vector<8x8x8xf32>
    %cst_49 = arith.constant dense<0.000000e+00> : vector<8x8xf32>
    %119 = vector.multi_reduction <add>, %118, %cst_49 [2] : vector<8x8x8xf32> to vector<8x8xf32>
    %120 = vector.shape_cast %119 : vector<8x8xf32> to vector<8x8x1xf32>
    %121 = tpu.reciprocal %120 : vector<8x8x1xf32> -> vector<8x8x1xf32>
    %122 = vector.broadcast %121 : vector<8x8x1xf32> to vector<8x8x8xf32>
    %123 = arith.mulf %118, %122 : vector<8x8x8xf32>
    %124 = arith.truncf %123 : vector<8x8x8xf32> to vector<8x8x8xbf16>
    "tpu.trace_start"() <{level = 10 : i32, message = "blm,bmd->bld"}> : () -> ()
    %cst_50 = arith.constant dense<0.000000e+00> : vector<8x8x32xf32>
    %125 = tpu.matmul %124, %105, %cst_50 {dimension_numbers = #tpu.dot_dimension_numbers<[2], [1], [1], [2], [0, 0, 0, 1, 1, 2], [0], [0]>} : vector<8x8x8xbf16>, vector<8x8x32xbf16>, vector<8x8x32xf32> -> vector<8x8x32xf32>
    "tpu.trace_stop"() : () -> ()
    %126 = vector.shape_cast %125 : vector<8x8x32xf32> to vector<64x32xf32>
    %127 = arith.truncf %126 : vector<64x32xf32> to vector<64x32xbf16>
    %c0_51 = arith.constant 0 : index
    %c0_52 = arith.constant 0 : index
    %c0_53 = arith.constant 0 : index
    %128 = vector.load %arg12[%c0_51, %c0_52, %c0_53] : memref<4x32x128xbf16, #tpu.memory_space<vmem>>, vector<1x32x128xbf16>
    %129 = vector.shape_cast %128 : vector<1x32x128xbf16> to vector<32x128xbf16>
    %cst_54 = arith.constant dense<0.000000e+00> : vector<64x128xf32>
    %130 = tpu.matmul %127, %129, %cst_54 {dimension_numbers = #tpu.dot_dimension_numbers<[1], [0], [0], [1], [0, 0, 1, 1], [], []>} : vector<64x32xbf16>, vector<32x128xbf16>, vector<64x128xf32> -> vector<64x128xf32>
    %131 = arith.addf %89, %130 : vector<64x128xf32>
    %c0_55 = arith.constant 0 : index
    %c0_56 = arith.constant 0 : index
    %c0_57 = arith.constant 0 : index
    %132 = vector.load %arg13[%c0_55, %c0_56, %c0_57] : memref<4x32x128xbf16, #tpu.memory_space<vmem>>, vector<1x32x128xbf16>
    %133 = vector.shape_cast %132 : vector<1x32x128xbf16> to vector<32x128xbf16>
    %cst_58 = arith.constant dense<0.000000e+00> : vector<64x128xf32>
    %134 = tpu.matmul %100, %133, %cst_58 {dimension_numbers = #tpu.dot_dimension_numbers<[1], [0], [0], [1], [0, 0, 1, 1], [], []>} : vector<64x32xbf16>, vector<32x128xbf16>, vector<64x128xf32> -> vector<64x128xf32>
    %135 = arith.addf %90, %134 : vector<64x128xf32>
    %c1 = arith.constant 1 : index
    %c0_59 = arith.constant 0 : index
    %c0_60 = arith.constant 0 : index
    %136 = vector.load %arg9[%c1, %c0_59, %c0_60] : memref<4x128x32xbf16, #tpu.memory_space<vmem>>, vector<1x128x32xbf16>
    %137 = vector.shape_cast %136 : vector<1x128x32xbf16> to vector<128x32xbf16>
    %cst_61 = arith.constant dense<0.000000e+00> : vector<64x32xf32>
    %138 = tpu.matmul %81, %137, %cst_61 {dimension_numbers = #tpu.dot_dimension_numbers<[1], [0], [0], [1], [0, 0, 1, 1], [], []>} : vector<64x128xbf16>, vector<128x32xbf16>, vector<64x32xf32> -> vector<64x32xf32>
    %c1_62 = arith.constant 1 : index
    %c0_63 = arith.constant 0 : index
    %c0_64 = arith.constant 0 : index
    %139 = vector.load %arg10[%c1_62, %c0_63, %c0_64] : memref<4x128x32xbf16, #tpu.memory_space<vmem>>, vector<1x128x32xbf16>
    %140 = vector.shape_cast %139 : vector<1x128x32xbf16> to vector<128x32xbf16>
    %cst_65 = arith.constant dense<0.000000e+00> : vector<64x32xf32>
    %141 = tpu.matmul %83, %140, %cst_65 {dimension_numbers = #tpu.dot_dimension_numbers<[1], [0], [0], [1], [0, 0, 1, 1], [], []>} : vector<64x128xbf16>, vector<128x32xbf16>, vector<64x32xf32> -> vector<64x32xf32>
    %c1_66 = arith.constant 1 : index
    %c0_67 = arith.constant 0 : index
    %c0_68 = arith.constant 0 : index
    %142 = vector.load %arg11[%c1_66, %c0_67, %c0_68] : memref<4x128x32xbf16, #tpu.memory_space<vmem>>, vector<1x128x32xbf16>
    %143 = vector.shape_cast %142 : vector<1x128x32xbf16> to vector<128x32xbf16>
    %cst_69 = arith.constant dense<0.000000e+00> : vector<64x32xf32>
    %144 = tpu.matmul %85, %143, %cst_69 {dimension_numbers = #tpu.dot_dimension_numbers<[1], [0], [0], [1], [0, 0, 1, 1], [], []>} : vector<64x128xbf16>, vector<128x32xbf16>, vector<64x32xf32> -> vector<64x32xf32>
    %145 = arith.truncf %144 : vector<64x32xf32> to vector<64x32xbf16>
    %146 = vector.shape_cast %138 : vector<64x32xf32> to vector<8x8x32xf32>
    %147 = arith.truncf %146 : vector<8x8x32xf32> to vector<8x8x32xbf16>
    %148 = vector.shape_cast %141 : vector<64x32xf32> to vector<8x8x32xf32>
    %149 = arith.truncf %148 : vector<8x8x32xf32> to vector<8x8x32xbf16>
    %150 = vector.shape_cast %145 : vector<64x32xbf16> to vector<8x8x32xbf16>
    "tpu.trace_start"() <{level = 10 : i32, message = "bld,bmd->blm"}> : () -> ()
    %cst_70 = arith.constant dense<0.000000e+00> : vector<8x8x8xf32>
    %151 = tpu.matmul %147, %149, %cst_70 {dimension_numbers = #tpu.dot_dimension_numbers<[2], [2], [1], [1], [0, 0, 0, 1, 1, 1], [0], [0]>} : vector<8x8x32xbf16>, vector<8x8x32xbf16>, vector<8x8x8xf32> -> vector<8x8x8xf32>
    "tpu.trace_stop"() : () -> ()
    %cst_71 = arith.constant 0.176776692 : f32
    %152 = vector.broadcast %cst_71 : f32 to vector<8x8x8xf32>
    %153 = arith.mulf %151, %152 : vector<8x8x8xf32>
    %154 = vector.shape_cast %88 : vector<8x8xi1> to vector<1x8x8xi1>
    %cst_72 = arith.constant -1.000000e+32 : f32
    %155 = vector.shape_cast %154 : vector<1x8x8xi1> to vector<1x8x8xi1>
    %156 = vector.broadcast %155 : vector<1x8x8xi1> to vector<8x8x8xi1>
    %157 = vector.broadcast %cst_72 : f32 to vector<8x8x8xf32>
    %158 = arith.select %156, %157, %153 : vector<8x8x8xi1>, vector<8x8x8xf32>
    %cst_73 = arith.constant dense<0xFF800000> : vector<8x8xf32>
    %159 = vector.multi_reduction <maximumf>, %158, %cst_73 [2] : vector<8x8x8xf32> to vector<8x8xf32>
    %160 = vector.shape_cast %159 : vector<8x8xf32> to vector<8x8x1xf32>
    %161 = vector.broadcast %160 : vector<8x8x1xf32> to vector<8x8x8xf32>
    %162 = arith.subf %158, %161 : vector<8x8x8xf32>
    %163 = math.exp %162 : vector<8x8x8xf32>
    %cst_74 = arith.constant dense<0.000000e+00> : vector<8x8xf32>
    %164 = vector.multi_reduction <add>, %163, %cst_74 [2] : vector<8x8x8xf32> to vector<8x8xf32>
    %165 = vector.shape_cast %164 : vector<8x8xf32> to vector<8x8x1xf32>
    %166 = tpu.reciprocal %165 : vector<8x8x1xf32> -> vector<8x8x1xf32>
    %167 = vector.broadcast %166 : vector<8x8x1xf32> to vector<8x8x8xf32>
    %168 = arith.mulf %163, %167 : vector<8x8x8xf32>
    %169 = arith.truncf %168 : vector<8x8x8xf32> to vector<8x8x8xbf16>
    "tpu.trace_start"() <{level = 10 : i32, message = "blm,bmd->bld"}> : () -> ()
    %cst_75 = arith.constant dense<0.000000e+00> : vector<8x8x32xf32>
    %170 = tpu.matmul %169, %150, %cst_75 {dimension_numbers = #tpu.dot_dimension_numbers<[2], [1], [1], [2], [0, 0, 0, 1, 1, 2], [0], [0]>} : vector<8x8x8xbf16>, vector<8x8x32xbf16>, vector<8x8x32xf32> -> vector<8x8x32xf32>
    "tpu.trace_stop"() : () -> ()
    %171 = vector.shape_cast %170 : vector<8x8x32xf32> to vector<64x32xf32>
    %172 = arith.truncf %171 : vector<64x32xf32> to vector<64x32xbf16>
    %c1_76 = arith.constant 1 : index
    %c0_77 = arith.constant 0 : index
    %c0_78 = arith.constant 0 : index
    %173 = vector.load %arg12[%c1_76, %c0_77, %c0_78] : memref<4x32x128xbf16, #tpu.memory_space<vmem>>, vector<1x32x128xbf16>
    %174 = vector.shape_cast %173 : vector<1x32x128xbf16> to vector<32x128xbf16>
    %cst_79 = arith.constant dense<0.000000e+00> : vector<64x128xf32>
    %175 = tpu.matmul %172, %174, %cst_79 {dimension_numbers = #tpu.dot_dimension_numbers<[1], [0], [0], [1], [0, 0, 1, 1], [], []>} : vector<64x32xbf16>, vector<32x128xbf16>, vector<64x128xf32> -> vector<64x128xf32>
    %176 = arith.addf %131, %175 : vector<64x128xf32>
    %c1_80 = arith.constant 1 : index
    %c0_81 = arith.constant 0 : index
    %c0_82 = arith.constant 0 : index
    %177 = vector.load %arg13[%c1_80, %c0_81, %c0_82] : memref<4x32x128xbf16, #tpu.memory_space<vmem>>, vector<1x32x128xbf16>
    %178 = vector.shape_cast %177 : vector<1x32x128xbf16> to vector<32x128xbf16>
    %cst_83 = arith.constant dense<0.000000e+00> : vector<64x128xf32>
    %179 = tpu.matmul %145, %178, %cst_83 {dimension_numbers = #tpu.dot_dimension_numbers<[1], [0], [0], [1], [0, 0, 1, 1], [], []>} : vector<64x32xbf16>, vector<32x128xbf16>, vector<64x128xf32> -> vector<64x128xf32>
    %180 = arith.addf %135, %179 : vector<64x128xf32>
    %c2 = arith.constant 2 : index
    %c0_84 = arith.constant 0 : index
    %c0_85 = arith.constant 0 : index
    %181 = vector.load %arg9[%c2, %c0_84, %c0_85] : memref<4x128x32xbf16, #tpu.memory_space<vmem>>, vector<1x128x32xbf16>
    %182 = vector.shape_cast %181 : vector<1x128x32xbf16> to vector<128x32xbf16>
    %cst_86 = arith.constant dense<0.000000e+00> : vector<64x32xf32>
    %183 = tpu.matmul %81, %182, %cst_86 {dimension_numbers = #tpu.dot_dimension_numbers<[1], [0], [0], [1], [0, 0, 1, 1], [], []>} : vector<64x128xbf16>, vector<128x32xbf16>, vector<64x32xf32> -> vector<64x32xf32>
    %c2_87 = arith.constant 2 : index
    %c0_88 = arith.constant 0 : index
    %c0_89 = arith.constant 0 : index
    %184 = vector.load %arg10[%c2_87, %c0_88, %c0_89] : memref<4x128x32xbf16, #tpu.memory_space<vmem>>, vector<1x128x32xbf16>
    %185 = vector.shape_cast %184 : vector<1x128x32xbf16> to vector<128x32xbf16>
    %cst_90 = arith.constant dense<0.000000e+00> : vector<64x32xf32>
    %186 = tpu.matmul %83, %185, %cst_90 {dimension_numbers = #tpu.dot_dimension_numbers<[1], [0], [0], [1], [0, 0, 1, 1], [], []>} : vector<64x128xbf16>, vector<128x32xbf16>, vector<64x32xf32> -> vector<64x32xf32>
    %c2_91 = arith.constant 2 : index
    %c0_92 = arith.constant 0 : index
    %c0_93 = arith.constant 0 : index
    %187 = vector.load %arg11[%c2_91, %c0_92, %c0_93] : memref<4x128x32xbf16, #tpu.memory_space<vmem>>, vector<1x128x32xbf16>
    %188 = vector.shape_cast %187 : vector<1x128x32xbf16> to vector<128x32xbf16>
    %cst_94 = arith.constant dense<0.000000e+00> : vector<64x32xf32>
    %189 = tpu.matmul %85, %188, %cst_94 {dimension_numbers = #tpu.dot_dimension_numbers<[1], [0], [0], [1], [0, 0, 1, 1], [], []>} : vector<64x128xbf16>, vector<128x32xbf16>, vector<64x32xf32> -> vector<64x32xf32>
    %190 = arith.truncf %189 : vector<64x32xf32> to vector<64x32xbf16>
    %191 = vector.shape_cast %183 : vector<64x32xf32> to vector<8x8x32xf32>
    %192 = arith.truncf %191 : vector<8x8x32xf32> to vector<8x8x32xbf16>
    %193 = vector.shape_cast %186 : vector<64x32xf32> to vector<8x8x32xf32>
    %194 = arith.truncf %193 : vector<8x8x32xf32> to vector<8x8x32xbf16>
    %195 = vector.shape_cast %190 : vector<64x32xbf16> to vector<8x8x32xbf16>
    "tpu.trace_start"() <{level = 10 : i32, message = "bld,bmd->blm"}> : () -> ()
    %cst_95 = arith.constant dense<0.000000e+00> : vector<8x8x8xf32>
    %196 = tpu.matmul %192, %194, %cst_95 {dimension_numbers = #tpu.dot_dimension_numbers<[2], [2], [1], [1], [0, 0, 0, 1, 1, 1], [0], [0]>} : vector<8x8x32xbf16>, vector<8x8x32xbf16>, vector<8x8x8xf32> -> vector<8x8x8xf32>
    "tpu.trace_stop"() : () -> ()
    %cst_96 = arith.constant 0.176776692 : f32
    %197 = vector.broadcast %cst_96 : f32 to vector<8x8x8xf32>
    %198 = arith.mulf %196, %197 : vector<8x8x8xf32>
    %199 = vector.shape_cast %88 : vector<8x8xi1> to vector<1x8x8xi1>
    %cst_97 = arith.constant -1.000000e+32 : f32
    %200 = vector.shape_cast %199 : vector<1x8x8xi1> to vector<1x8x8xi1>
    %201 = vector.broadcast %200 : vector<1x8x8xi1> to vector<8x8x8xi1>
    %202 = vector.broadcast %cst_97 : f32 to vector<8x8x8xf32>
    %203 = arith.select %201, %202, %198 : vector<8x8x8xi1>, vector<8x8x8xf32>
    %cst_98 = arith.constant dense<0xFF800000> : vector<8x8xf32>
    %204 = vector.multi_reduction <maximumf>, %203, %cst_98 [2] : vector<8x8x8xf32> to vector<8x8xf32>
    %205 = vector.shape_cast %204 : vector<8x8xf32> to vector<8x8x1xf32>
    %206 = vector.broadcast %205 : vector<8x8x1xf32> to vector<8x8x8xf32>
    %207 = arith.subf %203, %206 : vector<8x8x8xf32>
    %208 = math.exp %207 : vector<8x8x8xf32>
    %cst_99 = arith.constant dense<0.000000e+00> : vector<8x8xf32>
    %209 = vector.multi_reduction <add>, %208, %cst_99 [2] : vector<8x8x8xf32> to vector<8x8xf32>
    %210 = vector.shape_cast %209 : vector<8x8xf32> to vector<8x8x1xf32>
    %211 = tpu.reciprocal %210 : vector<8x8x1xf32> -> vector<8x8x1xf32>
    %212 = vector.broadcast %211 : vector<8x8x1xf32> to vector<8x8x8xf32>
    %213 = arith.mulf %208, %212 : vector<8x8x8xf32>
    %214 = arith.truncf %213 : vector<8x8x8xf32> to vector<8x8x8xbf16>
    "tpu.trace_start"() <{level = 10 : i32, message = "blm,bmd->bld"}> : () -> ()
    %cst_100 = arith.constant dense<0.000000e+00> : vector<8x8x32xf32>
    %215 = tpu.matmul %214, %195, %cst_100 {dimension_numbers = #tpu.dot_dimension_numbers<[2], [1], [1], [2], [0, 0, 0, 1, 1, 2], [0], [0]>} : vector<8x8x8xbf16>, vector<8x8x32xbf16>, vector<8x8x32xf32> -> vector<8x8x32xf32>
    "tpu.trace_stop"() : () -> ()
    %216 = vector.shape_cast %215 : vector<8x8x32xf32> to vector<64x32xf32>
    %217 = arith.truncf %216 : vector<64x32xf32> to vector<64x32xbf16>
    %c2_101 = arith.constant 2 : index
    %c0_102 = arith.constant 0 : index
    %c0_103 = arith.constant 0 : index
    %218 = vector.load %arg12[%c2_101, %c0_102, %c0_103] : memref<4x32x128xbf16, #tpu.memory_space<vmem>>, vector<1x32x128xbf16>
    %219 = vector.shape_cast %218 : vector<1x32x128xbf16> to vector<32x128xbf16>
    %cst_104 = arith.constant dense<0.000000e+00> : vector<64x128xf32>
    %220 = tpu.matmul %217, %219, %cst_104 {dimension_numbers = #tpu.dot_dimension_numbers<[1], [0], [0], [1], [0, 0, 1, 1], [], []>} : vector<64x32xbf16>, vector<32x128xbf16>, vector<64x128xf32> -> vector<64x128xf32>
    %221 = arith.addf %176, %220 : vector<64x128xf32>
    %c2_105 = arith.constant 2 : index
    %c0_106 = arith.constant 0 : index
    %c0_107 = arith.constant 0 : index
    %222 = vector.load %arg13[%c2_105, %c0_106, %c0_107] : memref<4x32x128xbf16, #tpu.memory_space<vmem>>, vector<1x32x128xbf16>
    %223 = vector.shape_cast %222 : vector<1x32x128xbf16> to vector<32x128xbf16>
    %cst_108 = arith.constant dense<0.000000e+00> : vector<64x128xf32>
    %224 = tpu.matmul %190, %223, %cst_108 {dimension_numbers = #tpu.dot_dimension_numbers<[1], [0], [0], [1], [0, 0, 1, 1], [], []>} : vector<64x32xbf16>, vector<32x128xbf16>, vector<64x128xf32> -> vector<64x128xf32>
    %225 = arith.addf %180, %224 : vector<64x128xf32>
    %c3 = arith.constant 3 : index
    %c0_109 = arith.constant 0 : index
    %c0_110 = arith.constant 0 : index
    %226 = vector.load %arg9[%c3, %c0_109, %c0_110] : memref<4x128x32xbf16, #tpu.memory_space<vmem>>, vector<1x128x32xbf16>
    %227 = vector.shape_cast %226 : vector<1x128x32xbf16> to vector<128x32xbf16>
    %cst_111 = arith.constant dense<0.000000e+00> : vector<64x32xf32>
    %228 = tpu.matmul %81, %227, %cst_111 {dimension_numbers = #tpu.dot_dimension_numbers<[1], [0], [0], [1], [0, 0, 1, 1], [], []>} : vector<64x128xbf16>, vector<128x32xbf16>, vector<64x32xf32> -> vector<64x32xf32>
    %c3_112 = arith.constant 3 : index
    %c0_113 = arith.constant 0 : index
    %c0_114 = arith.constant 0 : index
    %229 = vector.load %arg10[%c3_112, %c0_113, %c0_114] : memref<4x128x32xbf16, #tpu.memory_space<vmem>>, vector<1x128x32xbf16>
    %230 = vector.shape_cast %229 : vector<1x128x32xbf16> to vector<128x32xbf16>
    %cst_115 = arith.constant dense<0.000000e+00> : vector<64x32xf32>
    %231 = tpu.matmul %83, %230, %cst_115 {dimension_numbers = #tpu.dot_dimension_numbers<[1], [0], [0], [1], [0, 0, 1, 1], [], []>} : vector<64x128xbf16>, vector<128x32xbf16>, vector<64x32xf32> -> vector<64x32xf32>
    %c3_116 = arith.constant 3 : index
    %c0_117 = arith.constant 0 : index
    %c0_118 = arith.constant 0 : index
    %232 = vector.load %arg11[%c3_116, %c0_117, %c0_118] : memref<4x128x32xbf16, #tpu.memory_space<vmem>>, vector<1x128x32xbf16>
    %233 = vector.shape_cast %232 : vector<1x128x32xbf16> to vector<128x32xbf16>
    %cst_119 = arith.constant dense<0.000000e+00> : vector<64x32xf32>
    %234 = tpu.matmul %85, %233, %cst_119 {dimension_numbers = #tpu.dot_dimension_numbers<[1], [0], [0], [1], [0, 0, 1, 1], [], []>} : vector<64x128xbf16>, vector<128x32xbf16>, vector<64x32xf32> -> vector<64x32xf32>
    %235 = arith.truncf %234 : vector<64x32xf32> to vector<64x32xbf16>
    %236 = vector.shape_cast %228 : vector<64x32xf32> to vector<8x8x32xf32>
    %237 = arith.truncf %236 : vector<8x8x32xf32> to vector<8x8x32xbf16>
    %238 = vector.shape_cast %231 : vector<64x32xf32> to vector<8x8x32xf32>
    %239 = arith.truncf %238 : vector<8x8x32xf32> to vector<8x8x32xbf16>
    %240 = vector.shape_cast %235 : vector<64x32xbf16> to vector<8x8x32xbf16>
    "tpu.trace_start"() <{level = 10 : i32, message = "bld,bmd->blm"}> : () -> ()
    %cst_120 = arith.constant dense<0.000000e+00> : vector<8x8x8xf32>
    %241 = tpu.matmul %237, %239, %cst_120 {dimension_numbers = #tpu.dot_dimension_numbers<[2], [2], [1], [1], [0, 0, 0, 1, 1, 1], [0], [0]>} : vector<8x8x32xbf16>, vector<8x8x32xbf16>, vector<8x8x8xf32> -> vector<8x8x8xf32>
    "tpu.trace_stop"() : () -> ()
    %cst_121 = arith.constant 0.176776692 : f32
    %242 = vector.broadcast %cst_121 : f32 to vector<8x8x8xf32>
    %243 = arith.mulf %241, %242 : vector<8x8x8xf32>
    %244 = vector.shape_cast %88 : vector<8x8xi1> to vector<1x8x8xi1>
    %cst_122 = arith.constant -1.000000e+32 : f32
    %245 = vector.shape_cast %244 : vector<1x8x8xi1> to vector<1x8x8xi1>
    %246 = vector.broadcast %245 : vector<1x8x8xi1> to vector<8x8x8xi1>
    %247 = vector.broadcast %cst_122 : f32 to vector<8x8x8xf32>
    %248 = arith.select %246, %247, %243 : vector<8x8x8xi1>, vector<8x8x8xf32>
    %cst_123 = arith.constant dense<0xFF800000> : vector<8x8xf32>
    %249 = vector.multi_reduction <maximumf>, %248, %cst_123 [2] : vector<8x8x8xf32> to vector<8x8xf32>
    %250 = vector.shape_cast %249 : vector<8x8xf32> to vector<8x8x1xf32>
    %251 = vector.broadcast %250 : vector<8x8x1xf32> to vector<8x8x8xf32>
    %252 = arith.subf %248, %251 : vector<8x8x8xf32>
    %253 = math.exp %252 : vector<8x8x8xf32>
    %cst_124 = arith.constant dense<0.000000e+00> : vector<8x8xf32>
    %254 = vector.multi_reduction <add>, %253, %cst_124 [2] : vector<8x8x8xf32> to vector<8x8xf32>
    %255 = vector.shape_cast %254 : vector<8x8xf32> to vector<8x8x1xf32>
    %256 = tpu.reciprocal %255 : vector<8x8x1xf32> -> vector<8x8x1xf32>
    %257 = vector.broadcast %256 : vector<8x8x1xf32> to vector<8x8x8xf32>
    %258 = arith.mulf %253, %257 : vector<8x8x8xf32>
    %259 = arith.truncf %258 : vector<8x8x8xf32> to vector<8x8x8xbf16>
    "tpu.trace_start"() <{level = 10 : i32, message = "blm,bmd->bld"}> : () -> ()
    %cst_125 = arith.constant dense<0.000000e+00> : vector<8x8x32xf32>
    %260 = tpu.matmul %259, %240, %cst_125 {dimension_numbers = #tpu.dot_dimension_numbers<[2], [1], [1], [2], [0, 0, 0, 1, 1, 2], [0], [0]>} : vector<8x8x8xbf16>, vector<8x8x32xbf16>, vector<8x8x32xf32> -> vector<8x8x32xf32>
    "tpu.trace_stop"() : () -> ()
    %261 = vector.shape_cast %260 : vector<8x8x32xf32> to vector<64x32xf32>
    %262 = arith.truncf %261 : vector<64x32xf32> to vector<64x32xbf16>
    %c3_126 = arith.constant 3 : index
    %c0_127 = arith.constant 0 : index
    %c0_128 = arith.constant 0 : index
    %263 = vector.load %arg12[%c3_126, %c0_127, %c0_128] : memref<4x32x128xbf16, #tpu.memory_space<vmem>>, vector<1x32x128xbf16>
    %264 = vector.shape_cast %263 : vector<1x32x128xbf16> to vector<32x128xbf16>
    %cst_129 = arith.constant dense<0.000000e+00> : vector<64x128xf32>
    %265 = tpu.matmul %262, %264, %cst_129 {dimension_numbers = #tpu.dot_dimension_numbers<[1], [0], [0], [1], [0, 0, 1, 1], [], []>} : vector<64x32xbf16>, vector<32x128xbf16>, vector<64x128xf32> -> vector<64x128xf32>
    %266 = arith.addf %221, %265 : vector<64x128xf32>
    %c3_130 = arith.constant 3 : index
    %c0_131 = arith.constant 0 : index
    %c0_132 = arith.constant 0 : index
    %267 = vector.load %arg13[%c3_130, %c0_131, %c0_132] : memref<4x32x128xbf16, #tpu.memory_space<vmem>>, vector<1x32x128xbf16>
    %268 = vector.shape_cast %267 : vector<1x32x128xbf16> to vector<32x128xbf16>
    %cst_133 = arith.constant dense<0.000000e+00> : vector<64x128xf32>
    %269 = tpu.matmul %235, %268, %cst_133 {dimension_numbers = #tpu.dot_dimension_numbers<[1], [0], [0], [1], [0, 0, 1, 1], [], []>} : vector<64x32xbf16>, vector<32x128xbf16>, vector<64x128xf32> -> vector<64x128xf32>
    %270 = arith.addf %225, %269 : vector<64x128xf32>
    %271 = vector.shape_cast %266 : vector<64x128xf32> to vector<8x8x128xf32>
    %272 = vector.shape_cast %270 : vector<64x128xf32> to vector<8x8x128xf32>
    %273 = vector.broadcast %0 : vector<8x8x1xf32> to vector<8x8x128xf32>
    %274 = arith.mulf %271, %273 : vector<8x8x128xf32>
    %c0_134 = arith.constant 0 : index
    %c0_135 = arith.constant 0 : index
    %275 = vector.load %arg14[%c0_134, %c0_135] : memref<1x128xf32, #tpu.memory_space<vmem>>, vector<1x128xf32>
    %c0_136 = arith.constant 0 : index
    %c0_137 = arith.constant 0 : index
    %276 = vector.load %arg15[%c0_136, %c0_137] : memref<1x128xf32, #tpu.memory_space<vmem>>, vector<1x128xf32>
    %cst_138 = arith.constant dense<0.000000e+00> : vector<8x8xf32>
    %277 = vector.multi_reduction <add>, %274, %cst_138 [2] : vector<8x8x128xf32> to vector<8x8xf32>
    %278 = vector.shape_cast %277 : vector<8x8xf32> to vector<8x8x1xf32>
    %cst_139 = arith.constant 1.280000e+02 : f32
    %279 = vector.broadcast %cst_139 : f32 to vector<8x8x1xf32>
    %280 = arith.divf %278, %279 : vector<8x8x1xf32>
    %281 = vector.broadcast %280 : vector<8x8x1xf32> to vector<8x8x128xf32>
    %282 = arith.subf %274, %281 : vector<8x8x128xf32>
    %283 = arith.mulf %282, %282 : vector<8x8x128xf32>
    %cst_140 = arith.constant dense<0.000000e+00> : vector<8x8xf32>
    %284 = vector.multi_reduction <add>, %283, %cst_140 [2] : vector<8x8x128xf32> to vector<8x8xf32>
    %285 = vector.shape_cast %284 : vector<8x8xf32> to vector<8x8x1xf32>
    %cst_141 = arith.constant 1.280000e+02 : f32
    %286 = vector.broadcast %cst_141 : f32 to vector<8x8x1xf32>
    %287 = arith.divf %285, %286 : vector<8x8x1xf32>
    %288 = vector.broadcast %280 : vector<8x8x1xf32> to vector<8x8x128xf32>
    %289 = arith.subf %274, %288 : vector<8x8x128xf32>
    %cst_142 = arith.constant 9.99999974E-6 : f32
    %290 = vector.broadcast %cst_142 : f32 to vector<8x8x1xf32>
    %291 = arith.addf %287, %290 : vector<8x8x1xf32>
    %292 = math.rsqrt %291 : vector<8x8x1xf32>
    %293 = vector.broadcast %292 : vector<8x8x1xf32> to vector<8x8x128xf32>
    %294 = arith.mulf %289, %293 : vector<8x8x128xf32>
    %295 = vector.shape_cast %275 : vector<1x128xf32> to vector<1x1x128xf32>
    %296 = vector.broadcast %295 : vector<1x1x128xf32> to vector<8x8x128xf32>
    %297 = arith.mulf %294, %296 : vector<8x8x128xf32>
    %298 = vector.shape_cast %276 : vector<1x128xf32> to vector<1x1x128xf32>
    %299 = vector.broadcast %298 : vector<1x1x128xf32> to vector<8x8x128xf32>
    %300 = arith.addf %297, %299 : vector<8x8x128xf32>
    %301 = vector.shape_cast %300 : vector<8x8x128xf32> to vector<64x128xf32>
    %302 = arith.truncf %301 : vector<64x128xf32> to vector<64x128xbf16>
    %c0_143 = arith.constant 0 : index
    %c0_144 = arith.constant 0 : index
    %303 = vector.load %arg16[%c0_143, %c0_144] : memref<128x128xbf16, #tpu.memory_space<vmem>>, vector<128x128xbf16>
    %cst_145 = arith.constant dense<0.000000e+00> : vector<64x128xf32>
    %304 = tpu.matmul %302, %303, %cst_145 {dimension_numbers = #tpu.dot_dimension_numbers<[1], [0], [0], [1], [0, 0, 1, 1], [], []>} : vector<64x128xbf16>, vector<128x128xbf16>, vector<64x128xf32> -> vector<64x128xf32>
    %c0_146 = arith.constant 0 : index
    %c0_147 = arith.constant 0 : index
    %305 = vector.load %arg17[%c0_146, %c0_147] : memref<1x128xf32, #tpu.memory_space<vmem>>, vector<1x128xf32>
    %306 = vector.broadcast %305 : vector<1x128xf32> to vector<64x128xf32>
    %307 = arith.addf %304, %306 : vector<64x128xf32>
    %308 = arith.negf %307 : vector<64x128xf32>
    %309 = math.exp %308 : vector<64x128xf32>
    %cst_148 = arith.constant 1.000000e+00 : f32
    %310 = vector.broadcast %cst_148 : f32 to vector<64x128xf32>
    %311 = arith.addf %310, %309 : vector<64x128xf32>
    %312 = arith.divf %310, %311 : vector<64x128xf32>
    %313 = arith.mulf %307, %312 : vector<64x128xf32>
    %314 = arith.truncf %313 : vector<64x128xf32> to vector<64x128xbf16>
    %c0_149 = arith.constant 0 : index
    %c0_150 = arith.constant 0 : index
    %315 = vector.load %arg18[%c0_149, %c0_150] : memref<128x128xbf16, #tpu.memory_space<vmem>>, vector<128x128xbf16>
    %cst_151 = arith.constant dense<0.000000e+00> : vector<64x128xf32>
    %316 = tpu.matmul %314, %315, %cst_151 {dimension_numbers = #tpu.dot_dimension_numbers<[1], [0], [0], [1], [0, 0, 1, 1], [], []>} : vector<64x128xbf16>, vector<128x128xbf16>, vector<64x128xf32> -> vector<64x128xf32>
    %c0_152 = arith.constant 0 : index
    %c0_153 = arith.constant 0 : index
    %317 = vector.load %arg19[%c0_152, %c0_153] : memref<1x128xf32, #tpu.memory_space<vmem>>, vector<1x128xf32>
    %318 = vector.broadcast %317 : vector<1x128xf32> to vector<64x128xf32>
    %319 = arith.addf %316, %318 : vector<64x128xf32>
    %c0_154 = arith.constant 0 : index
    %c0_155 = arith.constant 0 : index
    %320 = vector.load %arg20[%c0_154, %c0_155] : memref<1x1xf32, #tpu.memory_space<vmem>>, vector<1x1xf32>
    %321 = vector.shape_cast %319 : vector<64x128xf32> to vector<8x8x128xf32>
    %322 = vector.shape_cast %320 : vector<1x1xf32> to vector<1x1x1xf32>
    %323 = vector.broadcast %322 : vector<1x1x1xf32> to vector<8x8x128xf32>
    %324 = arith.mulf %323, %321 : vector<8x8x128xf32>
    %325 = arith.addf %324, %274 : vector<8x8x128xf32>
    %326 = vector.broadcast %0 : vector<8x8x1xf32> to vector<8x8x128xf32>
    %327 = arith.mulf %325, %326 : vector<8x8x128xf32>
    %c0_156 = arith.constant 0 : index
    %c0_157 = arith.constant 0 : index
    %328 = vector.load %arg21[%c0_156, %c0_157] : memref<1x128xf32, #tpu.memory_space<vmem>>, vector<1x128xf32>
    %c0_158 = arith.constant 0 : index
    %c0_159 = arith.constant 0 : index
    %329 = vector.load %arg22[%c0_158, %c0_159] : memref<1x128xf32, #tpu.memory_space<vmem>>, vector<1x128xf32>
    %cst_160 = arith.constant dense<0.000000e+00> : vector<8x8xf32>
    %330 = vector.multi_reduction <add>, %327, %cst_160 [2] : vector<8x8x128xf32> to vector<8x8xf32>
    %331 = vector.shape_cast %330 : vector<8x8xf32> to vector<8x8x1xf32>
    %cst_161 = arith.constant 1.280000e+02 : f32
    %332 = vector.broadcast %cst_161 : f32 to vector<8x8x1xf32>
    %333 = arith.divf %331, %332 : vector<8x8x1xf32>
    %334 = vector.broadcast %333 : vector<8x8x1xf32> to vector<8x8x128xf32>
    %335 = arith.subf %327, %334 : vector<8x8x128xf32>
    %336 = arith.mulf %335, %335 : vector<8x8x128xf32>
    %cst_162 = arith.constant dense<0.000000e+00> : vector<8x8xf32>
    %337 = vector.multi_reduction <add>, %336, %cst_162 [2] : vector<8x8x128xf32> to vector<8x8xf32>
    %338 = vector.shape_cast %337 : vector<8x8xf32> to vector<8x8x1xf32>
    %cst_163 = arith.constant 1.280000e+02 : f32
    %339 = vector.broadcast %cst_163 : f32 to vector<8x8x1xf32>
    %340 = arith.divf %338, %339 : vector<8x8x1xf32>
    %341 = vector.broadcast %333 : vector<8x8x1xf32> to vector<8x8x128xf32>
    %342 = arith.subf %327, %341 : vector<8x8x128xf32>
    %cst_164 = arith.constant 9.99999974E-6 : f32
    %343 = vector.broadcast %cst_164 : f32 to vector<8x8x1xf32>
    %344 = arith.addf %340, %343 : vector<8x8x1xf32>
    %345 = math.rsqrt %344 : vector<8x8x1xf32>
    %346 = vector.broadcast %345 : vector<8x8x1xf32> to vector<8x8x128xf32>
    %347 = arith.mulf %342, %346 : vector<8x8x128xf32>
    %348 = vector.shape_cast %328 : vector<1x128xf32> to vector<1x1x128xf32>
    %349 = vector.broadcast %348 : vector<1x1x128xf32> to vector<8x8x128xf32>
    %350 = arith.mulf %347, %349 : vector<8x8x128xf32>
    %351 = vector.shape_cast %329 : vector<1x128xf32> to vector<1x1x128xf32>
    %352 = vector.broadcast %351 : vector<1x1x128xf32> to vector<8x8x128xf32>
    %353 = arith.addf %350, %352 : vector<8x8x128xf32>
    %c0_165 = arith.constant 0 : index
    %c0_166 = arith.constant 0 : index
    %354 = vector.load %arg23[%c0_165, %c0_166] : memref<1x128xf32, #tpu.memory_space<vmem>>, vector<1x128xf32>
    %c0_167 = arith.constant 0 : index
    %c0_168 = arith.constant 0 : index
    %355 = vector.load %arg24[%c0_167, %c0_168] : memref<1x128xf32, #tpu.memory_space<vmem>>, vector<1x128xf32>
    %cst_169 = arith.constant dense<0.000000e+00> : vector<8x8xf32>
    %356 = vector.multi_reduction <add>, %272, %cst_169 [2] : vector<8x8x128xf32> to vector<8x8xf32>
    %357 = vector.shape_cast %356 : vector<8x8xf32> to vector<8x8x1xf32>
    %cst_170 = arith.constant 1.280000e+02 : f32
    %358 = vector.broadcast %cst_170 : f32 to vector<8x8x1xf32>
    %359 = arith.divf %357, %358 : vector<8x8x1xf32>
    %360 = vector.broadcast %359 : vector<8x8x1xf32> to vector<8x8x128xf32>
    %361 = arith.subf %272, %360 : vector<8x8x128xf32>
    %362 = arith.mulf %361, %361 : vector<8x8x128xf32>
    %cst_171 = arith.constant dense<0.000000e+00> : vector<8x8xf32>
    %363 = vector.multi_reduction <add>, %362, %cst_171 [2] : vector<8x8x128xf32> to vector<8x8xf32>
    %364 = vector.shape_cast %363 : vector<8x8xf32> to vector<8x8x1xf32>
    %cst_172 = arith.constant 1.280000e+02 : f32
    %365 = vector.broadcast %cst_172 : f32 to vector<8x8x1xf32>
    %366 = arith.divf %364, %365 : vector<8x8x1xf32>
    %367 = vector.broadcast %359 : vector<8x8x1xf32> to vector<8x8x128xf32>
    %368 = arith.subf %272, %367 : vector<8x8x128xf32>
    %cst_173 = arith.constant 9.99999974E-6 : f32
    %369 = vector.broadcast %cst_173 : f32 to vector<8x8x1xf32>
    %370 = arith.addf %366, %369 : vector<8x8x1xf32>
    %371 = math.rsqrt %370 : vector<8x8x1xf32>
    %372 = vector.broadcast %371 : vector<8x8x1xf32> to vector<8x8x128xf32>
    %373 = arith.mulf %368, %372 : vector<8x8x128xf32>
    %374 = vector.shape_cast %354 : vector<1x128xf32> to vector<1x1x128xf32>
    %375 = vector.broadcast %374 : vector<1x1x128xf32> to vector<8x8x128xf32>
    %376 = arith.mulf %373, %375 : vector<8x8x128xf32>
    %377 = vector.shape_cast %355 : vector<1x128xf32> to vector<1x1x128xf32>
    %378 = vector.broadcast %377 : vector<1x1x128xf32> to vector<8x8x128xf32>
    %379 = arith.addf %376, %378 : vector<8x8x128xf32>
    %380 = arith.subf %353, %379 : vector<8x8x128xf32>
    %381 = arith.mulf %380, %380 : vector<8x8x128xf32>
    %c0_174 = arith.constant 0 : index
    %c0_175 = arith.constant 0 : index
    %382 = vector.load %arg25[%c0_174, %c0_175] : memref<1x128xf32, #tpu.memory_space<vmem>>, vector<1x128xf32>
    %383 = vector.shape_cast %382 : vector<1x128xf32> to vector<1x1x128xf32>
    %384 = vector.broadcast %383 : vector<1x1x128xf32> to vector<8x8x128xf32>
    %385 = arith.mulf %381, %384 : vector<8x8x128xf32>
    %cst_176 = arith.constant dense<0.000000e+00> : vector<8x8xf32>
    %386 = vector.multi_reduction <add>, %385, %cst_176 [2] : vector<8x8x128xf32> to vector<8x8xf32>
    %387 = vector.shape_cast %386 : vector<8x8xf32> to vector<8x8x1xf32>
    %c0_177 = arith.constant 0 : index
    %c0_178 = arith.constant 0 : index
    %388 = vector.load %arg26[%c0_177, %c0_178] : memref<1x1xf32, #tpu.memory_space<vmem>>, vector<1x1xf32>
    %389 = vector.shape_cast %388 : vector<1x1xf32> to vector<1x1x1xf32>
    %390 = vector.broadcast %389 : vector<1x1x1xf32> to vector<8x8x1xf32>
    %391 = arith.addf %387, %390 : vector<8x8x1xf32>
    %392 = arith.mulf %391, %0 : vector<8x8x1xf32>
    %cst_179 = arith.constant dense<0.000000e+00> : vector<8x1xf32>
    %393 = vector.multi_reduction <add>, %392, %cst_179 [1] : vector<8x8x1xf32> to vector<8x1xf32>
    %c0_180 = arith.constant 0 : index
    %c0_181 = arith.constant 0 : index
    %394 = vector.load %arg27[%c0_180, %c0_181] : memref<8x1xf32, #tpu.memory_space<vmem>>, vector<8x1xf32>
    tpu.vector_store %arg27[%c0_180, %c0_181], %393 {strides = array<i32>} : memref<8x1xf32, #tpu.memory_space<vmem>>, vector<8x1xf32>,
    return
  }
  func.func @transform_0(%arg0: i32) -> (i32, i32, i32) {
    %c0_i32 = arith.constant 0 : i32
    %c0_i32_0 = arith.constant 0 : i32
    %c0_i32_1 = arith.constant 0 : i32
    return %arg0, %c0_i32, %c0_i32_0 : i32, i32, i32
  }
  func.func @transform_1(%arg0: i32) -> (i32, i32, i32) {
    %c0_i32 = arith.constant 0 : i32
    %c0_i32_0 = arith.constant 0 : i32
    %c0_i32_1 = arith.constant 0 : i32
    return %arg0, %c0_i32, %c0_i32_0 : i32, i32, i32
  }
  func.func @transform_2(%arg0: i32) -> (i32, i32) {
    %c0_i32 = arith.constant 0 : i32
    %c0_i32_0 = arith.constant 0 : i32
    %c0_i32_1 = arith.constant 0 : i32
    return %c0_i32, %c0_i32_0 : i32, i32
  }
  func.func @transform_3(%arg0: i32) -> (i32, i32) {
    %c0_i32 = arith.constant 0 : i32
    %c0_i32_0 = arith.constant 0 : i32
    %c0_i32_1 = arith.constant 0 : i32
    return %c0_i32, %c0_i32_0 : i32, i32
  }
  func.func @transform_4(%arg0: i32) -> (i32, i32) {
    %c0_i32 = arith.constant 0 : i32
    %c0_i32_0 = arith.constant 0 : i32
    %c0_i32_1 = arith.constant 0 : i32
    return %c0_i32, %c0_i32_0 : i32, i32
  }
  func.func @transform_5(%arg0: i32) -> (i32, i32) {
    %c0_i32 = arith.constant 0 : i32
    %c0_i32_0 = arith.constant 0 : i32
    %c0_i32_1 = arith.constant 0 : i32
    return %c0_i32, %c0_i32_0 : i32, i32
  }
  func.func @transform_6(%arg0: i32) -> (i32, i32) {
    %c0_i32 = arith.constant 0 : i32
    %c0_i32_0 = arith.constant 0 : i32
    %c0_i32_1 = arith.constant 0 : i32
    return %c0_i32, %c0_i32_0 : i32, i32
  }
  func.func @transform_7(%arg0: i32) -> (i32, i32) {
    %c0_i32 = arith.constant 0 : i32
    %c0_i32_0 = arith.constant 0 : i32
    %c0_i32_1 = arith.constant 0 : i32
    return %c0_i32, %c0_i32_0 : i32, i32
  }
  func.func @transform_8(%arg0: i32) -> (i32, i32, i32) {
    %c0_i32 = arith.constant 0 : i32
    %c0_i32_0 = arith.constant 0 : i32
    %c0_i32_1 = arith.constant 0 : i32
    %c0_i32_2 = arith.constant 0 : i32
    return %c0_i32, %c0_i32_0, %c0_i32_1 : i32, i32, i32
  }
  func.func @transform_9(%arg0: i32) -> (i32, i32, i32) {
    %c0_i32 = arith.constant 0 : i32
    %c0_i32_0 = arith.constant 0 : i32
    %c0_i32_1 = arith.constant 0 : i32
    %c0_i32_2 = arith.constant 0 : i32
    return %c0_i32, %c0_i32_0, %c0_i32_1 : i32, i32, i32
  }
  func.func @transform_10(%arg0: i32) -> (i32, i32, i32) {
    %c0_i32 = arith.constant 0 : i32
    %c0_i32_0 = arith.constant 0 : i32
    %c0_i32_1 = arith.constant 0 : i32
    %c0_i32_2 = arith.constant 0 : i32
    return %c0_i32, %c0_i32_0, %c0_i32_1 : i32, i32, i32
  }
  func.func @transform_11(%arg0: i32) -> (i32, i32, i32) {
    %c0_i32 = arith.constant 0 : i32
    %c0_i32_0 = arith.constant 0 : i32
    %c0_i32_1 = arith.constant 0 : i32
    %c0_i32_2 = arith.constant 0 : i32
    return %c0_i32, %c0_i32_0, %c0_i32_1 : i32, i32, i32
  }
  func.func @transform_12(%arg0: i32) -> (i32, i32, i32) {
    %c0_i32 = arith.constant 0 : i32
    %c0_i32_0 = arith.constant 0 : i32
    %c0_i32_1 = arith.constant 0 : i32
    %c0_i32_2 = arith.constant 0 : i32
    return %c0_i32, %c0_i32_0, %c0_i32_1 : i32, i32, i32
  }
  func.func @transform_13(%arg0: i32) -> (i32, i32) {
    %c0_i32 = arith.constant 0 : i32
    %c0_i32_0 = arith.constant 0 : i32
    %c0_i32_1 = arith.constant 0 : i32
    return %c0_i32, %c0_i32_0 : i32, i32
  }
  func.func @transform_14(%arg0: i32) -> (i32, i32) {
    %c0_i32 = arith.constant 0 : i32
    %c0_i32_0 = arith.constant 0 : i32
    %c0_i32_1 = arith.constant 0 : i32
    return %c0_i32, %c0_i32_0 : i32, i32
  }
  func.func @transform_15(%arg0: i32) -> (i32, i32) {
    %c0_i32 = arith.constant 0 : i32
    %c0_i32_0 = arith.constant 0 : i32
    %c0_i32_1 = arith.constant 0 : i32
    return %c0_i32, %c0_i32_0 : i32, i32
  }
  func.func @transform_16(%arg0: i32) -> (i32, i32) {
    %c0_i32 = arith.constant 0 : i32
    %c0_i32_0 = arith.constant 0 : i32
    %c0_i32_1 = arith.constant 0 : i32
    return %c0_i32, %c0_i32_0 : i32, i32
  }
  func.func @transform_17(%arg0: i32) -> (i32, i32) {
    %c0_i32 = arith.constant 0 : i32
    %c0_i32_0 = arith.constant 0 : i32
    %c0_i32_1 = arith.constant 0 : i32
    return %c0_i32, %c0_i32_0 : i32, i32
  }
  func.func @transform_18(%arg0: i32) -> (i32, i32) {
    %c0_i32 = arith.constant 0 : i32
    %c0_i32_0 = arith.constant 0 : i32
    %c0_i32_1 = arith.constant 0 : i32
    return %c0_i32, %c0_i32_0 : i32, i32
  }
  func.func @transform_19(%arg0: i32) -> (i32, i32) {
    %c0_i32 = arith.constant 0 : i32
    %c0_i32_0 = arith.constant 0 : i32
    %c0_i32_1 = arith.constant 0 : i32
    return %c0_i32, %c0_i32_0 : i32, i32
  }
  func.func @transform_20(%arg0: i32) -> (i32, i32) {
    %c0_i32 = arith.constant 0 : i32
    %c0_i32_0 = arith.constant 0 : i32
    %c0_i32_1 = arith.constant 0 : i32
    return %c0_i32, %c0_i32_0 : i32, i32
  }
  func.func @transform_21(%arg0: i32) -> (i32, i32) {
    %c0_i32 = arith.constant 0 : i32
    %c0_i32_0 = arith.constant 0 : i32
    %c0_i32_1 = arith.constant 0 : i32
    return %c0_i32, %c0_i32_0 : i32, i32
  }
  func.func @transform_22(%arg0: i32) -> (i32, i32) {
    %c0_i32 = arith.constant 0 : i32
    %c0_i32_0 = arith.constant 0 : i32
    %c0_i32_1 = arith.constant 0 : i32
    return %c0_i32, %c0_i32_0 : i32, i32
  }
  func.func @transform_23(%arg0: i32) -> (i32, i32) {
    %c0_i32 = arith.constant 0 : i32
    %c0_i32_0 = arith.constant 0 : i32
    %c0_i32_1 = arith.constant 0 : i32
    return %c0_i32, %c0_i32_0 : i32, i32
  }
  func.func @transform_24(%arg0: i32) -> (i32, i32) {
    %c0_i32 = arith.constant 0 : i32
    %c0_i32_0 = arith.constant 0 : i32
    %c0_i32_1 = arith.constant 0 : i32
    return %c0_i32, %c0_i32_0 : i32, i32
  }
  func.func @transform_25(%arg0: i32) -> (i32, i32) {
    %c0_i32 = arith.constant 0 : i32
    %c0_i32_0 = arith.constant 0 : i32
    %c0_i32_1 = arith.constant 0 : i32
    return %c0_i32, %c0_i32_0 : i32, i32
  }
  func.func @transform_26(%arg0: i32) -> (i32, i32) {
    %c0_i32 = arith.constant 0 : i32
    %c0_i32_0 = arith.constant 0 : i32
    return %arg0, %c0_i32 : i32, i32
  }
}

</mosaic_0001>

<llo_original>
// kernel: tpu_custom_call.1
$region0: #{tpu_custom_call.1}
  #allocation0 [shape = 'u32[]', space=smem, size = 0x4, offset = 0x4, fixed_abs, tag = 'smem constant byte address 0x4 - core index']
  #allocation1 [shape = 'u32[144,128]{1,0:T(1,128)}', space=vmem, size = 0x12000, scoped, tag = 'internal scratch']
  #allocation2 [shape = 'f32[1,1]{1,0:T(1,128)S(1)}', space=vmem, size = 0x200, scoped, tag = 'scoped memory for tpu_custom_call.1']
  #allocation3 [shape = 'f32[1,1]{1,0:T(1,128)S(1)}', space=vmem, size = 0x200, scoped, tag = 'scoped memory for tpu_custom_call.1']
  %s0 = inlined_call_operand.hbm [shape: f32[16,8,1], index: 0, kind: input, shape index: {}]
  %s1 = inlined_call_operand.hbm [shape: f32[16,8,128], index: 1, kind: input, shape index: {}]
  %s2 = inlined_call_operand.hbm [shape: f32[1,128], index: 2, kind: input, shape index: {}]
  %s3 = inlined_call_operand.hbm [shape: f32[1,128], index: 3, kind: input, shape index: {}]
  %s4 = inlined_call_operand.hbm [shape: f32[1,128], index: 4, kind: input, shape index: {}]
  %s5 = inlined_call_operand.hbm [shape: f32[1,128], index: 5, kind: input, shape index: {}]
  %s6 = inlined_call_operand.hbm [shape: f32[1,128], index: 6, kind: input, shape index: {}]
  %s7 = inlined_call_operand.hbm [shape: f32[1,128], index: 7, kind: input, shape index: {}]
  %s8 = inlined_call_operand.hbm [shape: bf16[4,128,32], index: 8, kind: input, shape index: {}]
  %s9 = inlined_call_operand.hbm [shape: bf16[4,128,32], index: 9, kind: input, shape index: {}]
  %s10 = inlined_call_operand.hbm [shape: bf16[4,128,32], index: 10, kind: input, shape index: {}]
  %s11 = inlined_call_operand.hbm [shape: bf16[4,32,128], index: 11, kind: input, shape index: {}]
  %s12 = inlined_call_operand.hbm [shape: bf16[4,32,128], index: 12, kind: input, shape index: {}]
  %s13 = inlined_call_operand.hbm [shape: f32[1,128], index: 13, kind: input, shape index: {}]
  %s14 = inlined_call_operand.hbm [shape: f32[1,128], index: 14, kind: input, shape index: {}]
  %s15 = inlined_call_operand.hbm [shape: bf16[128,128], index: 15, kind: input, shape index: {}]
  %s16 = inlined_call_operand.hbm [shape: f32[1,128], index: 16, kind: input, shape index: {}]
  %s17 = inlined_call_operand.hbm [shape: bf16[128,128], index: 17, kind: input, shape index: {}]
  %s18 = inlined_call_operand.hbm [shape: f32[1,128], index: 18, kind: input, shape index: {}]
  %s19 = inlined_call_operand.<no memory space> [shape: f32[1,1], index: 19, kind: input, shape index: {}]
  %s20 = inlined_call_operand.hbm [shape: f32[1,128], index: 20, kind: input, shape index: {}]
  %s21 = inlined_call_operand.hbm [shape: f32[1,128], index: 21, kind: input, shape index: {}]
  %s22 = inlined_call_operand.hbm [shape: f32[1,128], index: 22, kind: input, shape index: {}]
  %s23 = inlined_call_operand.hbm [shape: f32[1,128], index: 23, kind: input, shape index: {}]
  %s24 = inlined_call_operand.hbm [shape: f32[1,128], index: 24, kind: input, shape index: {}]
  %s25 = inlined_call_operand.<no memory space> [shape: f32[1,1], index: 25, kind: input, shape index: {}]
  %s26 = inlined_call_operand.hbm [shape: f32[16,1], index: 26, kind: output, shape index: {}]
  %s27 = sld [smem:[#allocation0]]
  $region233: #{tpu_custom_call.1} parent=0
    _
  %s29 = ssub.s32 1, %s27
  %s30 = scalar_select 0, %s29, %s27
  %v31 = vstv %s19
  %32 = vst [vmem:[#allocation2] sm:$0x1] %v31
  %v33 = vstv %s25
  %34 = vst [vmem:[#allocation3] sm:$0x1] %v33
  $region1: #{tpu_custom_call.1} parent=0
    #allocation4 [shape = 'u8[65536]{0}', space=vmem, size = 0x10000, scoped, tag = 'input window, operand 0']
    #allocation5 [shape = 's32[2]{0}', space=sflag, size = 0x8, scoped, tag = 'scoped memory for tpu_custom_call.1']
    #allocation6 [shape = 's32[2]{0}', space=sflag, size = 0x8, scoped, tag = 'scoped memory for tpu_custom_call.1']
    #allocation7 [shape = 'u8[65536]{0}', space=vmem, size = 0x10000, scoped, tag = 'input window, operand 1']
    #allocation8 [shape = 's32[2]{0}', space=sflag, size = 0x8, scoped, tag = 'scoped memory for tpu_custom_call.1']
    #allocation9 [shape = 'u8[512]{0}', space=vmem, size = 0x400, scoped, tag = 'input window, operand 2, single buffered']
    #allocation10 [shape = 'u8[512]{0}', space=vmem, size = 0x400, scoped, tag = 'input window, operand 3, single buffered']
    #allocation11 [shape = 's32[1]{0}', space=sflag, size = 0x4, scoped, tag = 'scoped memory for tpu_custom_call.1']
    #allocation12 [shape = 'u8[512]{0}', space=vmem, size = 0x400, scoped, tag = 'input window, operand 4, single buffered']
    #allocation13 [shape = 'u8[512]{0}', space=vmem, size = 0x400, scoped, tag = 'input window, operand 5, single buffered']
    #allocation14 [shape = 's32[1]{0}', space=sflag, size = 0x4, scoped, tag = 'scoped memory for tpu_custom_call.1']
    #allocation15 [shape = 'u8[512]{0}', space=vmem, size = 0x400, scoped, tag = 'input window, operand 6, single buffered']
    #allocation16 [shape = 'u8[512]{0}', space=vmem, size = 0x400, scoped, tag = 'input window, operand 7, single buffered']
    #allocation17 [shape = 's32[1]{0}', space=sflag, size = 0x4, scoped, tag = 'scoped memory for tpu_custom_call.1']
    #allocation18 [shape = 'u8[131072]{0}', space=vmem, size = 0x20000, scoped, tag = 'input window, operand 8, single buffered']
    #allocation19 [shape = 'u8[131072]{0}', space=vmem, size = 0x20000, scoped, tag = 'input window, operand 9, single buffered']
    #allocation20 [shape = 's32[1]{0}', space=sflag, size = 0x4, scoped, tag = 'scoped memory for tpu_custom_call.1']
    #allocation21 [shape = 'u8[131072]{0}', space=vmem, size = 0x20000, scoped, tag = 'input window, operand 10, single buffered']
    #allocation22 [shape = 'u8[32768]{0}', space=vmem, size = 0x8000, scoped, tag = 'input window, operand 11, single buffered']
    #allocation23 [shape = 's32[1]{0}', space=sflag, size = 0x4, scoped, tag = 'scoped memory for tpu_custom_call.1']
    #allocation24 [shape = 'u8[32768]{0}', space=vmem, size = 0x8000, scoped, tag = 'input window, operand 12, single buffered']
    #allocation25 [shape = 'u8[512]{0}', space=vmem, size = 0x400, scoped, tag = 'input window, operand 13, single buffered']
    #allocation26 [shape = 's32[1]{0}', space=sflag, size = 0x4, scoped, tag = 'scoped memory for tpu_custom_call.1']
    #allocation27 [shape = 'u8[512]{0}', space=vmem, size = 0x400, scoped, tag = 'input window, operand 14, single buffered']
    #allocation28 [shape = 'u8[32768]{0}', space=vmem, size = 0x8000, scoped, tag = 'input window, operand 15, single buffered']
    #allocation29 [shape = 's32[1]{0}', space=sflag, size = 0x4, scoped, tag = 'scoped memory for tpu_custom_call.1']
    #allocation30 [shape = 'u8[512]{0}', space=vmem, size = 0x400, scoped, tag = 'input window, operand 16, single buffered']
    #allocation31 [shape = 'u8[32768]{0}', space=vmem, size = 0x8000, scoped, tag = 'input window, operand 17, single buffered']
    #allocation32 [shape = 's32[1]{0}', space=sflag, size = 0x4, scoped, tag = 'scoped memory for tpu_custom_call.1']
    #allocation33 [shape = 'u8[512]{0}', space=vmem, size = 0x400, scoped, tag = 'input window, operand 18, single buffered']
    #allocation34 [shape = 'u8[512]{0}', space=vmem, size = 0x400, scoped, tag = 'input window, operand 20, single buffered']
    #allocation35 [shape = 's32[1]{0}', space=sflag, size = 0x4, scoped, tag = 'scoped memory for tpu_custom_call.1']
    #allocation36 [shape = 'u8[512]{0}', space=vmem, size = 0x400, scoped, tag = 'input window, operand 21, single buffered']
    #allocation37 [shape = 'u8[512]{0}', space=vmem, size = 0x400, scoped, tag = 'input window, operand 22, single buffered']
    #allocation38 [shape = 's32[1]{0}', space=sflag, size = 0x4, scoped, tag = 'scoped memory for tpu_custom_call.1']
    #allocation39 [shape = 'u8[512]{0}', space=vmem, size = 0x400, scoped, tag = 'input window, operand 23, single buffered']
    #allocation40 [shape = 'u8[512]{0}', space=vmem, size = 0x400, scoped, tag = 'input window, operand 24, single buffered']
    #allocation41 [shape = 's32[1]{0}', space=sflag, size = 0x4, scoped, tag = 'scoped memory for tpu_custom_call.1']
    #allocation42 [shape = 'u8[8192]{0}', space=vmem, size = 0x2000, scoped, tag = 'output window, operand 0']
    %35 = vsyncpa [#allocation5], 0
    %s36 = scalar_lea.sflag [#allocation5], 1
    %37 = vsyncpa %s36, 0
    %38 = vsyncpa [#allocation8], 0
    %s39 = scalar_lea.sflag [#allocation8], 1
    %40 = vsyncpa %s39, 0
    %41 = vsyncpa [#allocation11], 0
    %42 = vsyncpa [#allocation14], 0
    %43 = vsyncpa [#allocation17], 0
    %44 = vsyncpa [#allocation20], 0
    %45 = vsyncpa [#allocation23], 0
    %46 = vsyncpa [#allocation26], 0
    %47 = vsyncpa [#allocation29], 0
    %48 = vsyncpa [#allocation32], 0
    %49 = vsyncpa [#allocation35], 0
    %50 = vsyncpa [#allocation38], 0
    %51 = vsyncpa [#allocation41], 0
    %52 = vsyncpa [#allocation6], 0
    %s53 = scalar_lea.sflag [#allocation6], 1
    %54 = vsyncpa %s53, 0
    loop: start=0, step=1, limit=4
    $region2: #{tpu_custom_call.1} parent=1 // loop_pre_header
      _
    $region3: #{tpu_custom_call.1} parent=1 // loop_header
      %s56 = sphi 0, %s60
      %p57 = scmp.ge.s32.totalorder %s56, 4
      %s66 = sphi 0, %s68
      %s69 = sphi 0, %s66
      %s70 = sphi 0, %s69
      %s86 = sphi 0, %s70
      %s92 = sphi 0, %s94
      %s95 = sphi 0, %s92
      %s96 = sphi 0, %s95
      %s112 = sphi 0, %s96
      %s116 = sphi 0, %s116
      %s118 = sphi 0, %s116
      %s119 = sphi 0, %s118
      %s133 = sphi 0, %s119
      %s137 = sphi 0, %s137
      %s139 = sphi 0, %s137
      %s140 = sphi 0, %s139
      %s154 = sphi 0, %s140
      %s158 = sphi 0, %s158
      %s160 = sphi 0, %s158
      %s161 = sphi 0, %s160
      %s175 = sphi 0, %s161
      %s179 = sphi 0, %s179
      %s181 = sphi 0, %s179
      %s182 = sphi 0, %s181
      %s196 = sphi 0, %s182
      %s200 = sphi 0, %s200
      %s202 = sphi 0, %s200
      %s203 = sphi 0, %s202
      %s217 = sphi 0, %s203
      %s221 = sphi 0, %s221
      %s223 = sphi 0, %s221
      %s224 = sphi 0, %s223
      %s238 = sphi 0, %s224
      %s242 = sphi 0, %s242
      %s244 = sphi 0, %s242
      %s245 = sphi 0, %s244
      %s259 = sphi 0, %s245
      %s263 = sphi 0, %s263
      %s265 = sphi 0, %s263
      %s266 = sphi 0, %s265
      %s280 = sphi 0, %s266
      %s284 = sphi 0, %s284
      %s286 = sphi 0, %s284
      %s287 = sphi 0, %s286
      %s301 = sphi 0, %s287
      %s305 = sphi 0, %s305
      %s307 = sphi 0, %s305
      %s308 = sphi 0, %s307
      %s322 = sphi 0, %s308
      %s326 = sphi 0, %s326
      %s328 = sphi 0, %s326
      %s329 = sphi 0, %s328
      %s343 = sphi 0, %s329
      %s347 = sphi 0, %s347
      %s349 = sphi 0, %s347
      %s350 = sphi 0, %s349
      %s364 = sphi 0, %s350
      %s368 = sphi 0, %s368
      %s370 = sphi 0, %s368
      %s371 = sphi 0, %s370
      %s385 = sphi 0, %s371
      %s389 = sphi 0, %s389
      %s391 = sphi 0, %s389
      %s392 = sphi 0, %s391
      %s406 = sphi 0, %s392
      %s410 = sphi 0, %s410
      %s412 = sphi 0, %s410
      %s413 = sphi 0, %s412
      %s427 = sphi 0, %s413
      %s431 = sphi 0, %s431
      %s433 = sphi 0, %s431
      %s434 = sphi 0, %s433
      %s448 = sphi 0, %s434
      %s452 = sphi 0, %s452
      %s454 = sphi 0, %s452
      %s455 = sphi 0, %s454
      %s469 = sphi 0, %s455
      %s473 = sphi 0, %s473
      %s475 = sphi 0, %s473
      %s476 = sphi 0, %s475
      %s490 = sphi 0, %s476
      %s494 = sphi 0, %s494
      %s496 = sphi 0, %s494
      %s497 = sphi 0, %s496
      %s511 = sphi 0, %s497
      %s515 = sphi 0, %s515
      %s517 = sphi 0, %s515
      %s518 = sphi 0, %s517
      %s532 = sphi 0, %s518
      %s536 = sphi 0, %s536
      %s538 = sphi 0, %s536
      %s539 = sphi 0, %s538
      %s553 = sphi 0, %s539
      %s557 = sphi 0, %s557
      %s559 = sphi 0, %s557
      %s560 = sphi 0, %s559
      %s574 = sphi 0, %s560
      %s578 = sphi 0, %s578
      %s580 = sphi 0, %s578
      %s581 = sphi 0, %s580
      %s595 = sphi 0, %s581
      %s599 = sphi 0, %s599
      %s601 = sphi 0, %s599
      %s602 = sphi 0, %s601
      %s616 = sphi 0, %s602
      %s622 = sphi 0, %s624
      %s625 = sphi 0, %s622
      %s626 = sphi 0, %s625
      %s642 = sphi 0, %s626
    $region4: #{tpu_custom_call.1} parent=1 // loop_header_branch
      %59 = sbr.rel (%p57) target = $region8
    $region5: #{tpu_custom_call.1} parent=1 // loop_body
      %s61 = ssub.s32 %s56, 1
      %s62 = ssub.s32 %s56, 2
      %s63 = sadd.s32 %s56, 1
      %s64 = ssub.s32 %s56, %s63
      %p65 = scmp.eq.s32.totalorder %s64, 0
      %s67 = sadd.s32 %s66, 1
      %s68 = scalar_select %p65, %s66, %s67
      %p71 = pneg %p65
      %p72 = scmp.eq.s32.totalorder %s56, 1
      %p73 = por %p71, %p72
      %p74 = scmp.ne.s32.totalorder %s66, %s69
      %p75 = scmp.eq.s32.totalorder %s56, 0
      %p76 = por %p74, %p75
      %p77 = scmp.ne.s32.totalorder %s66, %s69
      %p78 = scmp.eq.s32.totalorder %s61, 1
      %p79 = por %p77, %p78
      %p80 = scmp.ne.s32.totalorder %s69, %s70
      %p81 = scmp.eq.s32.totalorder %s61, 0
      %p82 = por %p80, %p81
      %p83 = scmp.ne.s32.totalorder %s69, %s70
      %p84 = scmp.eq.s32.totalorder %s62, 1
      %p85 = por %p83, %p84
      %p87 = scmp.ne.s32.totalorder %s70, %s86
      %p88 = scmp.eq.s32.totalorder %s62, 0
      %p89 = por %p87, %p88
      %s90 = ssub.s32 %s56, %s63
      %p91 = scmp.eq.s32.totalorder %s90, 0
      %s93 = sadd.s32 %s92, 1
      %s94 = scalar_select %p91, %s92, %s93
      %p97 = pneg %p91
      %p98 = scmp.eq.s32.totalorder %s56, 1
      %p99 = por %p97, %p98
      %p100 = scmp.ne.s32.totalorder %s92, %s95
      %p101 = scmp.eq.s32.totalorder %s56, 0
      %p102 = por %p100, %p101
      %p103 = scmp.ne.s32.totalorder %s92, %s95
      %p104 = scmp.eq.s32.totalorder %s61, 1
      %p105 = por %p103, %p104
      %p106 = scmp.ne.s32.totalorder %s95, %s96
      %p107 = scmp.eq.s32.totalorder %s61, 0
      %p108 = por %p106, %p107
      %p109 = scmp.ne.s32.totalorder %s95, %s96
      %p110 = scmp.eq.s32.totalorder %s62, 1
      %p111 = por %p109, %p110
      %p113 = scmp.ne.s32.totalorder %s96, %s112
      %p114 = scmp.eq.s32.totalorder %s62, 0
      %p115 = por %p113, %p114
      %s117 = sadd.s32 %s116, 1
      %p120 = scmp.eq.s32.totalorder %s56, 1
      %p121 = scmp.ne.s32.totalorder %s116, %s118
      %p122 = scmp.eq.s32.totalorder %s56, 0
      %p123 = por %p121, %p122
      %p124 = scmp.ne.s32.totalorder %s116, %s118
      %p125 = scmp.eq.s32.totalorder %s61, 1
      %p126 = por %p124, %p125
      %p127 = scmp.ne.s32.totalorder %s118, %s119
      %p128 = scmp.eq.s32.totalorder %s61, 0
      %p129 = por %p127, %p128
      %p130 = scmp.ne.s32.totalorder %s118, %s119
      %p131 = scmp.eq.s32.totalorder %s62, 1
      %p132 = por %p130, %p131
      %p134 = scmp.ne.s32.totalorder %s119, %s133
      %p135 = scmp.eq.s32.totalorder %s62, 0
      %p136 = por %p134, %p135
      %s138 = sadd.s32 %s137, 1
      %p141 = scmp.eq.s32.totalorder %s56, 1
      %p142 = scmp.ne.s32.totalorder %s137, %s139
      %p143 = scmp.eq.s32.totalorder %s56, 0
      %p144 = por %p142, %p143
      %p145 = scmp.ne.s32.totalorder %s137, %s139
      %p146 = scmp.eq.s32.totalorder %s61, 1
      %p147 = por %p145, %p146
      %p148 = scmp.ne.s32.totalorder %s139, %s140
      %p149 = scmp.eq.s32.totalorder %s61, 0
      %p150 = por %p148, %p149
      %p151 = scmp.ne.s32.totalorder %s139, %s140
      %p152 = scmp.eq.s32.totalorder %s62, 1
      %p153 = por %p151, %p152
      %p155 = scmp.ne.s32.totalorder %s140, %s154
      %p156 = scmp.eq.s32.totalorder %s62, 0
      %p157 = por %p155, %p156
      %s159 = sadd.s32 %s158, 1
      %p162 = scmp.eq.s32.totalorder %s56, 1
      %p163 = scmp.ne.s32.totalorder %s158, %s160
      %p164 = scmp.eq.s32.totalorder %s56, 0
      %p165 = por %p163, %p164
      %p166 = scmp.ne.s32.totalorder %s158, %s160
      %p167 = scmp.eq.s32.totalorder %s61, 1
      %p168 = por %p166, %p167
      %p169 = scmp.ne.s32.totalorder %s160, %s161
      %p170 = scmp.eq.s32.totalorder %s61, 0
      %p171 = por %p169, %p170
      %p172 = scmp.ne.s32.totalorder %s160, %s161
      %p173 = scmp.eq.s32.totalorder %s62, 1
      %p174 = por %p172, %p173
      %p176 = scmp.ne.s32.totalorder %s161, %s175
      %p177 = scmp.eq.s32.totalorder %s62, 0
      %p178 = por %p176, %p177
      %s180 = sadd.s32 %s179, 1
      %p183 = scmp.eq.s32.totalorder %s56, 1
      %p184 = scmp.ne.s32.totalorder %s179, %s181
      %p185 = scmp.eq.s32.totalorder %s56, 0
      %p186 = por %p184, %p185
      %p187 = scmp.ne.s32.totalorder %s179, %s181
      %p188 = scmp.eq.s32.totalorder %s61, 1
      %p189 = por %p187, %p188
      %p190 = scmp.ne.s32.totalorder %s181, %s182
      %p191 = scmp.eq.s32.totalorder %s61, 0
      %p192 = por %p190, %p191
      %p193 = scmp.ne.s32.totalorder %s181, %s182
      %p194 = scmp.eq.s32.totalorder %s62, 1
      %p195 = por %p193, %p194
      %p197 = scmp.ne.s32.totalorder %s182, %s196
      %p198 = scmp.eq.s32.totalorder %s62, 0
      %p199 = por %p197, %p198
      %s201 = sadd.s32 %s200, 1
      %p204 = scmp.eq.s32.totalorder %s56, 1
      %p205 = scmp.ne.s32.totalorder %s200, %s202
      %p206 = scmp.eq.s32.totalorder %s56, 0
      %p207 = por %p205, %p206
      %p208 = scmp.ne.s32.totalorder %s200, %s202
      %p209 = scmp.eq.s32.totalorder %s61, 1
      %p210 = por %p208, %p209
      %p211 = scmp.ne.s32.totalorder %s202, %s203
      %p212 = scmp.eq.s32.totalorder %s61, 0
      %p213 = por %p211, %p212
      %p214 = scmp.ne.s32.totalorder %s202, %s203
      %p215 = scmp.eq.s32.totalorder %s62, 1
      %p216 = por %p214, %p215
      %p218 = scmp.ne.s32.totalorder %s203, %s217
      %p219 = scmp.eq.s32.totalorder %s62, 0
      %p220 = por %p218, %p219
      %s222 = sadd.s32 %s221, 1
      %p225 = scmp.eq.s32.totalorder %s56, 1
      %p226 = scmp.ne.s32.totalorder %s221, %s223
      %p227 = scmp.eq.s32.totalorder %s56, 0
      %p228 = por %p226, %p227
      %p229 = scmp.ne.s32.totalorder %s221, %s223
      %p230 = scmp.eq.s32.totalorder %s61, 1
      %p231 = por %p229, %p230
      %p232 = scmp.ne.s32.totalorder %s223, %s224
      %p233 = scmp.eq.s32.totalorder %s61, 0
      %p234 = por %p232, %p233
      %p235 = scmp.ne.s32.totalorder %s223, %s224
      %p236 = scmp.eq.s32.totalorder %s62, 1
      %p237 = por %p235, %p236
      %p239 = scmp.ne.s32.totalorder %s224, %s238
      %p240 = scmp.eq.s32.totalorder %s62, 0
      %p241 = por %p239, %p240
      %s243 = sadd.s32 %s242, 1
      %p246 = scmp.eq.s32.totalorder %s56, 1
      %p247 = scmp.ne.s32.totalorder %s242, %s244
      %p248 = scmp.eq.s32.totalorder %s56, 0
      %p249 = por %p247, %p248
      %p250 = scmp.ne.s32.totalorder %s242, %s244
      %p251 = scmp.eq.s32.totalorder %s61, 1
      %p252 = por %p250, %p251
      %p253 = scmp.ne.s32.totalorder %s244, %s245
      %p254 = scmp.eq.s32.totalorder %s61, 0
      %p255 = por %p253, %p254
      %p256 = scmp.ne.s32.totalorder %s244, %s245
      %p257 = scmp.eq.s32.totalorder %s62, 1
      %p258 = por %p256, %p257
      %p260 = scmp.ne.s32.totalorder %s245, %s259
      %p261 = scmp.eq.s32.totalorder %s62, 0
      %p262 = por %p260, %p261
      %s264 = sadd.s32 %s263, 1
      %p267 = scmp.eq.s32.totalorder %s56, 1
      %p268 = scmp.ne.s32.totalorder %s263, %s265
      %p269 = scmp.eq.s32.totalorder %s56, 0
      %p270 = por %p268, %p269
      %p271 = scmp.ne.s32.totalorder %s263, %s265
      %p272 = scmp.eq.s32.totalorder %s61, 1
      %p273 = por %p271, %p272
      %p274 = scmp.ne.s32.totalorder %s265, %s266
      %p275 = scmp.eq.s32.totalorder %s61, 0
      %p276 = por %p274, %p275
      %p277 = scmp.ne.s32.totalorder %s265, %s266
      %p278 = scmp.eq.s32.totalorder %s62, 1
      %p279 = por %p277, %p278
      %p281 = scmp.ne.s32.totalorder %s266, %s280
      %p282 = scmp.eq.s32.totalorder %s62, 0
      %p283 = por %p281, %p282
      %s285 = sadd.s32 %s284, 1
      %p288 = scmp.eq.s32.totalorder %s56, 1
      %p289 = scmp.ne.s32.totalorder %s284, %s286
      %p290 = scmp.eq.s32.totalorder %s56, 0
      %p291 = por %p289, %p290
      %p292 = scmp.ne.s32.totalorder %s284, %s286
      %p293 = scmp.eq.s32.totalorder %s61, 1
      %p294 = por %p292, %p293
      %p295 = scmp.ne.s32.totalorder %s286, %s287
      %p296 = scmp.eq.s32.totalorder %s61, 0
      %p297 = por %p295, %p296
      %p298 = scmp.ne.s32.totalorder %s286, %s287
      %p299 = scmp.eq.s32.totalorder %s62, 1
      %p300 = por %p298, %p299
      %p302 = scmp.ne.s32.totalorder %s287, %s301
      %p303 = scmp.eq.s32.totalorder %s62, 0
      %p304 = por %p302, %p303
      %s306 = sadd.s32 %s305, 1
      %p309 = scmp.eq.s32.totalorder %s56, 1
      %p310 = scmp.ne.s32.totalorder %s305, %s307
      %p311 = scmp.eq.s32.totalorder %s56, 0
      %p312 = por %p310, %p311
      %p313 = scmp.ne.s32.totalorder %s305, %s307
      %p314 = scmp.eq.s32.totalorder %s61, 1
      %p315 = por %p313, %p314
      %p316 = scmp.ne.s32.totalorder %s307, %s308
      %p317 = scmp.eq.s32.totalorder %s61, 0
      %p318 = por %p316, %p317
      %p319 = scmp.ne.s32.totalorder %s307, %s308
      %p320 = scmp.eq.s32.totalorder %s62, 1
      %p321 = por %p319, %p320
      %p323 = scmp.ne.s32.totalorder %s308, %s322
      %p324 = scmp.eq.s32.totalorder %s62, 0
      %p325 = por %p323, %p324
      %s327 = sadd.s32 %s326, 1
      %p330 = scmp.eq.s32.totalorder %s56, 1
      %p331 = scmp.ne.s32.totalorder %s326, %s328
      %p332 = scmp.eq.s32.totalorder %s56, 0
      %p333 = por %p331, %p332
      %p334 = scmp.ne.s32.totalorder %s326, %s328
      %p335 = scmp.eq.s32.totalorder %s61, 1
      %p336 = por %p334, %p335
      %p337 = scmp.ne.s32.totalorder %s328, %s329
      %p338 = scmp.eq.s32.totalorder %s61, 0
      %p339 = por %p337, %p338
      %p340 = scmp.ne.s32.totalorder %s328, %s329
      %p341 = scmp.eq.s32.totalorder %s62, 1
      %p342 = por %p340, %p341
      %p344 = scmp.ne.s32.totalorder %s329, %s343
      %p345 = scmp.eq.s32.totalorder %s62, 0
      %p346 = por %p344, %p345
      %s348 = sadd.s32 %s347, 1
      %p351 = scmp.eq.s32.totalorder %s56, 1
      %p352 = scmp.ne.s32.totalorder %s347, %s349
      %p353 = scmp.eq.s32.totalorder %s56, 0
      %p354 = por %p352, %p353
      %p355 = scmp.ne.s32.totalorder %s347, %s349
      %p356 = scmp.eq.s32.totalorder %s61, 1
      %p357 = por %p355, %p356
      %p358 = scmp.ne.s32.totalorder %s349, %s350
      %p359 = scmp.eq.s32.totalorder %s61, 0
      %p360 = por %p358, %p359
      %p361 = scmp.ne.s32.totalorder %s349, %s350
      %p362 = scmp.eq.s32.totalorder %s62, 1
      %p363 = por %p361, %p362
      %p365 = scmp.ne.s32.totalorder %s350, %s364
      %p366 = scmp.eq.s32.totalorder %s62, 0
      %p367 = por %p365, %p366
      %s369 = sadd.s32 %s368, 1
      %p372 = scmp.eq.s32.totalorder %s56, 1
      %p373 = scmp.ne.s32.totalorder %s368, %s370
      %p374 = scmp.eq.s32.totalorder %s56, 0
      %p375 = por %p373, %p374
      %p376 = scmp.ne.s32.totalorder %s368, %s370
      %p377 = scmp.eq.s32.totalorder %s61, 1
      %p378 = por %p376, %p377
      %p379 = scmp.ne.s32.totalorder %s370, %s371
      %p380 = scmp.eq.s32.totalorder %s61, 0
      %p381 = por %p379, %p380
      %p382 = scmp.ne.s32.totalorder %s370, %s371
      %p383 = scmp.eq.s32.totalorder %s62, 1
      %p384 = por %p382, %p383
      %p386 = scmp.ne.s32.totalorder %s371, %s385
      %p387 = scmp.eq.s32.totalorder %s62, 0
      %p388 = por %p386, %p387
      %s390 = sadd.s32 %s389, 1
      %p393 = scmp.eq.s32.totalorder %s56, 1
      %p394 = scmp.ne.s32.totalorder %s389, %s391
      %p395 = scmp.eq.s32.totalorder %s56, 0
      %p396 = por %p394, %p395
      %p397 = scmp.ne.s32.totalorder %s389, %s391
      %p398 = scmp.eq.s32.totalorder %s61, 1
      %p399 = por %p397, %p398
      %p400 = scmp.ne.s32.totalorder %s391, %s392
      %p401 = scmp.eq.s32.totalorder %s61, 0
      %p402 = por %p400, %p401
      %p403 = scmp.ne.s32.totalorder %s391, %s392
      %p404 = scmp.eq.s32.totalorder %s62, 1
      %p405 = por %p403, %p404
      %p407 = scmp.ne.s32.totalorder %s392, %s406
      %p408 = scmp.eq.s32.totalorder %s62, 0
      %p409 = por %p407, %p408
      %s411 = sadd.s32 %s410, 1
      %p414 = scmp.eq.s32.totalorder %s56, 1
      %p415 = scmp.ne.s32.totalorder %s410, %s412
      %p416 = scmp.eq.s32.totalorder %s56, 0
      %p417 = por %p415, %p416
      %p418 = scmp.ne.s32.totalorder %s410, %s412
      %p419 = scmp.eq.s32.totalorder %s61, 1
      %p420 = por %p418, %p419
      %p421 = scmp.ne.s32.totalorder %s412, %s413
      %p422 = scmp.eq.s32.totalorder %s61, 0
      %p423 = por %p421, %p422
      %p424 = scmp.ne.s32.totalorder %s412, %s413
      %p425 = scmp.eq.s32.totalorder %s62, 1
      %p426 = por %p424, %p425
      %p428 = scmp.ne.s32.totalorder %s413, %s427
      %p429 = scmp.eq.s32.totalorder %s62, 0
      %p430 = por %p428, %p429
      %s432 = sadd.s32 %s431, 1
      %p435 = scmp.eq.s32.totalorder %s56, 1
      %p436 = scmp.ne.s32.totalorder %s431, %s433
      %p437 = scmp.eq.s32.totalorder %s56, 0
      %p438 = por %p436, %p437
      %p439 = scmp.ne.s32.totalorder %s431, %s433
      %p440 = scmp.eq.s32.totalorder %s61, 1
      %p441 = por %p439, %p440
      %p442 = scmp.ne.s32.totalorder %s433, %s434
      %p443 = scmp.eq.s32.totalorder %s61, 0
      %p444 = por %p442, %p443
      %p445 = scmp.ne.s32.totalorder %s433, %s434
      %p446 = scmp.eq.s32.totalorder %s62, 1
      %p447 = por %p445, %p446
      %p449 = scmp.ne.s32.totalorder %s434, %s448
      %p450 = scmp.eq.s32.totalorder %s62, 0
      %p451 = por %p449, %p450
      %s453 = sadd.s32 %s452, 1
      %p456 = scmp.eq.s32.totalorder %s56, 1
      %p457 = scmp.ne.s32.totalorder %s452, %s454
      %p458 = scmp.eq.s32.totalorder %s56, 0
      %p459 = por %p457, %p458
      %p460 = scmp.ne.s32.totalorder %s452, %s454
      %p461 = scmp.eq.s32.totalorder %s61, 1
      %p462 = por %p460, %p461
      %p463 = scmp.ne.s32.totalorder %s454, %s455
      %p464 = scmp.eq.s32.totalorder %s61, 0
      %p465 = por %p463, %p464
      %p466 = scmp.ne.s32.totalorder %s454, %s455
      %p467 = scmp.eq.s32.totalorder %s62, 1
      %p468 = por %p466, %p467
      %p470 = scmp.ne.s32.totalorder %s455, %s469
      %p471 = scmp.eq.s32.totalorder %s62, 0
      %p472 = por %p470, %p471
      %s474 = sadd.s32 %s473, 1
      %p477 = scmp.eq.s32.totalorder %s56, 1
      %p478 = scmp.ne.s32.totalorder %s473, %s475
      %p479 = scmp.eq.s32.totalorder %s56, 0
      %p480 = por %p478, %p479
      %p481 = scmp.ne.s32.totalorder %s473, %s475
      %p482 = scmp.eq.s32.totalorder %s61, 1
      %p483 = por %p481, %p482
      %p484 = scmp.ne.s32.totalorder %s475, %s476
      %p485 = scmp.eq.s32.totalorder %s61, 0
      %p486 = por %p484, %p485
      %p487 = scmp.ne.s32.totalorder %s475, %s476
      %p488 = scmp.eq.s32.totalorder %s62, 1
      %p489 = por %p487, %p488
      %p491 = scmp.ne.s32.totalorder %s476, %s490
      %p492 = scmp.eq.s32.totalorder %s62, 0
      %p493 = por %p491, %p492
      %s495 = sadd.s32 %s494, 1
      %p498 = scmp.eq.s32.totalorder %s56, 1
      %p499 = scmp.ne.s32.totalorder %s494, %s496
      %p500 = scmp.eq.s32.totalorder %s56, 0
      %p501 = por %p499, %p500
      %p502 = scmp.ne.s32.totalorder %s494, %s496
      %p503 = scmp.eq.s32.totalorder %s61, 1
      %p504 = por %p502, %p503
      %p505 = scmp.ne.s32.totalorder %s496, %s497
      %p506 = scmp.eq.s32.totalorder %s61, 0
      %p507 = por %p505, %p506
      %p508 = scmp.ne.s32.totalorder %s496, %s497
      %p509 = scmp.eq.s32.totalorder %s62, 1
      %p510 = por %p508, %p509
      %p512 = scmp.ne.s32.totalorder %s497, %s511
      %p513 = scmp.eq.s32.totalorder %s62, 0
      %p514 = por %p512, %p513
      %s516 = sadd.s32 %s515, 1
      %p519 = scmp.eq.s32.totalorder %s56, 1
      %p520 = scmp.ne.s32.totalorder %s515, %s517
      %p521 = scmp.eq.s32.totalorder %s56, 0
      %p522 = por %p520, %p521
      %p523 = scmp.ne.s32.totalorder %s515, %s517
      %p524 = scmp.eq.s32.totalorder %s61, 1
      %p525 = por %p523, %p524
      %p526 = scmp.ne.s32.totalorder %s517, %s518
      %p527 = scmp.eq.s32.totalorder %s61, 0
      %p528 = por %p526, %p527
      %p529 = scmp.ne.s32.totalorder %s517, %s518
      %p530 = scmp.eq.s32.totalorder %s62, 1
      %p531 = por %p529, %p530
      %p533 = scmp.ne.s32.totalorder %s518, %s532
      %p534 = scmp.eq.s32.totalorder %s62, 0
      %p535 = por %p533, %p534
      %s537 = sadd.s32 %s536, 1
      %p540 = scmp.eq.s32.totalorder %s56, 1
      %p541 = scmp.ne.s32.totalorder %s536, %s538
      %p542 = scmp.eq.s32.totalorder %s56, 0
      %p543 = por %p541, %p542
      %p544 = scmp.ne.s32.totalorder %s536, %s538
      %p545 = scmp.eq.s32.totalorder %s61, 1
      %p546 = por %p544, %p545
      %p547 = scmp.ne.s32.totalorder %s538, %s539
      %p548 = scmp.eq.s32.totalorder %s61, 0
      %p549 = por %p547, %p548
      %p550 = scmp.ne.s32.totalorder %s538, %s539
      %p551 = scmp.eq.s32.totalorder %s62, 1
      %p552 = por %p550, %p551
      %p554 = scmp.ne.s32.totalorder %s539, %s553
      %p555 = scmp.eq.s32.totalorder %s62, 0
      %p556 = por %p554, %p555
      %s558 = sadd.s32 %s557, 1
      %p561 = scmp.eq.s32.totalorder %s56, 1
      %p562 = scmp.ne.s32.totalorder %s557, %s559
      %p563 = scmp.eq.s32.totalorder %s56, 0
      %p564 = por %p562, %p563
      %p565 = scmp.ne.s32.totalorder %s557, %s559
      %p566 = scmp.eq.s32.totalorder %s61, 1
      %p567 = por %p565, %p566
      %p568 = scmp.ne.s32.totalorder %s559, %s560
      %p569 = scmp.eq.s32.totalorder %s61, 0
      %p570 = por %p568, %p569
      %p571 = scmp.ne.s32.totalorder %s559, %s560
      %p572 = scmp.eq.s32.totalorder %s62, 1
      %p573 = por %p571, %p572
      %p575 = scmp.ne.s32.totalorder %s560, %s574
      %p576 = scmp.eq.s32.totalorder %s62, 0
      %p577 = por %p575, %p576
      %s579 = sadd.s32 %s578, 1
      %p582 = scmp.eq.s32.totalorder %s56, 1
      %p583 = scmp.ne.s32.totalorder %s578, %s580
      %p584 = scmp.eq.s32.totalorder %s56, 0
      %p585 = por %p583, %p584
      %p586 = scmp.ne.s32.totalorder %s578, %s580
      %p587 = scmp.eq.s32.totalorder %s61, 1
      %p588 = por %p586, %p587
      %p589 = scmp.ne.s32.totalorder %s580, %s581
      %p590 = scmp.eq.s32.totalorder %s61, 0
      %p591 = por %p589, %p590
      %p592 = scmp.ne.s32.totalorder %s580, %s581
      %p593 = scmp.eq.s32.totalorder %s62, 1
      %p594 = por %p592, %p593
      %p596 = scmp.ne.s32.totalorder %s581, %s595
      %p597 = scmp.eq.s32.totalorder %s62, 0
      %p598 = por %p596, %p597
      %s600 = sadd.s32 %s599, 1
      %p603 = scmp.eq.s32.totalorder %s56, 1
      %p604 = scmp.ne.s32.totalorder %s599, %s601
      %p605 = scmp.eq.s32.totalorder %s56, 0
      %p606 = por %p604, %p605
      %p607 = scmp.ne.s32.totalorder %s599, %s601
      %p608 = scmp.eq.s32.totalorder %s61, 1
      %p609 = por %p607, %p608
      %p610 = scmp.ne.s32.totalorder %s601, %s602
      %p611 = scmp.eq.s32.totalorder %s61, 0
      %p612 = por %p610, %p611
      %p613 = scmp.ne.s32.totalorder %s601, %s602
      %p614 = scmp.eq.s32.totalorder %s62, 1
      %p615 = por %p613, %p614
      %p617 = scmp.ne.s32.totalorder %s602, %s616
      %p618 = scmp.eq.s32.totalorder %s62, 0
      %p619 = por %p617, %p618
      %s620 = ssub.s32 %s56, %s63
      %p621 = scmp.eq.s32.totalorder %s620, 0
      %s623 = sadd.s32 %s622, 1
      %s624 = scalar_select %p621, %s622, %s623
      %p627 = pneg %p621
      %p628 = scmp.eq.s32.totalorder %s56, 1
      %p629 = por %p627, %p628
      %p630 = scmp.ne.s32.totalorder %s622, %s625
      %p631 = scmp.eq.s32.totalorder %s56, 0
      %p632 = por %p630, %p631
      %p633 = scmp.ne.s32.totalorder %s622, %s625
      %p634 = scmp.eq.s32.totalorder %s61, 1
      %p635 = por %p633, %p634
      %p636 = scmp.ne.s32.totalorder %s625, %s626
      %p637 = scmp.eq.s32.totalorder %s61, 0
      %p638 = por %p636, %p637
      %p639 = scmp.ne.s32.totalorder %s625, %s626
      %p640 = scmp.eq.s32.totalorder %s62, 1
      %p641 = por %p639, %p640
      %p643 = scmp.ne.s32.totalorder %s626, %s642
      %p644 = scmp.eq.s32.totalorder %s62, 0
      %p645 = por %p643, %p644
      %p646 = scmp.le.s32.totalorder 1, %s56
      %p647 = scmp.lt.s32.totalorder %s56, 3
      %p648 = pnand %p646, %p647
      %p649 = pneg %p648
      // Predicated region
      $region9: #{tpu_custom_call.1} parent=5 // pred_check
        _
      $region10: #{tpu_custom_call.1} parent=5 // pred_check_branch
        %651 = sbr.rel (%p648) target = $region12
      $region11: #{tpu_custom_call.1} parent=5 // pred_region
        %s652 = ssub.s32 %s56, 1
        // Predicated region
        $region13: #{tpu_custom_call.1} parent=11 // pred_check
          %p653 = pneg %p129
        $region14: #{tpu_custom_call.1} parent=11 // pred_check_branch
          %655 = sbr.rel (%p653) target = $region16
        $region15: #{tpu_custom_call.1} parent=11 // pred_region
          %s657 = ssub.s32 16, 16
          %658 = vsyncadd [#allocation8], %s657
          %s660 = sshll.u32 [#allocation9], 4
          %s661 = int_to_ptr.vmem [resolvable:$true] %s660
          %663 = dma.hbm_to_vmem [thread:$0]  %s2, 16, %s661, [#allocation8]
        $region16: #{tpu_custom_call.1} parent=11 // pred_fallthru
          _
        // Predicated region
        $region17: #{tpu_custom_call.1} parent=11 // pred_check
          %p664 = pneg %p150
        $region18: #{tpu_custom_call.1} parent=11 // pred_check_branch
          %666 = sbr.rel (%p664) target = $region20
        $region19: #{tpu_custom_call.1} parent=11 // pred_region
          %s668 = ssub.s32 16, 16
          %669 = vsyncadd [#allocation11], %s668
          %s671 = sshll.u32 [#allocation10], 4
          %s672 = int_to_ptr.vmem [resolvable:$true] %s671
          %674 = dma.hbm_to_vmem [thread:$0]  %s3, 16, %s672, [#allocation11]
        $region20: #{tpu_custom_call.1} parent=11 // pred_fallthru
          _
        // Predicated region
        $region21: #{tpu_custom_call.1} parent=11 // pred_check
          %p675 = pneg %p171
        $region22: #{tpu_custom_call.1} parent=11 // pred_check_branch
          %677 = sbr.rel (%p675) target = $region24
        $region23: #{tpu_custom_call.1} parent=11 // pred_region
          %s679 = ssub.s32 16, 16
          %680 = vsyncadd [#allocation11], %s679
          %s682 = sshll.u32 [#allocation12], 4
          %s683 = int_to_ptr.vmem [resolvable:$true] %s682
          %685 = dma.hbm_to_vmem [thread:$0]  %s4, 16, %s683, [#allocation11]
        $region24: #{tpu_custom_call.1} parent=11 // pred_fallthru
          _
        // Predicated region
        $region25: #{tpu_custom_call.1} parent=11 // pred_check
          %p686 = pneg %p192
        $region26: #{tpu_custom_call.1} parent=11 // pred_check_branch
          %688 = sbr.rel (%p686) target = $region28
        $region27: #{tpu_custom_call.1} parent=11 // pred_region
          %s690 = ssub.s32 16, 16
          %691 = vsyncadd [#allocation14], %s690
          %s693 = sshll.u32 [#allocation13], 4
          %s694 = int_to_ptr.vmem [resolvable:$true] %s693
          %696 = dma.hbm_to_vmem [thread:$0]  %s5, 16, %s694, [#allocation14]
        $region28: #{tpu_custom_call.1} parent=11 // pred_fallthru
          _
        // Predicated region
        $region29: #{tpu_custom_call.1} parent=11 // pred_check
          %p697 = pneg %p213
        $region30: #{tpu_custom_call.1} parent=11 // pred_check_branch
          %699 = sbr.rel (%p697) target = $region32
        $region31: #{tpu_custom_call.1} parent=11 // pred_region
          %s701 = ssub.s32 16, 16
          %702 = vsyncadd [#allocation14], %s701
          %s704 = sshll.u32 [#allocation15], 4
          %s705 = int_to_ptr.vmem [resolvable:$true] %s704
          %707 = dma.hbm_to_vmem [thread:$0]  %s6, 16, %s705, [#allocation14]
        $region32: #{tpu_custom_call.1} parent=11 // pred_fallthru
          _
        // Predicated region
        $region33: #{tpu_custom_call.1} parent=11 // pred_check
          %p708 = pneg %p234
        $region34: #{tpu_custom_call.1} parent=11 // pred_check_branch
          %710 = sbr.rel (%p708) target = $region36
        $region35: #{tpu_custom_call.1} parent=11 // pred_region
          %s712 = ssub.s32 16, 16
          %713 = vsyncadd [#allocation17], %s712
          %s715 = sshll.u32 [#allocation16], 4
          %s716 = int_to_ptr.vmem [resolvable:$true] %s715
          %718 = dma.hbm_to_vmem [thread:$0]  %s7, 16, %s716, [#allocation17]
        $region36: #{tpu_custom_call.1} parent=11 // pred_fallthru
          _
        // Predicated region
        $region37: #{tpu_custom_call.1} parent=11 // pred_check
          %p719 = pneg %p255
        $region38: #{tpu_custom_call.1} parent=11 // pred_check_branch
          %721 = sbr.rel (%p719) target = $region40
        $region39: #{tpu_custom_call.1} parent=11 // pred_region
          %s723 = ssub.s32 4096, 4096
          %724 = vsyncadd [#allocation17], %s723
          %s725 = sshll.u32 [#allocation18], 4
          %s726 = int_to_ptr.vmem [resolvable:$true] %s725
          %731 = dma.hbm_to_vmem [thread:$0]  %s8, 4096, %s726, [#allocation17], 64, 64, 4
        $region40: #{tpu_custom_call.1} parent=11 // pred_fallthru
          _
        // Predicated region
        $region41: #{tpu_custom_call.1} parent=11 // pred_check
          %p732 = pneg %p276
        $region42: #{tpu_custom_call.1} parent=11 // pred_check_branch
          %734 = sbr.rel (%p732) target = $region44
        $region43: #{tpu_custom_call.1} parent=11 // pred_region
          %s736 = ssub.s32 4096, 4096
          %737 = vsyncadd [#allocation20], %s736
          %s738 = sshll.u32 [#allocation19], 4
          %s739 = int_to_ptr.vmem [resolvable:$true] %s738
          %744 = dma.hbm_to_vmem [thread:$0]  %s9, 4096, %s739, [#allocation20], 64, 64, 4
        $region44: #{tpu_custom_call.1} parent=11 // pred_fallthru
          _
        // Predicated region
        $region45: #{tpu_custom_call.1} parent=11 // pred_check
          %p745 = pneg %p297
        $region46: #{tpu_custom_call.1} parent=11 // pred_check_branch
          %747 = sbr.rel (%p745) target = $region48
        $region47: #{tpu_custom_call.1} parent=11 // pred_region
          %s749 = ssub.s32 4096, 4096
          %750 = vsyncadd [#allocation20], %s749
          %s751 = sshll.u32 [#allocation21], 4
          %s752 = int_to_ptr.vmem [resolvable:$true] %s751
          %757 = dma.hbm_to_vmem [thread:$0]  %s10, 4096, %s752, [#allocation20], 64, 64, 4
        $region48: #{tpu_custom_call.1} parent=11 // pred_fallthru
          _
        // Predicated region
        $region49: #{tpu_custom_call.1} parent=11 // pred_check
          %p758 = pneg %p318
        $region50: #{tpu_custom_call.1} parent=11 // pred_check_branch
          %760 = sbr.rel (%p758) target = $region52
        $region51: #{tpu_custom_call.1} parent=11 // pred_region
          %s762 = ssub.s32 1024, 1024
          %763 = vsyncadd [#allocation23], %s762
          %s764 = sshll.u32 [#allocation22], 4
          %s765 = int_to_ptr.vmem [resolvable:$true] %s764
          %770 = dma.hbm_to_vmem [thread:$0]  %s11, 1024, %s765, [#allocation23], 64, 64, 4
        $region52: #{tpu_custom_call.1} parent=11 // pred_fallthru
          _
        // Predicated region
        $region53: #{tpu_custom_call.1} parent=11 // pred_check
          %p771 = pneg %p339
        $region54: #{tpu_custom_call.1} parent=11 // pred_check_branch
          %773 = sbr.rel (%p771) target = $region56
        $region55: #{tpu_custom_call.1} parent=11 // pred_region
          %s775 = ssub.s32 1024, 1024
          %776 = vsyncadd [#allocation23], %s775
          %s777 = sshll.u32 [#allocation24], 4
          %s778 = int_to_ptr.vmem [resolvable:$true] %s777
          %783 = dma.hbm_to_vmem [thread:$0]  %s12, 1024, %s778, [#allocation23], 64, 64, 4
        $region56: #{tpu_custom_call.1} parent=11 // pred_fallthru
          _
        // Predicated region
        $region57: #{tpu_custom_call.1} parent=11 // pred_check
          %p784 = pneg %p360
        $region58: #{tpu_custom_call.1} parent=11 // pred_check_branch
          %786 = sbr.rel (%p784) target = $region60
        $region59: #{tpu_custom_call.1} parent=11 // pred_region
          %s788 = ssub.s32 16, 16
          %789 = vsyncadd [#allocation26], %s788
          %s791 = sshll.u32 [#allocation25], 4
          %s792 = int_to_ptr.vmem [resolvable:$true] %s791
          %794 = dma.hbm_to_vmem [thread:$0]  %s13, 16, %s792, [#allocation26]
        $region60: #{tpu_custom_call.1} parent=11 // pred_fallthru
          _
        // Predicated region
        $region61: #{tpu_custom_call.1} parent=11 // pred_check
          %p795 = pneg %p381
        $region62: #{tpu_custom_call.1} parent=11 // pred_check_branch
          %797 = sbr.rel (%p795) target = $region64
        $region63: #{tpu_custom_call.1} parent=11 // pred_region
          %s799 = ssub.s32 16, 16
          %800 = vsyncadd [#allocation26], %s799
          %s802 = sshll.u32 [#allocation27], 4
          %s803 = int_to_ptr.vmem [resolvable:$true] %s802
          %805 = dma.hbm_to_vmem [thread:$0]  %s14, 16, %s803, [#allocation26]
        $region64: #{tpu_custom_call.1} parent=11 // pred_fallthru
          _
        // Predicated region
        $region65: #{tpu_custom_call.1} parent=11 // pred_check
          %p806 = pneg %p402
        $region66: #{tpu_custom_call.1} parent=11 // pred_check_branch
          %808 = sbr.rel (%p806) target = $region68
        $region67: #{tpu_custom_call.1} parent=11 // pred_region
          %s810 = ssub.s32 1024, 1024
          %811 = vsyncadd [#allocation29], %s810
          %s812 = sshll.u32 [#allocation28], 4
          %s813 = int_to_ptr.vmem [resolvable:$true] %s812
          %818 = dma.hbm_to_vmem [thread:$0]  %s15, 1024, %s813, [#allocation29], 64, 64, 4
        $region68: #{tpu_custom_call.1} parent=11 // pred_fallthru
          _
        // Predicated region
        $region69: #{tpu_custom_call.1} parent=11 // pred_check
          %p819 = pneg %p423
        $region70: #{tpu_custom_call.1} parent=11 // pred_check_branch
          %821 = sbr.rel (%p819) target = $region72
        $region71: #{tpu_custom_call.1} parent=11 // pred_region
          %s823 = ssub.s32 16, 16
          %824 = vsyncadd [#allocation29], %s823
          %s826 = sshll.u32 [#allocation30], 4
          %s827 = int_to_ptr.vmem [resolvable:$true] %s826
          %829 = dma.hbm_to_vmem [thread:$0]  %s16, 16, %s827, [#allocation29]
        $region72: #{tpu_custom_call.1} parent=11 // pred_fallthru
          _
        // Predicated region
        $region73: #{tpu_custom_call.1} parent=11 // pred_check
          %p830 = pneg %p444
        $region74: #{tpu_custom_call.1} parent=11 // pred_check_branch
          %832 = sbr.rel (%p830) target = $region76
        $region75: #{tpu_custom_call.1} parent=11 // pred_region
          %s834 = ssub.s32 1024, 1024
          %835 = vsyncadd [#allocation32], %s834
          %s836 = sshll.u32 [#allocation31], 4
          %s837 = int_to_ptr.vmem [resolvable:$true] %s836
          %842 = dma.hbm_to_vmem [thread:$0]  %s17, 1024, %s837, [#allocation32], 64, 64, 4
        $region76: #{tpu_custom_call.1} parent=11 // pred_fallthru
          _
        // Predicated region
        $region77: #{tpu_custom_call.1} parent=11 // pred_check
          %p843 = pneg %p465
        $region78: #{tpu_custom_call.1} parent=11 // pred_check_branch
          %845 = sbr.rel (%p843) target = $region80
        $region79: #{tpu_custom_call.1} parent=11 // pred_region
          %s847 = ssub.s32 16, 16
          %848 = vsyncadd [#allocation32], %s847
          %s850 = sshll.u32 [#allocation33], 4
          %s851 = int_to_ptr.vmem [resolvable:$true] %s850
          %853 = dma.hbm_to_vmem [thread:$0]  %s18, 16, %s851, [#allocation32]
        $region80: #{tpu_custom_call.1} parent=11 // pred_fallthru
          _
        // Predicated region
        $region81: #{tpu_custom_call.1} parent=11 // pred_check
          %p854 = pneg %p486
        $region82: #{tpu_custom_call.1} parent=11 // pred_check_branch
          %856 = sbr.rel (%p854) target = $region84
        $region83: #{tpu_custom_call.1} parent=11 // pred_region
          _
        $region84: #{tpu_custom_call.1} parent=11 // pred_fallthru
          _
        // Predicated region
        $region85: #{tpu_custom_call.1} parent=11 // pred_check
          %p857 = pneg %p507
        $region86: #{tpu_custom_call.1} parent=11 // pred_check_branch
          %859 = sbr.rel (%p857) target = $region88
        $region87: #{tpu_custom_call.1} parent=11 // pred_region
          %s861 = ssub.s32 16, 16
          %862 = vsyncadd [#allocation35], %s861
          %s864 = sshll.u32 [#allocation34], 4
          %s865 = int_to_ptr.vmem [resolvable:$true] %s864
          %867 = dma.hbm_to_vmem [thread:$0]  %s20, 16, %s865, [#allocation35]
        $region88: #{tpu_custom_call.1} parent=11 // pred_fallthru
          _
        // Predicated region
        $region89: #{tpu_custom_call.1} parent=11 // pred_check
          %p868 = pneg %p528
        $region90: #{tpu_custom_call.1} parent=11 // pred_check_branch
          %870 = sbr.rel (%p868) target = $region92
        $region91: #{tpu_custom_call.1} parent=11 // pred_region
          %s872 = ssub.s32 16, 16
          %873 = vsyncadd [#allocation35], %s872
          %s875 = sshll.u32 [#allocation36], 4
          %s876 = int_to_ptr.vmem [resolvable:$true] %s875
          %878 = dma.hbm_to_vmem [thread:$0]  %s21, 16, %s876, [#allocation35]
        $region92: #{tpu_custom_call.1} parent=11 // pred_fallthru
          _
        // Predicated region
        $region93: #{tpu_custom_call.1} parent=11 // pred_check
          %p879 = pneg %p549
        $region94: #{tpu_custom_call.1} parent=11 // pred_check_branch
          %881 = sbr.rel (%p879) target = $region96
        $region95: #{tpu_custom_call.1} parent=11 // pred_region
          %s883 = ssub.s32 16, 16
          %884 = vsyncadd [#allocation38], %s883
          %s886 = sshll.u32 [#allocation37], 4
          %s887 = int_to_ptr.vmem [resolvable:$true] %s886
          %889 = dma.hbm_to_vmem [thread:$0]  %s22, 16, %s887, [#allocation38]
        $region96: #{tpu_custom_call.1} parent=11 // pred_fallthru
          _
        // Predicated region
        $region97: #{tpu_custom_call.1} parent=11 // pred_check
          %p890 = pneg %p570
        $region98: #{tpu_custom_call.1} parent=11 // pred_check_branch
          %892 = sbr.rel (%p890) target = $region100
        $region99: #{tpu_custom_call.1} parent=11 // pred_region
          %s894 = ssub.s32 16, 16
          %895 = vsyncadd [#allocation38], %s894
          %s897 = sshll.u32 [#allocation39], 4
          %s898 = int_to_ptr.vmem [resolvable:$true] %s897
          %900 = dma.hbm_to_vmem [thread:$0]  %s23, 16, %s898, [#allocation38]
        $region100: #{tpu_custom_call.1} parent=11 // pred_fallthru
          _
        // Predicated region
        $region101: #{tpu_custom_call.1} parent=11 // pred_check
          %p901 = pneg %p591
        $region102: #{tpu_custom_call.1} parent=11 // pred_check_branch
          %903 = sbr.rel (%p901) target = $region104
        $region103: #{tpu_custom_call.1} parent=11 // pred_region
          %s905 = ssub.s32 16, 16
          %906 = vsyncadd [#allocation41], %s905
          %s908 = sshll.u32 [#allocation40], 4
          %s909 = int_to_ptr.vmem [resolvable:$true] %s908
          %911 = dma.hbm_to_vmem [thread:$0]  %s24, 16, %s909, [#allocation41]
        $region104: #{tpu_custom_call.1} parent=11 // pred_fallthru
          _
        // Predicated region
        $region105: #{tpu_custom_call.1} parent=11 // pred_check
          %p912 = pneg %p612
        $region106: #{tpu_custom_call.1} parent=11 // pred_check_branch
          %914 = sbr.rel (%p912) target = $region108
        $region107: #{tpu_custom_call.1} parent=11 // pred_region
          _
        $region108: #{tpu_custom_call.1} parent=11 // pred_fallthru
          _
      $region12: #{tpu_custom_call.1} parent=5 // pred_fallthru
        _
      %p915 = scmp.lt.s32.totalorder %s56, 2
      // Predicated region
      $region109: #{tpu_custom_call.1} parent=5 // pred_check
        %p916 = pneg %p915
      $region110: #{tpu_custom_call.1} parent=5 // pred_check_branch
        %918 = sbr.rel (%p916) target = $region112
      $region111: #{tpu_custom_call.1} parent=5 // pred_region
        // Predicated region
        $region113: #{tpu_custom_call.1} parent=111 // pred_check
          %p919 = pneg %p76
        $region114: #{tpu_custom_call.1} parent=111 // pred_check_branch
          %921 = sbr.rel (%p919) target = $region116
        $region115: #{tpu_custom_call.1} parent=111 // pred_region
          %s922 = sand.u32 %s66, 1
          %s923 = scalar_lea.sflag [#allocation5], %s922
          %s924 = sand.u32 %s66, 1
          %s925 = smul.addr %s924, 64
          %s926 = scalar_lea.vmem [#allocation4], %s925
          %s927 = smul.u32 8, %s56
          %s929 = ssub.s32 1024, 1024
          %930 = vsyncadd %s923, %s929
          %s931 = smul.addr %s927, 128
          %s932 = scalar_lea.hbm %s0, %s931
          %s933 = sshll.u32 %s926, 4
          %s934 = int_to_ptr.vmem [resolvable:$true] %s933
          %939 = dma.hbm_to_vmem [thread:$0]  %s932, 1024, %s934, %s923, 128, 128, 8
        $region116: #{tpu_custom_call.1} parent=111 // pred_fallthru
          _
        // Predicated region
        $region117: #{tpu_custom_call.1} parent=111 // pred_check
          %p940 = pneg %p102
        $region118: #{tpu_custom_call.1} parent=111 // pred_check_branch
          %942 = sbr.rel (%p940) target = $region120
        $region119: #{tpu_custom_call.1} parent=111 // pred_region
          %s943 = sand.u32 %s56, 1
          %s944 = scalar_lea.sflag [#allocation8], %s943
          %s945 = sand.u32 %s92, 1
          %s946 = smul.addr %s945, 64
          %s947 = scalar_lea.vmem [#allocation7], %s946
          %s948 = smul.u32 8, %s56
          %s950 = ssub.s32 1024, 1024
          %951 = vsyncadd %s944, %s950
          %s952 = smul.addr %s948, 128
          %s953 = scalar_lea.hbm %s1, %s952
          %s954 = sshll.u32 %s947, 4
          %s955 = int_to_ptr.vmem [resolvable:$true] %s954
          %960 = dma.hbm_to_vmem [thread:$0]  %s953, 1024, %s955, %s944, 128, 128, 8
        $region120: #{tpu_custom_call.1} parent=111 // pred_fallthru
          _
      $region112: #{tpu_custom_call.1} parent=5 // pred_fallthru
        _
      %p961 = scmp.le.s32.totalorder 1, %s56
      %p962 = scmp.lt.s32.totalorder %s56, 3
      %p963 = pnand %p961, %p962
      %p964 = pneg %p963
      // Predicated region
      $region121: #{tpu_custom_call.1} parent=5 // pred_check
        _
      $region122: #{tpu_custom_call.1} parent=5 // pred_check_branch
        %966 = sbr.rel (%p963) target = $region124
      $region123: #{tpu_custom_call.1} parent=5 // pred_region
        %s967 = ssub.s32 %s56, 1
        %s968 = sand.u32 %s69, 1
        %s969 = scalar_lea.sflag [#allocation5], %s968
        %s970 = sand.u32 %s69, 1
        %s971 = smul.addr %s970, 64
        %s972 = scalar_lea.vmem [#allocation4], %s971
        // Predicated region
        $region125: #{tpu_custom_call.1} parent=123 // pred_check
          %p973 = pneg %p82
        $region126: #{tpu_custom_call.1} parent=123 // pred_check_branch
          %975 = sbr.rel (%p973) target = $region128
        $region127: #{tpu_custom_call.1} parent=123 // pred_region
          %976 = dma.done %s969, 1024
        $region128: #{tpu_custom_call.1} parent=123 // pred_fallthru
          _
        %s977 = sand.u32 %s61, 1
        %s978 = scalar_lea.sflag [#allocation8], %s977
        %s979 = sand.u32 %s95, 1
        %s980 = smul.addr %s979, 64
        %s981 = scalar_lea.vmem [#allocation7], %s980
        // Predicated region
        $region129: #{tpu_custom_call.1} parent=123 // pred_check
          %p982 = pneg %p108
        $region130: #{tpu_custom_call.1} parent=123 // pred_check_branch
          %984 = sbr.rel (%p982) target = $region132
        $region131: #{tpu_custom_call.1} parent=123 // pred_region
          %985 = dma.done %s978, 1024
        $region132: #{tpu_custom_call.1} parent=123 // pred_fallthru
          _
        // Predicated region
        $region133: #{tpu_custom_call.1} parent=123 // pred_check
          %p986 = pneg %p129
        $region134: #{tpu_custom_call.1} parent=123 // pred_check_branch
          %988 = sbr.rel (%p986) target = $region136
        $region135: #{tpu_custom_call.1} parent=123 // pred_region
          %989 = dma.done [#allocation8], 16
        $region136: #{tpu_custom_call.1} parent=123 // pred_fallthru
          _
        // Predicated region
        $region137: #{tpu_custom_call.1} parent=123 // pred_check
          %p990 = pneg %p150
        $region138: #{tpu_custom_call.1} parent=123 // pred_check_branch
          %992 = sbr.rel (%p990) target = $region140
        $region139: #{tpu_custom_call.1} parent=123 // pred_region
          %993 = dma.done [#allocation11], 16
        $region140: #{tpu_custom_call.1} parent=123 // pred_fallthru
          _
        // Predicated region
        $region141: #{tpu_custom_call.1} parent=123 // pred_check
          %p994 = pneg %p171
        $region142: #{tpu_custom_call.1} parent=123 // pred_check_branch
          %996 = sbr.rel (%p994) target = $region144
        $region143: #{tpu_custom_call.1} parent=123 // pred_region
          %997 = dma.done [#allocation11], 16
        $region144: #{tpu_custom_call.1} parent=123 // pred_fallthru
          _
        // Predicated region
        $region145: #{tpu_custom_call.1} parent=123 // pred_check
          %p998 = pneg %p192
        $region146: #{tpu_custom_call.1} parent=123 // pred_check_branch
          %1000 = sbr.rel (%p998) target = $region148
        $region147: #{tpu_custom_call.1} parent=123 // pred_region
          %1001 = dma.done [#allocation14], 16
        $region148: #{tpu_custom_call.1} parent=123 // pred_fallthru
          _
        // Predicated region
        $region149: #{tpu_custom_call.1} parent=123 // pred_check
          %p1002 = pneg %p213
        $region150: #{tpu_custom_call.1} parent=123 // pred_check_branch
          %1004 = sbr.rel (%p1002) target = $region152
        $region151: #{tpu_custom_call.1} parent=123 // pred_region
          %1005 = dma.done [#allocation14], 16
        $region152: #{tpu_custom_call.1} parent=123 // pred_fallthru
          _
        // Predicated region
        $region153: #{tpu_custom_call.1} parent=123 // pred_check
          %p1006 = pneg %p234
        $region154: #{tpu_custom_call.1} parent=123 // pred_check_branch
          %1008 = sbr.rel (%p1006) target = $region156
        $region155: #{tpu_custom_call.1} parent=123 // pred_region
          %1009 = dma.done [#allocation17], 16
        $region156: #{tpu_custom_call.1} parent=123 // pred_fallthru
          _
        // Predicated region
        $region157: #{tpu_custom_call.1} parent=123 // pred_check
          %p1010 = pneg %p255
        $region158: #{tpu_custom_call.1} parent=123 // pred_check_branch
          %1012 = sbr.rel (%p1010) target = $region160
        $region159: #{tpu_custom_call.1} parent=123 // pred_region
          %1013 = dma.done [#allocation17], 4096
        $region160: #{tpu_custom_call.1} parent=123 // pred_fallthru
          _
        // Predicated region
        $region161: #{tpu_custom_call.1} parent=123 // pred_check
          %p1014 = pneg %p276
        $region162: #{tpu_custom_call.1} parent=123 // pred_check_branch
          %1016 = sbr.rel (%p1014) target = $region164
        $region163: #{tpu_custom_call.1} parent=123 // pred_region
          %1017 = dma.done [#allocation20], 4096
        $region164: #{tpu_custom_call.1} parent=123 // pred_fallthru
          _
        // Predicated region
        $region165: #{tpu_custom_call.1} parent=123 // pred_check
          %p1018 = pneg %p297
        $region166: #{tpu_custom_call.1} parent=123 // pred_check_branch
          %1020 = sbr.rel (%p1018) target = $region168
        $region167: #{tpu_custom_call.1} parent=123 // pred_region
          %1021 = dma.done [#allocation20], 4096
        $region168: #{tpu_custom_call.1} parent=123 // pred_fallthru
          _
        // Predicated region
        $region169: #{tpu_custom_call.1} parent=123 // pred_check
          %p1022 = pneg %p318
        $region170: #{tpu_custom_call.1} parent=123 // pred_check_branch
          %1024 = sbr.rel (%p1022) target = $region172
        $region171: #{tpu_custom_call.1} parent=123 // pred_region
          %1025 = dma.done [#allocation23], 1024
        $region172: #{tpu_custom_call.1} parent=123 // pred_fallthru
          _
        // Predicated region
        $region173: #{tpu_custom_call.1} parent=123 // pred_check
          %p1026 = pneg %p339
        $region174: #{tpu_custom_call.1} parent=123 // pred_check_branch
          %1028 = sbr.rel (%p1026) target = $region176
        $region175: #{tpu_custom_call.1} parent=123 // pred_region
          %1029 = dma.done [#allocation23], 1024
        $region176: #{tpu_custom_call.1} parent=123 // pred_fallthru
          _
        // Predicated region
        $region177: #{tpu_custom_call.1} parent=123 // pred_check
          %p1030 = pneg %p360
        $region178: #{tpu_custom_call.1} parent=123 // pred_check_branch
          %1032 = sbr.rel (%p1030) target = $region180
        $region179: #{tpu_custom_call.1} parent=123 // pred_region
          %1033 = dma.done [#allocation26], 16
        $region180: #{tpu_custom_call.1} parent=123 // pred_fallthru
          _
        // Predicated region
        $region181: #{tpu_custom_call.1} parent=123 // pred_check
          %p1034 = pneg %p381
        $region182: #{tpu_custom_call.1} parent=123 // pred_check_branch
          %1036 = sbr.rel (%p1034) target = $region184
        $region183: #{tpu_custom_call.1} parent=123 // pred_region
          %1037 = dma.done [#allocation26], 16
        $region184: #{tpu_custom_call.1} parent=123 // pred_fallthru
          _
        // Predicated region
        $region185: #{tpu_custom_call.1} parent=123 // pred_check
          %p1038 = pneg %p402
        $region186: #{tpu_custom_call.1} parent=123 // pred_check_branch
          %1040 = sbr.rel (%p1038) target = $region188
        $region187: #{tpu_custom_call.1} parent=123 // pred_region
          %1041 = dma.done [#allocation29], 1024
        $region188: #{tpu_custom_call.1} parent=123 // pred_fallthru
          _
        // Predicated region
        $region189: #{tpu_custom_call.1} parent=123 // pred_check
          %p1042 = pneg %p423
        $region190: #{tpu_custom_call.1} parent=123 // pred_check_branch
          %1044 = sbr.rel (%p1042) target = $region192
        $region191: #{tpu_custom_call.1} parent=123 // pred_region
          %1045 = dma.done [#allocation29], 16
        $region192: #{tpu_custom_call.1} parent=123 // pred_fallthru
          _
        // Predicated region
        $region193: #{tpu_custom_call.1} parent=123 // pred_check
          %p1046 = pneg %p444
        $region194: #{tpu_custom_call.1} parent=123 // pred_check_branch
          %1048 = sbr.rel (%p1046) target = $region196
        $region195: #{tpu_custom_call.1} parent=123 // pred_region
          %1049 = dma.done [#allocation32], 1024
        $region196: #{tpu_custom_call.1} parent=123 // pred_fallthru
          _
        // Predicated region
        $region197: #{tpu_custom_call.1} parent=123 // pred_check
          %p1050 = pneg %p465
        $region198: #{tpu_custom_call.1} parent=123 // pred_check_branch
          %1052 = sbr.rel (%p1050) target = $region200
        $region199: #{tpu_custom_call.1} parent=123 // pred_region
          %1053 = dma.done [#allocation32], 16
        $region200: #{tpu_custom_call.1} parent=123 // pred_fallthru
          _
        // Predicated region
        $region201: #{tpu_custom_call.1} parent=123 // pred_check
          %p1054 = pneg %p507
        $region202: #{tpu_custom_call.1} parent=123 // pred_check_branch
          %1056 = sbr.rel (%p1054) target = $region204
        $region203: #{tpu_custom_call.1} parent=123 // pred_region
          %1057 = dma.done [#allocation35], 16
        $region204: #{tpu_custom_call.1} parent=123 // pred_fallthru
          _
        // Predicated region
        $region205: #{tpu_custom_call.1} parent=123 // pred_check
          %p1058 = pneg %p528
        $region206: #{tpu_custom_call.1} parent=123 // pred_check_branch
          %1060 = sbr.rel (%p1058) target = $region208
        $region207: #{tpu_custom_call.1} parent=123 // pred_region
          %1061 = dma.done [#allocation35], 16
        $region208: #{tpu_custom_call.1} parent=123 // pred_fallthru
          _
        // Predicated region
        $region209: #{tpu_custom_call.1} parent=123 // pred_check
          %p1062 = pneg %p549
        $region210: #{tpu_custom_call.1} parent=123 // pred_check_branch
          %1064 = sbr.rel (%p1062) target = $region212
        $region211: #{tpu_custom_call.1} parent=123 // pred_region
          %1065 = dma.done [#allocation38], 16
        $region212: #{tpu_custom_call.1} parent=123 // pred_fallthru
          _
        // Predicated region
        $region213: #{tpu_custom_call.1} parent=123 // pred_check
          %p1066 = pneg %p570
        $region214: #{tpu_custom_call.1} parent=123 // pred_check_branch
          %1068 = sbr.rel (%p1066) target = $region216
        $region215: #{tpu_custom_call.1} parent=123 // pred_region
          %1069 = dma.done [#allocation38], 16
        $region216: #{tpu_custom_call.1} parent=123 // pred_fallthru
          _
        // Predicated region
        $region217: #{tpu_custom_call.1} parent=123 // pred_check
          %p1070 = pneg %p591
        $region218: #{tpu_custom_call.1} parent=123 // pred_check_branch
          %1072 = sbr.rel (%p1070) target = $region220
        $region219: #{tpu_custom_call.1} parent=123 // pred_region
          %1073 = dma.done [#allocation41], 16
        $region220: #{tpu_custom_call.1} parent=123 // pred_fallthru
          _
        %s1074 = sand.u32 %s69, 1
        %s1075 = scalar_lea.sflag [#allocation5], %s1074
        %s1076 = sand.u32 %s69, 1
        %s1077 = smul.addr %s1076, 64
        %s1078 = scalar_lea.vmem [#allocation4], %s1077
        %p1079 = pneg %p82
        %p1080 = pneg %p79
        %s1081 = sand.u32 %s61, 1
        %s1082 = scalar_lea.sflag [#allocation8], %s1081
        %s1083 = sand.u32 %s95, 1
        %s1084 = smul.addr %s1083, 64
        %s1085 = scalar_lea.vmem [#allocation7], %s1084
        %p1086 = pneg %p108
        %p1087 = pneg %p105
        %p1088 = pneg %p129
        %p1089 = pneg %p126
        %p1090 = pneg %p150
        %p1091 = pneg %p147
        %p1092 = pneg %p171
        %p1093 = pneg %p168
        %p1094 = pneg %p192
        %p1095 = pneg %p189
        %p1096 = pneg %p213
        %p1097 = pneg %p210
        %p1098 = pneg %p234
        %p1099 = pneg %p231
        %p1100 = pneg %p255
        %p1101 = pneg %p252
        %p1102 = pneg %p276
        %p1103 = pneg %p273
        %p1104 = pneg %p297
        %p1105 = pneg %p294
        %p1106 = pneg %p318
        %p1107 = pneg %p315
        %p1108 = pneg %p339
        %p1109 = pneg %p336
        %p1110 = pneg %p360
        %p1111 = pneg %p357
        %p1112 = pneg %p381
        %p1113 = pneg %p378
        %p1114 = pneg %p402
        %p1115 = pneg %p399
        %p1116 = pneg %p423
        %p1117 = pneg %p420
        %p1118 = pneg %p444
        %p1119 = pneg %p441
        %p1120 = pneg %p465
        %p1121 = pneg %p462
        %p1122 = pneg %p486
        %p1123 = pneg %p483
        %p1124 = pneg %p507
        %p1125 = pneg %p504
        %p1126 = pneg %p528
        %p1127 = pneg %p525
        %p1128 = pneg %p549
        %p1129 = pneg %p546
        %p1130 = pneg %p570
        %p1131 = pneg %p567
        %p1132 = pneg %p591
        %p1133 = pneg %p588
        %p1134 = pneg %p612
        %p1135 = pneg %p609
        %p1136 = pneg %p638
        %p1137 = pneg %p635
        %s1138 = sand.u32 %s625, 1
        %s1139 = scalar_lea.sflag [#allocation6], %s1138
        %s1140 = sand.u32 %s625, 1
        %s1141 = smul.addr %s1140, 8
        %s1142 = scalar_lea.vmem [#allocation42], %s1141
        %s1143 = smul.u32 8, %s61
        %s1144 = smul.u32 8, %s61
        %v1146 = vld [vmem:[%s972] sm:$0xff]
        %v1147 = vld [vmem:[%s972 + $0x8] sm:$0xff]
        %v1148 = vld [vmem:[%s972 + $0x10] sm:$0xff]
        %v1149 = vld [vmem:[%s972 + $0x18] sm:$0xff]
        %v1150 = vld [vmem:[%s972 + $0x20] sm:$0xff]
        %v1151 = vld [vmem:[%s972 + $0x28] sm:$0xff]
        %v1152 = vld [vmem:[%s972 + $0x30] sm:$0xff]
        %v1153 = vld [vmem:[%s972 + $0x38] sm:$0xff]
        %v1154 = vld [vmem:[%s981] sm:$0xff]
        %v1155 = vld [vmem:[%s981 + $0x8] sm:$0xff]
        %v1156 = vld [vmem:[%s981 + $0x10] sm:$0xff]
        %v1157 = vld [vmem:[%s981 + $0x18] sm:$0xff]
        %v1158 = vld [vmem:[%s981 + $0x20] sm:$0xff]
        %v1159 = vld [vmem:[%s981 + $0x28] sm:$0xff]
        %v1160 = vld [vmem:[%s981 + $0x30] sm:$0xff]
        %v1161 = vld [vmem:[%s981 + $0x38] sm:$0xff]
        %v1162 = vld [vmem:[#allocation9] sm:$0x1]
        %v1163 = vld [vmem:[#allocation10] sm:$0x1]
        %1164 = vadd.xlane.f32.xlu0 %v1154
        %v1165 = vpop.xlane.xlu0 %1164
        %1166 = vadd.xlane.f32.xlu0 %v1155
        %v1167 = vpop.xlane.xlu0 %1166
        %1168 = vadd.xlane.f32.xlu0 %v1156
        %v1169 = vpop.xlane.xlu0 %1168
        %1170 = vadd.xlane.f32.xlu0 %v1157
        %v1171 = vpop.xlane.xlu0 %1170
        %1172 = vadd.xlane.f32.xlu0 %v1158
        %v1173 = vpop.xlane.xlu0 %1172
        %1174 = vadd.xlane.f32.xlu0 %v1159
        %v1175 = vpop.xlane.xlu0 %1174
        %1176 = vadd.xlane.f32.xlu0 %v1160
        %v1177 = vpop.xlane.xlu0 %1176
        %1178 = vadd.xlane.f32.xlu0 %v1161
        %v1179 = vpop.xlane.xlu0 %1178
        %v1180 = vrcp.pop 128.0
        %v1181 = vmul.f32 %v1165, %v1180
        %v1182 = vmul.f32 %v1167, %v1180
        %v1183 = vmul.f32 %v1169, %v1180
        %v1184 = vmul.f32 %v1171, %v1180
        %v1185 = vmul.f32 %v1173, %v1180
        %v1186 = vmul.f32 %v1175, %v1180
        %v1187 = vmul.f32 %v1177, %v1180
        %v1188 = vmul.f32 %v1179, %v1180
        %v1189 = vsub.f32 %v1154, %v1181
        %v1190 = vsub.f32 %v1155, %v1182
        %v1191 = vsub.f32 %v1156, %v1183
        %v1192 = vsub.f32 %v1157, %v1184
        %v1193 = vsub.f32 %v1158, %v1185
        %v1194 = vsub.f32 %v1159, %v1186
        %v1195 = vsub.f32 %v1160, %v1187
        %v1196 = vsub.f32 %v1161, %v1188
        %v1197 = vmul.f32 %v1189, %v1189
        %v1198 = vmul.f32 %v1190, %v1190
        %v1199 = vmul.f32 %v1191, %v1191
        %v1200 = vmul.f32 %v1192, %v1192
        %v1201 = vmul.f32 %v1193, %v1193
        %v1202 = vmul.f32 %v1194, %v1194
        %v1203 = vmul.f32 %v1195, %v1195
        %v1204 = vmul.f32 %v1196, %v1196
        %1205 = vadd.xlane.f32.xlu0 %v1197
        %v1206 = vpop.xlane.xlu0 %1205
        %1207 = vadd.xlane.f32.xlu0 %v1198
        %v1208 = vpop.xlane.xlu0 %1207
        %1209 = vadd.xlane.f32.xlu0 %v1199
        %v1210 = vpop.xlane.xlu0 %1209
        %1211 = vadd.xlane.f32.xlu0 %v1200
        %v1212 = vpop.xlane.xlu0 %1211
        %1213 = vadd.xlane.f32.xlu0 %v1201
        %v1214 = vpop.xlane.xlu0 %1213
        %1215 = vadd.xlane.f32.xlu0 %v1202
        %v1216 = vpop.xlane.xlu0 %1215
        %1217 = vadd.xlane.f32.xlu0 %v1203
        %v1218 = vpop.xlane.xlu0 %1217
        %1219 = vadd.xlane.f32.xlu0 %v1204
        %v1220 = vpop.xlane.xlu0 %1219
        %v1221 = vmul.f32 %v1206, %v1180
        %v1222 = vmul.f32 %v1208, %v1180
        %v1223 = vmul.f32 %v1210, %v1180
        %v1224 = vmul.f32 %v1212, %v1180
        %v1225 = vmul.f32 %v1214, %v1180
        %v1226 = vmul.f32 %v1216, %v1180
        %v1227 = vmul.f32 %v1218, %v1180
        %v1228 = vmul.f32 %v1220, %v1180
        %v1229 = vadd.f32 %v1221, 1e-05
        %v1230 = vadd.f32 %v1222, 1e-05
        %v1231 = vadd.f32 %v1223, 1e-05
        %v1232 = vadd.f32 %v1224, 1e-05
        %v1233 = vadd.f32 %v1225, 1e-05
        %v1234 = vadd.f32 %v1226, 1e-05
        %v1235 = vadd.f32 %v1227, 1e-05
        %v1236 = vadd.f32 %v1228, 1e-05
        %v1237 = vrsqrt.pop %v1229
        %v1238 = vrsqrt.pop %v1230
        %v1239 = vrsqrt.pop %v1231
        %v1240 = vrsqrt.pop %v1232
        %v1241 = vrsqrt.pop %v1233
        %v1242 = vrsqrt.pop %v1234
        %v1243 = vrsqrt.pop %v1235
        %v1244 = vrsqrt.pop %v1236
        %v1245 = vmul.f32 %v1189, %v1237
        %v1246 = vmul.f32 %v1190, %v1238
        %v1247 = vmul.f32 %v1191, %v1239
        %v1248 = vmul.f32 %v1192, %v1240
        %v1249 = vmul.f32 %v1193, %v1241
        %v1250 = vmul.f32 %v1194, %v1242
        %v1251 = vmul.f32 %v1195, %v1243
        %v1252 = vmul.f32 %v1196, %v1244
        %v1254 = vlaneseq
        %v1255 = vshrl.u32 %v1254, 7
        %v1256 = vsub.s32 0, %v1255
        %v1257 = vrot.slane %v1162, %v1256
        %v1259 = vmul.f32 %v1245, %v1257
        %v1260 = vmul.f32 %v1246, %v1257
        %v1261 = vmul.f32 %v1247, %v1257
        %v1262 = vmul.f32 %v1248, %v1257
        %v1263 = vmul.f32 %v1249, %v1257
        %v1264 = vmul.f32 %v1250, %v1257
        %v1265 = vmul.f32 %v1251, %v1257
        %v1266 = vmul.f32 %v1252, %v1257
        %v1268 = vlaneseq
        %v1269 = vshrl.u32 %v1268, 7
        %v1270 = vsub.s32 0, %v1269
        %v1271 = vrot.slane %v1163, %v1270
        %v1273 = vadd.f32 %v1259, %v1271
        %v1274 = vadd.f32 %v1260, %v1271
        %v1275 = vadd.f32 %v1261, %v1271
        %v1276 = vadd.f32 %v1262, %v1271
        %v1277 = vadd.f32 %v1263, %v1271
        %v1278 = vadd.f32 %v1264, %v1271
        %v1279 = vadd.f32 %v1265, %v1271
        %v1280 = vadd.f32 %v1266, %v1271
        %v1281 = vld [vmem:[#allocation12] sm:$0x1]
        %v1282 = vld [vmem:[#allocation13] sm:$0x1]
        %v1284 = vlaneseq
        %v1285 = vshrl.u32 %v1284, 7
        %v1286 = vsub.s32 0, %v1285
        %v1287 = vrot.slane %v1281, %v1286
        %v1289 = vmul.f32 %v1245, %v1287
        %v1290 = vmul.f32 %v1246, %v1287
        %v1291 = vmul.f32 %v1247, %v1287
        %v1292 = vmul.f32 %v1248, %v1287
        %v1293 = vmul.f32 %v1249, %v1287
        %v1294 = vmul.f32 %v1250, %v1287
        %v1295 = vmul.f32 %v1251, %v1287
        %v1296 = vmul.f32 %v1252, %v1287
        %v1298 = vlaneseq
        %v1299 = vshrl.u32 %v1298, 7
        %v1300 = vsub.s32 0, %v1299
        %v1301 = vrot.slane %v1282, %v1300
        %v1303 = vadd.f32 %v1289, %v1301
        %v1304 = vadd.f32 %v1290, %v1301
        %v1305 = vadd.f32 %v1291, %v1301
        %v1306 = vadd.f32 %v1292, %v1301
        %v1307 = vadd.f32 %v1293, %v1301
        %v1308 = vadd.f32 %v1294, %v1301
        %v1309 = vadd.f32 %v1295, %v1301
        %v1310 = vadd.f32 %v1296, %v1301
        %v1311 = vld [vmem:[#allocation15] sm:$0x1]
        %v1312 = vld [vmem:[#allocation16] sm:$0x1]
        %v1314 = vlaneseq
        %v1315 = vshrl.u32 %v1314, 7
        %v1316 = vsub.s32 0, %v1315
        %v1317 = vrot.slane %v1311, %v1316
        %v1319 = vmul.f32 %v1245, %v1317
        %v1320 = vmul.f32 %v1246, %v1317
        %v1321 = vmul.f32 %v1247, %v1317
        %v1322 = vmul.f32 %v1248, %v1317
        %v1323 = vmul.f32 %v1249, %v1317
        %v1324 = vmul.f32 %v1250, %v1317
        %v1325 = vmul.f32 %v1251, %v1317
        %v1326 = vmul.f32 %v1252, %v1317
        %v1328 = vlaneseq
        %v1329 = vshrl.u32 %v1328, 7
        %v1330 = vsub.s32 0, %v1329
        %v1331 = vrot.slane %v1312, %v1330
        %v1333 = vadd.f32 %v1319, %v1331
        %v1334 = vadd.f32 %v1320, %v1331
        %v1335 = vadd.f32 %v1321, %v1331
        %v1336 = vadd.f32 %v1322, %v1331
        %v1337 = vadd.f32 %v1323, %v1331
        %v1338 = vadd.f32 %v1324, %v1331
        %v1339 = vadd.f32 %v1325, %v1331
        %v1340 = vadd.f32 %v1326, %v1331
        %v1341 = vpack.c.bf16 %v1274, %v1273
        %v1342 = vpack.c.bf16 %v1276, %v1275
        %v1343 = vpack.c.bf16 %v1278, %v1277
        %v1344 = vpack.c.bf16 %v1280, %v1279
        %v1345 = vpack.c.bf16 %v1304, %v1303
        %v1346 = vpack.c.bf16 %v1306, %v1305
        %v1347 = vpack.c.bf16 %v1308, %v1307
        %v1348 = vpack.c.bf16 %v1310, %v1309
        %v1349 = vpack.c.bf16 %v1334, %v1333
        %v1350 = vpack.c.bf16 %v1336, %v1335
        %v1351 = vpack.c.bf16 %v1338, %v1337
        %v1352 = vpack.c.bf16 %v1340, %v1339
        %v1353 = vlaneseq
        %v1354 = vshrl.u32 %v1353, 7
        %v1355 = vlaneseq
        %v1356 = vand.u32 %v1355, 127
        %vm1357 = vcmp.eq.s32.totalorder %v1354, %v1356
        %v1358 = vld [vmem:[#allocation18] sm:$0xf]
        %v1359 = vld [vmem:[#allocation18 + $0x4] sm:$0xf]
        %v1360 = vld [vmem:[#allocation18 + $0x8] sm:$0xf]
        %v1361 = vld [vmem:[#allocation18 + $0xc] sm:$0xf]
        %v1362 = vld [vmem:[#allocation18 + $0x10] sm:$0xf]
        %v1363 = vld [vmem:[#allocation18 + $0x14] sm:$0xf]
        %v1364 = vld [vmem:[#allocation18 + $0x18] sm:$0xf]
        %v1365 = vld [vmem:[#allocation18 + $0x1c] sm:$0xf]
        %v1366 = vld [vmem:[#allocation18 + $0x20] sm:$0xf]
        %v1367 = vld [vmem:[#allocation18 + $0x24] sm:$0xf]
        %v1368 = vld [vmem:[#allocation18 + $0x28] sm:$0xf]
        %v1369 = vld [vmem:[#allocation18 + $0x2c] sm:$0xf]
        %v1370 = vld [vmem:[#allocation18 + $0x30] sm:$0xf]
        %v1371 = vld [vmem:[#allocation18 + $0x34] sm:$0xf]
        %v1372 = vld [vmem:[#allocation18 + $0x38] sm:$0xf]
        %v1373 = vld [vmem:[#allocation18 + $0x3c] sm:$0xf]
        %v1390 = vunpack.c.l.b16 %v1358
        %v1391 = vunpack.c.l.b16 %v1359
        %v1392 = vunpack.c.l.b16 %v1360
        %v1393 = vunpack.c.l.b16 %v1361
        %v1394 = vunpack.c.l.b16 %v1362
        %v1395 = vunpack.c.l.b16 %v1363
        %v1396 = vunpack.c.l.b16 %v1364
        %v1397 = vunpack.c.l.b16 %v1365
        %v1398 = vunpack.c.l.b16 %v1366
        %v1399 = vunpack.c.l.b16 %v1367
        %v1400 = vunpack.c.l.b16 %v1368
        %v1401 = vunpack.c.l.b16 %v1369
        %v1402 = vunpack.c.l.b16 %v1370
        %v1403 = vunpack.c.l.b16 %v1371
        %v1404 = vunpack.c.l.b16 %v1372
        %v1405 = vunpack.c.l.b16 %v1373
        %v1406 = vpack.c.b16 %v1391, %v1390
        %v1407 = vpack.c.b16 %v1393, %v1392
        %v1408 = vpack.c.b16 %v1395, %v1394
        %v1409 = vpack.c.b16 %v1397, %v1396
        %v1410 = vpack.c.b16 %v1399, %v1398
        %v1411 = vpack.c.b16 %v1401, %v1400
        %v1412 = vpack.c.b16 %v1403, %v1402
        %v1413 = vpack.c.b16 %v1405, %v1404
        %1422 = vmatprep.subr.bf16.mxu0 0
        %1423 = vmatpush1.bf16.msra.mxu0 %v1406
        %1424 = vmatprep.subr.bf16.mxu0 0
        %1425 = vmatpush1.bf16.msra.mxu0 %v1407
        %1426 = vmatprep.subr.bf16.mxu0 0
        %1427 = vmatpush1.bf16.msra.mxu0 %v1408
        %1428 = vmatprep.subr.bf16.mxu0 0
        %1429 = vmatpush1.bf16.msra.mxu0 %v1409
        %1430 = vmatprep.subr.bf16.mxu0 0
        %1431 = vmatpush1.bf16.msra.mxu0 %v1410
        %1432 = vmatprep.subr.bf16.mxu0 0
        %1433 = vmatpush1.bf16.msra.mxu0 %v1411
        %1434 = vmatprep.subr.bf16.mxu0 0
        %1435 = vmatpush1.bf16.msra.mxu0 %v1412
        %1436 = vmatprep.subr.bf16.mxu0 0
        %1437 = vmatpush1.bf16.msra.mxu0 %v1413
        %1438 = vmatprep.subr.bf16.mxu0 0
        %1439 = vmatpush1.bf16.msra.mxu0 0
        %1440 = vmatprep.subr.bf16.mxu0 0
        %1441 = vmatpush1.bf16.msra.mxu0 0
        %1442 = vmatprep.subr.bf16.mxu0 0
        %1443 = vmatpush1.bf16.msra.mxu0 0
        %1444 = vmatprep.subr.bf16.mxu0 0
        %1445 = vmatpush1.bf16.msra.mxu0 0
        %1446 = vmatprep.subr.bf16.mxu0 0
        %1447 = vmatpush1.bf16.msra.mxu0 0
        %1448 = vmatprep.subr.bf16.mxu0 0
        %1449 = vmatpush1.bf16.msra.mxu0 0
        %1450 = vmatprep.subr.bf16.mxu0 0
        %1451 = vmatpush1.bf16.msra.mxu0 0
        %1452 = vmatprep.subr.bf16.mxu0 0
        %1453 = vmatpush1.bf16.msra.mxu0 0
        %1454 = vmatprep.mubr.bf16.mxu0 0
        %1455 = vmatmul.mubr.bf16.gmra.mrb[0].mxu0 %v1341
        %v1456 = vpop.f32.mrb[0].mxu0
        %v1457 = vadd.f32 0.0, %v1456
        %v1458 = vpop.f32.mrb[0].mxu0
        %v1459 = vpop.f32.mrb[0].mxu0
        %v1460 = vadd.f32 0.0, %v1459
        %v1461 = vpop.f32.mrb[0].mxu0
        %1462 = vmatprep.mubr.bf16.mxu0 0
        %1463 = vmatmul.mubr.bf16.gmra.mrb[0].mxu0 %v1342
        %v1464 = vpop.f32.mrb[0].mxu0
        %v1465 = vadd.f32 0.0, %v1464
        %v1466 = vpop.f32.mrb[0].mxu0
        %v1467 = vpop.f32.mrb[0].mxu0
        %v1468 = vadd.f32 0.0, %v1467
        %v1469 = vpop.f32.mrb[0].mxu0
        %1470 = vmatprep.mubr.bf16.mxu0 0
        %1471 = vmatmul.mubr.bf16.gmra.mrb[0].mxu0 %v1343
        %v1472 = vpop.f32.mrb[0].mxu0
        %v1473 = vadd.f32 0.0, %v1472
        %v1474 = vpop.f32.mrb[0].mxu0
        %v1475 = vpop.f32.mrb[0].mxu0
        %v1476 = vadd.f32 0.0, %v1475
        %v1477 = vpop.f32.mrb[0].mxu0
        %1478 = vmatprep.mubr.bf16.mxu0 0
        %1479 = vmatmul.mubr.bf16.gmra.mrb[0].mxu0 %v1344
        %v1480 = vpop.f32.mrb[0].mxu0
        %v1481 = vadd.f32 0.0, %v1480
        %v1482 = vpop.f32.mrb[0].mxu0
        %v1483 = vpop.f32.mrb[0].mxu0
        %v1484 = vadd.f32 0.0, %v1483
        %v1485 = vpop.f32.mrb[0].mxu0
        %1486 = vdwg.mxu0
        %v1487 = vld [vmem:[#allocation19] sm:$0xf]
        %v1488 = vld [vmem:[#allocation19 + $0x4] sm:$0xf]
        %v1489 = vld [vmem:[#allocation19 + $0x8] sm:$0xf]
        %v1490 = vld [vmem:[#allocation19 + $0xc] sm:$0xf]
        %v1491 = vld [vmem:[#allocation19 + $0x10] sm:$0xf]
        %v1492 = vld [vmem:[#allocation19 + $0x14] sm:$0xf]
        %v1493 = vld [vmem:[#allocation19 + $0x18] sm:$0xf]
        %v1494 = vld [vmem:[#allocation19 + $0x1c] sm:$0xf]
        %v1495 = vld [vmem:[#allocation19 + $0x20] sm:$0xf]
        %v1496 = vld [vmem:[#allocation19 + $0x24] sm:$0xf]
        %v1497 = vld [vmem:[#allocation19 + $0x28] sm:$0xf]
        %v1498 = vld [vmem:[#allocation19 + $0x2c] sm:$0xf]
        %v1499 = vld [vmem:[#allocation19 + $0x30] sm:$0xf]
        %v1500 = vld [vmem:[#allocation19 + $0x34] sm:$0xf]
        %v1501 = vld [vmem:[#allocation19 + $0x38] sm:$0xf]
        %v1502 = vld [vmem:[#allocation19 + $0x3c] sm:$0xf]
        %v1519 = vunpack.c.l.b16 %v1487
        %v1520 = vunpack.c.l.b16 %v1488
        %v1521 = vunpack.c.l.b16 %v1489
        %v1522 = vunpack.c.l.b16 %v1490
        %v1523 = vunpack.c.l.b16 %v1491
        %v1524 = vunpack.c.l.b16 %v1492
        %v1525 = vunpack.c.l.b16 %v1493
        %v1526 = vunpack.c.l.b16 %v1494
        %v1527 = vunpack.c.l.b16 %v1495
        %v1528 = vunpack.c.l.b16 %v1496
        %v1529 = vunpack.c.l.b16 %v1497
        %v1530 = vunpack.c.l.b16 %v1498
        %v1531 = vunpack.c.l.b16 %v1499
        %v1532 = vunpack.c.l.b16 %v1500
        %v1533 = vunpack.c.l.b16 %v1501
        %v1534 = vunpack.c.l.b16 %v1502
        %v1535 = vpack.c.b16 %v1520, %v1519
        %v1536 = vpack.c.b16 %v1522, %v1521
        %v1537 = vpack.c.b16 %v1524, %v1523
        %v1538 = vpack.c.b16 %v1526, %v1525
        %v1539 = vpack.c.b16 %v1528, %v1527
        %v1540 = vpack.c.b16 %v1530, %v1529
        %v1541 = vpack.c.b16 %v1532, %v1531
        %v1542 = vpack.c.b16 %v1534, %v1533
        %1551 = vmatprep.subr.bf16.mxu0 0
        %1552 = vmatpush1.bf16.msra.mxu0 %v1535
        %1553 = vmatprep.subr.bf16.mxu0 0
        %1554 = vmatpush1.bf16.msra.mxu0 %v1536
        %1555 = vmatprep.subr.bf16.mxu0 0
        %1556 = vmatpush1.bf16.msra.mxu0 %v1537
        %1557 = vmatprep.subr.bf16.mxu0 0
        %1558 = vmatpush1.bf16.msra.mxu0 %v1538
        %1559 = vmatprep.subr.bf16.mxu0 0
        %1560 = vmatpush1.bf16.msra.mxu0 %v1539
        %1561 = vmatprep.subr.bf16.mxu0 0
        %1562 = vmatpush1.bf16.msra.mxu0 %v1540
        %1563 = vmatprep.subr.bf16.mxu0 0
        %1564 = vmatpush1.bf16.msra.mxu0 %v1541
        %1565 = vmatprep.subr.bf16.mxu0 0
        %1566 = vmatpush1.bf16.msra.mxu0 %v1542
        %1567 = vmatprep.subr.bf16.mxu0 0
        %1568 = vmatpush1.bf16.msra.mxu0 0
        %1569 = vmatprep.subr.bf16.mxu0 0
        %1570 = vmatpush1.bf16.msra.mxu0 0
        %1571 = vmatprep.subr.bf16.mxu0 0
        %1572 = vmatpush1.bf16.msra.mxu0 0
        %1573 = vmatprep.subr.bf16.mxu0 0
        %1574 = vmatpush1.bf16.msra.mxu0 0
        %1575 = vmatprep.subr.bf16.mxu0 0
        %1576 = vmatpush1.bf16.msra.mxu0 0
        %1577 = vmatprep.subr.bf16.mxu0 0
        %1578 = vmatpush1.bf16.msra.mxu0 0
        %1579 = vmatprep.subr.bf16.mxu0 0
        %1580 = vmatpush1.bf16.msra.mxu0 0
        %1581 = vmatprep.subr.bf16.mxu0 0
        %1582 = vmatpush1.bf16.msra.mxu0 0
        %1583 = vmatprep.mubr.bf16.mxu0 0
        %1584 = vmatmul.mubr.bf16.gmra.mrb[0].mxu0 %v1345
        %v1585 = vpop.f32.mrb[0].mxu0
        %v1586 = vadd.f32 0.0, %v1585
        %v1587 = vpop.f32.mrb[0].mxu0
        %v1588 = vpop.f32.mrb[0].mxu0
        %v1589 = vadd.f32 0.0, %v1588
        %v1590 = vpop.f32.mrb[0].mxu0
        %1591 = vmatprep.mubr.bf16.mxu0 0
        %1592 = vmatmul.mubr.bf16.gmra.mrb[0].mxu0 %v1346
        %v1593 = vpop.f32.mrb[0].mxu0
        %v1594 = vadd.f32 0.0, %v1593
        %v1595 = vpop.f32.mrb[0].mxu0
        %v1596 = vpop.f32.mrb[0].mxu0
        %v1597 = vadd.f32 0.0, %v1596
        %v1598 = vpop.f32.mrb[0].mxu0
        %1599 = vmatprep.mubr.bf16.mxu0 0
        %1600 = vmatmul.mubr.bf16.gmra.mrb[0].mxu0 %v1347
        %v1601 = vpop.f32.mrb[0].mxu0
        %v1602 = vadd.f32 0.0, %v1601
        %v1603 = vpop.f32.mrb[0].mxu0
        %v1604 = vpop.f32.mrb[0].mxu0
        %v1605 = vadd.f32 0.0, %v1604
        %v1606 = vpop.f32.mrb[0].mxu0
        %1607 = vmatprep.mubr.bf16.mxu0 0
        %1608 = vmatmul.mubr.bf16.gmra.mrb[0].mxu0 %v1348
        %v1609 = vpop.f32.mrb[0].mxu0
        %v1610 = vadd.f32 0.0, %v1609
        %v1611 = vpop.f32.mrb[0].mxu0
        %v1612 = vpop.f32.mrb[0].mxu0
        %v1613 = vadd.f32 0.0, %v1612
        %v1614 = vpop.f32.mrb[0].mxu0
        %1615 = vdwg.mxu0
        %v1616 = vld [vmem:[#allocation21] sm:$0xf]
        %v1617 = vld [vmem:[#allocation21 + $0x4] sm:$0xf]
        %v1618 = vld [vmem:[#allocation21 + $0x8] sm:$0xf]
        %v1619 = vld [vmem:[#allocation21 + $0xc] sm:$0xf]
        %v1620 = vld [vmem:[#allocation21 + $0x10] sm:$0xf]
        %v1621 = vld [vmem:[#allocation21 + $0x14] sm:$0xf]
        %v1622 = vld [vmem:[#allocation21 + $0x18] sm:$0xf]
        %v1623 = vld [vmem:[#allocation21 + $0x1c] sm:$0xf]
        %v1624 = vld [vmem:[#allocation21 + $0x20] sm:$0xf]
        %v1625 = vld [vmem:[#allocation21 + $0x24] sm:$0xf]
        %v1626 = vld [vmem:[#allocation21 + $0x28] sm:$0xf]
        %v1627 = vld [vmem:[#allocation21 + $0x2c] sm:$0xf]
        %v1628 = vld [vmem:[#allocation21 + $0x30] sm:$0xf]
        %v1629 = vld [vmem:[#allocation21 + $0x34] sm:$0xf]
        %v1630 = vld [vmem:[#allocation21 + $0x38] sm:$0xf]
        %v1631 = vld [vmem:[#allocation21 + $0x3c] sm:$0xf]
        %v1648 = vunpack.c.l.b16 %v1616
        %v1649 = vunpack.c.l.b16 %v1617
        %v1650 = vunpack.c.l.b16 %v1618
        %v1651 = vunpack.c.l.b16 %v1619
        %v1652 = vunpack.c.l.b16 %v1620
        %v1653 = vunpack.c.l.b16 %v1621
        %v1654 = vunpack.c.l.b16 %v1622
        %v1655 = vunpack.c.l.b16 %v1623
        %v1656 = vunpack.c.l.b16 %v1624
        %v1657 = vunpack.c.l.b16 %v1625
        %v1658 = vunpack.c.l.b16 %v1626
        %v1659 = vunpack.c.l.b16 %v1627
        %v1660 = vunpack.c.l.b16 %v1628
        %v1661 = vunpack.c.l.b16 %v1629
        %v1662 = vunpack.c.l.b16 %v1630
        %v1663 = vunpack.c.l.b16 %v1631
        %v1664 = vpack.c.b16 %v1649, %v1648
        %v1665 = vpack.c.b16 %v1651, %v1650
        %v1666 = vpack.c.b16 %v1653, %v1652
        %v1667 = vpack.c.b16 %v1655, %v1654
        %v1668 = vpack.c.b16 %v1657, %v1656
        %v1669 = vpack.c.b16 %v1659, %v1658
        %v1670 = vpack.c.b16 %v1661, %v1660
        %v1671 = vpack.c.b16 %v1663, %v1662
        %1680 = vmatprep.subr.bf16.mxu0 0
        %1681 = vmatpush1.bf16.msra.mxu0 %v1664
        %1682 = vmatprep.subr.bf16.mxu0 0
        %1683 = vmatpush1.bf16.msra.mxu0 %v1665
        %1684 = vmatprep.subr.bf16.mxu0 0
        %1685 = vmatpush1.bf16.msra.mxu0 %v1666
        %1686 = vmatprep.subr.bf16.mxu0 0
        %1687 = vmatpush1.bf16.msra.mxu0 %v1667
        %1688 = vmatprep.subr.bf16.mxu0 0
        %1689 = vmatpush1.bf16.msra.mxu0 %v1668
        %1690 = vmatprep.subr.bf16.mxu0 0
        %1691 = vmatpush1.bf16.msra.mxu0 %v1669
        %1692 = vmatprep.subr.bf16.mxu0 0
        %1693 = vmatpush1.bf16.msra.mxu0 %v1670
        %1694 = vmatprep.subr.bf16.mxu0 0
        %1695 = vmatpush1.bf16.msra.mxu0 %v1671
        %1696 = vmatprep.subr.bf16.mxu0 0
        %1697 = vmatpush1.bf16.msra.mxu0 0
        %1698 = vmatprep.subr.bf16.mxu0 0
        %1699 = vmatpush1.bf16.msra.mxu0 0
        %1700 = vmatprep.subr.bf16.mxu0 0
        %1701 = vmatpush1.bf16.msra.mxu0 0
        %1702 = vmatprep.subr.bf16.mxu0 0
        %1703 = vmatpush1.bf16.msra.mxu0 0
        %1704 = vmatprep.subr.bf16.mxu0 0
        %1705 = vmatpush1.bf16.msra.mxu0 0
        %1706 = vmatprep.subr.bf16.mxu0 0
        %1707 = vmatpush1.bf16.msra.mxu0 0
        %1708 = vmatprep.subr.bf16.mxu0 0
        %1709 = vmatpush1.bf16.msra.mxu0 0
        %1710 = vmatprep.subr.bf16.mxu0 0
        %1711 = vmatpush1.bf16.msra.mxu0 0
        %1712 = vmatprep.mubr.bf16.mxu0 0
        %1713 = vmatmul.mubr.bf16.gmra.mrb[0].mxu0 %v1349
        %v1714 = vpop.f32.mrb[0].mxu0
        %v1715 = vadd.f32 0.0, %v1714
        %v1716 = vpop.f32.mrb[0].mxu0
        %v1717 = vpop.f32.mrb[0].mxu0
        %v1718 = vadd.f32 0.0, %v1717
        %v1719 = vpop.f32.mrb[0].mxu0
        %1720 = vmatprep.mubr.bf16.mxu0 0
        %1721 = vmatmul.mubr.bf16.gmra.mrb[0].mxu0 %v1350
        %v1722 = vpop.f32.mrb[0].mxu0
        %v1723 = vadd.f32 0.0, %v1722
        %v1724 = vpop.f32.mrb[0].mxu0
        %v1725 = vpop.f32.mrb[0].mxu0
        %v1726 = vadd.f32 0.0, %v1725
        %v1727 = vpop.f32.mrb[0].mxu0
        %1728 = vmatprep.mubr.bf16.mxu0 0
        %1729 = vmatmul.mubr.bf16.gmra.mrb[0].mxu0 %v1351
        %v1730 = vpop.f32.mrb[0].mxu0
        %v1731 = vadd.f32 0.0, %v1730
        %v1732 = vpop.f32.mrb[0].mxu0
        %v1733 = vpop.f32.mrb[0].mxu0
        %v1734 = vadd.f32 0.0, %v1733
        %v1735 = vpop.f32.mrb[0].mxu0
        %1736 = vmatprep.mubr.bf16.mxu0 0
        %1737 = vmatmul.mubr.bf16.gmra.mrb[0].mxu0 %v1352
        %v1738 = vpop.f32.mrb[0].mxu0
        %v1739 = vadd.f32 0.0, %v1738
        %v1740 = vpop.f32.mrb[0].mxu0
        %v1741 = vpop.f32.mrb[0].mxu0
        %v1742 = vadd.f32 0.0, %v1741
        %v1743 = vpop.f32.mrb[0].mxu0
        %1744 = vdwg.mxu0
        %v1745 = vpack.c.bf16 %v1718, %v1715
        %v1746 = vpack.c.bf16 %v1726, %v1723
        %v1747 = vpack.c.bf16 %v1734, %v1731
        %v1748 = vpack.c.bf16 %v1742, %v1739
        %v1749 = vpack.c.bf16 %v1457, %v1457
        %v1750 = vpack.c.bf16 %v1460, %v1460
        %v1751 = vpack.c.bf16 %v1465, %v1465
        %v1752 = vpack.c.bf16 %v1468, %v1468
        %v1753 = vpack.c.bf16 %v1473, %v1473
        %v1754 = vpack.c.bf16 %v1476, %v1476
        %v1755 = vpack.c.bf16 %v1481, %v1481
        %v1756 = vpack.c.bf16 %v1484, %v1484
        %v1757 = vpack.c.bf16 %v1586, %v1586
        %v1758 = vpack.c.bf16 %v1589, %v1589
        %v1759 = vpack.c.bf16 %v1594, %v1594
        %v1760 = vpack.c.bf16 %v1597, %v1597
        %v1761 = vpack.c.bf16 %v1602, %v1602
        %v1762 = vpack.c.bf16 %v1605, %v1605
        %v1763 = vpack.c.bf16 %v1610, %v1610
        %v1764 = vpack.c.bf16 %v1613, %v1613
        %v1769 = vunpack.c.l.b16 %v1745
        %v1770 = vunpack.c.h.b16 %v1745
        %v1771 = vunpack.c.l.b16 %v1746
        %v1772 = vunpack.c.h.b16 %v1746
        %v1773 = vunpack.c.l.b16 %v1747
        %v1774 = vunpack.c.h.b16 %v1747
        %v1775 = vunpack.c.l.b16 %v1748
        %v1776 = vunpack.c.h.b16 %v1748
        %v1777 = vpack.c.b16 %v1769, %v1769
        %v1778 = vpack.c.b16 %v1770, %v1770
        %v1779 = vpack.c.b16 %v1771, %v1771
        %v1780 = vpack.c.b16 %v1772, %v1772
        %v1781 = vpack.c.b16 %v1773, %v1773
        %v1782 = vpack.c.b16 %v1774, %v1774
        %v1783 = vpack.c.b16 %v1775, %v1775
        %v1784 = vpack.c.b16 %v1776, %v1776
        %vm1785 = vcmask 261120
        %v1787 = vsel %vm1785, %v1749, 0
        %v1790 = vsel %vm1785, %v1757, 0
        %1792 = vmatprep.subr.bf16.mxu0 0
        %1793 = vmatpush1.bf16.xpose.msra.mxu0 %v1790
        %1794 = vmatprep.subr.bf16.mxu0 0
        %1795 = vmatpush1.bf16.xpose.msra.mxu0 0
        %1796 = vmatprep.subr.bf16.mxu0 0
        %1797 = vmatpush1.bf16.xpose.msra.mxu0 0
        %1798 = vmatprep.subr.bf16.mxu0 0
        %1799 = vmatpush1.bf16.xpose.msra.mxu0 0
        %1800 = vmatprep.subr.bf16.mxu0 0
        %1801 = vmatpush1.bf16.xpose.msra.mxu0 0
        %1802 = vmatprep.subr.bf16.mxu0 0
        %1803 = vmatpush1.bf16.xpose.msra.mxu0 0
        %1804 = vmatprep.subr.bf16.mxu0 0
        %1805 = vmatpush1.bf16.xpose.msra.mxu0 0
        %1806 = vmatprep.subr.bf16.mxu0 0
        %1807 = vmatpush1.bf16.xpose.msra.mxu0 0
        %1808 = vmatprep.subr.bf16.mxu0 0
        %1809 = vmatpush1.bf16.xpose.msra.mxu0 0
        %1810 = vmatprep.subr.bf16.mxu0 0
        %1811 = vmatpush1.bf16.xpose.msra.mxu0 0
        %1812 = vmatprep.subr.bf16.mxu0 0
        %1813 = vmatpush1.bf16.xpose.msra.mxu0 0
        %1814 = vmatprep.subr.bf16.mxu0 0
        %1815 = vmatpush1.bf16.xpose.msra.mxu0 0
        %1816 = vmatprep.subr.bf16.mxu0 0
        %1817 = vmatpush1.bf16.xpose.msra.mxu0 0
        %1818 = vmatprep.subr.bf16.mxu0 0
        %1819 = vmatpush1.bf16.xpose.msra.mxu0 0
        %1820 = vmatprep.subr.bf16.mxu0 0
        %1821 = vmatpush1.bf16.xpose.msra.mxu0 0
        %1822 = vmatprep.subr.bf16.mxu0 0
        %1823 = vmatpush1.bf16.xpose.msra.mxu0 0
        %1824 = vmatprep.mubr.bf16.mxu0 0
        %1825 = vmatmul.mubr.bf16.gmra.mrb[0].mxu0 %v1787
        %v1826 = vpop.f32.mrb[0].mxu0
        %v1827 = vadd.f32 0.0, %v1826
        %v1828 = vpop.f32.mrb[0].mxu0
        %v1829 = vpop.f32.mrb[0].mxu0
        %v1830 = vpop.f32.mrb[0].mxu0
        %1831 = vdwg.mxu0
        %v1833 = vsel %vm1785, %v1750, 0
        %v1836 = vsel %vm1785, %v1758, 0
        %1838 = vmatprep.subr.bf16.mxu0 0
        %1839 = vmatpush1.bf16.xpose.msra.mxu0 %v1836
        %1840 = vmatprep.subr.bf16.mxu0 0
        %1841 = vmatpush1.bf16.xpose.msra.mxu0 0
        %1842 = vmatprep.subr.bf16.mxu0 0
        %1843 = vmatpush1.bf16.xpose.msra.mxu0 0
        %1844 = vmatprep.subr.bf16.mxu0 0
        %1845 = vmatpush1.bf16.xpose.msra.mxu0 0
        %1846 = vmatprep.subr.bf16.mxu0 0
        %1847 = vmatpush1.bf16.xpose.msra.mxu0 0
        %1848 = vmatprep.subr.bf16.mxu0 0
        %1849 = vmatpush1.bf16.xpose.msra.mxu0 0
        %1850 = vmatprep.subr.bf16.mxu0 0
        %1851 = vmatpush1.bf16.xpose.msra.mxu0 0
        %1852 = vmatprep.subr.bf16.mxu0 0
        %1853 = vmatpush1.bf16.xpose.msra.mxu0 0
        %1854 = vmatprep.subr.bf16.mxu0 0
        %1855 = vmatpush1.bf16.xpose.msra.mxu0 0
        %1856 = vmatprep.subr.bf16.mxu0 0
        %1857 = vmatpush1.bf16.xpose.msra.mxu0 0
        %1858 = vmatprep.subr.bf16.mxu0 0
        %1859 = vmatpush1.bf16.xpose.msra.mxu0 0
        %1860 = vmatprep.subr.bf16.mxu0 0
        %1861 = vmatpush1.bf16.xpose.msra.mxu0 0
        %1862 = vmatprep.subr.bf16.mxu0 0
        %1863 = vmatpush1.bf16.xpose.msra.mxu0 0
        %1864 = vmatprep.subr.bf16.mxu0 0
        %1865 = vmatpush1.bf16.xpose.msra.mxu0 0
        %1866 = vmatprep.subr.bf16.mxu0 0
        %1867 = vmatpush1.bf16.xpose.msra.mxu0 0
        %1868 = vmatprep.subr.bf16.mxu0 0
        %1869 = vmatpush1.bf16.xpose.msra.mxu0 0
        %1870 = vmatprep.mubr.bf16.mxu0 0
        %1871 = vmatmul.mubr.bf16.gmra.mrb[0].mxu0 %v1833
        %v1872 = vpop.f32.mrb[0].mxu0
        %v1873 = vadd.f32 0.0, %v1872
        %v1874 = vpop.f32.mrb[0].mxu0
        %v1875 = vpop.f32.mrb[0].mxu0
        %v1876 = vpop.f32.mrb[0].mxu0
        %1877 = vdwg.mxu0
        %v1879 = vsel %vm1785, %v1751, 0
        %v1882 = vsel %vm1785, %v1759, 0
        %1884 = vmatprep.subr.bf16.mxu0 0
        %1885 = vmatpush1.bf16.xpose.msra.mxu0 %v1882
        %1886 = vmatprep.subr.bf16.mxu0 0
        %1887 = vmatpush1.bf16.xpose.msra.mxu0 0
        %1888 = vmatprep.subr.bf16.mxu0 0
        %1889 = vmatpush1.bf16.xpose.msra.mxu0 0
        %1890 = vmatprep.subr.bf16.mxu0 0
        %1891 = vmatpush1.bf16.xpose.msra.mxu0 0
        %1892 = vmatprep.subr.bf16.mxu0 0
        %1893 = vmatpush1.bf16.xpose.msra.mxu0 0
        %1894 = vmatprep.subr.bf16.mxu0 0
        %1895 = vmatpush1.bf16.xpose.msra.mxu0 0
        %1896 = vmatprep.subr.bf16.mxu0 0
        %1897 = vmatpush1.bf16.xpose.msra.mxu0 0
        %1898 = vmatprep.subr.bf16.mxu0 0
        %1899 = vmatpush1.bf16.xpose.msra.mxu0 0
        %1900 = vmatprep.subr.bf16.mxu0 0
        %1901 = vmatpush1.bf16.xpose.msra.mxu0 0
        %1902 = vmatprep.subr.bf16.mxu0 0
        %1903 = vmatpush1.bf16.xpose.msra.mxu0 0
        %1904 = vmatprep.subr.bf16.mxu0 0
        %1905 = vmatpush1.bf16.xpose.msra.mxu0 0
        %1906 = vmatprep.subr.bf16.mxu0 0
        %1907 = vmatpush1.bf16.xpose.msra.mxu0 0
        %1908 = vmatprep.subr.bf16.mxu0 0
        %1909 = vmatpush1.bf16.xpose.msra.mxu0 0
        %1910 = vmatprep.subr.bf16.mxu0 0
        %1911 = vmatpush1.bf16.xpose.msra.mxu0 0
        %1912 = vmatprep.subr.bf16.mxu0 0
        %1913 = vmatpush1.bf16.xpose.msra.mxu0 0
        %1914 = vmatprep.subr.bf16.mxu0 0
        %1915 = vmatpush1.bf16.xpose.msra.mxu0 0
        %1916 = vmatprep.mubr.bf16.mxu0 0
        %1917 = vmatmul.mubr.bf16.gmra.mrb[0].mxu0 %v1879
        %v1918 = vpop.f32.mrb[0].mxu0
        %v1919 = vadd.f32 0.0, %v1918
        %v1920 = vpop.f32.mrb[0].mxu0
        %v1921 = vpop.f32.mrb[0].mxu0
        %v1922 = vpop.f32.mrb[0].mxu0
        %1923 = vdwg.mxu0
        %v1925 = vsel %vm1785, %v1752, 0
        %v1928 = vsel %vm1785, %v1760, 0
        %1930 = vmatprep.subr.bf16.mxu0 0
        %1931 = vmatpush1.bf16.xpose.msra.mxu0 %v1928
        %1932 = vmatprep.subr.bf16.mxu0 0
        %1933 = vmatpush1.bf16.xpose.msra.mxu0 0
        %1934 = vmatprep.subr.bf16.mxu0 0
        %1935 = vmatpush1.bf16.xpose.msra.mxu0 0
        %1936 = vmatprep.subr.bf16.mxu0 0
        %1937 = vmatpush1.bf16.xpose.msra.mxu0 0
        %1938 = vmatprep.subr.bf16.mxu0 0
        %1939 = vmatpush1.bf16.xpose.msra.mxu0 0
        %1940 = vmatprep.subr.bf16.mxu0 0
        %1941 = vmatpush1.bf16.xpose.msra.mxu0 0
        %1942 = vmatprep.subr.bf16.mxu0 0
        %1943 = vmatpush1.bf16.xpose.msra.mxu0 0
        %1944 = vmatprep.subr.bf16.mxu0 0
        %1945 = vmatpush1.bf16.xpose.msra.mxu0 0
        %1946 = vmatprep.subr.bf16.mxu0 0
        %1947 = vmatpush1.bf16.xpose.msra.mxu0 0
        %1948 = vmatprep.subr.bf16.mxu0 0
        %1949 = vmatpush1.bf16.xpose.msra.mxu0 0
        %1950 = vmatprep.subr.bf16.mxu0 0
        %1951 = vmatpush1.bf16.xpose.msra.mxu0 0
        %1952 = vmatprep.subr.bf16.mxu0 0
        %1953 = vmatpush1.bf16.xpose.msra.mxu0 0
        %1954 = vmatprep.subr.bf16.mxu0 0
        %1955 = vmatpush1.bf16.xpose.msra.mxu0 0
        %1956 = vmatprep.subr.bf16.mxu0 0
        %1957 = vmatpush1.bf16.xpose.msra.mxu0 0
        %1958 = vmatprep.subr.bf16.mxu0 0
        %1959 = vmatpush1.bf16.xpose.msra.mxu0 0
        %1960 = vmatprep.subr.bf16.mxu0 0
        %1961 = vmatpush1.bf16.xpose.msra.mxu0 0
        %1962 = vmatprep.mubr.bf16.mxu0 0
        %1963 = vmatmul.mubr.bf16.gmra.mrb[0].mxu0 %v1925
        %v1964 = vpop.f32.mrb[0].mxu0
        %v1965 = vadd.f32 0.0, %v1964
        %v1966 = vpop.f32.mrb[0].mxu0
        %v1967 = vpop.f32.mrb[0].mxu0
        %v1968 = vpop.f32.mrb[0].mxu0
        %1969 = vdwg.mxu0
        %v1971 = vsel %vm1785, %v1753, 0
        %v1974 = vsel %vm1785, %v1761, 0
        %1976 = vmatprep.subr.bf16.mxu0 0
        %1977 = vmatpush1.bf16.xpose.msra.mxu0 %v1974
        %1978 = vmatprep.subr.bf16.mxu0 0
        %1979 = vmatpush1.bf16.xpose.msra.mxu0 0
        %1980 = vmatprep.subr.bf16.mxu0 0
        %1981 = vmatpush1.bf16.xpose.msra.mxu0 0
        %1982 = vmatprep.subr.bf16.mxu0 0
        %1983 = vmatpush1.bf16.xpose.msra.mxu0 0
        %1984 = vmatprep.subr.bf16.mxu0 0
        %1985 = vmatpush1.bf16.xpose.msra.mxu0 0
        %1986 = vmatprep.subr.bf16.mxu0 0
        %1987 = vmatpush1.bf16.xpose.msra.mxu0 0
        %1988 = vmatprep.subr.bf16.mxu0 0
        %1989 = vmatpush1.bf16.xpose.msra.mxu0 0
        %1990 = vmatprep.subr.bf16.mxu0 0
        %1991 = vmatpush1.bf16.xpose.msra.mxu0 0
        %1992 = vmatprep.subr.bf16.mxu0 0
        %1993 = vmatpush1.bf16.xpose.msra.mxu0 0
        %1994 = vmatprep.subr.bf16.mxu0 0
        %1995 = vmatpush1.bf16.xpose.msra.mxu0 0
        %1996 = vmatprep.subr.bf16.mxu0 0
        %1997 = vmatpush1.bf16.xpose.msra.mxu0 0
        %1998 = vmatprep.subr.bf16.mxu0 0
        %1999 = vmatpush1.bf16.xpose.msra.mxu0 0
        %2000 = vmatprep.subr.bf16.mxu0 0
        %2001 = vmatpush1.bf16.xpose.msra.mxu0 0
        %2002 = vmatprep.subr.bf16.mxu0 0
        %2003 = vmatpush1.bf16.xpose.msra.mxu0 0
        %2004 = vmatprep.subr.bf16.mxu0 0
        %2005 = vmatpush1.bf16.xpose.msra.mxu0 0
        %2006 = vmatprep.subr.bf16.mxu0 0
        %2007 = vmatpush1.bf16.xpose.msra.mxu0 0
        %2008 = vmatprep.mubr.bf16.mxu0 0
        %2009 = vmatmul.mubr.bf16.gmra.mrb[0].mxu0 %v1971
        %v2010 = vpop.f32.mrb[0].mxu0
        %v2011 = vadd.f32 0.0, %v2010
        %v2012 = vpop.f32.mrb[0].mxu0
        %v2013 = vpop.f32.mrb[0].mxu0
        %v2014 = vpop.f32.mrb[0].mxu0
        %2015 = vdwg.mxu0
        %v2017 = vsel %vm1785, %v1754, 0
        %v2020 = vsel %vm1785, %v1762, 0
        %2022 = vmatprep.subr.bf16.mxu0 0
        %2023 = vmatpush1.bf16.xpose.msra.mxu0 %v2020
        %2024 = vmatprep.subr.bf16.mxu0 0
        %2025 = vmatpush1.bf16.xpose.msra.mxu0 0
        %2026 = vmatprep.subr.bf16.mxu0 0
        %2027 = vmatpush1.bf16.xpose.msra.mxu0 0
        %2028 = vmatprep.subr.bf16.mxu0 0
        %2029 = vmatpush1.bf16.xpose.msra.mxu0 0
        %2030 = vmatprep.subr.bf16.mxu0 0
        %2031 = vmatpush1.bf16.xpose.msra.mxu0 0
        %2032 = vmatprep.subr.bf16.mxu0 0
        %2033 = vmatpush1.bf16.xpose.msra.mxu0 0
        %2034 = vmatprep.subr.bf16.mxu0 0
        %2035 = vmatpush1.bf16.xpose.msra.mxu0 0
        %2036 = vmatprep.subr.bf16.mxu0 0
        %2037 = vmatpush1.bf16.xpose.msra.mxu0 0
        %2038 = vmatprep.subr.bf16.mxu0 0
        %2039 = vmatpush1.bf16.xpose.msra.mxu0 0
        %2040 = vmatprep.subr.bf16.mxu0 0
        %2041 = vmatpush1.bf16.xpose.msra.mxu0 0
        %2042 = vmatprep.subr.bf16.mxu0 0
        %2043 = vmatpush1.bf16.xpose.msra.mxu0 0
        %2044 = vmatprep.subr.bf16.mxu0 0
        %2045 = vmatpush1.bf16.xpose.msra.mxu0 0
        %2046 = vmatprep.subr.bf16.mxu0 0
        %2047 = vmatpush1.bf16.xpose.msra.mxu0 0
        %2048 = vmatprep.subr.bf16.mxu0 0
        %2049 = vmatpush1.bf16.xpose.msra.mxu0 0
        %2050 = vmatprep.subr.bf16.mxu0 0
        %2051 = vmatpush1.bf16.xpose.msra.mxu0 0
        %2052 = vmatprep.subr.bf16.mxu0 0
        %2053 = vmatpush1.bf16.xpose.msra.mxu0 0
        %2054 = vmatprep.mubr.bf16.mxu0 0
        %2055 = vmatmul.mubr.bf16.gmra.mrb[0].mxu0 %v2017
        %v2056 = vpop.f32.mrb[0].mxu0
        %v2057 = vadd.f32 0.0, %v2056
        %v2058 = vpop.f32.mrb[0].mxu0
        %v2059 = vpop.f32.mrb[0].mxu0
        %v2060 = vpop.f32.mrb[0].mxu0
        %2061 = vdwg.mxu0
        %v2063 = vsel %vm1785, %v1755, 0
        %v2066 = vsel %vm1785, %v1763, 0
        %2068 = vmatprep.subr.bf16.mxu0 0
        %2069 = vmatpush1.bf16.xpose.msra.mxu0 %v2066
        %2070 = vmatprep.subr.bf16.mxu0 0
        %2071 = vmatpush1.bf16.xpose.msra.mxu0 0
        %2072 = vmatprep.subr.bf16.mxu0 0
        %2073 = vmatpush1.bf16.xpose.msra.mxu0 0
        %2074 = vmatprep.subr.bf16.mxu0 0
        %2075 = vmatpush1.bf16.xpose.msra.mxu0 0
        %2076 = vmatprep.subr.bf16.mxu0 0
        %2077 = vmatpush1.bf16.xpose.msra.mxu0 0
        %2078 = vmatprep.subr.bf16.mxu0 0
        %2079 = vmatpush1.bf16.xpose.msra.mxu0 0
        %2080 = vmatprep.subr.bf16.mxu0 0
        %2081 = vmatpush1.bf16.xpose.msra.mxu0 0
        %2082 = vmatprep.subr.bf16.mxu0 0
        %2083 = vmatpush1.bf16.xpose.msra.mxu0 0
        %2084 = vmatprep.subr.bf16.mxu0 0
        %2085 = vmatpush1.bf16.xpose.msra.mxu0 0
        %2086 = vmatprep.subr.bf16.mxu0 0
        %2087 = vmatpush1.bf16.xpose.msra.mxu0 0
        %2088 = vmatprep.subr.bf16.mxu0 0
        %2089 = vmatpush1.bf16.xpose.msra.mxu0 0
        %2090 = vmatprep.subr.bf16.mxu0 0
        %2091 = vmatpush1.bf16.xpose.msra.mxu0 0
        %2092 = vmatprep.subr.bf16.mxu0 0
        %2093 = vmatpush1.bf16.xpose.msra.mxu0 0
        %2094 = vmatprep.subr.bf16.mxu0 0
        %2095 = vmatpush1.bf16.xpose.msra.mxu0 0
        %2096 = vmatprep.subr.bf16.mxu0 0
        %2097 = vmatpush1.bf16.xpose.msra.mxu0 0
        %2098 = vmatprep.subr.bf16.mxu0 0
        %2099 = vmatpush1.bf16.xpose.msra.mxu0 0
        %2100 = vmatprep.mubr.bf16.mxu0 0
        %2101 = vmatmul.mubr.bf16.gmra.mrb[0].mxu0 %v2063
        %v2102 = vpop.f32.mrb[0].mxu0
        %v2103 = vadd.f32 0.0, %v2102
        %v2104 = vpop.f32.mrb[0].mxu0
        %v2105 = vpop.f32.mrb[0].mxu0
        %v2106 = vpop.f32.mrb[0].mxu0
        %2107 = vdwg.mxu0
        %v2109 = vsel %vm1785, %v1756, 0
        %v2112 = vsel %vm1785, %v1764, 0
        %2114 = vmatprep.subr.bf16.mxu0 0
        %2115 = vmatpush1.bf16.xpose.msra.mxu0 %v2112
        %2116 = vmatprep.subr.bf16.mxu0 0
        %2117 = vmatpush1.bf16.xpose.msra.mxu0 0
        %2118 = vmatprep.subr.bf16.mxu0 0
        %2119 = vmatpush1.bf16.xpose.msra.mxu0 0
        %2120 = vmatprep.subr.bf16.mxu0 0
        %2121 = vmatpush1.bf16.xpose.msra.mxu0 0
        %2122 = vmatprep.subr.bf16.mxu0 0
        %2123 = vmatpush1.bf16.xpose.msra.mxu0 0
        %2124 = vmatprep.subr.bf16.mxu0 0
        %2125 = vmatpush1.bf16.xpose.msra.mxu0 0
        %2126 = vmatprep.subr.bf16.mxu0 0
        %2127 = vmatpush1.bf16.xpose.msra.mxu0 0
        %2128 = vmatprep.subr.bf16.mxu0 0
        %2129 = vmatpush1.bf16.xpose.msra.mxu0 0
        %2130 = vmatprep.subr.bf16.mxu0 0
        %2131 = vmatpush1.bf16.xpose.msra.mxu0 0
        %2132 = vmatprep.subr.bf16.mxu0 0
        %2133 = vmatpush1.bf16.xpose.msra.mxu0 0
        %2134 = vmatprep.subr.bf16.mxu0 0
        %2135 = vmatpush1.bf16.xpose.msra.mxu0 0
        %2136 = vmatprep.subr.bf16.mxu0 0
        %2137 = vmatpush1.bf16.xpose.msra.mxu0 0
        %2138 = vmatprep.subr.bf16.mxu0 0
        %2139 = vmatpush1.bf16.xpose.msra.mxu0 0
        %2140 = vmatprep.subr.bf16.mxu0 0
        %2141 = vmatpush1.bf16.xpose.msra.mxu0 0
        %2142 = vmatprep.subr.bf16.mxu0 0
        %2143 = vmatpush1.bf16.xpose.msra.mxu0 0
        %2144 = vmatprep.subr.bf16.mxu0 0
        %2145 = vmatpush1.bf16.xpose.msra.mxu0 0
        %2146 = vmatprep.mubr.bf16.mxu0 0
        %2147 = vmatmul.mubr.bf16.gmra.mrb[0].mxu0 %v2109
        %v2148 = vpop.f32.mrb[0].mxu0
        %v2149 = vadd.f32 0.0, %v2148
        %v2150 = vpop.f32.mrb[0].mxu0
        %v2151 = vpop.f32.mrb[0].mxu0
        %v2152 = vpop.f32.mrb[0].mxu0
        %2153 = vdwg.mxu0
        %v2154 = vmul.f32 %v1827, 0.17677669
        %v2155 = vmul.f32 %v1873, 0.17677669
        %v2156 = vmul.f32 %v1919, 0.17677669
        %v2157 = vmul.f32 %v1965, 0.17677669
        %v2158 = vmul.f32 %v2011, 0.17677669
        %v2159 = vmul.f32 %v2057, 0.17677669
        %v2160 = vmul.f32 %v2103, 0.17677669
        %v2161 = vmul.f32 %v2149, 0.17677669
        %v2162 = vsel %vm1357, 1, 0
        %vm2163 = vcmp.eq.s32.totalorder %v2162, 1
        %v2164 = vsel %vm2163, -1e+32, %v2154
        %v2165 = vsel %vm2163, -1e+32, %v2155
        %v2166 = vsel %vm2163, -1e+32, %v2156
        %v2167 = vsel %vm2163, -1e+32, %v2157
        %v2168 = vsel %vm2163, -1e+32, %v2158
        %v2169 = vsel %vm2163, -1e+32, %v2159
        %v2170 = vsel %vm2163, -1e+32, %v2160
        %v2171 = vsel %vm2163, -1e+32, %v2161
        %vm2172 = vcmask 64512
        %v2173 = vsel %vm2172, %v2164, -inf
        %2174 = vmax.xlane.f32.xlu0 %v2173
        %v2175 = vpop.xlane.xlu0 %2174
        %v2176 = vsel %vm2172, %v2165, -inf
        %2177 = vmax.xlane.f32.xlu0 %v2176
        %v2178 = vpop.xlane.xlu0 %2177
        %v2179 = vsel %vm2172, %v2166, -inf
        %2180 = vmax.xlane.f32.xlu0 %v2179
        %v2181 = vpop.xlane.xlu0 %2180
        %v2182 = vsel %vm2172, %v2167, -inf
        %2183 = vmax.xlane.f32.xlu0 %v2182
        %v2184 = vpop.xlane.xlu0 %2183
        %v2185 = vsel %vm2172, %v2168, -inf
        %2186 = vmax.xlane.f32.xlu0 %v2185
        %v2187 = vpop.xlane.xlu0 %2186
        %v2188 = vsel %vm2172, %v2169, -inf
        %2189 = vmax.xlane.f32.xlu0 %v2188
        %v2190 = vpop.xlane.xlu0 %2189
        %v2191 = vsel %vm2172, %v2170, -inf
        %2192 = vmax.xlane.f32.xlu0 %v2191
        %v2193 = vpop.xlane.xlu0 %2192
        %v2194 = vsel %vm2172, %v2171, -inf
        %2195 = vmax.xlane.f32.xlu0 %v2194
        %v2196 = vpop.xlane.xlu0 %2195
        %v2197 = vsub.f32 %v2164, %v2175
        %v2198 = vsub.f32 %v2165, %v2178
        %v2199 = vsub.f32 %v2166, %v2181
        %v2200 = vsub.f32 %v2167, %v2184
        %v2201 = vsub.f32 %v2168, %v2187
        %v2202 = vsub.f32 %v2169, %v2190
        %v2203 = vsub.f32 %v2170, %v2193
        %v2204 = vsub.f32 %v2171, %v2196
        %v2205 = vmul.f32 %v2197, 1.442695
        %v2206 = vpow.pop %v2205
        %v2207 = vmul.f32 %v2198, 1.442695
        %v2208 = vpow.pop %v2207
        %v2209 = vmul.f32 %v2199, 1.442695
        %v2210 = vpow.pop %v2209
        %v2211 = vmul.f32 %v2200, 1.442695
        %v2212 = vpow.pop %v2211
        %v2213 = vmul.f32 %v2201, 1.442695
        %v2214 = vpow.pop %v2213
        %v2215 = vmul.f32 %v2202, 1.442695
        %v2216 = vpow.pop %v2215
        %v2217 = vmul.f32 %v2203, 1.442695
        %v2218 = vpow.pop %v2217
        %v2219 = vmul.f32 %v2204, 1.442695
        %v2220 = vpow.pop %v2219
        %v2221 = vsel %vm2172, %v2206, 0.0
        %2222 = vadd.xlane.f32.xlu0 %v2221
        %v2223 = vpop.xlane.xlu0 %2222
        %v2224 = vsel %vm2172, %v2208, 0.0
        %2225 = vadd.xlane.f32.xlu0 %v2224
        %v2226 = vpop.xlane.xlu0 %2225
        %v2227 = vsel %vm2172, %v2210, 0.0
        %2228 = vadd.xlane.f32.xlu0 %v2227
        %v2229 = vpop.xlane.xlu0 %2228
        %v2230 = vsel %vm2172, %v2212, 0.0
        %2231 = vadd.xlane.f32.xlu0 %v2230
        %v2232 = vpop.xlane.xlu0 %2231
        %v2233 = vsel %vm2172, %v2214, 0.0
        %2234 = vadd.xlane.f32.xlu0 %v2233
        %v2235 = vpop.xlane.xlu0 %2234
        %v2236 = vsel %vm2172, %v2216, 0.0
        %2237 = vadd.xlane.f32.xlu0 %v2236
        %v2238 = vpop.xlane.xlu0 %2237
        %v2239 = vsel %vm2172, %v2218, 0.0
        %2240 = vadd.xlane.f32.xlu0 %v2239
        %v2241 = vpop.xlane.xlu0 %2240
        %v2242 = vsel %vm2172, %v2220, 0.0
        %2243 = vadd.xlane.f32.xlu0 %v2242
        %v2244 = vpop.xlane.xlu0 %2243
        %v2245 = vrcp.pop %v2223
        %v2246 = vrcp.pop %v2226
        %v2247 = vrcp.pop %v2229
        %v2248 = vrcp.pop %v2232
        %v2249 = vrcp.pop %v2235
        %v2250 = vrcp.pop %v2238
        %v2251 = vrcp.pop %v2241
        %v2252 = vrcp.pop %v2244
        %v2253 = vmul.f32 %v2206, %v2245
        %v2254 = vmul.f32 %v2208, %v2246
        %v2255 = vmul.f32 %v2210, %v2247
        %v2256 = vmul.f32 %v2212, %v2248
        %v2257 = vmul.f32 %v2214, %v2249
        %v2258 = vmul.f32 %v2216, %v2250
        %v2259 = vmul.f32 %v2218, %v2251
        %v2260 = vmul.f32 %v2220, %v2252
        %v2261 = vpack.c.bf16 %v2253, %v2253
        %v2262 = vpack.c.bf16 %v2254, %v2254
        %v2263 = vpack.c.bf16 %v2255, %v2255
        %v2264 = vpack.c.bf16 %v2256, %v2256
        %v2265 = vpack.c.bf16 %v2257, %v2257
        %v2266 = vpack.c.bf16 %v2258, %v2258
        %v2267 = vpack.c.bf16 %v2259, %v2259
        %v2268 = vpack.c.bf16 %v2260, %v2260
        %v2270 = vsel %vm2172, %v2261, 0
        %vm2272 = vcmask 1043456
        %v2274 = vsel %vm2272, %v1777, 0
        %2276 = vmatprep.subr.bf16.mxu0 0
        %2277 = vmatpush1.bf16.msra.mxu0 %v2274
        %2278 = vmatprep.subr.bf16.mxu0 0
        %2279 = vmatpush1.bf16.msra.mxu0 0
        %2280 = vmatprep.subr.bf16.mxu0 0
        %2281 = vmatpush1.bf16.msra.mxu0 0
        %2282 = vmatprep.subr.bf16.mxu0 0
        %2283 = vmatpush1.bf16.msra.mxu0 0
        %2284 = vmatprep.subr.bf16.mxu0 0
        %2285 = vmatpush1.bf16.msra.mxu0 0
        %2286 = vmatprep.subr.bf16.mxu0 0
        %2287 = vmatpush1.bf16.msra.mxu0 0
        %2288 = vmatprep.subr.bf16.mxu0 0
        %2289 = vmatpush1.bf16.msra.mxu0 0
        %2290 = vmatprep.subr.bf16.mxu0 0
        %2291 = vmatpush1.bf16.msra.mxu0 0
        %2292 = vmatprep.subr.bf16.mxu0 0
        %2293 = vmatpush1.bf16.msra.mxu0 0
        %2294 = vmatprep.subr.bf16.mxu0 0
        %2295 = vmatpush1.bf16.msra.mxu0 0
        %2296 = vmatprep.subr.bf16.mxu0 0
        %2297 = vmatpush1.bf16.msra.mxu0 0
        %2298 = vmatprep.subr.bf16.mxu0 0
        %2299 = vmatpush1.bf16.msra.mxu0 0
        %2300 = vmatprep.subr.bf16.mxu0 0
        %2301 = vmatpush1.bf16.msra.mxu0 0
        %2302 = vmatprep.subr.bf16.mxu0 0
        %2303 = vmatpush1.bf16.msra.mxu0 0
        %2304 = vmatprep.subr.bf16.mxu0 0
        %2305 = vmatpush1.bf16.msra.mxu0 0
        %2306 = vmatprep.subr.bf16.mxu0 0
        %2307 = vmatpush1.bf16.msra.mxu0 0
        %2308 = vmatprep.mubr.bf16.mxu0 0
        %2309 = vmatmul.mubr.bf16.gmra.mrb[0].mxu0 %v2270
        %v2310 = vpop.f32.mrb[0].mxu0
        %v2311 = vadd.f32 0.0, %v2310
        %v2312 = vpop.f32.mrb[0].mxu0
        %v2313 = vpop.f32.mrb[0].mxu0
        %v2314 = vpop.f32.mrb[0].mxu0
        %2315 = vdwg.mxu0
        %v2317 = vsel %vm2172, %v2262, 0
        %v2320 = vsel %vm2272, %v1778, 0
        %2322 = vmatprep.subr.bf16.mxu0 0
        %2323 = vmatpush1.bf16.msra.mxu0 %v2320
        %2324 = vmatprep.subr.bf16.mxu0 0
        %2325 = vmatpush1.bf16.msra.mxu0 0
        %2326 = vmatprep.subr.bf16.mxu0 0
        %2327 = vmatpush1.bf16.msra.mxu0 0
        %2328 = vmatprep.subr.bf16.mxu0 0
        %2329 = vmatpush1.bf16.msra.mxu0 0
        %2330 = vmatprep.subr.bf16.mxu0 0
        %2331 = vmatpush1.bf16.msra.mxu0 0
        %2332 = vmatprep.subr.bf16.mxu0 0
        %2333 = vmatpush1.bf16.msra.mxu0 0
        %2334 = vmatprep.subr.bf16.mxu0 0
        %2335 = vmatpush1.bf16.msra.mxu0 0
        %2336 = vmatprep.subr.bf16.mxu0 0
        %2337 = vmatpush1.bf16.msra.mxu0 0
        %2338 = vmatprep.subr.bf16.mxu0 0
        %2339 = vmatpush1.bf16.msra.mxu0 0
        %2340 = vmatprep.subr.bf16.mxu0 0
        %2341 = vmatpush1.bf16.msra.mxu0 0
        %2342 = vmatprep.subr.bf16.mxu0 0
        %2343 = vmatpush1.bf16.msra.mxu0 0
        %2344 = vmatprep.subr.bf16.mxu0 0
        %2345 = vmatpush1.bf16.msra.mxu0 0
        %2346 = vmatprep.subr.bf16.mxu0 0
        %2347 = vmatpush1.bf16.msra.mxu0 0
        %2348 = vmatprep.subr.bf16.mxu0 0
        %2349 = vmatpush1.bf16.msra.mxu0 0
        %2350 = vmatprep.subr.bf16.mxu0 0
        %2351 = vmatpush1.bf16.msra.mxu0 0
        %2352 = vmatprep.subr.bf16.mxu0 0
        %2353 = vmatpush1.bf16.msra.mxu0 0
        %2354 = vmatprep.mubr.bf16.mxu0 0
        %2355 = vmatmul.mubr.bf16.gmra.mrb[0].mxu0 %v2317
        %v2356 = vpop.f32.mrb[0].mxu0
        %v2357 = vadd.f32 0.0, %v2356
        %v2358 = vpop.f32.mrb[0].mxu0
        %v2359 = vpop.f32.mrb[0].mxu0
        %v2360 = vpop.f32.mrb[0].mxu0
        %2361 = vdwg.mxu0
        %v2363 = vsel %vm2172, %v2263, 0
        %v2366 = vsel %vm2272, %v1779, 0
        %2368 = vmatprep.subr.bf16.mxu0 0
        %2369 = vmatpush1.bf16.msra.mxu0 %v2366
        %2370 = vmatprep.subr.bf16.mxu0 0
        %2371 = vmatpush1.bf16.msra.mxu0 0
        %2372 = vmatprep.subr.bf16.mxu0 0
        %2373 = vmatpush1.bf16.msra.mxu0 0
        %2374 = vmatprep.subr.bf16.mxu0 0
        %2375 = vmatpush1.bf16.msra.mxu0 0
        %2376 = vmatprep.subr.bf16.mxu0 0
        %2377 = vmatpush1.bf16.msra.mxu0 0
        %2378 = vmatprep.subr.bf16.mxu0 0
        %2379 = vmatpush1.bf16.msra.mxu0 0
        %2380 = vmatprep.subr.bf16.mxu0 0
        %2381 = vmatpush1.bf16.msra.mxu0 0
        %2382 = vmatprep.subr.bf16.mxu0 0
        %2383 = vmatpush1.bf16.msra.mxu0 0
        %2384 = vmatprep.subr.bf16.mxu0 0
        %2385 = vmatpush1.bf16.msra.mxu0 0
        %2386 = vmatprep.subr.bf16.mxu0 0
        %2387 = vmatpush1.bf16.msra.mxu0 0
        %2388 = vmatprep.subr.bf16.mxu0 0
        %2389 = vmatpush1.bf16.msra.mxu0 0
        %2390 = vmatprep.subr.bf16.mxu0 0
        %2391 = vmatpush1.bf16.msra.mxu0 0
        %2392 = vmatprep.subr.bf16.mxu0 0
        %2393 = vmatpush1.bf16.msra.mxu0 0
        %2394 = vmatprep.subr.bf16.mxu0 0
        %2395 = vmatpush1.bf16.msra.mxu0 0
        %2396 = vmatprep.subr.bf16.mxu0 0
        %2397 = vmatpush1.bf16.msra.mxu0 0
        %2398 = vmatprep.subr.bf16.mxu0 0
        %2399 = vmatpush1.bf16.msra.mxu0 0
        %2400 = vmatprep.mubr.bf16.mxu0 0
        %2401 = vmatmul.mubr.bf16.gmra.mrb[0].mxu0 %v2363
        %v2402 = vpop.f32.mrb[0].mxu0
        %v2403 = vadd.f32 0.0, %v2402
        %v2404 = vpop.f32.mrb[0].mxu0
        %v2405 = vpop.f32.mrb[0].mxu0
        %v2406 = vpop.f32.mrb[0].mxu0
        %2407 = vdwg.mxu0
        %v2409 = vsel %vm2172, %v2264, 0
        %v2412 = vsel %vm2272, %v1780, 0
        %2414 = vmatprep.subr.bf16.mxu0 0
        %2415 = vmatpush1.bf16.msra.mxu0 %v2412
        %2416 = vmatprep.subr.bf16.mxu0 0
        %2417 = vmatpush1.bf16.msra.mxu0 0
        %2418 = vmatprep.subr.bf16.mxu0 0
        %2419 = vmatpush1.bf16.msra.mxu0 0
        %2420 = vmatprep.subr.bf16.mxu0 0
        %2421 = vmatpush1.bf16.msra.mxu0 0
        %2422 = vmatprep.subr.bf16.mxu0 0
        %2423 = vmatpush1.bf16.msra.mxu0 0
        %2424 = vmatprep.subr.bf16.mxu0 0
        %2425 = vmatpush1.bf16.msra.mxu0 0
        %2426 = vmatprep.subr.bf16.mxu0 0
        %2427 = vmatpush1.bf16.msra.mxu0 0
        %2428 = vmatprep.subr.bf16.mxu0 0
        %2429 = vmatpush1.bf16.msra.mxu0 0
        %2430 = vmatprep.subr.bf16.mxu0 0
        %2431 = vmatpush1.bf16.msra.mxu0 0
        %2432 = vmatprep.subr.bf16.mxu0 0
        %2433 = vmatpush1.bf16.msra.mxu0 0
        %2434 = vmatprep.subr.bf16.mxu0 0
        %2435 = vmatpush1.bf16.msra.mxu0 0
        %2436 = vmatprep.subr.bf16.mxu0 0
        %2437 = vmatpush1.bf16.msra.mxu0 0
        %2438 = vmatprep.subr.bf16.mxu0 0
        %2439 = vmatpush1.bf16.msra.mxu0 0
        %2440 = vmatprep.subr.bf16.mxu0 0
        %2441 = vmatpush1.bf16.msra.mxu0 0
        %2442 = vmatprep.subr.bf16.mxu0 0
        %2443 = vmatpush1.bf16.msra.mxu0 0
        %2444 = vmatprep.subr.bf16.mxu0 0
        %2445 = vmatpush1.bf16.msra.mxu0 0
        %2446 = vmatprep.mubr.bf16.mxu0 0
        %2447 = vmatmul.mubr.bf16.gmra.mrb[0].mxu0 %v2409
        %v2448 = vpop.f32.mrb[0].mxu0
        %v2449 = vadd.f32 0.0, %v2448
        %v2450 = vpop.f32.mrb[0].mxu0
        %v2451 = vpop.f32.mrb[0].mxu0
        %v2452 = vpop.f32.mrb[0].mxu0
        %2453 = vdwg.mxu0
        %v2455 = vsel %vm2172, %v2265, 0
        %v2458 = vsel %vm2272, %v1781, 0
        %2460 = vmatprep.subr.bf16.mxu0 0
        %2461 = vmatpush1.bf16.msra.mxu0 %v2458
        %2462 = vmatprep.subr.bf16.mxu0 0
        %2463 = vmatpush1.bf16.msra.mxu0 0
        %2464 = vmatprep.subr.bf16.mxu0 0
        %2465 = vmatpush1.bf16.msra.mxu0 0
        %2466 = vmatprep.subr.bf16.mxu0 0
        %2467 = vmatpush1.bf16.msra.mxu0 0
        %2468 = vmatprep.subr.bf16.mxu0 0
        %2469 = vmatpush1.bf16.msra.mxu0 0
        %2470 = vmatprep.subr.bf16.mxu0 0
        %2471 = vmatpush1.bf16.msra.mxu0 0
        %2472 = vmatprep.subr.bf16.mxu0 0
        %2473 = vmatpush1.bf16.msra.mxu0 0
        %2474 = vmatprep.subr.bf16.mxu0 0
        %2475 = vmatpush1.bf16.msra.mxu0 0
        %2476 = vmatprep.subr.bf16.mxu0 0
        %2477 = vmatpush1.bf16.msra.mxu0 0
        %2478 = vmatprep.subr.bf16.mxu0 0
        %2479 = vmatpush1.bf16.msra.mxu0 0
        %2480 = vmatprep.subr.bf16.mxu0 0
        %2481 = vmatpush1.bf16.msra.mxu0 0
        %2482 = vmatprep.subr.bf16.mxu0 0
        %2483 = vmatpush1.bf16.msra.mxu0 0
        %2484 = vmatprep.subr.bf16.mxu0 0
        %2485 = vmatpush1.bf16.msra.mxu0 0
        %2486 = vmatprep.subr.bf16.mxu0 0
        %2487 = vmatpush1.bf16.msra.mxu0 0
        %2488 = vmatprep.subr.bf16.mxu0 0
        %2489 = vmatpush1.bf16.msra.mxu0 0
        %2490 = vmatprep.subr.bf16.mxu0 0
        %2491 = vmatpush1.bf16.msra.mxu0 0
        %2492 = vmatprep.mubr.bf16.mxu0 0
        %2493 = vmatmul.mubr.bf16.gmra.mrb[0].mxu0 %v2455
        %v2494 = vpop.f32.mrb[0].mxu0
        %v2495 = vadd.f32 0.0, %v2494
        %v2496 = vpop.f32.mrb[0].mxu0
        %v2497 = vpop.f32.mrb[0].mxu0
        %v2498 = vpop.f32.mrb[0].mxu0
        %2499 = vdwg.mxu0
        %v2501 = vsel %vm2172, %v2266, 0
        %v2504 = vsel %vm2272, %v1782, 0
        %2506 = vmatprep.subr.bf16.mxu0 0
        %2507 = vmatpush1.bf16.msra.mxu0 %v2504
        %2508 = vmatprep.subr.bf16.mxu0 0
        %2509 = vmatpush1.bf16.msra.mxu0 0
        %2510 = vmatprep.subr.bf16.mxu0 0
        %2511 = vmatpush1.bf16.msra.mxu0 0
        %2512 = vmatprep.subr.bf16.mxu0 0
        %2513 = vmatpush1.bf16.msra.mxu0 0
        %2514 = vmatprep.subr.bf16.mxu0 0
        %2515 = vmatpush1.bf16.msra.mxu0 0
        %2516 = vmatprep.subr.bf16.mxu0 0
        %2517 = vmatpush1.bf16.msra.mxu0 0
        %2518 = vmatprep.subr.bf16.mxu0 0
        %2519 = vmatpush1.bf16.msra.mxu0 0
        %2520 = vmatprep.subr.bf16.mxu0 0
        %2521 = vmatpush1.bf16.msra.mxu0 0
        %2522 = vmatprep.subr.bf16.mxu0 0
        %2523 = vmatpush1.bf16.msra.mxu0 0
        %2524 = vmatprep.subr.bf16.mxu0 0
        %2525 = vmatpush1.bf16.msra.mxu0 0
        %2526 = vmatprep.subr.bf16.mxu0 0
        %2527 = vmatpush1.bf16.msra.mxu0 0
        %2528 = vmatprep.subr.bf16.mxu0 0
        %2529 = vmatpush1.bf16.msra.mxu0 0
        %2530 = vmatprep.subr.bf16.mxu0 0
        %2531 = vmatpush1.bf16.msra.mxu0 0
        %2532 = vmatprep.subr.bf16.mxu0 0
        %2533 = vmatpush1.bf16.msra.mxu0 0
        %2534 = vmatprep.subr.bf16.mxu0 0
        %2535 = vmatpush1.bf16.msra.mxu0 0
        %2536 = vmatprep.subr.bf16.mxu0 0
        %2537 = vmatpush1.bf16.msra.mxu0 0
        %2538 = vmatprep.mubr.bf16.mxu0 0
        %2539 = vmatmul.mubr.bf16.gmra.mrb[0].mxu0 %v2501
        %v2540 = vpop.f32.mrb[0].mxu0
        %v2541 = vadd.f32 0.0, %v2540
        %v2542 = vpop.f32.mrb[0].mxu0
        %v2543 = vpop.f32.mrb[0].mxu0
        %v2544 = vpop.f32.mrb[0].mxu0
        %2545 = vdwg.mxu0
        %v2547 = vsel %vm2172, %v2267, 0
        %v2550 = vsel %vm2272, %v1783, 0
        %2552 = vmatprep.subr.bf16.mxu0 0
        %2553 = vmatpush1.bf16.msra.mxu0 %v2550
        %2554 = vmatprep.subr.bf16.mxu0 0
        %2555 = vmatpush1.bf16.msra.mxu0 0
        %2556 = vmatprep.subr.bf16.mxu0 0
        %2557 = vmatpush1.bf16.msra.mxu0 0
        %2558 = vmatprep.subr.bf16.mxu0 0
        %2559 = vmatpush1.bf16.msra.mxu0 0
        %2560 = vmatprep.subr.bf16.mxu0 0
        %2561 = vmatpush1.bf16.msra.mxu0 0
        %2562 = vmatprep.subr.bf16.mxu0 0
        %2563 = vmatpush1.bf16.msra.mxu0 0
        %2564 = vmatprep.subr.bf16.mxu0 0
        %2565 = vmatpush1.bf16.msra.mxu0 0
        %2566 = vmatprep.subr.bf16.mxu0 0
        %2567 = vmatpush1.bf16.msra.mxu0 0
        %2568 = vmatprep.subr.bf16.mxu0 0
        %2569 = vmatpush1.bf16.msra.mxu0 0
        %2570 = vmatprep.subr.bf16.mxu0 0
        %2571 = vmatpush1.bf16.msra.mxu0 0
        %2572 = vmatprep.subr.bf16.mxu0 0
        %2573 = vmatpush1.bf16.msra.mxu0 0
        %2574 = vmatprep.subr.bf16.mxu0 0
        %2575 = vmatpush1.bf16.msra.mxu0 0
        %2576 = vmatprep.subr.bf16.mxu0 0
        %2577 = vmatpush1.bf16.msra.mxu0 0
        %2578 = vmatprep.subr.bf16.mxu0 0
        %2579 = vmatpush1.bf16.msra.mxu0 0
        %2580 = vmatprep.subr.bf16.mxu0 0
        %2581 = vmatpush1.bf16.msra.mxu0 0
        %2582 = vmatprep.subr.bf16.mxu0 0
        %2583 = vmatpush1.bf16.msra.mxu0 0
        %2584 = vmatprep.mubr.bf16.mxu0 0
        %2585 = vmatmul.mubr.bf16.gmra.mrb[0].mxu0 %v2547
        %v2586 = vpop.f32.mrb[0].mxu0
        %v2587 = vadd.f32 0.0, %v2586
        %v2588 = vpop.f32.mrb[0].mxu0
        %v2589 = vpop.f32.mrb[0].mxu0
        %v2590 = vpop.f32.mrb[0].mxu0
        %2591 = vdwg.mxu0
        %v2593 = vsel %vm2172, %v2268, 0
        %v2596 = vsel %vm2272, %v1784, 0
        %2598 = vmatprep.subr.bf16.mxu0 0
        %2599 = vmatpush1.bf16.msra.mxu0 %v2596
        %2600 = vmatprep.subr.bf16.mxu0 0
        %2601 = vmatpush1.bf16.msra.mxu0 0
        %2602 = vmatprep.subr.bf16.mxu0 0
        %2603 = vmatpush1.bf16.msra.mxu0 0
        %2604 = vmatprep.subr.bf16.mxu0 0
        %2605 = vmatpush1.bf16.msra.mxu0 0
        %2606 = vmatprep.subr.bf16.mxu0 0
        %2607 = vmatpush1.bf16.msra.mxu0 0
        %2608 = vmatprep.subr.bf16.mxu0 0
        %2609 = vmatpush1.bf16.msra.mxu0 0
        %2610 = vmatprep.subr.bf16.mxu0 0
        %2611 = vmatpush1.bf16.msra.mxu0 0
        %2612 = vmatprep.subr.bf16.mxu0 0
        %2613 = vmatpush1.bf16.msra.mxu0 0
        %2614 = vmatprep.subr.bf16.mxu0 0
        %2615 = vmatpush1.bf16.msra.mxu0 0
        %2616 = vmatprep.subr.bf16.mxu0 0
        %2617 = vmatpush1.bf16.msra.mxu0 0
        %2618 = vmatprep.subr.bf16.mxu0 0
        %2619 = vmatpush1.bf16.msra.mxu0 0
        %2620 = vmatprep.subr.bf16.mxu0 0
        %2621 = vmatpush1.bf16.msra.mxu0 0
        %2622 = vmatprep.subr.bf16.mxu0 0
        %2623 = vmatpush1.bf16.msra.mxu0 0
        %2624 = vmatprep.subr.bf16.mxu0 0
        %2625 = vmatpush1.bf16.msra.mxu0 0
        %2626 = vmatprep.subr.bf16.mxu0 0
        %2627 = vmatpush1.bf16.msra.mxu0 0
        %2628 = vmatprep.subr.bf16.mxu0 0
        %2629 = vmatpush1.bf16.msra.mxu0 0
        %2630 = vmatprep.mubr.bf16.mxu0 0
        %2631 = vmatmul.mubr.bf16.gmra.mrb[0].mxu0 %v2593
        %v2632 = vpop.f32.mrb[0].mxu0
        %v2633 = vadd.f32 0.0, %v2632
        %v2634 = vpop.f32.mrb[0].mxu0
        %v2635 = vpop.f32.mrb[0].mxu0
        %v2636 = vpop.f32.mrb[0].mxu0
        %2637 = vdwg.mxu0
        %v2638 = vpack.c.bf16 %v2357, %v2311
        %v2639 = vpack.c.bf16 %v2449, %v2403
        %v2640 = vpack.c.bf16 %v2541, %v2495
        %v2641 = vpack.c.bf16 %v2633, %v2587
        %v2642 = vld [vmem:[#allocation22] sm:$0xf]
        %v2643 = vld [vmem:[#allocation22 + $0x4] sm:$0xf]
        %v2644 = vld [vmem:[#allocation22 + $0x8] sm:$0xf]
        %v2645 = vld [vmem:[#allocation22 + $0xc] sm:$0xf]
        %v2646 = vld [vmem:[#allocation24] sm:$0xf]
        %v2647 = vld [vmem:[#allocation24 + $0x4] sm:$0xf]
        %v2648 = vld [vmem:[#allocation24 + $0x8] sm:$0xf]
        %v2649 = vld [vmem:[#allocation24 + $0xc] sm:$0xf]
        %s2650 = scalar_lea.vmem [#allocation18], 64
        %v2651 = vld [vmem:[%s2650] sm:$0xf]
        %v2652 = vld [vmem:[%s2650 + $0x4] sm:$0xf]
        %v2653 = vld [vmem:[%s2650 + $0x8] sm:$0xf]
        %v2654 = vld [vmem:[%s2650 + $0xc] sm:$0xf]
        %v2655 = vld [vmem:[%s2650 + $0x10] sm:$0xf]
        %v2656 = vld [vmem:[%s2650 + $0x14] sm:$0xf]
        %v2657 = vld [vmem:[%s2650 + $0x18] sm:$0xf]
        %v2658 = vld [vmem:[%s2650 + $0x1c] sm:$0xf]
        %v2659 = vld [vmem:[%s2650 + $0x20] sm:$0xf]
        %v2660 = vld [vmem:[%s2650 + $0x24] sm:$0xf]
        %v2661 = vld [vmem:[%s2650 + $0x28] sm:$0xf]
        %v2662 = vld [vmem:[%s2650 + $0x2c] sm:$0xf]
        %v2663 = vld [vmem:[%s2650 + $0x30] sm:$0xf]
        %v2664 = vld [vmem:[%s2650 + $0x34] sm:$0xf]
        %v2665 = vld [vmem:[%s2650 + $0x38] sm:$0xf]
        %v2666 = vld [vmem:[%s2650 + $0x3c] sm:$0xf]
        %v2683 = vunpack.c.l.b16 %v2651
        %v2684 = vunpack.c.l.b16 %v2652
        %v2685 = vunpack.c.l.b16 %v2653
        %v2686 = vunpack.c.l.b16 %v2654
        %v2687 = vunpack.c.l.b16 %v2655
        %v2688 = vunpack.c.l.b16 %v2656
        %v2689 = vunpack.c.l.b16 %v2657
        %v2690 = vunpack.c.l.b16 %v2658
        %v2691 = vunpack.c.l.b16 %v2659
        %v2692 = vunpack.c.l.b16 %v2660
        %v2693 = vunpack.c.l.b16 %v2661
        %v2694 = vunpack.c.l.b16 %v2662
        %v2695 = vunpack.c.l.b16 %v2663
        %v2696 = vunpack.c.l.b16 %v2664
        %v2697 = vunpack.c.l.b16 %v2665
        %v2698 = vunpack.c.l.b16 %v2666
        %v2699 = vpack.c.b16 %v2684, %v2683
        %v2700 = vpack.c.b16 %v2686, %v2685
        %v2701 = vpack.c.b16 %v2688, %v2687
        %v2702 = vpack.c.b16 %v2690, %v2689
        %v2703 = vpack.c.b16 %v2692, %v2691
        %v2704 = vpack.c.b16 %v2694, %v2693
        %v2705 = vpack.c.b16 %v2696, %v2695
        %v2706 = vpack.c.b16 %v2698, %v2697
        %2715 = vmatprep.subr.bf16.mxu0 0
        %2716 = vmatpush1.bf16.msra.mxu0 %v2699
        %2717 = vmatprep.subr.bf16.mxu0 0
        %2718 = vmatpush1.bf16.msra.mxu0 %v2700
        %2719 = vmatprep.subr.bf16.mxu0 0
        %2720 = vmatpush1.bf16.msra.mxu0 %v2701
        %2721 = vmatprep.subr.bf16.mxu0 0
        %2722 = vmatpush1.bf16.msra.mxu0 %v2702
        %2723 = vmatprep.subr.bf16.mxu0 0
        %2724 = vmatpush1.bf16.msra.mxu0 %v2703
        %2725 = vmatprep.subr.bf16.mxu0 0
        %2726 = vmatpush1.bf16.msra.mxu0 %v2704
        %2727 = vmatprep.subr.bf16.mxu0 0
        %2728 = vmatpush1.bf16.msra.mxu0 %v2705
        %2729 = vmatprep.subr.bf16.mxu0 0
        %2730 = vmatpush1.bf16.msra.mxu0 %v2706
        %2731 = vmatprep.subr.bf16.mxu0 0
        %2732 = vmatpush1.bf16.msra.mxu0 0
        %2733 = vmatprep.subr.bf16.mxu0 0
        %2734 = vmatpush1.bf16.msra.mxu0 0
        %2735 = vmatprep.subr.bf16.mxu0 0
        %2736 = vmatpush1.bf16.msra.mxu0 0
        %2737 = vmatprep.subr.bf16.mxu0 0
        %2738 = vmatpush1.bf16.msra.mxu0 0
        %2739 = vmatprep.subr.bf16.mxu0 0
        %2740 = vmatpush1.bf16.msra.mxu0 0
        %2741 = vmatprep.subr.bf16.mxu0 0
        %2742 = vmatpush1.bf16.msra.mxu0 0
        %2743 = vmatprep.subr.bf16.mxu0 0
        %2744 = vmatpush1.bf16.msra.mxu0 0
        %2745 = vmatprep.subr.bf16.mxu0 0
        %2746 = vmatpush1.bf16.msra.mxu0 0
        %2747 = vmatprep.mubr.bf16.mxu0 0
        %2748 = vmatmul.mubr.bf16.gmra.mrb[0].mxu0 %v1341
        %v2749 = vpop.f32.mrb[0].mxu0
        %v2750 = vadd.f32 0.0, %v2749
        %v2751 = vpop.f32.mrb[0].mxu0
        %v2752 = vpop.f32.mrb[0].mxu0
        %v2753 = vadd.f32 0.0, %v2752
        %v2754 = vpop.f32.mrb[0].mxu0
        %2755 = vmatprep.mubr.bf16.mxu0 0
        %2756 = vmatmul.mubr.bf16.gmra.mrb[0].mxu0 %v1342
        %v2757 = vpop.f32.mrb[0].mxu0
        %v2758 = vadd.f32 0.0, %v2757
        %v2759 = vpop.f32.mrb[0].mxu0
        %v2760 = vpop.f32.mrb[0].mxu0
        %v2761 = vadd.f32 0.0, %v2760
        %v2762 = vpop.f32.mrb[0].mxu0
        %2763 = vmatprep.mubr.bf16.mxu0 0
        %2764 = vmatmul.mubr.bf16.gmra.mrb[0].mxu0 %v1343
        %v2765 = vpop.f32.mrb[0].mxu0
        %v2766 = vadd.f32 0.0, %v2765
        %v2767 = vpop.f32.mrb[0].mxu0
        %v2768 = vpop.f32.mrb[0].mxu0
        %v2769 = vadd.f32 0.0, %v2768
        %v2770 = vpop.f32.mrb[0].mxu0
        %2771 = vmatprep.mubr.bf16.mxu0 0
        %2772 = vmatmul.mubr.bf16.gmra.mrb[0].mxu0 %v1344
        %v2773 = vpop.f32.mrb[0].mxu0
        %v2774 = vadd.f32 0.0, %v2773
        %v2775 = vpop.f32.mrb[0].mxu0
        %v2776 = vpop.f32.mrb[0].mxu0
        %v2777 = vadd.f32 0.0, %v2776
        %v2778 = vpop.f32.mrb[0].mxu0
        %2779 = vdwg.mxu0
        %s2780 = scalar_lea.vmem [#allocation19], 64
        %v2781 = vld [vmem:[%s2780] sm:$0xf]
        %v2782 = vld [vmem:[%s2780 + $0x4] sm:$0xf]
        %v2783 = vld [vmem:[%s2780 + $0x8] sm:$0xf]
        %v2784 = vld [vmem:[%s2780 + $0xc] sm:$0xf]
        %v2785 = vld [vmem:[%s2780 + $0x10] sm:$0xf]
        %v2786 = vld [vmem:[%s2780 + $0x14] sm:$0xf]
        %v2787 = vld [vmem:[%s2780 + $0x18] sm:$0xf]
        %v2788 = vld [vmem:[%s2780 + $0x1c] sm:$0xf]
        %v2789 = vld [vmem:[%s2780 + $0x20] sm:$0xf]
        %v2790 = vld [vmem:[%s2780 + $0x24] sm:$0xf]
        %v2791 = vld [vmem:[%s2780 + $0x28] sm:$0xf]
        %v2792 = vld [vmem:[%s2780 + $0x2c] sm:$0xf]
        %v2793 = vld [vmem:[%s2780 + $0x30] sm:$0xf]
        %v2794 = vld [vmem:[%s2780 + $0x34] sm:$0xf]
        %v2795 = vld [vmem:[%s2780 + $0x38] sm:$0xf]
        %v2796 = vld [vmem:[%s2780 + $0x3c] sm:$0xf]
        %v2813 = vunpack.c.l.b16 %v2781
        %v2814 = vunpack.c.l.b16 %v2782
        %v2815 = vunpack.c.l.b16 %v2783
        %v2816 = vunpack.c.l.b16 %v2784
        %v2817 = vunpack.c.l.b16 %v2785
        %v2818 = vunpack.c.l.b16 %v2786
        %v2819 = vunpack.c.l.b16 %v2787
        %v2820 = vunpack.c.l.b16 %v2788
        %v2821 = vunpack.c.l.b16 %v2789
        %v2822 = vunpack.c.l.b16 %v2790
        %v2823 = vunpack.c.l.b16 %v2791
        %v2824 = vunpack.c.l.b16 %v2792
        %v2825 = vunpack.c.l.b16 %v2793
        %v2826 = vunpack.c.l.b16 %v2794
        %v2827 = vunpack.c.l.b16 %v2795
        %v2828 = vunpack.c.l.b16 %v2796
        %v2829 = vpack.c.b16 %v2814, %v2813
        %v2830 = vpack.c.b16 %v2816, %v2815
        %v2831 = vpack.c.b16 %v2818, %v2817
        %v2832 = vpack.c.b16 %v2820, %v2819
        %v2833 = vpack.c.b16 %v2822, %v2821
        %v2834 = vpack.c.b16 %v2824, %v2823
        %v2835 = vpack.c.b16 %v2826, %v2825
        %v2836 = vpack.c.b16 %v2828, %v2827
        %2845 = vmatprep.subr.bf16.mxu0 0
        %2846 = vmatpush1.bf16.msra.mxu0 %v2829
        %2847 = vmatprep.subr.bf16.mxu0 0
        %2848 = vmatpush1.bf16.msra.mxu0 %v2830
        %2849 = vmatprep.subr.bf16.mxu0 0
        %2850 = vmatpush1.bf16.msra.mxu0 %v2831
        %2851 = vmatprep.subr.bf16.mxu0 0
        %2852 = vmatpush1.bf16.msra.mxu0 %v2832
        %2853 = vmatprep.subr.bf16.mxu0 0
        %2854 = vmatpush1.bf16.msra.mxu0 %v2833
        %2855 = vmatprep.subr.bf16.mxu0 0
        %2856 = vmatpush1.bf16.msra.mxu0 %v2834
        %2857 = vmatprep.subr.bf16.mxu0 0
        %2858 = vmatpush1.bf16.msra.mxu0 %v2835
        %2859 = vmatprep.subr.bf16.mxu0 0
        %2860 = vmatpush1.bf16.msra.mxu0 %v2836
        %2861 = vmatprep.subr.bf16.mxu0 0
        %2862 = vmatpush1.bf16.msra.mxu0 0
        %2863 = vmatprep.subr.bf16.mxu0 0
        %2864 = vmatpush1.bf16.msra.mxu0 0
        %2865 = vmatprep.subr.bf16.mxu0 0
        %2866 = vmatpush1.bf16.msra.mxu0 0
        %2867 = vmatprep.subr.bf16.mxu0 0
        %2868 = vmatpush1.bf16.msra.mxu0 0
        %2869 = vmatprep.subr.bf16.mxu0 0
        %2870 = vmatpush1.bf16.msra.mxu0 0
        %2871 = vmatprep.subr.bf16.mxu0 0
        %2872 = vmatpush1.bf16.msra.mxu0 0
        %2873 = vmatprep.subr.bf16.mxu0 0
        %2874 = vmatpush1.bf16.msra.mxu0 0
        %2875 = vmatprep.subr.bf16.mxu0 0
        %2876 = vmatpush1.bf16.msra.mxu0 0
        %2877 = vmatprep.mubr.bf16.mxu0 0
        %2878 = vmatmul.mubr.bf16.gmra.mrb[0].mxu0 %v1345
        %v2879 = vpop.f32.mrb[0].mxu0
        %v2880 = vadd.f32 0.0, %v2879
        %v2881 = vpop.f32.mrb[0].mxu0
        %v2882 = vpop.f32.mrb[0].mxu0
        %v2883 = vadd.f32 0.0, %v2882
        %v2884 = vpop.f32.mrb[0].mxu0
        %2885 = vmatprep.mubr.bf16.mxu0 0
        %2886 = vmatmul.mubr.bf16.gmra.mrb[0].mxu0 %v1346
        %v2887 = vpop.f32.mrb[0].mxu0
        %v2888 = vadd.f32 0.0, %v2887
        %v2889 = vpop.f32.mrb[0].mxu0
        %v2890 = vpop.f32.mrb[0].mxu0
        %v2891 = vadd.f32 0.0, %v2890
        %v2892 = vpop.f32.mrb[0].mxu0
        %2893 = vmatprep.mubr.bf16.mxu0 0
        %2894 = vmatmul.mubr.bf16.gmra.mrb[0].mxu0 %v1347
        %v2895 = vpop.f32.mrb[0].mxu0
        %v2896 = vadd.f32 0.0, %v2895
        %v2897 = vpop.f32.mrb[0].mxu0
        %v2898 = vpop.f32.mrb[0].mxu0
        %v2899 = vadd.f32 0.0, %v2898
        %v2900 = vpop.f32.mrb[0].mxu0
        %2901 = vmatprep.mubr.bf16.mxu0 0
        %2902 = vmatmul.mubr.bf16.gmra.mrb[0].mxu0 %v1348
        %v2903 = vpop.f32.mrb[0].mxu0
        %v2904 = vadd.f32 0.0, %v2903
        %v2905 = vpop.f32.mrb[0].mxu0
        %v2906 = vpop.f32.mrb[0].mxu0
        %v2907 = vadd.f32 0.0, %v2906
        %v2908 = vpop.f32.mrb[0].mxu0
        %2909 = vdwg.mxu0
        %s2910 = scalar_lea.vmem [#allocation21], 64
        %v2911 = vld [vmem:[%s2910] sm:$0xf]
        %v2912 = vld [vmem:[%s2910 + $0x4] sm:$0xf]
        %v2913 = vld [vmem:[%s2910 + $0x8] sm:$0xf]
        %v2914 = vld [vmem:[%s2910 + $0xc] sm:$0xf]
        %v2915 = vld [vmem:[%s2910 + $0x10] sm:$0xf]
        %v2916 = vld [vmem:[%s2910 + $0x14] sm:$0xf]
        %v2917 = vld [vmem:[%s2910 + $0x18] sm:$0xf]
        %v2918 = vld [vmem:[%s2910 + $0x1c] sm:$0xf]
        %v2919 = vld [vmem:[%s2910 + $0x20] sm:$0xf]
        %v2920 = vld [vmem:[%s2910 + $0x24] sm:$0xf]
        %v2921 = vld [vmem:[%s2910 + $0x28] sm:$0xf]
        %v2922 = vld [vmem:[%s2910 + $0x2c] sm:$0xf]
        %v2923 = vld [vmem:[%s2910 + $0x30] sm:$0xf]
        %v2924 = vld [vmem:[%s2910 + $0x34] sm:$0xf]
        %v2925 = vld [vmem:[%s2910 + $0x38] sm:$0xf]
        %v2926 = vld [vmem:[%s2910 + $0x3c] sm:$0xf]
        %v2943 = vunpack.c.l.b16 %v2911
        %v2944 = vunpack.c.l.b16 %v2912
        %v2945 = vunpack.c.l.b16 %v2913
        %v2946 = vunpack.c.l.b16 %v2914
        %v2947 = vunpack.c.l.b16 %v2915
        %v2948 = vunpack.c.l.b16 %v2916
        %v2949 = vunpack.c.l.b16 %v2917
        %v2950 = vunpack.c.l.b16 %v2918
        %v2951 = vunpack.c.l.b16 %v2919
        %v2952 = vunpack.c.l.b16 %v2920
        %v2953 = vunpack.c.l.b16 %v2921
        %v2954 = vunpack.c.l.b16 %v2922
        %v2955 = vunpack.c.l.b16 %v2923
        %v2956 = vunpack.c.l.b16 %v2924
        %v2957 = vunpack.c.l.b16 %v2925
        %v2958 = vunpack.c.l.b16 %v2926
        %v2959 = vpack.c.b16 %v2944, %v2943
        %v2960 = vpack.c.b16 %v2946, %v2945
        %v2961 = vpack.c.b16 %v2948, %v2947
        %v2962 = vpack.c.b16 %v2950, %v2949
        %v2963 = vpack.c.b16 %v2952, %v2951
        %v2964 = vpack.c.b16 %v2954, %v2953
        %v2965 = vpack.c.b16 %v2956, %v2955
        %v2966 = vpack.c.b16 %v2958, %v2957
        %2975 = vmatprep.subr.bf16.mxu0 0
        %2976 = vmatpush1.bf16.msra.mxu0 %v2959
        %2977 = vmatprep.subr.bf16.mxu0 0
        %2978 = vmatpush1.bf16.msra.mxu0 %v2960
        %2979 = vmatprep.subr.bf16.mxu0 0
        %2980 = vmatpush1.bf16.msra.mxu0 %v2961
        %2981 = vmatprep.subr.bf16.mxu0 0
        %2982 = vmatpush1.bf16.msra.mxu0 %v2962
        %2983 = vmatprep.subr.bf16.mxu0 0
        %2984 = vmatpush1.bf16.msra.mxu0 %v2963
        %2985 = vmatprep.subr.bf16.mxu0 0
        %2986 = vmatpush1.bf16.msra.mxu0 %v2964
        %2987 = vmatprep.subr.bf16.mxu0 0
        %2988 = vmatpush1.bf16.msra.mxu0 %v2965
        %2989 = vmatprep.subr.bf16.mxu0 0
        %2990 = vmatpush1.bf16.msra.mxu0 %v2966
        %2991 = vmatprep.subr.bf16.mxu0 0
        %2992 = vmatpush1.bf16.msra.mxu0 0
        %2993 = vmatprep.subr.bf16.mxu0 0
        %2994 = vmatpush1.bf16.msra.mxu0 0
        %2995 = vmatprep.subr.bf16.mxu0 0
        %2996 = vmatpush1.bf16.msra.mxu0 0
        %2997 = vmatprep.subr.bf16.mxu0 0
        %2998 = vmatpush1.bf16.msra.mxu0 0
        %2999 = vmatprep.subr.bf16.mxu0 0
        %3000 = vmatpush1.bf16.msra.mxu0 0
        %3001 = vmatprep.subr.bf16.mxu0 0
        %3002 = vmatpush1.bf16.msra.mxu0 0
        %3003 = vmatprep.subr.bf16.mxu0 0
        %3004 = vmatpush1.bf16.msra.mxu0 0
        %3005 = vmatprep.subr.bf16.mxu0 0
        %3006 = vmatpush1.bf16.msra.mxu0 0
        %3007 = vmatprep.mubr.bf16.mxu0 0
        %3008 = vmatmul.mubr.bf16.gmra.mrb[0].mxu0 %v1349
        %v3009 = vpop.f32.mrb[0].mxu0
        %v3010 = vadd.f32 0.0, %v3009
        %v3011 = vpop.f32.mrb[0].mxu0
        %v3012 = vpop.f32.mrb[0].mxu0
        %v3013 = vadd.f32 0.0, %v3012
        %v3014 = vpop.f32.mrb[0].mxu0
        %3015 = vmatprep.mubr.bf16.mxu0 0
        %3016 = vmatmul.mubr.bf16.gmra.mrb[0].mxu0 %v1350
        %v3017 = vpop.f32.mrb[0].mxu0
        %v3018 = vadd.f32 0.0, %v3017
        %v3019 = vpop.f32.mrb[0].mxu0
        %v3020 = vpop.f32.mrb[0].mxu0
        %v3021 = vadd.f32 0.0, %v3020
        %v3022 = vpop.f32.mrb[0].mxu0
        %3023 = vmatprep.mubr.bf16.mxu0 0
        %3024 = vmatmul.mubr.bf16.gmra.mrb[0].mxu0 %v1351
        %v3025 = vpop.f32.mrb[0].mxu0
        %v3026 = vadd.f32 0.0, %v3025
        %v3027 = vpop.f32.mrb[0].mxu0
        %v3028 = vpop.f32.mrb[0].mxu0
        %v3029 = vadd.f32 0.0, %v3028
        %v3030 = vpop.f32.mrb[0].mxu0
        %3031 = vmatprep.mubr.bf16.mxu0 0
        %3032 = vmatmul.mubr.bf16.gmra.mrb[0].mxu0 %v1352
        %v3033 = vpop.f32.mrb[0].mxu0
        %v3034 = vadd.f32 0.0, %v3033
        %v3035 = vpop.f32.mrb[0].mxu0
        %v3036 = vpop.f32.mrb[0].mxu0
        %v3037 = vadd.f32 0.0, %v3036
        %v3038 = vpop.f32.mrb[0].mxu0
        %3039 = vdwg.mxu0
        %v3040 = vpack.c.bf16 %v3013, %v3010
        %v3041 = vpack.c.bf16 %v3021, %v3018
        %v3042 = vpack.c.bf16 %v3029, %v3026
        %v3043 = vpack.c.bf16 %v3037, %v3034
        %v3044 = vpack.c.bf16 %v2750, %v2750
        %v3045 = vpack.c.bf16 %v2753, %v2753
        %v3046 = vpack.c.bf16 %v2758, %v2758
        %v3047 = vpack.c.bf16 %v2761, %v2761
        %v3048 = vpack.c.bf16 %v2766, %v2766
        %v3049 = vpack.c.bf16 %v2769, %v2769
        %v3050 = vpack.c.bf16 %v2774, %v2774
        %v3051 = vpack.c.bf16 %v2777, %v2777
        %v3052 = vpack.c.bf16 %v2880, %v2880
        %v3053 = vpack.c.bf16 %v2883, %v2883
        %v3054 = vpack.c.bf16 %v2888, %v2888
        %v3055 = vpack.c.bf16 %v2891, %v2891
        %v3056 = vpack.c.bf16 %v2896, %v2896
        %v3057 = vpack.c.bf16 %v2899, %v2899
        %v3058 = vpack.c.bf16 %v2904, %v2904
        %v3059 = vpack.c.bf16 %v2907, %v2907
        %v3064 = vunpack.c.l.b16 %v3040
        %v3065 = vunpack.c.h.b16 %v3040
        %v3066 = vunpack.c.l.b16 %v3041
        %v3067 = vunpack.c.h.b16 %v3041
        %v3068 = vunpack.c.l.b16 %v3042
        %v3069 = vunpack.c.h.b16 %v3042
        %v3070 = vunpack.c.l.b16 %v3043
        %v3071 = vunpack.c.h.b16 %v3043
        %v3072 = vpack.c.b16 %v3064, %v3064
        %v3073 = vpack.c.b16 %v3065, %v3065
        %v3074 = vpack.c.b16 %v3066, %v3066
        %v3075 = vpack.c.b16 %v3067, %v3067
        %v3076 = vpack.c.b16 %v3068, %v3068
        %v3077 = vpack.c.b16 %v3069, %v3069
        %v3078 = vpack.c.b16 %v3070, %v3070
        %v3079 = vpack.c.b16 %v3071, %v3071
        %v3081 = vsel %vm1785, %v3044, 0
        %v3084 = vsel %vm1785, %v3052, 0
        %3086 = vmatprep.subr.bf16.mxu0 0
        %3087 = vmatpush1.bf16.xpose.msra.mxu0 %v3084
        %3088 = vmatprep.subr.bf16.mxu0 0
        %3089 = vmatpush1.bf16.xpose.msra.mxu0 0
        %3090 = vmatprep.subr.bf16.mxu0 0
        %3091 = vmatpush1.bf16.xpose.msra.mxu0 0
        %3092 = vmatprep.subr.bf16.mxu0 0
        %3093 = vmatpush1.bf16.xpose.msra.mxu0 0
        %3094 = vmatprep.subr.bf16.mxu0 0
        %3095 = vmatpush1.bf16.xpose.msra.mxu0 0
        %3096 = vmatprep.subr.bf16.mxu0 0
        %3097 = vmatpush1.bf16.xpose.msra.mxu0 0
        %3098 = vmatprep.subr.bf16.mxu0 0
        %3099 = vmatpush1.bf16.xpose.msra.mxu0 0
        %3100 = vmatprep.subr.bf16.mxu0 0
        %3101 = vmatpush1.bf16.xpose.msra.mxu0 0
        %3102 = vmatprep.subr.bf16.mxu0 0
        %3103 = vmatpush1.bf16.xpose.msra.mxu0 0
        %3104 = vmatprep.subr.bf16.mxu0 0
        %3105 = vmatpush1.bf16.xpose.msra.mxu0 0
        %3106 = vmatprep.subr.bf16.mxu0 0
        %3107 = vmatpush1.bf16.xpose.msra.mxu0 0
        %3108 = vmatprep.subr.bf16.mxu0 0
        %3109 = vmatpush1.bf16.xpose.msra.mxu0 0
        %3110 = vmatprep.subr.bf16.mxu0 0
        %3111 = vmatpush1.bf16.xpose.msra.mxu0 0
        %3112 = vmatprep.subr.bf16.mxu0 0
        %3113 = vmatpush1.bf16.xpose.msra.mxu0 0
        %3114 = vmatprep.subr.bf16.mxu0 0
        %3115 = vmatpush1.bf16.xpose.msra.mxu0 0
        %3116 = vmatprep.subr.bf16.mxu0 0
        %3117 = vmatpush1.bf16.xpose.msra.mxu0 0
        %3118 = vmatprep.mubr.bf16.mxu0 0
        %3119 = vmatmul.mubr.bf16.gmra.mrb[0].mxu0 %v3081
        %v3120 = vpop.f32.mrb[0].mxu0
        %v3121 = vadd.f32 0.0, %v3120
        %v3122 = vpop.f32.mrb[0].mxu0
        %v3123 = vpop.f32.mrb[0].mxu0
        %v3124 = vpop.f32.mrb[0].mxu0
        %3125 = vdwg.mxu0
        %v3127 = vsel %vm1785, %v3045, 0
        %v3130 = vsel %vm1785, %v3053, 0
        %3132 = vmatprep.subr.bf16.mxu0 0
        %3133 = vmatpush1.bf16.xpose.msra.mxu0 %v3130
        %3134 = vmatprep.subr.bf16.mxu0 0
        %3135 = vmatpush1.bf16.xpose.msra.mxu0 0
        %3136 = vmatprep.subr.bf16.mxu0 0
        %3137 = vmatpush1.bf16.xpose.msra.mxu0 0
        %3138 = vmatprep.subr.bf16.mxu0 0
        %3139 = vmatpush1.bf16.xpose.msra.mxu0 0
        %3140 = vmatprep.subr.bf16.mxu0 0
        %3141 = vmatpush1.bf16.xpose.msra.mxu0 0
        %3142 = vmatprep.subr.bf16.mxu0 0
        %3143 = vmatpush1.bf16.xpose.msra.mxu0 0
        %3144 = vmatprep.subr.bf16.mxu0 0
        %3145 = vmatpush1.bf16.xpose.msra.mxu0 0
        %3146 = vmatprep.subr.bf16.mxu0 0
        %3147 = vmatpush1.bf16.xpose.msra.mxu0 0
        %3148 = vmatprep.subr.bf16.mxu0 0
        %3149 = vmatpush1.bf16.xpose.msra.mxu0 0
        %3150 = vmatprep.subr.bf16.mxu0 0
        %3151 = vmatpush1.bf16.xpose.msra.mxu0 0
        %3152 = vmatprep.subr.bf16.mxu0 0
        %3153 = vmatpush1.bf16.xpose.msra.mxu0 0
        %3154 = vmatprep.subr.bf16.mxu0 0
        %3155 = vmatpush1.bf16.xpose.msra.mxu0 0
        %3156 = vmatprep.subr.bf16.mxu0 0
        %3157 = vmatpush1.bf16.xpose.msra.mxu0 0
        %3158 = vmatprep.subr.bf16.mxu0 0
        %3159 = vmatpush1.bf16.xpose.msra.mxu0 0
        %3160 = vmatprep.subr.bf16.mxu0 0
        %3161 = vmatpush1.bf16.xpose.msra.mxu0 0
        %3162 = vmatprep.subr.bf16.mxu0 0
        %3163 = vmatpush1.bf16.xpose.msra.mxu0 0
        %3164 = vmatprep.mubr.bf16.mxu0 0
        %3165 = vmatmul.mubr.bf16.gmra.mrb[0].mxu0 %v3127
        %v3166 = vpop.f32.mrb[0].mxu0
        %v3167 = vadd.f32 0.0, %v3166
        %v3168 = vpop.f32.mrb[0].mxu0
        %v3169 = vpop.f32.mrb[0].mxu0
        %v3170 = vpop.f32.mrb[0].mxu0
        %3171 = vdwg.mxu0
        %v3173 = vsel %vm1785, %v3046, 0
        %v3176 = vsel %vm1785, %v3054, 0
        %3178 = vmatprep.subr.bf16.mxu0 0
        %3179 = vmatpush1.bf16.xpose.msra.mxu0 %v3176
        %3180 = vmatprep.subr.bf16.mxu0 0
        %3181 = vmatpush1.bf16.xpose.msra.mxu0 0
        %3182 = vmatprep.subr.bf16.mxu0 0
        %3183 = vmatpush1.bf16.xpose.msra.mxu0 0
        %3184 = vmatprep.subr.bf16.mxu0 0
        %3185 = vmatpush1.bf16.xpose.msra.mxu0 0
        %3186 = vmatprep.subr.bf16.mxu0 0
        %3187 = vmatpush1.bf16.xpose.msra.mxu0 0
        %3188 = vmatprep.subr.bf16.mxu0 0
        %3189 = vmatpush1.bf16.xpose.msra.mxu0 0
        %3190 = vmatprep.subr.bf16.mxu0 0
        %3191 = vmatpush1.bf16.xpose.msra.mxu0 0
        %3192 = vmatprep.subr.bf16.mxu0 0
        %3193 = vmatpush1.bf16.xpose.msra.mxu0 0
        %3194 = vmatprep.subr.bf16.mxu0 0
        %3195 = vmatpush1.bf16.xpose.msra.mxu0 0
        %3196 = vmatprep.subr.bf16.mxu0 0
        %3197 = vmatpush1.bf16.xpose.msra.mxu0 0
        %3198 = vmatprep.subr.bf16.mxu0 0
        %3199 = vmatpush1.bf16.xpose.msra.mxu0 0
        %3200 = vmatprep.subr.bf16.mxu0 0
        %3201 = vmatpush1.bf16.xpose.msra.mxu0 0
        %3202 = vmatprep.subr.bf16.mxu0 0
        %3203 = vmatpush1.bf16.xpose.msra.mxu0 0
        %3204 = vmatprep.subr.bf16.mxu0 0
        %3205 = vmatpush1.bf16.xpose.msra.mxu0 0
        %3206 = vmatprep.subr.bf16.mxu0 0
        %3207 = vmatpush1.bf16.xpose.msra.mxu0 0
        %3208 = vmatprep.subr.bf16.mxu0 0
        %3209 = vmatpush1.bf16.xpose.msra.mxu0 0
        %3210 = vmatprep.mubr.bf16.mxu0 0
        %3211 = vmatmul.mubr.bf16.gmra.mrb[0].mxu0 %v3173
        %v3212 = vpop.f32.mrb[0].mxu0
        %v3213 = vadd.f32 0.0, %v3212
        %v3214 = vpop.f32.mrb[0].mxu0
        %v3215 = vpop.f32.mrb[0].mxu0
        %v3216 = vpop.f32.mrb[0].mxu0
        %3217 = vdwg.mxu0
        %v3219 = vsel %vm1785, %v3047, 0
        %v3222 = vsel %vm1785, %v3055, 0
        %3224 = vmatprep.subr.bf16.mxu0 0
        %3225 = vmatpush1.bf16.xpose.msra.mxu0 %v3222
        %3226 = vmatprep.subr.bf16.mxu0 0
        %3227 = vmatpush1.bf16.xpose.msra.mxu0 0
        %3228 = vmatprep.subr.bf16.mxu0 0
        %3229 = vmatpush1.bf16.xpose.msra.mxu0 0
        %3230 = vmatprep.subr.bf16.mxu0 0
        %3231 = vmatpush1.bf16.xpose.msra.mxu0 0
        %3232 = vmatprep.subr.bf16.mxu0 0
        %3233 = vmatpush1.bf16.xpose.msra.mxu0 0
        %3234 = vmatprep.subr.bf16.mxu0 0
        %3235 = vmatpush1.bf16.xpose.msra.mxu0 0
        %3236 = vmatprep.subr.bf16.mxu0 0
        %3237 = vmatpush1.bf16.xpose.msra.mxu0 0
        %3238 = vmatprep.subr.bf16.mxu0 0
        %3239 = vmatpush1.bf16.xpose.msra.mxu0 0
        %3240 = vmatprep.subr.bf16.mxu0 0
        %3241 = vmatpush1.bf16.xpose.msra.mxu0 0
        %3242 = vmatprep.subr.bf16.mxu0 0
        %3243 = vmatpush1.bf16.xpose.msra.mxu0 0
        %3244 = vmatprep.subr.bf16.mxu0 0
        %3245 = vmatpush1.bf16.xpose.msra.mxu0 0
        %3246 = vmatprep.subr.bf16.mxu0 0
        %3247 = vmatpush1.bf16.xpose.msra.mxu0 0
        %3248 = vmatprep.subr.bf16.mxu0 0
        %3249 = vmatpush1.bf16.xpose.msra.mxu0 0
        %3250 = vmatprep.subr.bf16.mxu0 0
        %3251 = vmatpush1.bf16.xpose.msra.mxu0 0
        %3252 = vmatprep.subr.bf16.mxu0 0
        %3253 = vmatpush1.bf16.xpose.msra.mxu0 0
        %3254 = vmatprep.subr.bf16.mxu0 0
        %3255 = vmatpush1.bf16.xpose.msra.mxu0 0
        %3256 = vmatprep.mubr.bf16.mxu0 0
        %3257 = vmatmul.mubr.bf16.gmra.mrb[0].mxu0 %v3219
        %v3258 = vpop.f32.mrb[0].mxu0
        %v3259 = vadd.f32 0.0, %v3258
        %v3260 = vpop.f32.mrb[0].mxu0
        %v3261 = vpop.f32.mrb[0].mxu0
        %v3262 = vpop.f32.mrb[0].mxu0
        %3263 = vdwg.mxu0
        %v3265 = vsel %vm1785, %v3048, 0
        %v3268 = vsel %vm1785, %v3056, 0
        %3270 = vmatprep.subr.bf16.mxu0 0
        %3271 = vmatpush1.bf16.xpose.msra.mxu0 %v3268
        %3272 = vmatprep.subr.bf16.mxu0 0
        %3273 = vmatpush1.bf16.xpose.msra.mxu0 0
        %3274 = vmatprep.subr.bf16.mxu0 0
        %3275 = vmatpush1.bf16.xpose.msra.mxu0 0
        %3276 = vmatprep.subr.bf16.mxu0 0
        %3277 = vmatpush1.bf16.xpose.msra.mxu0 0
        %3278 = vmatprep.subr.bf16.mxu0 0
        %3279 = vmatpush1.bf16.xpose.msra.mxu0 0
        %3280 = vmatprep.subr.bf16.mxu0 0
        %3281 = vmatpush1.bf16.xpose.msra.mxu0 0
        %3282 = vmatprep.subr.bf16.mxu0 0
        %3283 = vmatpush1.bf16.xpose.msra.mxu0 0
        %3284 = vmatprep.subr.bf16.mxu0 0
        %3285 = vmatpush1.bf16.xpose.msra.mxu0 0
        %3286 = vmatprep.subr.bf16.mxu0 0
        %3287 = vmatpush1.bf16.xpose.msra.mxu0 0
        %3288 = vmatprep.subr.bf16.mxu0 0
        %3289 = vmatpush1.bf16.xpose.msra.mxu0 0
        %3290 = vmatprep.subr.bf16.mxu0 0
        %3291 = vmatpush1.bf16.xpose.msra.mxu0 0
        %3292 = vmatprep.subr.bf16.mxu0 0
        %3293 = vmatpush1.bf16.xpose.msra.mxu0 0
        %3294 = vmatprep.subr.bf16.mxu0 0
        %3295 = vmatpush1.bf16.xpose.msra.mxu0 0
        %3296 = vmatprep.subr.bf16.mxu0 0
        %3297 = vmatpush1.bf16.xpose.msra.mxu0 0
        %3298 = vmatprep.subr.bf16.mxu0 0
        %3299 = vmatpush1.bf16.xpose.msra.mxu0 0
        %3300 = vmatprep.subr.bf16.mxu0 0
        %3301 = vmatpush1.bf16.xpose.msra.mxu0 0
        %3302 = vmatprep.mubr.bf16.mxu0 0
        %3303 = vmatmul.mubr.bf16.gmra.mrb[0].mxu0 %v3265
        %v3304 = vpop.f32.mrb[0].mxu0
        %v3305 = vadd.f32 0.0, %v3304
        %v3306 = vpop.f32.mrb[0].mxu0
        %v3307 = vpop.f32.mrb[0].mxu0
        %v3308 = vpop.f32.mrb[0].mxu0
        %3309 = vdwg.mxu0
        %v3311 = vsel %vm1785, %v3049, 0
        %v3314 = vsel %vm1785, %v3057, 0
        %3316 = vmatprep.subr.bf16.mxu0 0
        %3317 = vmatpush1.bf16.xpose.msra.mxu0 %v3314
        %3318 = vmatprep.subr.bf16.mxu0 0
        %3319 = vmatpush1.bf16.xpose.msra.mxu0 0
        %3320 = vmatprep.subr.bf16.mxu0 0
        %3321 = vmatpush1.bf16.xpose.msra.mxu0 0
        %3322 = vmatprep.subr.bf16.mxu0 0
        %3323 = vmatpush1.bf16.xpose.msra.mxu0 0
        %3324 = vmatprep.subr.bf16.mxu0 0
        %3325 = vmatpush1.bf16.xpose.msra.mxu0 0
        %3326 = vmatprep.subr.bf16.mxu0 0
        %3327 = vmatpush1.bf16.xpose.msra.mxu0 0
        %3328 = vmatprep.subr.bf16.mxu0 0
        %3329 = vmatpush1.bf16.xpose.msra.mxu0 0
        %3330 = vmatprep.subr.bf16.mxu0 0
        %3331 = vmatpush1.bf16.xpose.msra.mxu0 0
        %3332 = vmatprep.subr.bf16.mxu0 0
        %3333 = vmatpush1.bf16.xpose.msra.mxu0 0
        %3334 = vmatprep.subr.bf16.mxu0 0
        %3335 = vmatpush1.bf16.xpose.msra.mxu0 0
        %3336 = vmatprep.subr.bf16.mxu0 0
        %3337 = vmatpush1.bf16.xpose.msra.mxu0 0
        %3338 = vmatprep.subr.bf16.mxu0 0
        %3339 = vmatpush1.bf16.xpose.msra.mxu0 0
        %3340 = vmatprep.subr.bf16.mxu0 0
        %3341 = vmatpush1.bf16.xpose.msra.mxu0 0
        %3342 = vmatprep.subr.bf16.mxu0 0
        %3343 = vmatpush1.bf16.xpose.msra.mxu0 0
        %3344 = vmatprep.subr.bf16.mxu0 0
        %3345 = vmatpush1.bf16.xpose.msra.mxu0 0
        %3346 = vmatprep.subr.bf16.mxu0 0
        %3347 = vmatpush1.bf16.xpose.msra.mxu0 0
        %3348 = vmatprep.mubr.bf16.mxu0 0
        %3349 = vmatmul.mubr.bf16.gmra.mrb[0].mxu0 %v3311
        %v3350 = vpop.f32.mrb[0].mxu0
        %v3351 = vadd.f32 0.0, %v3350
        %v3352 = vpop.f32.mrb[0].mxu0
        %v3353 = vpop.f32.mrb[0].mxu0
        %v3354 = vpop.f32.mrb[0].mxu0
        %3355 = vdwg.mxu0
        %v3357 = vsel %vm1785, %v3050, 0
        %v3360 = vsel %vm1785, %v3058, 0
        %3362 = vmatprep.subr.bf16.mxu0 0
        %3363 = vmatpush1.bf16.xpose.msra.mxu0 %v3360
        %3364 = vmatprep.subr.bf16.mxu0 0
        %3365 = vmatpush1.bf16.xpose.msra.mxu0 0
        %3366 = vmatprep.subr.bf16.mxu0 0
        %3367 = vmatpush1.bf16.xpose.msra.mxu0 0
        %3368 = vmatprep.subr.bf16.mxu0 0
        %3369 = vmatpush1.bf16.xpose.msra.mxu0 0
        %3370 = vmatprep.subr.bf16.mxu0 0
        %3371 = vmatpush1.bf16.xpose.msra.mxu0 0
        %3372 = vmatprep.subr.bf16.mxu0 0
        %3373 = vmatpush1.bf16.xpose.msra.mxu0 0
        %3374 = vmatprep.subr.bf16.mxu0 0
        %3375 = vmatpush1.bf16.xpose.msra.mxu0 0
        %3376 = vmatprep.subr.bf16.mxu0 0
        %3377 = vmatpush1.bf16.xpose.msra.mxu0 0
        %3378 = vmatprep.subr.bf16.mxu0 0
        %3379 = vmatpush1.bf16.xpose.msra.mxu0 0
        %3380 = vmatprep.subr.bf16.mxu0 0
        %3381 = vmatpush1.bf16.xpose.msra.mxu0 0
        %3382 = vmatprep.subr.bf16.mxu0 0
        %3383 = vmatpush1.bf16.xpose.msra.mxu0 0
        %3384 = vmatprep.subr.bf16.mxu0 0
        %3385 = vmatpush1.bf16.xpose.msra.mxu0 0
        %3386 = vmatprep.subr.bf16.mxu0 0
        %3387 = vmatpush1.bf16.xpose.msra.mxu0 0
        %3388 = vmatprep.subr.bf16.mxu0 0
        %3389 = vmatpush1.bf16.xpose.msra.mxu0 0
        %3390 = vmatprep.subr.bf16.mxu0 0
        %3391 = vmatpush1.bf16.xpose.msra.mxu0 0
        %3392 = vmatprep.subr.bf16.mxu0 0
        %3393 = vmatpush1.bf16.xpose.msra.mxu0 0
        %3394 = vmatprep.mubr.bf16.mxu0 0
        %3395 = vmatmul.mubr.bf16.gmra.mrb[0].mxu0 %v3357
        %v3396 = vpop.f32.mrb[0].mxu0
        %v3397 = vadd.f32 0.0, %v3396
        %v3398 = vpop.f32.mrb[0].mxu0
        %v3399 = vpop.f32.mrb[0].mxu0
        %v3400 = vpop.f32.mrb[0].mxu0
        %3401 = vdwg.mxu0
        %v3403 = vsel %vm1785, %v3051, 0
        %v3406 = vsel %vm1785, %v3059, 0
        %3408 = vmatprep.subr.bf16.mxu0 0
        %3409 = vmatpush1.bf16.xpose.msra.mxu0 %v3406
        %3410 = vmatprep.subr.bf16.mxu0 0
        %3411 = vmatpush1.bf16.xpose.msra.mxu0 0
        %3412 = vmatprep.subr.bf16.mxu0 0
        %3413 = vmatpush1.bf16.xpose.msra.mxu0 0
        %3414 = vmatprep.subr.bf16.mxu0 0
        %3415 = vmatpush1.bf16.xpose.msra.mxu0 0
        %3416 = vmatprep.subr.bf16.mxu0 0
        %3417 = vmatpush1.bf16.xpose.msra.mxu0 0
        %3418 = vmatprep.subr.bf16.mxu0 0
        %3419 = vmatpush1.bf16.xpose.msra.mxu0 0
        %3420 = vmatprep.subr.bf16.mxu0 0
        %3421 = vmatpush1.bf16.xpose.msra.mxu0 0
        %3422 = vmatprep.subr.bf16.mxu0 0
        %3423 = vmatpush1.bf16.xpose.msra.mxu0 0
        %3424 = vmatprep.subr.bf16.mxu0 0
        %3425 = vmatpush1.bf16.xpose.msra.mxu0 0
        %3426 = vmatprep.subr.bf16.mxu0 0
        %3427 = vmatpush1.bf16.xpose.msra.mxu0 0
        %3428 = vmatprep.subr.bf16.mxu0 0
        %3429 = vmatpush1.bf16.xpose.msra.mxu0 0
        %3430 = vmatprep.subr.bf16.mxu0 0
        %3431 = vmatpush1.bf16.xpose.msra.mxu0 0
        %3432 = vmatprep.subr.bf16.mxu0 0
        %3433 = vmatpush1.bf16.xpose.msra.mxu0 0
        %3434 = vmatprep.subr.bf16.mxu0 0
        %3435 = vmatpush1.bf16.xpose.msra.mxu0 0
        %3436 = vmatprep.subr.bf16.mxu0 0
        %3437 = vmatpush1.bf16.xpose.msra.mxu0 0
        %3438 = vmatprep.subr.bf16.mxu0 0
        %3439 = vmatpush1.bf16.xpose.msra.mxu0 0
        %3440 = vmatprep.mubr.bf16.mxu0 0
        %3441 = vmatmul.mubr.bf16.gmra.mrb[0].mxu0 %v3403
        %v3442 = vpop.f32.mrb[0].mxu0
        %v3443 = vadd.f32 0.0, %v3442
        %v3444 = vpop.f32.mrb[0].mxu0
        %v3445 = vpop.f32.mrb[0].mxu0
        %v3446 = vpop.f32.mrb[0].mxu0
        %3447 = vdwg.mxu0
        %v3448 = vmul.f32 %v3121, 0.17677669
        %v3449 = vmul.f32 %v3167, 0.17677669
        %v3450 = vmul.f32 %v3213, 0.17677669
        %v3451 = vmul.f32 %v3259, 0.17677669
        %v3452 = vmul.f32 %v3305, 0.17677669
        %v3453 = vmul.f32 %v3351, 0.17677669
        %v3454 = vmul.f32 %v3397, 0.17677669
        %v3455 = vmul.f32 %v3443, 0.17677669
        %v3456 = vsel %vm2163, -1e+32, %v3448
        %v3457 = vsel %vm2163, -1e+32, %v3449
        %v3458 = vsel %vm2163, -1e+32, %v3450
        %v3459 = vsel %vm2163, -1e+32, %v3451
        %v3460 = vsel %vm2163, -1e+32, %v3452
        %v3461 = vsel %vm2163, -1e+32, %v3453
        %v3462 = vsel %vm2163, -1e+32, %v3454
        %v3463 = vsel %vm2163, -1e+32, %v3455
        %v3464 = vsel %vm2172, %v3456, -inf
        %3465 = vmax.xlane.f32.xlu0 %v3464
        %v3466 = vpop.xlane.xlu0 %3465
        %v3467 = vsel %vm2172, %v3457, -inf
        %3468 = vmax.xlane.f32.xlu0 %v3467
        %v3469 = vpop.xlane.xlu0 %3468
        %v3470 = vsel %vm2172, %v3458, -inf
        %3471 = vmax.xlane.f32.xlu0 %v3470
        %v3472 = vpop.xlane.xlu0 %3471
        %v3473 = vsel %vm2172, %v3459, -inf
        %3474 = vmax.xlane.f32.xlu0 %v3473
        %v3475 = vpop.xlane.xlu0 %3474
        %v3476 = vsel %vm2172, %v3460, -inf
        %3477 = vmax.xlane.f32.xlu0 %v3476
        %v3478 = vpop.xlane.xlu0 %3477
        %v3479 = vsel %vm2172, %v3461, -inf
        %3480 = vmax.xlane.f32.xlu0 %v3479
        %v3481 = vpop.xlane.xlu0 %3480
        %v3482 = vsel %vm2172, %v3462, -inf
        %3483 = vmax.xlane.f32.xlu0 %v3482
        %v3484 = vpop.xlane.xlu0 %3483
        %v3485 = vsel %vm2172, %v3463, -inf
        %3486 = vmax.xlane.f32.xlu0 %v3485
        %v3487 = vpop.xlane.xlu0 %3486
        %v3488 = vsub.f32 %v3456, %v3466
        %v3489 = vsub.f32 %v3457, %v3469
        %v3490 = vsub.f32 %v3458, %v3472
        %v3491 = vsub.f32 %v3459, %v3475
        %v3492 = vsub.f32 %v3460, %v3478
        %v3493 = vsub.f32 %v3461, %v3481
        %v3494 = vsub.f32 %v3462, %v3484
        %v3495 = vsub.f32 %v3463, %v3487
        %v3496 = vmul.f32 %v3488, 1.442695
        %v3497 = vpow.pop %v3496
        %v3498 = vmul.f32 %v3489, 1.442695
        %v3499 = vpow.pop %v3498
        %v3500 = vmul.f32 %v3490, 1.442695
        %v3501 = vpow.pop %v3500
        %v3502 = vmul.f32 %v3491, 1.442695
        %v3503 = vpow.pop %v3502
        %v3504 = vmul.f32 %v3492, 1.442695
        %v3505 = vpow.pop %v3504
        %v3506 = vmul.f32 %v3493, 1.442695
        %v3507 = vpow.pop %v3506
        %v3508 = vmul.f32 %v3494, 1.442695
        %v3509 = vpow.pop %v3508
        %v3510 = vmul.f32 %v3495, 1.442695
        %v3511 = vpow.pop %v3510
        %v3512 = vsel %vm2172, %v3497, 0.0
        %3513 = vadd.xlane.f32.xlu0 %v3512
        %v3514 = vpop.xlane.xlu0 %3513
        %v3515 = vsel %vm2172, %v3499, 0.0
        %3516 = vadd.xlane.f32.xlu0 %v3515
        %v3517 = vpop.xlane.xlu0 %3516
        %v3518 = vsel %vm2172, %v3501, 0.0
        %3519 = vadd.xlane.f32.xlu0 %v3518
        %v3520 = vpop.xlane.xlu0 %3519
        %v3521 = vsel %vm2172, %v3503, 0.0
        %3522 = vadd.xlane.f32.xlu0 %v3521
        %v3523 = vpop.xlane.xlu0 %3522
        %v3524 = vsel %vm2172, %v3505, 0.0
        %3525 = vadd.xlane.f32.xlu0 %v3524
        %v3526 = vpop.xlane.xlu0 %3525
        %v3527 = vsel %vm2172, %v3507, 0.0
        %3528 = vadd.xlane.f32.xlu0 %v3527
        %v3529 = vpop.xlane.xlu0 %3528
        %v3530 = vsel %vm2172, %v3509, 0.0
        %3531 = vadd.xlane.f32.xlu0 %v3530
        %v3532 = vpop.xlane.xlu0 %3531
        %v3533 = vsel %vm2172, %v3511, 0.0
        %3534 = vadd.xlane.f32.xlu0 %v3533
        %v3535 = vpop.xlane.xlu0 %3534
        %v3536 = vrcp.pop %v3514
        %v3537 = vrcp.pop %v3517
        %v3538 = vrcp.pop %v3520
        %v3539 = vrcp.pop %v3523
        %v3540 = vrcp.pop %v3526
        %v3541 = vrcp.pop %v3529
        %v3542 = vrcp.pop %v3532
        %v3543 = vrcp.pop %v3535
        %v3544 = vmul.f32 %v3497, %v3536
        %v3545 = vmul.f32 %v3499, %v3537
        %v3546 = vmul.f32 %v3501, %v3538
        %v3547 = vmul.f32 %v3503, %v3539
        %v3548 = vmul.f32 %v3505, %v3540
        %v3549 = vmul.f32 %v3507, %v3541
        %v3550 = vmul.f32 %v3509, %v3542
        %v3551 = vmul.f32 %v3511, %v3543
        %v3552 = vpack.c.bf16 %v3544, %v3544
        %v3553 = vpack.c.bf16 %v3545, %v3545
        %v3554 = vpack.c.bf16 %v3546, %v3546
        %v3555 = vpack.c.bf16 %v3547, %v3547
        %v3556 = vpack.c.bf16 %v3548, %v3548
        %v3557 = vpack.c.bf16 %v3549, %v3549
        %v3558 = vpack.c.bf16 %v3550, %v3550
        %v3559 = vpack.c.bf16 %v3551, %v3551
        %v3561 = vsel %vm2172, %v3552, 0
        %v3564 = vsel %vm2272, %v3072, 0
        %3566 = vmatprep.subr.bf16.mxu0 0
        %3567 = vmatpush1.bf16.msra.mxu0 %v3564
        %3568 = vmatprep.subr.bf16.mxu0 0
        %3569 = vmatpush1.bf16.msra.mxu0 0
        %3570 = vmatprep.subr.bf16.mxu0 0
        %3571 = vmatpush1.bf16.msra.mxu0 0
        %3572 = vmatprep.subr.bf16.mxu0 0
        %3573 = vmatpush1.bf16.msra.mxu0 0
        %3574 = vmatprep.subr.bf16.mxu0 0
        %3575 = vmatpush1.bf16.msra.mxu0 0
        %3576 = vmatprep.subr.bf16.mxu0 0
        %3577 = vmatpush1.bf16.msra.mxu0 0
        %3578 = vmatprep.subr.bf16.mxu0 0
        %3579 = vmatpush1.bf16.msra.mxu0 0
        %3580 = vmatprep.subr.bf16.mxu0 0
        %3581 = vmatpush1.bf16.msra.mxu0 0
        %3582 = vmatprep.subr.bf16.mxu0 0
        %3583 = vmatpush1.bf16.msra.mxu0 0
        %3584 = vmatprep.subr.bf16.mxu0 0
        %3585 = vmatpush1.bf16.msra.mxu0 0
        %3586 = vmatprep.subr.bf16.mxu0 0
        %3587 = vmatpush1.bf16.msra.mxu0 0
        %3588 = vmatprep.subr.bf16.mxu0 0
        %3589 = vmatpush1.bf16.msra.mxu0 0
        %3590 = vmatprep.subr.bf16.mxu0 0
        %3591 = vmatpush1.bf16.msra.mxu0 0
        %3592 = vmatprep.subr.bf16.mxu0 0
        %3593 = vmatpush1.bf16.msra.mxu0 0
        %3594 = vmatprep.subr.bf16.mxu0 0
        %3595 = vmatpush1.bf16.msra.mxu0 0
        %3596 = vmatprep.subr.bf16.mxu0 0
        %3597 = vmatpush1.bf16.msra.mxu0 0
        %3598 = vmatprep.mubr.bf16.mxu0 0
        %3599 = vmatmul.mubr.bf16.gmra.mrb[0].mxu0 %v3561
        %v3600 = vpop.f32.mrb[0].mxu0
        %v3601 = vadd.f32 0.0, %v3600
        %v3602 = vpop.f32.mrb[0].mxu0
        %v3603 = vpop.f32.mrb[0].mxu0
        %v3604 = vpop.f32.mrb[0].mxu0
        %3605 = vdwg.mxu0
        %v3607 = vsel %vm2172, %v3553, 0
        %v3610 = vsel %vm2272, %v3073, 0
        %3612 = vmatprep.subr.bf16.mxu0 0
        %3613 = vmatpush1.bf16.msra.mxu0 %v3610
        %3614 = vmatprep.subr.bf16.mxu0 0
        %3615 = vmatpush1.bf16.msra.mxu0 0
        %3616 = vmatprep.subr.bf16.mxu0 0
        %3617 = vmatpush1.bf16.msra.mxu0 0
        %3618 = vmatprep.subr.bf16.mxu0 0
        %3619 = vmatpush1.bf16.msra.mxu0 0
        %3620 = vmatprep.subr.bf16.mxu0 0
        %3621 = vmatpush1.bf16.msra.mxu0 0
        %3622 = vmatprep.subr.bf16.mxu0 0
        %3623 = vmatpush1.bf16.msra.mxu0 0
        %3624 = vmatprep.subr.bf16.mxu0 0
        %3625 = vmatpush1.bf16.msra.mxu0 0
        %3626 = vmatprep.subr.bf16.mxu0 0
        %3627 = vmatpush1.bf16.msra.mxu0 0
        %3628 = vmatprep.subr.bf16.mxu0 0
        %3629 = vmatpush1.bf16.msra.mxu0 0
        %3630 = vmatprep.subr.bf16.mxu0 0
        %3631 = vmatpush1.bf16.msra.mxu0 0
        %3632 = vmatprep.subr.bf16.mxu0 0
        %3633 = vmatpush1.bf16.msra.mxu0 0
        %3634 = vmatprep.subr.bf16.mxu0 0
        %3635 = vmatpush1.bf16.msra.mxu0 0
        %3636 = vmatprep.subr.bf16.mxu0 0
        %3637 = vmatpush1.bf16.msra.mxu0 0
        %3638 = vmatprep.subr.bf16.mxu0 0
        %3639 = vmatpush1.bf16.msra.mxu0 0
        %3640 = vmatprep.subr.bf16.mxu0 0
        %3641 = vmatpush1.bf16.msra.mxu0 0
        %3642 = vmatprep.subr.bf16.mxu0 0
        %3643 = vmatpush1.bf16.msra.mxu0 0
        %3644 = vmatprep.mubr.bf16.mxu0 0
        %3645 = vmatmul.mubr.bf16.gmra.mrb[0].mxu0 %v3607
        %v3646 = vpop.f32.mrb[0].mxu0
        %v3647 = vadd.f32 0.0, %v3646
        %v3648 = vpop.f32.mrb[0].mxu0
        %v3649 = vpop.f32.mrb[0].mxu0
        %v3650 = vpop.f32.mrb[0].mxu0
        %3651 = vdwg.mxu0
        %v3653 = vsel %vm2172, %v3554, 0
        %v3656 = vsel %vm2272, %v3074, 0
        %3658 = vmatprep.subr.bf16.mxu0 0
        %3659 = vmatpush1.bf16.msra.mxu0 %v3656
        %3660 = vmatprep.subr.bf16.mxu0 0
        %3661 = vmatpush1.bf16.msra.mxu0 0
        %3662 = vmatprep.subr.bf16.mxu0 0
        %3663 = vmatpush1.bf16.msra.mxu0 0
        %3664 = vmatprep.subr.bf16.mxu0 0
        %3665 = vmatpush1.bf16.msra.mxu0 0
        %3666 = vmatprep.subr.bf16.mxu0 0
        %3667 = vmatpush1.bf16.msra.mxu0 0
        %3668 = vmatprep.subr.bf16.mxu0 0
        %3669 = vmatpush1.bf16.msra.mxu0 0
        %3670 = vmatprep.subr.bf16.mxu0 0
        %3671 = vmatpush1.bf16.msra.mxu0 0
        %3672 = vmatprep.subr.bf16.mxu0 0
        %3673 = vmatpush1.bf16.msra.mxu0 0
        %3674 = vmatprep.subr.bf16.mxu0 0
        %3675 = vmatpush1.bf16.msra.mxu0 0
        %3676 = vmatprep.subr.bf16.mxu0 0
        %3677 = vmatpush1.bf16.msra.mxu0 0
        %3678 = vmatprep.subr.bf16.mxu0 0
        %3679 = vmatpush1.bf16.msra.mxu0 0
        %3680 = vmatprep.subr.bf16.mxu0 0
        %3681 = vmatpush1.bf16.msra.mxu0 0
        %3682 = vmatprep.subr.bf16.mxu0 0
        %3683 = vmatpush1.bf16.msra.mxu0 0
        %3684 = vmatprep.subr.bf16.mxu0 0
        %3685 = vmatpush1.bf16.msra.mxu0 0
        %3686 = vmatprep.subr.bf16.mxu0 0
        %3687 = vmatpush1.bf16.msra.mxu0 0
        %3688 = vmatprep.subr.bf16.mxu0 0
        %3689 = vmatpush1.bf16.msra.mxu0 0
        %3690 = vmatprep.mubr.bf16.mxu0 0
        %3691 = vmatmul.mubr.bf16.gmra.mrb[0].mxu0 %v3653
        %v3692 = vpop.f32.mrb[0].mxu0
        %v3693 = vadd.f32 0.0, %v3692
        %v3694 = vpop.f32.mrb[0].mxu0
        %v3695 = vpop.f32.mrb[0].mxu0
        %v3696 = vpop.f32.mrb[0].mxu0
        %3697 = vdwg.mxu0
        %v3699 = vsel %vm2172, %v3555, 0
        %v3702 = vsel %vm2272, %v3075, 0
        %3704 = vmatprep.subr.bf16.mxu0 0
        %3705 = vmatpush1.bf16.msra.mxu0 %v3702
        %3706 = vmatprep.subr.bf16.mxu0 0
        %3707 = vmatpush1.bf16.msra.mxu0 0
        %3708 = vmatprep.subr.bf16.mxu0 0
        %3709 = vmatpush1.bf16.msra.mxu0 0
        %3710 = vmatprep.subr.bf16.mxu0 0
        %3711 = vmatpush1.bf16.msra.mxu0 0
        %3712 = vmatprep.subr.bf16.mxu0 0
        %3713 = vmatpush1.bf16.msra.mxu0 0
        %3714 = vmatprep.subr.bf16.mxu0 0
        %3715 = vmatpush1.bf16.msra.mxu0 0
        %3716 = vmatprep.subr.bf16.mxu0 0
        %3717 = vmatpush1.bf16.msra.mxu0 0
        %3718 = vmatprep.subr.bf16.mxu0 0
        %3719 = vmatpush1.bf16.msra.mxu0 0
        %3720 = vmatprep.subr.bf16.mxu0 0
        %3721 = vmatpush1.bf16.msra.mxu0 0
        %3722 = vmatprep.subr.bf16.mxu0 0
        %3723 = vmatpush1.bf16.msra.mxu0 0
        %3724 = vmatprep.subr.bf16.mxu0 0
        %3725 = vmatpush1.bf16.msra.mxu0 0
        %3726 = vmatprep.subr.bf16.mxu0 0
        %3727 = vmatpush1.bf16.msra.mxu0 0
        %3728 = vmatprep.subr.bf16.mxu0 0
        %3729 = vmatpush1.bf16.msra.mxu0 0
        %3730 = vmatprep.subr.bf16.mxu0 0
        %3731 = vmatpush1.bf16.msra.mxu0 0
        %3732 = vmatprep.subr.bf16.mxu0 0
        %3733 = vmatpush1.bf16.msra.mxu0 0
        %3734 = vmatprep.subr.bf16.mxu0 0
        %3735 = vmatpush1.bf16.msra.mxu0 0
        %3736 = vmatprep.mubr.bf16.mxu0 0
        %3737 = vmatmul.mubr.bf16.gmra.mrb[0].mxu0 %v3699
        %v3738 = vpop.f32.mrb[0].mxu0
        %v3739 = vadd.f32 0.0, %v3738
        %v3740 = vpop.f32.mrb[0].mxu0
        %v3741 = vpop.f32.mrb[0].mxu0
        %v3742 = vpop.f32.mrb[0].mxu0
        %3743 = vdwg.mxu0
        %v3745 = vsel %vm2172, %v3556, 0
        %v3748 = vsel %vm2272, %v3076, 0
        %3750 = vmatprep.subr.bf16.mxu0 0
        %3751 = vmatpush1.bf16.msra.mxu0 %v3748
        %3752 = vmatprep.subr.bf16.mxu0 0
        %3753 = vmatpush1.bf16.msra.mxu0 0
        %3754 = vmatprep.subr.bf16.mxu0 0
        %3755 = vmatpush1.bf16.msra.mxu0 0
        %3756 = vmatprep.subr.bf16.mxu0 0
        %3757 = vmatpush1.bf16.msra.mxu0 0
        %3758 = vmatprep.subr.bf16.mxu0 0
        %3759 = vmatpush1.bf16.msra.mxu0 0
        %3760 = vmatprep.subr.bf16.mxu0 0
        %3761 = vmatpush1.bf16.msra.mxu0 0
        %3762 = vmatprep.subr.bf16.mxu0 0
        %3763 = vmatpush1.bf16.msra.mxu0 0
        %3764 = vmatprep.subr.bf16.mxu0 0
        %3765 = vmatpush1.bf16.msra.mxu0 0
        %3766 = vmatprep.subr.bf16.mxu0 0
        %3767 = vmatpush1.bf16.msra.mxu0 0
        %3768 = vmatprep.subr.bf16.mxu0 0
        %3769 = vmatpush1.bf16.msra.mxu0 0
        %3770 = vmatprep.subr.bf16.mxu0 0
        %3771 = vmatpush1.bf16.msra.mxu0 0
        %3772 = vmatprep.subr.bf16.mxu0 0
        %3773 = vmatpush1.bf16.msra.mxu0 0
        %3774 = vmatprep.subr.bf16.mxu0 0
        %3775 = vmatpush1.bf16.msra.mxu0 0
        %3776 = vmatprep.subr.bf16.mxu0 0
        %3777 = vmatpush1.bf16.msra.mxu0 0
        %3778 = vmatprep.subr.bf16.mxu0 0
        %3779 = vmatpush1.bf16.msra.mxu0 0
        %3780 = vmatprep.subr.bf16.mxu0 0
        %3781 = vmatpush1.bf16.msra.mxu0 0
        %3782 = vmatprep.mubr.bf16.mxu0 0
        %3783 = vmatmul.mubr.bf16.gmra.mrb[0].mxu0 %v3745
        %v3784 = vpop.f32.mrb[0].mxu0
        %v3785 = vadd.f32 0.0, %v3784
        %v3786 = vpop.f32.mrb[0].mxu0
        %v3787 = vpop.f32.mrb[0].mxu0
        %v3788 = vpop.f32.mrb[0].mxu0
        %3789 = vdwg.mxu0
        %v3791 = vsel %vm2172, %v3557, 0
        %v3794 = vsel %vm2272, %v3077, 0
        %3796 = vmatprep.subr.bf16.mxu0 0
        %3797 = vmatpush1.bf16.msra.mxu0 %v3794
        %3798 = vmatprep.subr.bf16.mxu0 0
        %3799 = vmatpush1.bf16.msra.mxu0 0
        %3800 = vmatprep.subr.bf16.mxu0 0
        %3801 = vmatpush1.bf16.msra.mxu0 0
        %3802 = vmatprep.subr.bf16.mxu0 0
        %3803 = vmatpush1.bf16.msra.mxu0 0
        %3804 = vmatprep.subr.bf16.mxu0 0
        %3805 = vmatpush1.bf16.msra.mxu0 0
        %3806 = vmatprep.subr.bf16.mxu0 0
        %3807 = vmatpush1.bf16.msra.mxu0 0
        %3808 = vmatprep.subr.bf16.mxu0 0
        %3809 = vmatpush1.bf16.msra.mxu0 0
        %3810 = vmatprep.subr.bf16.mxu0 0
        %3811 = vmatpush1.bf16.msra.mxu0 0
        %3812 = vmatprep.subr.bf16.mxu0 0
        %3813 = vmatpush1.bf16.msra.mxu0 0
        %3814 = vmatprep.subr.bf16.mxu0 0
        %3815 = vmatpush1.bf16.msra.mxu0 0
        %3816 = vmatprep.subr.bf16.mxu0 0
        %3817 = vmatpush1.bf16.msra.mxu0 0
        %3818 = vmatprep.subr.bf16.mxu0 0
        %3819 = vmatpush1.bf16.msra.mxu0 0
        %3820 = vmatprep.subr.bf16.mxu0 0
        %3821 = vmatpush1.bf16.msra.mxu0 0
        %3822 = vmatprep.subr.bf16.mxu0 0
        %3823 = vmatpush1.bf16.msra.mxu0 0
        %3824 = vmatprep.subr.bf16.mxu0 0
        %3825 = vmatpush1.bf16.msra.mxu0 0
        %3826 = vmatprep.subr.bf16.mxu0 0
        %3827 = vmatpush1.bf16.msra.mxu0 0
        %3828 = vmatprep.mubr.bf16.mxu0 0
        %3829 = vmatmul.mubr.bf16.gmra.mrb[0].mxu0 %v3791
        %v3830 = vpop.f32.mrb[0].mxu0
        %v3831 = vadd.f32 0.0, %v3830
        %v3832 = vpop.f32.mrb[0].mxu0
        %v3833 = vpop.f32.mrb[0].mxu0
        %v3834 = vpop.f32.mrb[0].mxu0
        %3835 = vdwg.mxu0
        %v3837 = vsel %vm2172, %v3558, 0
        %v3840 = vsel %vm2272, %v3078, 0
        %3842 = vmatprep.subr.bf16.mxu0 0
        %3843 = vmatpush1.bf16.msra.mxu0 %v3840
        %3844 = vmatprep.subr.bf16.mxu0 0
        %3845 = vmatpush1.bf16.msra.mxu0 0
        %3846 = vmatprep.subr.bf16.mxu0 0
        %3847 = vmatpush1.bf16.msra.mxu0 0
        %3848 = vmatprep.subr.bf16.mxu0 0
        %3849 = vmatpush1.bf16.msra.mxu0 0
        %3850 = vmatprep.subr.bf16.mxu0 0
        %3851 = vmatpush1.bf16.msra.mxu0 0
        %3852 = vmatprep.subr.bf16.mxu0 0
        %3853 = vmatpush1.bf16.msra.mxu0 0
        %3854 = vmatprep.subr.bf16.mxu0 0
        %3855 = vmatpush1.bf16.msra.mxu0 0
        %3856 = vmatprep.subr.bf16.mxu0 0
        %3857 = vmatpush1.bf16.msra.mxu0 0
        %3858 = vmatprep.subr.bf16.mxu0 0
        %3859 = vmatpush1.bf16.msra.mxu0 0
        %3860 = vmatprep.subr.bf16.mxu0 0
        %3861 = vmatpush1.bf16.msra.mxu0 0
        %3862 = vmatprep.subr.bf16.mxu0 0
        %3863 = vmatpush1.bf16.msra.mxu0 0
        %3864 = vmatprep.subr.bf16.mxu0 0
        %3865 = vmatpush1.bf16.msra.mxu0 0
        %3866 = vmatprep.subr.bf16.mxu0 0
        %3867 = vmatpush1.bf16.msra.mxu0 0
        %3868 = vmatprep.subr.bf16.mxu0 0
        %3869 = vmatpush1.bf16.msra.mxu0 0
        %3870 = vmatprep.subr.bf16.mxu0 0
        %3871 = vmatpush1.bf16.msra.mxu0 0
        %3872 = vmatprep.subr.bf16.mxu0 0
        %3873 = vmatpush1.bf16.msra.mxu0 0
        %3874 = vmatprep.mubr.bf16.mxu0 0
        %3875 = vmatmul.mubr.bf16.gmra.mrb[0].mxu0 %v3837
        %v3876 = vpop.f32.mrb[0].mxu0
        %v3877 = vadd.f32 0.0, %v3876
        %v3878 = vpop.f32.mrb[0].mxu0
        %v3879 = vpop.f32.mrb[0].mxu0
        %v3880 = vpop.f32.mrb[0].mxu0
        %3881 = vdwg.mxu0
        %v3883 = vsel %vm2172, %v3559, 0
        %v3886 = vsel %vm2272, %v3079, 0
        %3888 = vmatprep.subr.bf16.mxu0 0
        %3889 = vmatpush1.bf16.msra.mxu0 %v3886
        %3890 = vmatprep.subr.bf16.mxu0 0
        %3891 = vmatpush1.bf16.msra.mxu0 0
        %3892 = vmatprep.subr.bf16.mxu0 0
        %3893 = vmatpush1.bf16.msra.mxu0 0
        %3894 = vmatprep.subr.bf16.mxu0 0
        %3895 = vmatpush1.bf16.msra.mxu0 0
        %3896 = vmatprep.subr.bf16.mxu0 0
        %3897 = vmatpush1.bf16.msra.mxu0 0
        %3898 = vmatprep.subr.bf16.mxu0 0
        %3899 = vmatpush1.bf16.msra.mxu0 0
        %3900 = vmatprep.subr.bf16.mxu0 0
        %3901 = vmatpush1.bf16.msra.mxu0 0
        %3902 = vmatprep.subr.bf16.mxu0 0
        %3903 = vmatpush1.bf16.msra.mxu0 0
        %3904 = vmatprep.subr.bf16.mxu0 0
        %3905 = vmatpush1.bf16.msra.mxu0 0
        %3906 = vmatprep.subr.bf16.mxu0 0
        %3907 = vmatpush1.bf16.msra.mxu0 0
        %3908 = vmatprep.subr.bf16.mxu0 0
        %3909 = vmatpush1.bf16.msra.mxu0 0
        %3910 = vmatprep.subr.bf16.mxu0 0
        %3911 = vmatpush1.bf16.msra.mxu0 0
        %3912 = vmatprep.subr.bf16.mxu0 0
        %3913 = vmatpush1.bf16.msra.mxu0 0
        %3914 = vmatprep.subr.bf16.mxu0 0
        %3915 = vmatpush1.bf16.msra.mxu0 0
        %3916 = vmatprep.subr.bf16.mxu0 0
        %3917 = vmatpush1.bf16.msra.mxu0 0
        %3918 = vmatprep.subr.bf16.mxu0 0
        %3919 = vmatpush1.bf16.msra.mxu0 0
        %3920 = vmatprep.mubr.bf16.mxu0 0
        %3921 = vmatmul.mubr.bf16.gmra.mrb[0].mxu0 %v3883
        %v3922 = vpop.f32.mrb[0].mxu0
        %v3923 = vadd.f32 0.0, %v3922
        %v3924 = vpop.f32.mrb[0].mxu0
        %v3925 = vpop.f32.mrb[0].mxu0
        %v3926 = vpop.f32.mrb[0].mxu0
        %3927 = vdwg.mxu0
        %v3928 = vpack.c.bf16 %v3647, %v3601
        %v3929 = vpack.c.bf16 %v3739, %v3693
        %v3930 = vpack.c.bf16 %v3831, %v3785
        %v3931 = vpack.c.bf16 %v3923, %v3877
        %s3932 = scalar_lea.vmem [#allocation22], 16
        %v3933 = vld [vmem:[%s3932] sm:$0xf]
        %v3934 = vld [vmem:[%s3932 + $0x4] sm:$0xf]
        %v3935 = vld [vmem:[%s3932 + $0x8] sm:$0xf]
        %v3936 = vld [vmem:[%s3932 + $0xc] sm:$0xf]
        %v3941 = vunpack.c.l.b16 %v3933
        %v3942 = vunpack.c.l.b16 %v3934
        %v3943 = vunpack.c.l.b16 %v3935
        %v3944 = vunpack.c.l.b16 %v3936
        %v3945 = vpack.c.b16 %v3942, %v3941
        %v3946 = vpack.c.b16 %v3944, %v3943
        %v3950 = vsel %vm1785, %v3928, 0
        %v3953 = vsel %vm1785, %v3929, 0
        %v3956 = vsel %vm1785, %v3930, 0
        %v3959 = vsel %vm1785, %v3931, 0
        %3961 = vmatprep.subr.bf16.mxu0 0
        %3962 = vmatpush1.bf16.msra.mxu0 %v3945
        %3963 = vmatprep.subr.bf16.mxu0 0
        %3964 = vmatpush1.bf16.msra.mxu0 %v3946
        %3965 = vmatprep.subr.bf16.mxu0 0
        %3966 = vmatpush1.bf16.msra.mxu0 0
        %3967 = vmatprep.subr.bf16.mxu0 0
        %3968 = vmatpush1.bf16.msra.mxu0 0
        %3969 = vmatprep.subr.bf16.mxu0 0
        %3970 = vmatpush1.bf16.msra.mxu0 0
        %3971 = vmatprep.subr.bf16.mxu0 0
        %3972 = vmatpush1.bf16.msra.mxu0 0
        %3973 = vmatprep.subr.bf16.mxu0 0
        %3974 = vmatpush1.bf16.msra.mxu0 0
        %3975 = vmatprep.subr.bf16.mxu0 0
        %3976 = vmatpush1.bf16.msra.mxu0 0
        %3977 = vmatprep.subr.bf16.mxu0 0
        %3978 = vmatpush1.bf16.msra.mxu0 0
        %3979 = vmatprep.subr.bf16.mxu0 0
        %3980 = vmatpush1.bf16.msra.mxu0 0
        %3981 = vmatprep.subr.bf16.mxu0 0
        %3982 = vmatpush1.bf16.msra.mxu0 0
        %3983 = vmatprep.subr.bf16.mxu0 0
        %3984 = vmatpush1.bf16.msra.mxu0 0
        %3985 = vmatprep.subr.bf16.mxu0 0
        %3986 = vmatpush1.bf16.msra.mxu0 0
        %3987 = vmatprep.subr.bf16.mxu0 0
        %3988 = vmatpush1.bf16.msra.mxu0 0
        %3989 = vmatprep.subr.bf16.mxu0 0
        %3990 = vmatpush1.bf16.msra.mxu0 0
        %3991 = vmatprep.subr.bf16.mxu0 0
        %3992 = vmatpush1.bf16.msra.mxu0 0
        %3993 = vmatprep.mubr.bf16.mxu0 0
        %3994 = vmatmul.mubr.bf16.gmra.mrb[0].mxu0 %v3950
        %v3995 = vpop.f32.mrb[0].mxu0
        %v3996 = vadd.f32 0.0, %v3995
        %v3997 = vpop.f32.mrb[0].mxu0
        %v3998 = vpop.f32.mrb[0].mxu0
        %v3999 = vadd.f32 0.0, %v3998
        %v4000 = vpop.f32.mrb[0].mxu0
        %4001 = vmatprep.mubr.bf16.mxu0 0
        %4002 = vmatmul.mubr.bf16.gmra.mrb[0].mxu0 %v3953
        %v4003 = vpop.f32.mrb[0].mxu0
        %v4004 = vadd.f32 0.0, %v4003
        %v4005 = vpop.f32.mrb[0].mxu0
        %v4006 = vpop.f32.mrb[0].mxu0
        %v4007 = vadd.f32 0.0, %v4006
        %v4008 = vpop.f32.mrb[0].mxu0
        %4009 = vmatprep.mubr.bf16.mxu0 0
        %4010 = vmatmul.mubr.bf16.gmra.mrb[0].mxu0 %v3956
        %v4011 = vpop.f32.mrb[0].mxu0
        %v4012 = vadd.f32 0.0, %v4011
        %v4013 = vpop.f32.mrb[0].mxu0
        %v4014 = vpop.f32.mrb[0].mxu0
        %v4015 = vadd.f32 0.0, %v4014
        %v4016 = vpop.f32.mrb[0].mxu0
        %4017 = vmatprep.mubr.bf16.mxu0 0
        %4018 = vmatmul.mubr.bf16.gmra.mrb[0].mxu0 %v3959
        %v4019 = vpop.f32.mrb[0].mxu0
        %v4020 = vadd.f32 0.0, %v4019
        %v4021 = vpop.f32.mrb[0].mxu0
        %v4022 = vpop.f32.mrb[0].mxu0
        %v4023 = vadd.f32 0.0, %v4022
        %v4024 = vpop.f32.mrb[0].mxu0
        %4025 = vdwg.mxu0
        %v4030 = vunpack.c.l.b16 %v2642
        %v4031 = vunpack.c.l.b16 %v2643
        %v4032 = vunpack.c.l.b16 %v2644
        %v4033 = vunpack.c.l.b16 %v2645
        %v4034 = vpack.c.b16 %v4031, %v4030
        %v4035 = vpack.c.b16 %v4033, %v4032
        %v4039 = vsel %vm1785, %v2638, 0
        %v4042 = vsel %vm1785, %v2639, 0
        %v4045 = vsel %vm1785, %v2640, 0
        %v4048 = vsel %vm1785, %v2641, 0
        %4050 = vmatprep.subr.bf16.mxu0 0
        %4051 = vmatpush1.bf16.msra.mxu0 %v4034
        %4052 = vmatprep.subr.bf16.mxu0 0
        %4053 = vmatpush1.bf16.msra.mxu0 %v4035
        %4054 = vmatprep.subr.bf16.mxu0 0
        %4055 = vmatpush1.bf16.msra.mxu0 0
        %4056 = vmatprep.subr.bf16.mxu0 0
        %4057 = vmatpush1.bf16.msra.mxu0 0
        %4058 = vmatprep.subr.bf16.mxu0 0
        %4059 = vmatpush1.bf16.msra.mxu0 0
        %4060 = vmatprep.subr.bf16.mxu0 0
        %4061 = vmatpush1.bf16.msra.mxu0 0
        %4062 = vmatprep.subr.bf16.mxu0 0
        %4063 = vmatpush1.bf16.msra.mxu0 0
        %4064 = vmatprep.subr.bf16.mxu0 0
        %4065 = vmatpush1.bf16.msra.mxu0 0
        %4066 = vmatprep.subr.bf16.mxu0 0
        %4067 = vmatpush1.bf16.msra.mxu0 0
        %4068 = vmatprep.subr.bf16.mxu0 0
        %4069 = vmatpush1.bf16.msra.mxu0 0
        %4070 = vmatprep.subr.bf16.mxu0 0
        %4071 = vmatpush1.bf16.msra.mxu0 0
        %4072 = vmatprep.subr.bf16.mxu0 0
        %4073 = vmatpush1.bf16.msra.mxu0 0
        %4074 = vmatprep.subr.bf16.mxu0 0
        %4075 = vmatpush1.bf16.msra.mxu0 0
        %4076 = vmatprep.subr.bf16.mxu0 0
        %4077 = vmatpush1.bf16.msra.mxu0 0
        %4078 = vmatprep.subr.bf16.mxu0 0
        %4079 = vmatpush1.bf16.msra.mxu0 0
        %4080 = vmatprep.subr.bf16.mxu0 0
        %4081 = vmatpush1.bf16.msra.mxu0 0
        %4082 = vmatprep.mubr.bf16.mxu0 0
        %4083 = vmatmul.mubr.bf16.gmra.mrb[0].mxu0 %v4039
        %v4084 = vpop.f32.mrb[0].mxu0
        %v4085 = vadd.f32 %v3996, %v4084
        %v4086 = vpop.f32.mrb[0].mxu0
        %v4087 = vpop.f32.mrb[0].mxu0
        %v4088 = vadd.f32 %v3999, %v4087
        %v4089 = vpop.f32.mrb[0].mxu0
        %4090 = vmatprep.mubr.bf16.mxu0 0
        %4091 = vmatmul.mubr.bf16.gmra.mrb[0].mxu0 %v4042
        %v4092 = vpop.f32.mrb[0].mxu0
        %v4093 = vadd.f32 %v4004, %v4092
        %v4094 = vpop.f32.mrb[0].mxu0
        %v4095 = vpop.f32.mrb[0].mxu0
        %v4096 = vadd.f32 %v4007, %v4095
        %v4097 = vpop.f32.mrb[0].mxu0
        %4098 = vmatprep.mubr.bf16.mxu0 0
        %4099 = vmatmul.mubr.bf16.gmra.mrb[0].mxu0 %v4045
        %v4100 = vpop.f32.mrb[0].mxu0
        %v4101 = vadd.f32 %v4012, %v4100
        %v4102 = vpop.f32.mrb[0].mxu0
        %v4103 = vpop.f32.mrb[0].mxu0
        %v4104 = vadd.f32 %v4015, %v4103
        %v4105 = vpop.f32.mrb[0].mxu0
        %4106 = vmatprep.mubr.bf16.mxu0 0
        %4107 = vmatmul.mubr.bf16.gmra.mrb[0].mxu0 %v4048
        %v4108 = vpop.f32.mrb[0].mxu0
        %v4109 = vadd.f32 %v4020, %v4108
        %v4110 = vpop.f32.mrb[0].mxu0
        %v4111 = vpop.f32.mrb[0].mxu0
        %v4112 = vadd.f32 %v4023, %v4111
        %v4113 = vpop.f32.mrb[0].mxu0
        %4114 = vdwg.mxu0
        %s4115 = scalar_lea.vmem [#allocation24], 16
        %v4116 = vld [vmem:[%s4115] sm:$0xf]
        %v4117 = vld [vmem:[%s4115 + $0x4] sm:$0xf]
        %v4118 = vld [vmem:[%s4115 + $0x8] sm:$0xf]
        %v4119 = vld [vmem:[%s4115 + $0xc] sm:$0xf]
        %v4124 = vunpack.c.l.b16 %v4116
        %v4125 = vunpack.c.l.b16 %v4117
        %v4126 = vunpack.c.l.b16 %v4118
        %v4127 = vunpack.c.l.b16 %v4119
        %v4128 = vpack.c.b16 %v4125, %v4124
        %v4129 = vpack.c.b16 %v4127, %v4126
        %v4133 = vsel %vm1785, %v3040, 0
        %v4136 = vsel %vm1785, %v3041, 0
        %v4139 = vsel %vm1785, %v3042, 0
        %v4142 = vsel %vm1785, %v3043, 0
        %4144 = vmatprep.subr.bf16.mxu0 0
        %4145 = vmatpush1.bf16.msra.mxu0 %v4128
        %4146 = vmatprep.subr.bf16.mxu0 0
        %4147 = vmatpush1.bf16.msra.mxu0 %v4129
        %4148 = vmatprep.subr.bf16.mxu0 0
        %4149 = vmatpush1.bf16.msra.mxu0 0
        %4150 = vmatprep.subr.bf16.mxu0 0
        %4151 = vmatpush1.bf16.msra.mxu0 0
        %4152 = vmatprep.subr.bf16.mxu0 0
        %4153 = vmatpush1.bf16.msra.mxu0 0
        %4154 = vmatprep.subr.bf16.mxu0 0
        %4155 = vmatpush1.bf16.msra.mxu0 0
        %4156 = vmatprep.subr.bf16.mxu0 0
        %4157 = vmatpush1.bf16.msra.mxu0 0
        %4158 = vmatprep.subr.bf16.mxu0 0
        %4159 = vmatpush1.bf16.msra.mxu0 0
        %4160 = vmatprep.subr.bf16.mxu0 0
        %4161 = vmatpush1.bf16.msra.mxu0 0
        %4162 = vmatprep.subr.bf16.mxu0 0
        %4163 = vmatpush1.bf16.msra.mxu0 0
        %4164 = vmatprep.subr.bf16.mxu0 0
        %4165 = vmatpush1.bf16.msra.mxu0 0
        %4166 = vmatprep.subr.bf16.mxu0 0
        %4167 = vmatpush1.bf16.msra.mxu0 0
        %4168 = vmatprep.subr.bf16.mxu0 0
        %4169 = vmatpush1.bf16.msra.mxu0 0
        %4170 = vmatprep.subr.bf16.mxu0 0
        %4171 = vmatpush1.bf16.msra.mxu0 0
        %4172 = vmatprep.subr.bf16.mxu0 0
        %4173 = vmatpush1.bf16.msra.mxu0 0
        %4174 = vmatprep.subr.bf16.mxu0 0
        %4175 = vmatpush1.bf16.msra.mxu0 0
        %4176 = vmatprep.mubr.bf16.mxu0 0
        %4177 = vmatmul.mubr.bf16.gmra.mrb[0].mxu0 %v4133
        %v4178 = vpop.f32.mrb[0].mxu0
        %v4179 = vadd.f32 0.0, %v4178
        %v4180 = vpop.f32.mrb[0].mxu0
        %v4181 = vpop.f32.mrb[0].mxu0
        %v4182 = vadd.f32 0.0, %v4181
        %v4183 = vpop.f32.mrb[0].mxu0
        %4184 = vmatprep.mubr.bf16.mxu0 0
        %4185 = vmatmul.mubr.bf16.gmra.mrb[0].mxu0 %v4136
        %v4186 = vpop.f32.mrb[0].mxu0
        %v4187 = vadd.f32 0.0, %v4186
        %v4188 = vpop.f32.mrb[0].mxu0
        %v4189 = vpop.f32.mrb[0].mxu0
        %v4190 = vadd.f32 0.0, %v4189
        %v4191 = vpop.f32.mrb[0].mxu0
        %4192 = vmatprep.mubr.bf16.mxu0 0
        %4193 = vmatmul.mubr.bf16.gmra.mrb[0].mxu0 %v4139
        %v4194 = vpop.f32.mrb[0].mxu0
        %v4195 = vadd.f32 0.0, %v4194
        %v4196 = vpop.f32.mrb[0].mxu0
        %v4197 = vpop.f32.mrb[0].mxu0
        %v4198 = vadd.f32 0.0, %v4197
        %v4199 = vpop.f32.mrb[0].mxu0
        %4200 = vmatprep.mubr.bf16.mxu0 0
        %4201 = vmatmul.mubr.bf16.gmra.mrb[0].mxu0 %v4142
        %v4202 = vpop.f32.mrb[0].mxu0
        %v4203 = vadd.f32 0.0, %v4202
        %v4204 = vpop.f32.mrb[0].mxu0
        %v4205 = vpop.f32.mrb[0].mxu0
        %v4206 = vadd.f32 0.0, %v4205
        %v4207 = vpop.f32.mrb[0].mxu0
        %4208 = vdwg.mxu0
        %v4213 = vunpack.c.l.b16 %v2646
        %v4214 = vunpack.c.l.b16 %v2647
        %v4215 = vunpack.c.l.b16 %v2648
        %v4216 = vunpack.c.l.b16 %v2649
        %v4217 = vpack.c.b16 %v4214, %v4213
        %v4218 = vpack.c.b16 %v4216, %v4215
        %v4222 = vsel %vm1785, %v1745, 0
        %v4225 = vsel %vm1785, %v1746, 0
        %v4228 = vsel %vm1785, %v1747, 0
        %v4231 = vsel %vm1785, %v1748, 0
        %4233 = vmatprep.subr.bf16.mxu0 0
        %4234 = vmatpush1.bf16.msra.mxu0 %v4217
        %4235 = vmatprep.subr.bf16.mxu0 0
        %4236 = vmatpush1.bf16.msra.mxu0 %v4218
        %4237 = vmatprep.subr.bf16.mxu0 0
        %4238 = vmatpush1.bf16.msra.mxu0 0
        %4239 = vmatprep.subr.bf16.mxu0 0
        %4240 = vmatpush1.bf16.msra.mxu0 0
        %4241 = vmatprep.subr.bf16.mxu0 0
        %4242 = vmatpush1.bf16.msra.mxu0 0
        %4243 = vmatprep.subr.bf16.mxu0 0
        %4244 = vmatpush1.bf16.msra.mxu0 0
        %4245 = vmatprep.subr.bf16.mxu0 0
        %4246 = vmatpush1.bf16.msra.mxu0 0
        %4247 = vmatprep.subr.bf16.mxu0 0
        %4248 = vmatpush1.bf16.msra.mxu0 0
        %4249 = vmatprep.subr.bf16.mxu0 0
        %4250 = vmatpush1.bf16.msra.mxu0 0
        %4251 = vmatprep.subr.bf16.mxu0 0
        %4252 = vmatpush1.bf16.msra.mxu0 0
        %4253 = vmatprep.subr.bf16.mxu0 0
        %4254 = vmatpush1.bf16.msra.mxu0 0
        %4255 = vmatprep.subr.bf16.mxu0 0
        %4256 = vmatpush1.bf16.msra.mxu0 0
        %4257 = vmatprep.subr.bf16.mxu0 0
        %4258 = vmatpush1.bf16.msra.mxu0 0
        %4259 = vmatprep.subr.bf16.mxu0 0
        %4260 = vmatpush1.bf16.msra.mxu0 0
        %4261 = vmatprep.subr.bf16.mxu0 0
        %4262 = vmatpush1.bf16.msra.mxu0 0
        %4263 = vmatprep.subr.bf16.mxu0 0
        %4264 = vmatpush1.bf16.msra.mxu0 0
        %4265 = vmatprep.mubr.bf16.mxu0 0
        %4266 = vmatmul.mubr.bf16.gmra.mrb[0].mxu0 %v4222
        %v4267 = vpop.f32.mrb[0].mxu0
        %v4268 = vadd.f32 %v4179, %v4267
        %v4269 = vpop.f32.mrb[0].mxu0
        %v4270 = vpop.f32.mrb[0].mxu0
        %v4271 = vadd.f32 %v4182, %v4270
        %v4272 = vpop.f32.mrb[0].mxu0
        %4273 = vmatprep.mubr.bf16.mxu0 0
        %4274 = vmatmul.mubr.bf16.gmra.mrb[0].mxu0 %v4225
        %v4275 = vpop.f32.mrb[0].mxu0
        %v4276 = vadd.f32 %v4187, %v4275
        %v4277 = vpop.f32.mrb[0].mxu0
        %v4278 = vpop.f32.mrb[0].mxu0
        %v4279 = vadd.f32 %v4190, %v4278
        %v4280 = vpop.f32.mrb[0].mxu0
        %4281 = vmatprep.mubr.bf16.mxu0 0
        %4282 = vmatmul.mubr.bf16.gmra.mrb[0].mxu0 %v4228
        %v4283 = vpop.f32.mrb[0].mxu0
        %v4284 = vadd.f32 %v4195, %v4283
        %v4285 = vpop.f32.mrb[0].mxu0
        %v4286 = vpop.f32.mrb[0].mxu0
        %v4287 = vadd.f32 %v4198, %v4286
        %v4288 = vpop.f32.mrb[0].mxu0
        %4289 = vmatprep.mubr.bf16.mxu0 0
        %4290 = vmatmul.mubr.bf16.gmra.mrb[0].mxu0 %v4231
        %v4291 = vpop.f32.mrb[0].mxu0
        %v4292 = vadd.f32 %v4203, %v4291
        %v4293 = vpop.f32.mrb[0].mxu0
        %v4294 = vpop.f32.mrb[0].mxu0
        %v4295 = vadd.f32 %v4206, %v4294
        %v4296 = vpop.f32.mrb[0].mxu0
        %4297 = vdwg.mxu0
        %s4298 = scalar_lea.vmem [#allocation18], 128
        %v4299 = vld [vmem:[%s4298] sm:$0xf]
        %v4300 = vld [vmem:[%s4298 + $0x4] sm:$0xf]
        %v4301 = vld [vmem:[%s4298 + $0x8] sm:$0xf]
        %v4302 = vld [vmem:[%s4298 + $0xc] sm:$0xf]
        %v4303 = vld [vmem:[%s4298 + $0x10] sm:$0xf]
        %v4304 = vld [vmem:[%s4298 + $0x14] sm:$0xf]
        %v4305 = vld [vmem:[%s4298 + $0x18] sm:$0xf]
        %v4306 = vld [vmem:[%s4298 + $0x1c] sm:$0xf]
        %v4307 = vld [vmem:[%s4298 + $0x20] sm:$0xf]
        %v4308 = vld [vmem:[%s4298 + $0x24] sm:$0xf]
        %v4309 = vld [vmem:[%s4298 + $0x28] sm:$0xf]
        %v4310 = vld [vmem:[%s4298 + $0x2c] sm:$0xf]
        %v4311 = vld [vmem:[%s4298 + $0x30] sm:$0xf]
        %v4312 = vld [vmem:[%s4298 + $0x34] sm:$0xf]
        %v4313 = vld [vmem:[%s4298 + $0x38] sm:$0xf]
        %v4314 = vld [vmem:[%s4298 + $0x3c] sm:$0xf]
        %v4331 = vunpack.c.l.b16 %v4299
        %v4332 = vunpack.c.l.b16 %v4300
        %v4333 = vunpack.c.l.b16 %v4301
        %v4334 = vunpack.c.l.b16 %v4302
        %v4335 = vunpack.c.l.b16 %v4303
        %v4336 = vunpack.c.l.b16 %v4304
        %v4337 = vunpack.c.l.b16 %v4305
        %v4338 = vunpack.c.l.b16 %v4306
        %v4339 = vunpack.c.l.b16 %v4307
        %v4340 = vunpack.c.l.b16 %v4308
        %v4341 = vunpack.c.l.b16 %v4309
        %v4342 = vunpack.c.l.b16 %v4310
        %v4343 = vunpack.c.l.b16 %v4311
        %v4344 = vunpack.c.l.b16 %v4312
        %v4345 = vunpack.c.l.b16 %v4313
        %v4346 = vunpack.c.l.b16 %v4314
        %v4347 = vpack.c.b16 %v4332, %v4331
        %v4348 = vpack.c.b16 %v4334, %v4333
        %v4349 = vpack.c.b16 %v4336, %v4335
        %v4350 = vpack.c.b16 %v4338, %v4337
        %v4351 = vpack.c.b16 %v4340, %v4339
        %v4352 = vpack.c.b16 %v4342, %v4341
        %v4353 = vpack.c.b16 %v4344, %v4343
        %v4354 = vpack.c.b16 %v4346, %v4345
        %4363 = vmatprep.subr.bf16.mxu0 0
        %4364 = vmatpush1.bf16.msra.mxu0 %v4347
        %4365 = vmatprep.subr.bf16.mxu0 0
        %4366 = vmatpush1.bf16.msra.mxu0 %v4348
        %4367 = vmatprep.subr.bf16.mxu0 0
        %4368 = vmatpush1.bf16.msra.mxu0 %v4349
        %4369 = vmatprep.subr.bf16.mxu0 0
        %4370 = vmatpush1.bf16.msra.mxu0 %v4350
        %4371 = vmatprep.subr.bf16.mxu0 0
        %4372 = vmatpush1.bf16.msra.mxu0 %v4351
        %4373 = vmatprep.subr.bf16.mxu0 0
        %4374 = vmatpush1.bf16.msra.mxu0 %v4352
        %4375 = vmatprep.subr.bf16.mxu0 0
        %4376 = vmatpush1.bf16.msra.mxu0 %v4353
        %4377 = vmatprep.subr.bf16.mxu0 0
        %4378 = vmatpush1.bf16.msra.mxu0 %v4354
        %4379 = vmatprep.subr.bf16.mxu0 0
        %4380 = vmatpush1.bf16.msra.mxu0 0
        %4381 = vmatprep.subr.bf16.mxu0 0
        %4382 = vmatpush1.bf16.msra.mxu0 0
        %4383 = vmatprep.subr.bf16.mxu0 0
        %4384 = vmatpush1.bf16.msra.mxu0 0
        %4385 = vmatprep.subr.bf16.mxu0 0
        %4386 = vmatpush1.bf16.msra.mxu0 0
        %4387 = vmatprep.subr.bf16.mxu0 0
        %4388 = vmatpush1.bf16.msra.mxu0 0
        %4389 = vmatprep.subr.bf16.mxu0 0
        %4390 = vmatpush1.bf16.msra.mxu0 0
        %4391 = vmatprep.subr.bf16.mxu0 0
        %4392 = vmatpush1.bf16.msra.mxu0 0
        %4393 = vmatprep.subr.bf16.mxu0 0
        %4394 = vmatpush1.bf16.msra.mxu0 0
        %4395 = vmatprep.mubr.bf16.mxu0 0
        %4396 = vmatmul.mubr.bf16.gmra.mrb[0].mxu0 %v1341
        %v4397 = vpop.f32.mrb[0].mxu0
        %v4398 = vadd.f32 0.0, %v4397
        %v4399 = vpop.f32.mrb[0].mxu0
        %v4400 = vpop.f32.mrb[0].mxu0
        %v4401 = vadd.f32 0.0, %v4400
        %v4402 = vpop.f32.mrb[0].mxu0
        %4403 = vmatprep.mubr.bf16.mxu0 0
        %4404 = vmatmul.mubr.bf16.gmra.mrb[0].mxu0 %v1342
        %v4405 = vpop.f32.mrb[0].mxu0
        %v4406 = vadd.f32 0.0, %v4405
        %v4407 = vpop.f32.mrb[0].mxu0
        %v4408 = vpop.f32.mrb[0].mxu0
        %v4409 = vadd.f32 0.0, %v4408
        %v4410 = vpop.f32.mrb[0].mxu0
        %4411 = vmatprep.mubr.bf16.mxu0 0
        %4412 = vmatmul.mubr.bf16.gmra.mrb[0].mxu0 %v1343
        %v4413 = vpop.f32.mrb[0].mxu0
        %v4414 = vadd.f32 0.0, %v4413
        %v4415 = vpop.f32.mrb[0].mxu0
        %v4416 = vpop.f32.mrb[0].mxu0
        %v4417 = vadd.f32 0.0, %v4416
        %v4418 = vpop.f32.mrb[0].mxu0
        %4419 = vmatprep.mubr.bf16.mxu0 0
        %4420 = vmatmul.mubr.bf16.gmra.mrb[0].mxu0 %v1344
        %v4421 = vpop.f32.mrb[0].mxu0
        %v4422 = vadd.f32 0.0, %v4421
        %v4423 = vpop.f32.mrb[0].mxu0
        %v4424 = vpop.f32.mrb[0].mxu0
        %v4425 = vadd.f32 0.0, %v4424
        %v4426 = vpop.f32.mrb[0].mxu0
        %4427 = vdwg.mxu0
        %s4428 = scalar_lea.vmem [#allocation19], 128
        %v4429 = vld [vmem:[%s4428] sm:$0xf]
        %v4430 = vld [vmem:[%s4428 + $0x4] sm:$0xf]
        %v4431 = vld [vmem:[%s4428 + $0x8] sm:$0xf]
        %v4432 = vld [vmem:[%s4428 + $0xc] sm:$0xf]
        %v4433 = vld [vmem:[%s4428 + $0x10] sm:$0xf]
        %v4434 = vld [vmem:[%s4428 + $0x14] sm:$0xf]
        %v4435 = vld [vmem:[%s4428 + $0x18] sm:$0xf]
        %v4436 = vld [vmem:[%s4428 + $0x1c] sm:$0xf]
        %v4437 = vld [vmem:[%s4428 + $0x20] sm:$0xf]
        %v4438 = vld [vmem:[%s4428 + $0x24] sm:$0xf]
        %v4439 = vld [vmem:[%s4428 + $0x28] sm:$0xf]
        %v4440 = vld [vmem:[%s4428 + $0x2c] sm:$0xf]
        %v4441 = vld [vmem:[%s4428 + $0x30] sm:$0xf]
        %v4442 = vld [vmem:[%s4428 + $0x34] sm:$0xf]
        %v4443 = vld [vmem:[%s4428 + $0x38] sm:$0xf]
        %v4444 = vld [vmem:[%s4428 + $0x3c] sm:$0xf]
        %v4461 = vunpack.c.l.b16 %v4429
        %v4462 = vunpack.c.l.b16 %v4430
        %v4463 = vunpack.c.l.b16 %v4431
        %v4464 = vunpack.c.l.b16 %v4432
        %v4465 = vunpack.c.l.b16 %v4433
        %v4466 = vunpack.c.l.b16 %v4434
        %v4467 = vunpack.c.l.b16 %v4435
        %v4468 = vunpack.c.l.b16 %v4436
        %v4469 = vunpack.c.l.b16 %v4437
        %v4470 = vunpack.c.l.b16 %v4438
        %v4471 = vunpack.c.l.b16 %v4439
        %v4472 = vunpack.c.l.b16 %v4440
        %v4473 = vunpack.c.l.b16 %v4441
        %v4474 = vunpack.c.l.b16 %v4442
        %v4475 = vunpack.c.l.b16 %v4443
        %v4476 = vunpack.c.l.b16 %v4444
        %v4477 = vpack.c.b16 %v4462, %v4461
        %v4478 = vpack.c.b16 %v4464, %v4463
        %v4479 = vpack.c.b16 %v4466, %v4465
        %v4480 = vpack.c.b16 %v4468, %v4467
        %v4481 = vpack.c.b16 %v4470, %v4469
        %v4482 = vpack.c.b16 %v4472, %v4471
        %v4483 = vpack.c.b16 %v4474, %v4473
        %v4484 = vpack.c.b16 %v4476, %v4475
        %4493 = vmatprep.subr.bf16.mxu0 0
        %4494 = vmatpush1.bf16.msra.mxu0 %v4477
        %4495 = vmatprep.subr.bf16.mxu0 0
        %4496 = vmatpush1.bf16.msra.mxu0 %v4478
        %4497 = vmatprep.subr.bf16.mxu0 0
        %4498 = vmatpush1.bf16.msra.mxu0 %v4479
        %4499 = vmatprep.subr.bf16.mxu0 0
        %4500 = vmatpush1.bf16.msra.mxu0 %v4480
        %4501 = vmatprep.subr.bf16.mxu0 0
        %4502 = vmatpush1.bf16.msra.mxu0 %v4481
        %4503 = vmatprep.subr.bf16.mxu0 0
        %4504 = vmatpush1.bf16.msra.mxu0 %v4482
        %4505 = vmatprep.subr.bf16.mxu0 0
        %4506 = vmatpush1.bf16.msra.mxu0 %v4483
        %4507 = vmatprep.subr.bf16.mxu0 0
        %4508 = vmatpush1.bf16.msra.mxu0 %v4484
        %4509 = vmatprep.subr.bf16.mxu0 0
        %4510 = vmatpush1.bf16.msra.mxu0 0
        %4511 = vmatprep.subr.bf16.mxu0 0
        %4512 = vmatpush1.bf16.msra.mxu0 0
        %4513 = vmatprep.subr.bf16.mxu0 0
        %4514 = vmatpush1.bf16.msra.mxu0 0
        %4515 = vmatprep.subr.bf16.mxu0 0
        %4516 = vmatpush1.bf16.msra.mxu0 0
        %4517 = vmatprep.subr.bf16.mxu0 0
        %4518 = vmatpush1.bf16.msra.mxu0 0
        %4519 = vmatprep.subr.bf16.mxu0 0
        %4520 = vmatpush1.bf16.msra.mxu0 0
        %4521 = vmatprep.subr.bf16.mxu0 0
        %4522 = vmatpush1.bf16.msra.mxu0 0
        %4523 = vmatprep.subr.bf16.mxu0 0
        %4524 = vmatpush1.bf16.msra.mxu0 0
        %4525 = vmatprep.mubr.bf16.mxu0 0
        %4526 = vmatmul.mubr.bf16.gmra.mrb[0].mxu0 %v1345
        %v4527 = vpop.f32.mrb[0].mxu0
        %v4528 = vadd.f32 0.0, %v4527
        %v4529 = vpop.f32.mrb[0].mxu0
        %v4530 = vpop.f32.mrb[0].mxu0
        %v4531 = vadd.f32 0.0, %v4530
        %v4532 = vpop.f32.mrb[0].mxu0
        %4533 = vmatprep.mubr.bf16.mxu0 0
        %4534 = vmatmul.mubr.bf16.gmra.mrb[0].mxu0 %v1346
        %v4535 = vpop.f32.mrb[0].mxu0
        %v4536 = vadd.f32 0.0, %v4535
        %v4537 = vpop.f32.mrb[0].mxu0
        %v4538 = vpop.f32.mrb[0].mxu0
        %v4539 = vadd.f32 0.0, %v4538
        %v4540 = vpop.f32.mrb[0].mxu0
        %4541 = vmatprep.mubr.bf16.mxu0 0
        %4542 = vmatmul.mubr.bf16.gmra.mrb[0].mxu0 %v1347
        %v4543 = vpop.f32.mrb[0].mxu0
        %v4544 = vadd.f32 0.0, %v4543
        %v4545 = vpop.f32.mrb[0].mxu0
        %v4546 = vpop.f32.mrb[0].mxu0
        %v4547 = vadd.f32 0.0, %v4546
        %v4548 = vpop.f32.mrb[0].mxu0
        %4549 = vmatprep.mubr.bf16.mxu0 0
        %4550 = vmatmul.mubr.bf16.gmra.mrb[0].mxu0 %v1348
        %v4551 = vpop.f32.mrb[0].mxu0
        %v4552 = vadd.f32 0.0, %v4551
        %v4553 = vpop.f32.mrb[0].mxu0
        %v4554 = vpop.f32.mrb[0].mxu0
        %v4555 = vadd.f32 0.0, %v4554
        %v4556 = vpop.f32.mrb[0].mxu0
        %4557 = vdwg.mxu0
        %s4558 = scalar_lea.vmem [#allocation21], 128
        %v4559 = vld [vmem:[%s4558] sm:$0xf]
        %v4560 = vld [vmem:[%s4558 + $0x4] sm:$0xf]
        %v4561 = vld [vmem:[%s4558 + $0x8] sm:$0xf]
        %v4562 = vld [vmem:[%s4558 + $0xc] sm:$0xf]
        %v4563 = vld [vmem:[%s4558 + $0x10] sm:$0xf]
        %v4564 = vld [vmem:[%s4558 + $0x14] sm:$0xf]
        %v4565 = vld [vmem:[%s4558 + $0x18] sm:$0xf]
        %v4566 = vld [vmem:[%s4558 + $0x1c] sm:$0xf]
        %v4567 = vld [vmem:[%s4558 + $0x20] sm:$0xf]
        %v4568 = vld [vmem:[%s4558 + $0x24] sm:$0xf]
        %v4569 = vld [vmem:[%s4558 + $0x28] sm:$0xf]
        %v4570 = vld [vmem:[%s4558 + $0x2c] sm:$0xf]
        %v4571 = vld [vmem:[%s4558 + $0x30] sm:$0xf]
        %v4572 = vld [vmem:[%s4558 + $0x34] sm:$0xf]
        %v4573 = vld [vmem:[%s4558 + $0x38] sm:$0xf]
        %v4574 = vld [vmem:[%s4558 + $0x3c] sm:$0xf]
        %v4591 = vunpack.c.l.b16 %v4559
        %v4592 = vunpack.c.l.b16 %v4560
        %v4593 = vunpack.c.l.b16 %v4561
        %v4594 = vunpack.c.l.b16 %v4562
        %v4595 = vunpack.c.l.b16 %v4563
        %v4596 = vunpack.c.l.b16 %v4564
        %v4597 = vunpack.c.l.b16 %v4565
        %v4598 = vunpack.c.l.b16 %v4566
        %v4599 = vunpack.c.l.b16 %v4567
        %v4600 = vunpack.c.l.b16 %v4568
        %v4601 = vunpack.c.l.b16 %v4569
        %v4602 = vunpack.c.l.b16 %v4570
        %v4603 = vunpack.c.l.b16 %v4571
        %v4604 = vunpack.c.l.b16 %v4572
        %v4605 = vunpack.c.l.b16 %v4573
        %v4606 = vunpack.c.l.b16 %v4574
        %v4607 = vpack.c.b16 %v4592, %v4591
        %v4608 = vpack.c.b16 %v4594, %v4593
        %v4609 = vpack.c.b16 %v4596, %v4595
        %v4610 = vpack.c.b16 %v4598, %v4597
        %v4611 = vpack.c.b16 %v4600, %v4599
        %v4612 = vpack.c.b16 %v4602, %v4601
        %v4613 = vpack.c.b16 %v4604, %v4603
        %v4614 = vpack.c.b16 %v4606, %v4605
        %4623 = vmatprep.subr.bf16.mxu0 0
        %4624 = vmatpush1.bf16.msra.mxu0 %v4607
        %4625 = vmatprep.subr.bf16.mxu0 0
        %4626 = vmatpush1.bf16.msra.mxu0 %v4608
        %4627 = vmatprep.subr.bf16.mxu0 0
        %4628 = vmatpush1.bf16.msra.mxu0 %v4609
        %4629 = vmatprep.subr.bf16.mxu0 0
        %4630 = vmatpush1.bf16.msra.mxu0 %v4610
        %4631 = vmatprep.subr.bf16.mxu0 0
        %4632 = vmatpush1.bf16.msra.mxu0 %v4611
        %4633 = vmatprep.subr.bf16.mxu0 0
        %4634 = vmatpush1.bf16.msra.mxu0 %v4612
        %4635 = vmatprep.subr.bf16.mxu0 0
        %4636 = vmatpush1.bf16.msra.mxu0 %v4613
        %4637 = vmatprep.subr.bf16.mxu0 0
        %4638 = vmatpush1.bf16.msra.mxu0 %v4614
        %4639 = vmatprep.subr.bf16.mxu0 0
        %4640 = vmatpush1.bf16.msra.mxu0 0
        %4641 = vmatprep.subr.bf16.mxu0 0
        %4642 = vmatpush1.bf16.msra.mxu0 0
        %4643 = vmatprep.subr.bf16.mxu0 0
        %4644 = vmatpush1.bf16.msra.mxu0 0
        %4645 = vmatprep.subr.bf16.mxu0 0
        %4646 = vmatpush1.bf16.msra.mxu0 0
        %4647 = vmatprep.subr.bf16.mxu0 0
        %4648 = vmatpush1.bf16.msra.mxu0 0
        %4649 = vmatprep.subr.bf16.mxu0 0
        %4650 = vmatpush1.bf16.msra.mxu0 0
        %4651 = vmatprep.subr.bf16.mxu0 0
        %4652 = vmatpush1.bf16.msra.mxu0 0
        %4653 = vmatprep.subr.bf16.mxu0 0
        %4654 = vmatpush1.bf16.msra.mxu0 0
        %4655 = vmatprep.mubr.bf16.mxu0 0
        %4656 = vmatmul.mubr.bf16.gmra.mrb[0].mxu0 %v1349
        %v4657 = vpop.f32.mrb[0].mxu0
        %v4658 = vadd.f32 0.0, %v4657
        %v4659 = vpop.f32.mrb[0].mxu0
        %v4660 = vpop.f32.mrb[0].mxu0
        %v4661 = vadd.f32 0.0, %v4660
        %v4662 = vpop.f32.mrb[0].mxu0
        %4663 = vmatprep.mubr.bf16.mxu0 0
        %4664 = vmatmul.mubr.bf16.gmra.mrb[0].mxu0 %v1350
        %v4665 = vpop.f32.mrb[0].mxu0
        %v4666 = vadd.f32 0.0, %v4665
        %v4667 = vpop.f32.mrb[0].mxu0
        %v4668 = vpop.f32.mrb[0].mxu0
        %v4669 = vadd.f32 0.0, %v4668
        %v4670 = vpop.f32.mrb[0].mxu0
        %4671 = vmatprep.mubr.bf16.mxu0 0
        %4672 = vmatmul.mubr.bf16.gmra.mrb[0].mxu0 %v1351
        %v4673 = vpop.f32.mrb[0].mxu0
        %v4674 = vadd.f32 0.0, %v4673
        %v4675 = vpop.f32.mrb[0].mxu0
        %v4676 = vpop.f32.mrb[0].mxu0
        %v4677 = vadd.f32 0.0, %v4676
        %v4678 = vpop.f32.mrb[0].mxu0
        %4679 = vmatprep.mubr.bf16.mxu0 0
        %4680 = vmatmul.mubr.bf16.gmra.mrb[0].mxu0 %v1352
        %v4681 = vpop.f32.mrb[0].mxu0
        %v4682 = vadd.f32 0.0, %v4681
        %v4683 = vpop.f32.mrb[0].mxu0
        %v4684 = vpop.f32.mrb[0].mxu0
        %v4685 = vadd.f32 0.0, %v4684
        %v4686 = vpop.f32.mrb[0].mxu0
        %4687 = vdwg.mxu0
        %v4688 = vpack.c.bf16 %v4661, %v4658
        %v4689 = vpack.c.bf16 %v4669, %v4666
        %v4690 = vpack.c.bf16 %v4677, %v4674
        %v4691 = vpack.c.bf16 %v4685, %v4682
        %v4692 = vpack.c.bf16 %v4398, %v4398
        %v4693 = vpack.c.bf16 %v4401, %v4401
        %v4694 = vpack.c.bf16 %v4406, %v4406
        %v4695 = vpack.c.bf16 %v4409, %v4409
        %v4696 = vpack.c.bf16 %v4414, %v4414
        %v4697 = vpack.c.bf16 %v4417, %v4417
        %v4698 = vpack.c.bf16 %v4422, %v4422
        %v4699 = vpack.c.bf16 %v4425, %v4425
        %v4700 = vpack.c.bf16 %v4528, %v4528
        %v4701 = vpack.c.bf16 %v4531, %v4531
        %v4702 = vpack.c.bf16 %v4536, %v4536
        %v4703 = vpack.c.bf16 %v4539, %v4539
        %v4704 = vpack.c.bf16 %v4544, %v4544
        %v4705 = vpack.c.bf16 %v4547, %v4547
        %v4706 = vpack.c.bf16 %v4552, %v4552
        %v4707 = vpack.c.bf16 %v4555, %v4555
        %v4712 = vunpack.c.l.b16 %v4688
        %v4713 = vunpack.c.h.b16 %v4688
        %v4714 = vunpack.c.l.b16 %v4689
        %v4715 = vunpack.c.h.b16 %v4689
        %v4716 = vunpack.c.l.b16 %v4690
        %v4717 = vunpack.c.h.b16 %v4690
        %v4718 = vunpack.c.l.b16 %v4691
        %v4719 = vunpack.c.h.b16 %v4691
        %v4720 = vpack.c.b16 %v4712, %v4712
        %v4721 = vpack.c.b16 %v4713, %v4713
        %v4722 = vpack.c.b16 %v4714, %v4714
        %v4723 = vpack.c.b16 %v4715, %v4715
        %v4724 = vpack.c.b16 %v4716, %v4716
        %v4725 = vpack.c.b16 %v4717, %v4717
        %v4726 = vpack.c.b16 %v4718, %v4718
        %v4727 = vpack.c.b16 %v4719, %v4719
        %v4729 = vsel %vm1785, %v4692, 0
        %v4732 = vsel %vm1785, %v4700, 0
        %4734 = vmatprep.subr.bf16.mxu0 0
        %4735 = vmatpush1.bf16.xpose.msra.mxu0 %v4732
        %4736 = vmatprep.subr.bf16.mxu0 0
        %4737 = vmatpush1.bf16.xpose.msra.mxu0 0
        %4738 = vmatprep.subr.bf16.mxu0 0
        %4739 = vmatpush1.bf16.xpose.msra.mxu0 0
        %4740 = vmatprep.subr.bf16.mxu0 0
        %4741 = vmatpush1.bf16.xpose.msra.mxu0 0
        %4742 = vmatprep.subr.bf16.mxu0 0
        %4743 = vmatpush1.bf16.xpose.msra.mxu0 0
        %4744 = vmatprep.subr.bf16.mxu0 0
        %4745 = vmatpush1.bf16.xpose.msra.mxu0 0
        %4746 = vmatprep.subr.bf16.mxu0 0
        %4747 = vmatpush1.bf16.xpose.msra.mxu0 0
        %4748 = vmatprep.subr.bf16.mxu0 0
        %4749 = vmatpush1.bf16.xpose.msra.mxu0 0
        %4750 = vmatprep.subr.bf16.mxu0 0
        %4751 = vmatpush1.bf16.xpose.msra.mxu0 0
        %4752 = vmatprep.subr.bf16.mxu0 0
        %4753 = vmatpush1.bf16.xpose.msra.mxu0 0
        %4754 = vmatprep.subr.bf16.mxu0 0
        %4755 = vmatpush1.bf16.xpose.msra.mxu0 0
        %4756 = vmatprep.subr.bf16.mxu0 0
        %4757 = vmatpush1.bf16.xpose.msra.mxu0 0
        %4758 = vmatprep.subr.bf16.mxu0 0
        %4759 = vmatpush1.bf16.xpose.msra.mxu0 0
        %4760 = vmatprep.subr.bf16.mxu0 0
        %4761 = vmatpush1.bf16.xpose.msra.mxu0 0
        %4762 = vmatprep.subr.bf16.mxu0 0
        %4763 = vmatpush1.bf16.xpose.msra.mxu0 0
        %4764 = vmatprep.subr.bf16.mxu0 0
        %4765 = vmatpush1.bf16.xpose.msra.mxu0 0
        %4766 = vmatprep.mubr.bf16.mxu0 0
        %4767 = vmatmul.mubr.bf16.gmra.mrb[0].mxu0 %v4729
        %v4768 = vpop.f32.mrb[0].mxu0
        %v4769 = vadd.f32 0.0, %v4768
        %v4770 = vpop.f32.mrb[0].mxu0
        %v4771 = vpop.f32.mrb[0].mxu0
        %v4772 = vpop.f32.mrb[0].mxu0
        %4773 = vdwg.mxu0
        %v4775 = vsel %vm1785, %v4693, 0
        %v4778 = vsel %vm1785, %v4701, 0
        %4780 = vmatprep.subr.bf16.mxu0 0
        %4781 = vmatpush1.bf16.xpose.msra.mxu0 %v4778
        %4782 = vmatprep.subr.bf16.mxu0 0
        %4783 = vmatpush1.bf16.xpose.msra.mxu0 0
        %4784 = vmatprep.subr.bf16.mxu0 0
        %4785 = vmatpush1.bf16.xpose.msra.mxu0 0
        %4786 = vmatprep.subr.bf16.mxu0 0
        %4787 = vmatpush1.bf16.xpose.msra.mxu0 0
        %4788 = vmatprep.subr.bf16.mxu0 0
        %4789 = vmatpush1.bf16.xpose.msra.mxu0 0
        %4790 = vmatprep.subr.bf16.mxu0 0
        %4791 = vmatpush1.bf16.xpose.msra.mxu0 0
        %4792 = vmatprep.subr.bf16.mxu0 0
        %4793 = vmatpush1.bf16.xpose.msra.mxu0 0
        %4794 = vmatprep.subr.bf16.mxu0 0
        %4795 = vmatpush1.bf16.xpose.msra.mxu0 0
        %4796 = vmatprep.subr.bf16.mxu0 0
        %4797 = vmatpush1.bf16.xpose.msra.mxu0 0
        %4798 = vmatprep.subr.bf16.mxu0 0
        %4799 = vmatpush1.bf16.xpose.msra.mxu0 0
        %4800 = vmatprep.subr.bf16.mxu0 0
        %4801 = vmatpush1.bf16.xpose.msra.mxu0 0
        %4802 = vmatprep.subr.bf16.mxu0 0
        %4803 = vmatpush1.bf16.xpose.msra.mxu0 0
        %4804 = vmatprep.subr.bf16.mxu0 0
        %4805 = vmatpush1.bf16.xpose.msra.mxu0 0
        %4806 = vmatprep.subr.bf16.mxu0 0
        %4807 = vmatpush1.bf16.xpose.msra.mxu0 0
        %4808 = vmatprep.subr.bf16.mxu0 0
        %4809 = vmatpush1.bf16.xpose.msra.mxu0 0
        %4810 = vmatprep.subr.bf16.mxu0 0
        %4811 = vmatpush1.bf16.xpose.msra.mxu0 0
        %4812 = vmatprep.mubr.bf16.mxu0 0
        %4813 = vmatmul.mubr.bf16.gmra.mrb[0].mxu0 %v4775
        %v4814 = vpop.f32.mrb[0].mxu0
        %v4815 = vadd.f32 0.0, %v4814
        %v4816 = vpop.f32.mrb[0].mxu0
        %v4817 = vpop.f32.mrb[0].mxu0
        %v4818 = vpop.f32.mrb[0].mxu0
        %4819 = vdwg.mxu0
        %v4821 = vsel %vm1785, %v4694, 0
        %v4824 = vsel %vm1785, %v4702, 0
        %4826 = vmatprep.subr.bf16.mxu0 0
        %4827 = vmatpush1.bf16.xpose.msra.mxu0 %v4824
        %4828 = vmatprep.subr.bf16.mxu0 0
        %4829 = vmatpush1.bf16.xpose.msra.mxu0 0
        %4830 = vmatprep.subr.bf16.mxu0 0
        %4831 = vmatpush1.bf16.xpose.msra.mxu0 0
        %4832 = vmatprep.subr.bf16.mxu0 0
        %4833 = vmatpush1.bf16.xpose.msra.mxu0 0
        %4834 = vmatprep.subr.bf16.mxu0 0
        %4835 = vmatpush1.bf16.xpose.msra.mxu0 0
        %4836 = vmatprep.subr.bf16.mxu0 0
        %4837 = vmatpush1.bf16.xpose.msra.mxu0 0
        %4838 = vmatprep.subr.bf16.mxu0 0
        %4839 = vmatpush1.bf16.xpose.msra.mxu0 0
        %4840 = vmatprep.subr.bf16.mxu0 0
        %4841 = vmatpush1.bf16.xpose.msra.mxu0 0
        %4842 = vmatprep.subr.bf16.mxu0 0
        %4843 = vmatpush1.bf16.xpose.msra.mxu0 0
        %4844 = vmatprep.subr.bf16.mxu0 0
        %4845 = vmatpush1.bf16.xpose.msra.mxu0 0
        %4846 = vmatprep.subr.bf16.mxu0 0
        %4847 = vmatpush1.bf16.xpose.msra.mxu0 0
        %4848 = vmatprep.subr.bf16.mxu0 0
        %4849 = vmatpush1.bf16.xpose.msra.mxu0 0
        %4850 = vmatprep.subr.bf16.mxu0 0
        %4851 = vmatpush1.bf16.xpose.msra.mxu0 0
        %4852 = vmatprep.subr.bf16.mxu0 0
        %4853 = vmatpush1.bf16.xpose.msra.mxu0 0
        %4854 = vmatprep.subr.bf16.mxu0 0
        %4855 = vmatpush1.bf16.xpose.msra.mxu0 0
        %4856 = vmatprep.subr.bf16.mxu0 0
        %4857 = vmatpush1.bf16.xpose.msra.mxu0 0
        %4858 = vmatprep.mubr.bf16.mxu0 0
        %4859 = vmatmul.mubr.bf16.gmra.mrb[0].mxu0 %v4821
        %v4860 = vpop.f32.mrb[0].mxu0
        %v4861 = vadd.f32 0.0, %v4860
        %v4862 = vpop.f32.mrb[0].mxu0
        %v4863 = vpop.f32.mrb[0].mxu0
        %v4864 = vpop.f32.mrb[0].mxu0
        %4865 = vdwg.mxu0
        %v4867 = vsel %vm1785, %v4695, 0
        %v4870 = vsel %vm1785, %v4703, 0
        %4872 = vmatprep.subr.bf16.mxu0 0
        %4873 = vmatpush1.bf16.xpose.msra.mxu0 %v4870
        %4874 = vmatprep.subr.bf16.mxu0 0
        %4875 = vmatpush1.bf16.xpose.msra.mxu0 0
        %4876 = vmatprep.subr.bf16.mxu0 0
        %4877 = vmatpush1.bf16.xpose.msra.mxu0 0
        %4878 = vmatprep.subr.bf16.mxu0 0
        %4879 = vmatpush1.bf16.xpose.msra.mxu0 0
        %4880 = vmatprep.subr.bf16.mxu0 0
        %4881 = vmatpush1.bf16.xpose.msra.mxu0 0
        %4882 = vmatprep.subr.bf16.mxu0 0
        %4883 = vmatpush1.bf16.xpose.msra.mxu0 0
        %4884 = vmatprep.subr.bf16.mxu0 0
        %4885 = vmatpush1.bf16.xpose.msra.mxu0 0
        %4886 = vmatprep.subr.bf16.mxu0 0
        %4887 = vmatpush1.bf16.xpose.msra.mxu0 0
        %4888 = vmatprep.subr.bf16.mxu0 0
        %4889 = vmatpush1.bf16.xpose.msra.mxu0 0
        %4890 = vmatprep.subr.bf16.mxu0 0
        %4891 = vmatpush1.bf16.xpose.msra.mxu0 0
        %4892 = vmatprep.subr.bf16.mxu0 0
        %4893 = vmatpush1.bf16.xpose.msra.mxu0 0
        %4894 = vmatprep.subr.bf16.mxu0 0
        %4895 = vmatpush1.bf16.xpose.msra.mxu0 0
        %4896 = vmatprep.subr.bf16.mxu0 0
        %4897 = vmatpush1.bf16.xpose.msra.mxu0 0
        %4898 = vmatprep.subr.bf16.mxu0 0
        %4899 = vmatpush1.bf16.xpose.msra.mxu0 0
        %4900 = vmatprep.subr.bf16.mxu0 0
        %4901 = vmatpush1.bf16.xpose.msra.mxu0 0
        %4902 = vmatprep.subr.bf16.mxu0 0
        %4903 = vmatpush1.bf16.xpose.msra.mxu0 0
        %4904 = vmatprep.mubr.bf16.mxu0 0
        %4905 = vmatmul.mubr.bf16.gmra.mrb[0].mxu0 %v4867
        %v4906 = vpop.f32.mrb[0].mxu0
        %v4907 = vadd.f32 0.0, %v4906
        %v4908 = vpop.f32.mrb[0].mxu0
        %v4909 = vpop.f32.mrb[0].mxu0
        %v4910 = vpop.f32.mrb[0].mxu0
        %4911 = vdwg.mxu0
        %v4913 = vsel %vm1785, %v4696, 0
        %v4916 = vsel %vm1785, %v4704, 0
        %4918 = vmatprep.subr.bf16.mxu0 0
        %4919 = vmatpush1.bf16.xpose.msra.mxu0 %v4916
        %4920 = vmatprep.subr.bf16.mxu0 0
        %4921 = vmatpush1.bf16.xpose.msra.mxu0 0
        %4922 = vmatprep.subr.bf16.mxu0 0
        %4923 = vmatpush1.bf16.xpose.msra.mxu0 0
        %4924 = vmatprep.subr.bf16.mxu0 0
        %4925 = vmatpush1.bf16.xpose.msra.mxu0 0
        %4926 = vmatprep.subr.bf16.mxu0 0
        %4927 = vmatpush1.bf16.xpose.msra.mxu0 0
        %4928 = vmatprep.subr.bf16.mxu0 0
        %4929 = vmatpush1.bf16.xpose.msra.mxu0 0
        %4930 = vmatprep.subr.bf16.mxu0 0
        %4931 = vmatpush1.bf16.xpose.msra.mxu0 0
        %4932 = vmatprep.subr.bf16.mxu0 0
        %4933 = vmatpush1.bf16.xpose.msra.mxu0 0
        %4934 = vmatprep.subr.bf16.mxu0 0
        %4935 = vmatpush1.bf16.xpose.msra.mxu0 0
        %4936 = vmatprep.subr.bf16.mxu0 0
        %4937 = vmatpush1.bf16.xpose.msra.mxu0 0
        %4938 = vmatprep.subr.bf16.mxu0 0
        %4939 = vmatpush1.bf16.xpose.msra.mxu0 0
        %4940 = vmatprep.subr.bf16.mxu0 0
        %4941 = vmatpush1.bf16.xpose.msra.mxu0 0
        %4942 = vmatprep.subr.bf16.mxu0 0
        %4943 = vmatpush1.bf16.xpose.msra.mxu0 0
        %4944 = vmatprep.subr.bf16.mxu0 0
        %4945 = vmatpush1.bf16.xpose.msra.mxu0 0
        %4946 = vmatprep.subr.bf16.mxu0 0
        %4947 = vmatpush1.bf16.xpose.msra.mxu0 0
        %4948 = vmatprep.subr.bf16.mxu0 0
        %4949 = vmatpush1.bf16.xpose.msra.mxu0 0
        %4950 = vmatprep.mubr.bf16.mxu0 0
        %4951 = vmatmul.mubr.bf16.gmra.mrb[0].mxu0 %v4913
        %v4952 = vpop.f32.mrb[0].mxu0
        %v4953 = vadd.f32 0.0, %v4952
        %v4954 = vpop.f32.mrb[0].mxu0
        %v4955 = vpop.f32.mrb[0].mxu0
        %v4956 = vpop.f32.mrb[0].mxu0
        %4957 = vdwg.mxu0
        %v4959 = vsel %vm1785, %v4697, 0
        %v4962 = vsel %vm1785, %v4705, 0
        %4964 = vmatprep.subr.bf16.mxu0 0
        %4965 = vmatpush1.bf16.xpose.msra.mxu0 %v4962
        %4966 = vmatprep.subr.bf16.mxu0 0
        %4967 = vmatpush1.bf16.xpose.msra.mxu0 0
        %4968 = vmatprep.subr.bf16.mxu0 0
        %4969 = vmatpush1.bf16.xpose.msra.mxu0 0
        %4970 = vmatprep.subr.bf16.mxu0 0
        %4971 = vmatpush1.bf16.xpose.msra.mxu0 0
        %4972 = vmatprep.subr.bf16.mxu0 0
        %4973 = vmatpush1.bf16.xpose.msra.mxu0 0
        %4974 = vmatprep.subr.bf16.mxu0 0
        %4975 = vmatpush1.bf16.xpose.msra.mxu0 0
        %4976 = vmatprep.subr.bf16.mxu0 0
        %4977 = vmatpush1.bf16.xpose.msra.mxu0 0
        %4978 = vmatprep.subr.bf16.mxu0 0
        %4979 = vmatpush1.bf16.xpose.msra.mxu0 0
        %4980 = vmatprep.subr.bf16.mxu0 0
        %4981 = vmatpush1.bf16.xpose.msra.mxu0 0
        %4982 = vmatprep.subr.bf16.mxu0 0
        %4983 = vmatpush1.bf16.xpose.msra.mxu0 0
        %4984 = vmatprep.subr.bf16.mxu0 0
        %4985 = vmatpush1.bf16.xpose.msra.mxu0 0
        %4986 = vmatprep.subr.bf16.mxu0 0
        %4987 = vmatpush1.bf16.xpose.msra.mxu0 0
        %4988 = vmatprep.subr.bf16.mxu0 0
        %4989 = vmatpush1.bf16.xpose.msra.mxu0 0
        %4990 = vmatprep.subr.bf16.mxu0 0
        %4991 = vmatpush1.bf16.xpose.msra.mxu0 0
        %4992 = vmatprep.subr.bf16.mxu0 0
        %4993 = vmatpush1.bf16.xpose.msra.mxu0 0
        %4994 = vmatprep.subr.bf16.mxu0 0
        %4995 = vmatpush1.bf16.xpose.msra.mxu0 0
        %4996 = vmatprep.mubr.bf16.mxu0 0
        %4997 = vmatmul.mubr.bf16.gmra.mrb[0].mxu0 %v4959
        %v4998 = vpop.f32.mrb[0].mxu0
        %v4999 = vadd.f32 0.0, %v4998
        %v5000 = vpop.f32.mrb[0].mxu0
        %v5001 = vpop.f32.mrb[0].mxu0
        %v5002 = vpop.f32.mrb[0].mxu0
        %5003 = vdwg.mxu0
        %v5005 = vsel %vm1785, %v4698, 0
        %v5008 = vsel %vm1785, %v4706, 0
        %5010 = vmatprep.subr.bf16.mxu0 0
        %5011 = vmatpush1.bf16.xpose.msra.mxu0 %v5008
        %5012 = vmatprep.subr.bf16.mxu0 0
        %5013 = vmatpush1.bf16.xpose.msra.mxu0 0
        %5014 = vmatprep.subr.bf16.mxu0 0
        %5015 = vmatpush1.bf16.xpose.msra.mxu0 0
        %5016 = vmatprep.subr.bf16.mxu0 0
        %5017 = vmatpush1.bf16.xpose.msra.mxu0 0
        %5018 = vmatprep.subr.bf16.mxu0 0
        %5019 = vmatpush1.bf16.xpose.msra.mxu0 0
        %5020 = vmatprep.subr.bf16.mxu0 0
        %5021 = vmatpush1.bf16.xpose.msra.mxu0 0
        %5022 = vmatprep.subr.bf16.mxu0 0
        %5023 = vmatpush1.bf16.xpose.msra.mxu0 0
        %5024 = vmatprep.subr.bf16.mxu0 0
        %5025 = vmatpush1.bf16.xpose.msra.mxu0 0
        %5026 = vmatprep.subr.bf16.mxu0 0
        %5027 = vmatpush1.bf16.xpose.msra.mxu0 0
        %5028 = vmatprep.subr.bf16.mxu0 0
        %5029 = vmatpush1.bf16.xpose.msra.mxu0 0
        %5030 = vmatprep.subr.bf16.mxu0 0
        %5031 = vmatpush1.bf16.xpose.msra.mxu0 0
        %5032 = vmatprep.subr.bf16.mxu0 0
        %5033 = vmatpush1.bf16.xpose.msra.mxu0 0
        %5034 = vmatprep.subr.bf16.mxu0 0
        %5035 = vmatpush1.bf16.xpose.msra.mxu0 0
        %5036 = vmatprep.subr.bf16.mxu0 0
        %5037 = vmatpush1.bf16.xpose.msra.mxu0 0
        %5038 = vmatprep.subr.bf16.mxu0 0
        %5039 = vmatpush1.bf16.xpose.msra.mxu0 0
        %5040 = vmatprep.subr.bf16.mxu0 0
        %5041 = vmatpush1.bf16.xpose.msra.mxu0 0
        %5042 = vmatprep.mubr.bf16.mxu0 0
        %5043 = vmatmul.mubr.bf16.gmra.mrb[0].mxu0 %v5005
        %v5044 = vpop.f32.mrb[0].mxu0
        %v5045 = vadd.f32 0.0, %v5044
        %v5046 = vpop.f32.mrb[0].mxu0
        %v5047 = vpop.f32.mrb[0].mxu0
        %v5048 = vpop.f32.mrb[0].mxu0
        %5049 = vdwg.mxu0
        %v5051 = vsel %vm1785, %v4699, 0
        %v5054 = vsel %vm1785, %v4707, 0
        %5056 = vmatprep.subr.bf16.mxu0 0
        %5057 = vmatpush1.bf16.xpose.msra.mxu0 %v5054
        %5058 = vmatprep.subr.bf16.mxu0 0
        %5059 = vmatpush1.bf16.xpose.msra.mxu0 0
        %5060 = vmatprep.subr.bf16.mxu0 0
        %5061 = vmatpush1.bf16.xpose.msra.mxu0 0
        %5062 = vmatprep.subr.bf16.mxu0 0
        %5063 = vmatpush1.bf16.xpose.msra.mxu0 0
        %5064 = vmatprep.subr.bf16.mxu0 0
        %5065 = vmatpush1.bf16.xpose.msra.mxu0 0
        %5066 = vmatprep.subr.bf16.mxu0 0
        %5067 = vmatpush1.bf16.xpose.msra.mxu0 0
        %5068 = vmatprep.subr.bf16.mxu0 0
        %5069 = vmatpush1.bf16.xpose.msra.mxu0 0
        %5070 = vmatprep.subr.bf16.mxu0 0
        %5071 = vmatpush1.bf16.xpose.msra.mxu0 0
        %5072 = vmatprep.subr.bf16.mxu0 0
        %5073 = vmatpush1.bf16.xpose.msra.mxu0 0
        %5074 = vmatprep.subr.bf16.mxu0 0
        %5075 = vmatpush1.bf16.xpose.msra.mxu0 0
        %5076 = vmatprep.subr.bf16.mxu0 0
        %5077 = vmatpush1.bf16.xpose.msra.mxu0 0
        %5078 = vmatprep.subr.bf16.mxu0 0
        %5079 = vmatpush1.bf16.xpose.msra.mxu0 0
        %5080 = vmatprep.subr.bf16.mxu0 0
        %5081 = vmatpush1.bf16.xpose.msra.mxu0 0
        %5082 = vmatprep.subr.bf16.mxu0 0
        %5083 = vmatpush1.bf16.xpose.msra.mxu0 0
        %5084 = vmatprep.subr.bf16.mxu0 0
        %5085 = vmatpush1.bf16.xpose.msra.mxu0 0
        %5086 = vmatprep.subr.bf16.mxu0 0
        %5087 = vmatpush1.bf16.xpose.msra.mxu0 0
        %5088 = vmatprep.mubr.bf16.mxu0 0
        %5089 = vmatmul.mubr.bf16.gmra.mrb[0].mxu0 %v5051
        %v5090 = vpop.f32.mrb[0].mxu0
        %v5091 = vadd.f32 0.0, %v5090
        %v5092 = vpop.f32.mrb[0].mxu0
        %v5093 = vpop.f32.mrb[0].mxu0
        %v5094 = vpop.f32.mrb[0].mxu0
        %5095 = vdwg.mxu0
        %v5096 = vmul.f32 %v4769, 0.17677669
        %v5097 = vmul.f32 %v4815, 0.17677669
        %v5098 = vmul.f32 %v4861, 0.17677669
        %v5099 = vmul.f32 %v4907, 0.17677669
        %v5100 = vmul.f32 %v4953, 0.17677669
        %v5101 = vmul.f32 %v4999, 0.17677669
        %v5102 = vmul.f32 %v5045, 0.17677669
        %v5103 = vmul.f32 %v5091, 0.17677669
        %v5104 = vsel %vm2163, -1e+32, %v5096
        %v5105 = vsel %vm2163, -1e+32, %v5097
        %v5106 = vsel %vm2163, -1e+32, %v5098
        %v5107 = vsel %vm2163, -1e+32, %v5099
        %v5108 = vsel %vm2163, -1e+32, %v5100
        %v5109 = vsel %vm2163, -1e+32, %v5101
        %v5110 = vsel %vm2163, -1e+32, %v5102
        %v5111 = vsel %vm2163, -1e+32, %v5103
        %v5112 = vsel %vm2172, %v5104, -inf
        %5113 = vmax.xlane.f32.xlu0 %v5112
        %v5114 = vpop.xlane.xlu0 %5113
        %v5115 = vsel %vm2172, %v5105, -inf
        %5116 = vmax.xlane.f32.xlu0 %v5115
        %v5117 = vpop.xlane.xlu0 %5116
        %v5118 = vsel %vm2172, %v5106, -inf
        %5119 = vmax.xlane.f32.xlu0 %v5118
        %v5120 = vpop.xlane.xlu0 %5119
        %v5121 = vsel %vm2172, %v5107, -inf
        %5122 = vmax.xlane.f32.xlu0 %v5121
        %v5123 = vpop.xlane.xlu0 %5122
        %v5124 = vsel %vm2172, %v5108, -inf
        %5125 = vmax.xlane.f32.xlu0 %v5124
        %v5126 = vpop.xlane.xlu0 %5125
        %v5127 = vsel %vm2172, %v5109, -inf
        %5128 = vmax.xlane.f32.xlu0 %v5127
        %v5129 = vpop.xlane.xlu0 %5128
        %v5130 = vsel %vm2172, %v5110, -inf
        %5131 = vmax.xlane.f32.xlu0 %v5130
        %v5132 = vpop.xlane.xlu0 %5131
        %v5133 = vsel %vm2172, %v5111, -inf
        %5134 = vmax.xlane.f32.xlu0 %v5133
        %v5135 = vpop.xlane.xlu0 %5134
        %v5136 = vsub.f32 %v5104, %v5114
        %v5137 = vsub.f32 %v5105, %v5117
        %v5138 = vsub.f32 %v5106, %v5120
        %v5139 = vsub.f32 %v5107, %v5123
        %v5140 = vsub.f32 %v5108, %v5126
        %v5141 = vsub.f32 %v5109, %v5129
        %v5142 = vsub.f32 %v5110, %v5132
        %v5143 = vsub.f32 %v5111, %v5135
        %v5144 = vmul.f32 %v5136, 1.442695
        %v5145 = vpow.pop %v5144
        %v5146 = vmul.f32 %v5137, 1.442695
        %v5147 = vpow.pop %v5146
        %v5148 = vmul.f32 %v5138, 1.442695
        %v5149 = vpow.pop %v5148
        %v5150 = vmul.f32 %v5139, 1.442695
        %v5151 = vpow.pop %v5150
        %v5152 = vmul.f32 %v5140, 1.442695
        %v5153 = vpow.pop %v5152
        %v5154 = vmul.f32 %v5141, 1.442695
        %v5155 = vpow.pop %v5154
        %v5156 = vmul.f32 %v5142, 1.442695
        %v5157 = vpow.pop %v5156
        %v5158 = vmul.f32 %v5143, 1.442695
        %v5159 = vpow.pop %v5158
        %v5160 = vsel %vm2172, %v5145, 0.0
        %5161 = vadd.xlane.f32.xlu0 %v5160
        %v5162 = vpop.xlane.xlu0 %5161
        %v5163 = vsel %vm2172, %v5147, 0.0
        %5164 = vadd.xlane.f32.xlu0 %v5163
        %v5165 = vpop.xlane.xlu0 %5164
        %v5166 = vsel %vm2172, %v5149, 0.0
        %5167 = vadd.xlane.f32.xlu0 %v5166
        %v5168 = vpop.xlane.xlu0 %5167
        %v5169 = vsel %vm2172, %v5151, 0.0
        %5170 = vadd.xlane.f32.xlu0 %v5169
        %v5171 = vpop.xlane.xlu0 %5170
        %v5172 = vsel %vm2172, %v5153, 0.0
        %5173 = vadd.xlane.f32.xlu0 %v5172
        %v5174 = vpop.xlane.xlu0 %5173
        %v5175 = vsel %vm2172, %v5155, 0.0
        %5176 = vadd.xlane.f32.xlu0 %v5175
        %v5177 = vpop.xlane.xlu0 %5176
        %v5178 = vsel %vm2172, %v5157, 0.0
        %5179 = vadd.xlane.f32.xlu0 %v5178
        %v5180 = vpop.xlane.xlu0 %5179
        %v5181 = vsel %vm2172, %v5159, 0.0
        %5182 = vadd.xlane.f32.xlu0 %v5181
        %v5183 = vpop.xlane.xlu0 %5182
        %v5184 = vrcp.pop %v5162
        %v5185 = vrcp.pop %v5165
        %v5186 = vrcp.pop %v5168
        %v5187 = vrcp.pop %v5171
        %v5188 = vrcp.pop %v5174
        %v5189 = vrcp.pop %v5177
        %v5190 = vrcp.pop %v5180
        %v5191 = vrcp.pop %v5183
        %v5192 = vmul.f32 %v5145, %v5184
        %v5193 = vmul.f32 %v5147, %v5185
        %v5194 = vmul.f32 %v5149, %v5186
        %v5195 = vmul.f32 %v5151, %v5187
        %v5196 = vmul.f32 %v5153, %v5188
        %v5197 = vmul.f32 %v5155, %v5189
        %v5198 = vmul.f32 %v5157, %v5190
        %v5199 = vmul.f32 %v5159, %v5191
        %v5200 = vpack.c.bf16 %v5192, %v5192
        %v5201 = vpack.c.bf16 %v5193, %v5193
        %v5202 = vpack.c.bf16 %v5194, %v5194
        %v5203 = vpack.c.bf16 %v5195, %v5195
        %v5204 = vpack.c.bf16 %v5196, %v5196
        %v5205 = vpack.c.bf16 %v5197, %v5197
        %v5206 = vpack.c.bf16 %v5198, %v5198
        %v5207 = vpack.c.bf16 %v5199, %v5199
        %v5209 = vsel %vm2172, %v5200, 0
        %v5212 = vsel %vm2272, %v4720, 0
        %5214 = vmatprep.subr.bf16.mxu0 0
        %5215 = vmatpush1.bf16.msra.mxu0 %v5212
        %5216 = vmatprep.subr.bf16.mxu0 0
        %5217 = vmatpush1.bf16.msra.mxu0 0
        %5218 = vmatprep.subr.bf16.mxu0 0
        %5219 = vmatpush1.bf16.msra.mxu0 0
        %5220 = vmatprep.subr.bf16.mxu0 0
        %5221 = vmatpush1.bf16.msra.mxu0 0
        %5222 = vmatprep.subr.bf16.mxu0 0
        %5223 = vmatpush1.bf16.msra.mxu0 0
        %5224 = vmatprep.subr.bf16.mxu0 0
        %5225 = vmatpush1.bf16.msra.mxu0 0
        %5226 = vmatprep.subr.bf16.mxu0 0
        %5227 = vmatpush1.bf16.msra.mxu0 0
        %5228 = vmatprep.subr.bf16.mxu0 0
        %5229 = vmatpush1.bf16.msra.mxu0 0
        %5230 = vmatprep.subr.bf16.mxu0 0
        %5231 = vmatpush1.bf16.msra.mxu0 0
        %5232 = vmatprep.subr.bf16.mxu0 0
        %5233 = vmatpush1.bf16.msra.mxu0 0
        %5234 = vmatprep.subr.bf16.mxu0 0
        %5235 = vmatpush1.bf16.msra.mxu0 0
        %5236 = vmatprep.subr.bf16.mxu0 0
        %5237 = vmatpush1.bf16.msra.mxu0 0
        %5238 = vmatprep.subr.bf16.mxu0 0
        %5239 = vmatpush1.bf16.msra.mxu0 0
        %5240 = vmatprep.subr.bf16.mxu0 0
        %5241 = vmatpush1.bf16.msra.mxu0 0
        %5242 = vmatprep.subr.bf16.mxu0 0
        %5243 = vmatpush1.bf16.msra.mxu0 0
        %5244 = vmatprep.subr.bf16.mxu0 0
        %5245 = vmatpush1.bf16.msra.mxu0 0
        %5246 = vmatprep.mubr.bf16.mxu0 0
        %5247 = vmatmul.mubr.bf16.gmra.mrb[0].mxu0 %v5209
        %v5248 = vpop.f32.mrb[0].mxu0
        %v5249 = vadd.f32 0.0, %v5248
        %v5250 = vpop.f32.mrb[0].mxu0
        %v5251 = vpop.f32.mrb[0].mxu0
        %v5252 = vpop.f32.mrb[0].mxu0
        %5253 = vdwg.mxu0
        %v5255 = vsel %vm2172, %v5201, 0
        %v5258 = vsel %vm2272, %v4721, 0
        %5260 = vmatprep.subr.bf16.mxu0 0
        %5261 = vmatpush1.bf16.msra.mxu0 %v5258
        %5262 = vmatprep.subr.bf16.mxu0 0
        %5263 = vmatpush1.bf16.msra.mxu0 0
        %5264 = vmatprep.subr.bf16.mxu0 0
        %5265 = vmatpush1.bf16.msra.mxu0 0
        %5266 = vmatprep.subr.bf16.mxu0 0
        %5267 = vmatpush1.bf16.msra.mxu0 0
        %5268 = vmatprep.subr.bf16.mxu0 0
        %5269 = vmatpush1.bf16.msra.mxu0 0
        %5270 = vmatprep.subr.bf16.mxu0 0
        %5271 = vmatpush1.bf16.msra.mxu0 0
        %5272 = vmatprep.subr.bf16.mxu0 0
        %5273 = vmatpush1.bf16.msra.mxu0 0
        %5274 = vmatprep.subr.bf16.mxu0 0
        %5275 = vmatpush1.bf16.msra.mxu0 0
        %5276 = vmatprep.subr.bf16.mxu0 0
        %5277 = vmatpush1.bf16.msra.mxu0 0
        %5278 = vmatprep.subr.bf16.mxu0 0
        %5279 = vmatpush1.bf16.msra.mxu0 0
        %5280 = vmatprep.subr.bf16.mxu0 0
        %5281 = vmatpush1.bf16.msra.mxu0 0
        %5282 = vmatprep.subr.bf16.mxu0 0
        %5283 = vmatpush1.bf16.msra.mxu0 0
        %5284 = vmatprep.subr.bf16.mxu0 0
        %5285 = vmatpush1.bf16.msra.mxu0 0
        %5286 = vmatprep.subr.bf16.mxu0 0
        %5287 = vmatpush1.bf16.msra.mxu0 0
        %5288 = vmatprep.subr.bf16.mxu0 0
        %5289 = vmatpush1.bf16.msra.mxu0 0
        %5290 = vmatprep.subr.bf16.mxu0 0
        %5291 = vmatpush1.bf16.msra.mxu0 0
        %5292 = vmatprep.mubr.bf16.mxu0 0
        %5293 = vmatmul.mubr.bf16.gmra.mrb[0].mxu0 %v5255
        %v5294 = vpop.f32.mrb[0].mxu0
        %v5295 = vadd.f32 0.0, %v5294
        %v5296 = vpop.f32.mrb[0].mxu0
        %v5297 = vpop.f32.mrb[0].mxu0
        %v5298 = vpop.f32.mrb[0].mxu0
        %5299 = vdwg.mxu0
        %v5301 = vsel %vm2172, %v5202, 0
        %v5304 = vsel %vm2272, %v4722, 0
        %5306 = vmatprep.subr.bf16.mxu0 0
        %5307 = vmatpush1.bf16.msra.mxu0 %v5304
        %5308 = vmatprep.subr.bf16.mxu0 0
        %5309 = vmatpush1.bf16.msra.mxu0 0
        %5310 = vmatprep.subr.bf16.mxu0 0
        %5311 = vmatpush1.bf16.msra.mxu0 0
        %5312 = vmatprep.subr.bf16.mxu0 0
        %5313 = vmatpush1.bf16.msra.mxu0 0
        %5314 = vmatprep.subr.bf16.mxu0 0
        %5315 = vmatpush1.bf16.msra.mxu0 0
        %5316 = vmatprep.subr.bf16.mxu0 0
        %5317 = vmatpush1.bf16.msra.mxu0 0
        %5318 = vmatprep.subr.bf16.mxu0 0
        %5319 = vmatpush1.bf16.msra.mxu0 0
        %5320 = vmatprep.subr.bf16.mxu0 0
        %5321 = vmatpush1.bf16.msra.mxu0 0
        %5322 = vmatprep.subr.bf16.mxu0 0
        %5323 = vmatpush1.bf16.msra.mxu0 0
        %5324 = vmatprep.subr.bf16.mxu0 0
        %5325 = vmatpush1.bf16.msra.mxu0 0
        %5326 = vmatprep.subr.bf16.mxu0 0
        %5327 = vmatpush1.bf16.msra.mxu0 0
        %5328 = vmatprep.subr.bf16.mxu0 0
        %5329 = vmatpush1.bf16.msra.mxu0 0
        %5330 = vmatprep.subr.bf16.mxu0 0
        %5331 = vmatpush1.bf16.msra.mxu0 0
        %5332 = vmatprep.subr.bf16.mxu0 0
        %5333 = vmatpush1.bf16.msra.mxu0 0
        %5334 = vmatprep.subr.bf16.mxu0 0
        %5335 = vmatpush1.bf16.msra.mxu0 0
        %5336 = vmatprep.subr.bf16.mxu0 0
        %5337 = vmatpush1.bf16.msra.mxu0 0
        %5338 = vmatprep.mubr.bf16.mxu0 0
        %5339 = vmatmul.mubr.bf16.gmra.mrb[0].mxu0 %v5301
        %v5340 = vpop.f32.mrb[0].mxu0
        %v5341 = vadd.f32 0.0, %v5340
        %v5342 = vpop.f32.mrb[0].mxu0
        %v5343 = vpop.f32.mrb[0].mxu0
        %v5344 = vpop.f32.mrb[0].mxu0
        %5345 = vdwg.mxu0
        %v5347 = vsel %vm2172, %v5203, 0
        %v5350 = vsel %vm2272, %v4723, 0
        %5352 = vmatprep.subr.bf16.mxu0 0
        %5353 = vmatpush1.bf16.msra.mxu0 %v5350
        %5354 = vmatprep.subr.bf16.mxu0 0
        %5355 = vmatpush1.bf16.msra.mxu0 0
        %5356 = vmatprep.subr.bf16.mxu0 0
        %5357 = vmatpush1.bf16.msra.mxu0 0
        %5358 = vmatprep.subr.bf16.mxu0 0
        %5359 = vmatpush1.bf16.msra.mxu0 0
        %5360 = vmatprep.subr.bf16.mxu0 0
        %5361 = vmatpush1.bf16.msra.mxu0 0
        %5362 = vmatprep.subr.bf16.mxu0 0
        %5363 = vmatpush1.bf16.msra.mxu0 0
        %5364 = vmatprep.subr.bf16.mxu0 0
        %5365 = vmatpush1.bf16.msra.mxu0 0
        %5366 = vmatprep.subr.bf16.mxu0 0
        %5367 = vmatpush1.bf16.msra.mxu0 0
        %5368 = vmatprep.subr.bf16.mxu0 0
        %5369 = vmatpush1.bf16.msra.mxu0 0
        %5370 = vmatprep.subr.bf16.mxu0 0
        %5371 = vmatpush1.bf16.msra.mxu0 0
        %5372 = vmatprep.subr.bf16.mxu0 0
        %5373 = vmatpush1.bf16.msra.mxu0 0
        %5374 = vmatprep.subr.bf16.mxu0 0
        %5375 = vmatpush1.bf16.msra.mxu0 0
        %5376 = vmatprep.subr.bf16.mxu0 0
        %5377 = vmatpush1.bf16.msra.mxu0 0
        %5378 = vmatprep.subr.bf16.mxu0 0
        %5379 = vmatpush1.bf16.msra.mxu0 0
        %5380 = vmatprep.subr.bf16.mxu0 0
        %5381 = vmatpush1.bf16.msra.mxu0 0
        %5382 = vmatprep.subr.bf16.mxu0 0
        %5383 = vmatpush1.bf16.msra.mxu0 0
        %5384 = vmatprep.mubr.bf16.mxu0 0
        %5385 = vmatmul.mubr.bf16.gmra.mrb[0].mxu0 %v5347
        %v5386 = vpop.f32.mrb[0].mxu0
        %v5387 = vadd.f32 0.0, %v5386
        %v5388 = vpop.f32.mrb[0].mxu0
        %v5389 = vpop.f32.mrb[0].mxu0
        %v5390 = vpop.f32.mrb[0].mxu0
        %5391 = vdwg.mxu0
        %v5393 = vsel %vm2172, %v5204, 0
        %v5396 = vsel %vm2272, %v4724, 0
        %5398 = vmatprep.subr.bf16.mxu0 0
        %5399 = vmatpush1.bf16.msra.mxu0 %v5396
        %5400 = vmatprep.subr.bf16.mxu0 0
        %5401 = vmatpush1.bf16.msra.mxu0 0
        %5402 = vmatprep.subr.bf16.mxu0 0
        %5403 = vmatpush1.bf16.msra.mxu0 0
        %5404 = vmatprep.subr.bf16.mxu0 0
        %5405 = vmatpush1.bf16.msra.mxu0 0
        %5406 = vmatprep.subr.bf16.mxu0 0
        %5407 = vmatpush1.bf16.msra.mxu0 0
        %5408 = vmatprep.subr.bf16.mxu0 0
        %5409 = vmatpush1.bf16.msra.mxu0 0
        %5410 = vmatprep.subr.bf16.mxu0 0
        %5411 = vmatpush1.bf16.msra.mxu0 0
        %5412 = vmatprep.subr.bf16.mxu0 0
        %5413 = vmatpush1.bf16.msra.mxu0 0
        %5414 = vmatprep.subr.bf16.mxu0 0
        %5415 = vmatpush1.bf16.msra.mxu0 0
        %5416 = vmatprep.subr.bf16.mxu0 0
        %5417 = vmatpush1.bf16.msra.mxu0 0
        %5418 = vmatprep.subr.bf16.mxu0 0
        %5419 = vmatpush1.bf16.msra.mxu0 0
        %5420 = vmatprep.subr.bf16.mxu0 0
        %5421 = vmatpush1.bf16.msra.mxu0 0
        %5422 = vmatprep.subr.bf16.mxu0 0
        %5423 = vmatpush1.bf16.msra.mxu0 0
        %5424 = vmatprep.subr.bf16.mxu0 0
        %5425 = vmatpush1.bf16.msra.mxu0 0
        %5426 = vmatprep.subr.bf16.mxu0 0
        %5427 = vmatpush1.bf16.msra.mxu0 0
        %5428 = vmatprep.subr.bf16.mxu0 0
        %5429 = vmatpush1.bf16.msra.mxu0 0
        %5430 = vmatprep.mubr.bf16.mxu0 0
        %5431 = vmatmul.mubr.bf16.gmra.mrb[0].mxu0 %v5393
        %v5432 = vpop.f32.mrb[0].mxu0
        %v5433 = vadd.f32 0.0, %v5432
        %v5434 = vpop.f32.mrb[0].mxu0
        %v5435 = vpop.f32.mrb[0].mxu0
        %v5436 = vpop.f32.mrb[0].mxu0
        %5437 = vdwg.mxu0
        %v5439 = vsel %vm2172, %v5205, 0
        %v5442 = vsel %vm2272, %v4725, 0
        %5444 = vmatprep.subr.bf16.mxu0 0
        %5445 = vmatpush1.bf16.msra.mxu0 %v5442
        %5446 = vmatprep.subr.bf16.mxu0 0
        %5447 = vmatpush1.bf16.msra.mxu0 0
        %5448 = vmatprep.subr.bf16.mxu0 0
        %5449 = vmatpush1.bf16.msra.mxu0 0
        %5450 = vmatprep.subr.bf16.mxu0 0
        %5451 = vmatpush1.bf16.msra.mxu0 0
        %5452 = vmatprep.subr.bf16.mxu0 0
        %5453 = vmatpush1.bf16.msra.mxu0 0
        %5454 = vmatprep.subr.bf16.mxu0 0
        %5455 = vmatpush1.bf16.msra.mxu0 0
        %5456 = vmatprep.subr.bf16.mxu0 0
        %5457 = vmatpush1.bf16.msra.mxu0 0
        %5458 = vmatprep.subr.bf16.mxu0 0
        %5459 = vmatpush1.bf16.msra.mxu0 0
        %5460 = vmatprep.subr.bf16.mxu0 0
        %5461 = vmatpush1.bf16.msra.mxu0 0
        %5462 = vmatprep.subr.bf16.mxu0 0
        %5463 = vmatpush1.bf16.msra.mxu0 0
        %5464 = vmatprep.subr.bf16.mxu0 0
        %5465 = vmatpush1.bf16.msra.mxu0 0
        %5466 = vmatprep.subr.bf16.mxu0 0
        %5467 = vmatpush1.bf16.msra.mxu0 0
        %5468 = vmatprep.subr.bf16.mxu0 0
        %5469 = vmatpush1.bf16.msra.mxu0 0
        %5470 = vmatprep.subr.bf16.mxu0 0
        %5471 = vmatpush1.bf16.msra.mxu0 0
        %5472 = vmatprep.subr.bf16.mxu0 0
        %5473 = vmatpush1.bf16.msra.mxu0 0
        %5474 = vmatprep.subr.bf16.mxu0 0
        %5475 = vmatpush1.bf16.msra.mxu0 0
        %5476 = vmatprep.mubr.bf16.mxu0 0
        %5477 = vmatmul.mubr.bf16.gmra.mrb[0].mxu0 %v5439
        %v5478 = vpop.f32.mrb[0].mxu0
        %v5479 = vadd.f32 0.0, %v5478
        %v5480 = vpop.f32.mrb[0].mxu0
        %v5481 = vpop.f32.mrb[0].mxu0
        %v5482 = vpop.f32.mrb[0].mxu0
        %5483 = vdwg.mxu0
        %v5485 = vsel %vm2172, %v5206, 0
        %v5488 = vsel %vm2272, %v4726, 0
        %5490 = vmatprep.subr.bf16.mxu0 0
        %5491 = vmatpush1.bf16.msra.mxu0 %v5488
        %5492 = vmatprep.subr.bf16.mxu0 0
        %5493 = vmatpush1.bf16.msra.mxu0 0
        %5494 = vmatprep.subr.bf16.mxu0 0
        %5495 = vmatpush1.bf16.msra.mxu0 0
        %5496 = vmatprep.subr.bf16.mxu0 0
        %5497 = vmatpush1.bf16.msra.mxu0 0
        %5498 = vmatprep.subr.bf16.mxu0 0
        %5499 = vmatpush1.bf16.msra.mxu0 0
        %5500 = vmatprep.subr.bf16.mxu0 0
        %5501 = vmatpush1.bf16.msra.mxu0 0
        %5502 = vmatprep.subr.bf16.mxu0 0
        %5503 = vmatpush1.bf16.msra.mxu0 0
        %5504 = vmatprep.subr.bf16.mxu0 0
        %5505 = vmatpush1.bf16.msra.mxu0 0
        %5506 = vmatprep.subr.bf16.mxu0 0
        %5507 = vmatpush1.bf16.msra.mxu0 0
        %5508 = vmatprep.subr.bf16.mxu0 0
        %5509 = vmatpush1.bf16.msra.mxu0 0
        %5510 = vmatprep.subr.bf16.mxu0 0
        %5511 = vmatpush1.bf16.msra.mxu0 0
        %5512 = vmatprep.subr.bf16.mxu0 0
        %5513 = vmatpush1.bf16.msra.mxu0 0
        %5514 = vmatprep.subr.bf16.mxu0 0
        %5515 = vmatpush1.bf16.msra.mxu0 0
        %5516 = vmatprep.subr.bf16.mxu0 0
        %5517 = vmatpush1.bf16.msra.mxu0 0
        %5518 = vmatprep.subr.bf16.mxu0 0
        %5519 = vmatpush1.bf16.msra.mxu0 0
        %5520 = vmatprep.subr.bf16.mxu0 0
        %5521 = vmatpush1.bf16.msra.mxu0 0
        %5522 = vmatprep.mubr.bf16.mxu0 0
        %5523 = vmatmul.mubr.bf16.gmra.mrb[0].mxu0 %v5485
        %v5524 = vpop.f32.mrb[0].mxu0
        %v5525 = vadd.f32 0.0, %v5524
        %v5526 = vpop.f32.mrb[0].mxu0
        %v5527 = vpop.f32.mrb[0].mxu0
        %v5528 = vpop.f32.mrb[0].mxu0
        %5529 = vdwg.mxu0
        %v5531 = vsel %vm2172, %v5207, 0
        %v5534 = vsel %vm2272, %v4727, 0
        %5536 = vmatprep.subr.bf16.mxu0 0
        %5537 = vmatpush1.bf16.msra.mxu0 %v5534
        %5538 = vmatprep.subr.bf16.mxu0 0
        %5539 = vmatpush1.bf16.msra.mxu0 0
        %5540 = vmatprep.subr.bf16.mxu0 0
        %5541 = vmatpush1.bf16.msra.mxu0 0
        %5542 = vmatprep.subr.bf16.mxu0 0
        %5543 = vmatpush1.bf16.msra.mxu0 0
        %5544 = vmatprep.subr.bf16.mxu0 0
        %5545 = vmatpush1.bf16.msra.mxu0 0
        %5546 = vmatprep.subr.bf16.mxu0 0
        %5547 = vmatpush1.bf16.msra.mxu0 0
        %5548 = vmatprep.subr.bf16.mxu0 0
        %5549 = vmatpush1.bf16.msra.mxu0 0
        %5550 = vmatprep.subr.bf16.mxu0 0
        %5551 = vmatpush1.bf16.msra.mxu0 0
        %5552 = vmatprep.subr.bf16.mxu0 0
        %5553 = vmatpush1.bf16.msra.mxu0 0
        %5554 = vmatprep.subr.bf16.mxu0 0
        %5555 = vmatpush1.bf16.msra.mxu0 0
        %5556 = vmatprep.subr.bf16.mxu0 0
        %5557 = vmatpush1.bf16.msra.mxu0 0
        %5558 = vmatprep.subr.bf16.mxu0 0
        %5559 = vmatpush1.bf16.msra.mxu0 0
        %5560 = vmatprep.subr.bf16.mxu0 0
        %5561 = vmatpush1.bf16.msra.mxu0 0
        %5562 = vmatprep.subr.bf16.mxu0 0
        %5563 = vmatpush1.bf16.msra.mxu0 0
        %5564 = vmatprep.subr.bf16.mxu0 0
        %5565 = vmatpush1.bf16.msra.mxu0 0
        %5566 = vmatprep.subr.bf16.mxu0 0
        %5567 = vmatpush1.bf16.msra.mxu0 0
        %5568 = vmatprep.mubr.bf16.mxu0 0
        %5569 = vmatmul.mubr.bf16.gmra.mrb[0].mxu0 %v5531
        %v5570 = vpop.f32.mrb[0].mxu0
        %v5571 = vadd.f32 0.0, %v5570
        %v5572 = vpop.f32.mrb[0].mxu0
        %v5573 = vpop.f32.mrb[0].mxu0
        %v5574 = vpop.f32.mrb[0].mxu0
        %5575 = vdwg.mxu0
        %v5576 = vpack.c.bf16 %v5295, %v5249
        %v5577 = vpack.c.bf16 %v5387, %v5341
        %v5578 = vpack.c.bf16 %v5479, %v5433
        %v5579 = vpack.c.bf16 %v5571, %v5525
        %s5580 = scalar_lea.vmem [#allocation22], 32
        %v5581 = vld [vmem:[%s5580] sm:$0xf]
        %v5582 = vld [vmem:[%s5580 + $0x4] sm:$0xf]
        %v5583 = vld [vmem:[%s5580 + $0x8] sm:$0xf]
        %v5584 = vld [vmem:[%s5580 + $0xc] sm:$0xf]
        %v5589 = vunpack.c.l.b16 %v5581
        %v5590 = vunpack.c.l.b16 %v5582
        %v5591 = vunpack.c.l.b16 %v5583
        %v5592 = vunpack.c.l.b16 %v5584
        %v5593 = vpack.c.b16 %v5590, %v5589
        %v5594 = vpack.c.b16 %v5592, %v5591
        %v5598 = vsel %vm1785, %v5576, 0
        %v5601 = vsel %vm1785, %v5577, 0
        %v5604 = vsel %vm1785, %v5578, 0
        %v5607 = vsel %vm1785, %v5579, 0
        %5609 = vmatprep.subr.bf16.mxu0 0
        %5610 = vmatpush1.bf16.msra.mxu0 %v5593
        %5611 = vmatprep.subr.bf16.mxu0 0
        %5612 = vmatpush1.bf16.msra.mxu0 %v5594
        %5613 = vmatprep.subr.bf16.mxu0 0
        %5614 = vmatpush1.bf16.msra.mxu0 0
        %5615 = vmatprep.subr.bf16.mxu0 0
        %5616 = vmatpush1.bf16.msra.mxu0 0
        %5617 = vmatprep.subr.bf16.mxu0 0
        %5618 = vmatpush1.bf16.msra.mxu0 0
        %5619 = vmatprep.subr.bf16.mxu0 0
        %5620 = vmatpush1.bf16.msra.mxu0 0
        %5621 = vmatprep.subr.bf16.mxu0 0
        %5622 = vmatpush1.bf16.msra.mxu0 0
        %5623 = vmatprep.subr.bf16.mxu0 0
        %5624 = vmatpush1.bf16.msra.mxu0 0
        %5625 = vmatprep.subr.bf16.mxu0 0
        %5626 = vmatpush1.bf16.msra.mxu0 0
        %5627 = vmatprep.subr.bf16.mxu0 0
        %5628 = vmatpush1.bf16.msra.mxu0 0
        %5629 = vmatprep.subr.bf16.mxu0 0
        %5630 = vmatpush1.bf16.msra.mxu0 0
        %5631 = vmatprep.subr.bf16.mxu0 0
        %5632 = vmatpush1.bf16.msra.mxu0 0
        %5633 = vmatprep.subr.bf16.mxu0 0
        %5634 = vmatpush1.bf16.msra.mxu0 0
        %5635 = vmatprep.subr.bf16.mxu0 0
        %5636 = vmatpush1.bf16.msra.mxu0 0
        %5637 = vmatprep.subr.bf16.mxu0 0
        %5638 = vmatpush1.bf16.msra.mxu0 0
        %5639 = vmatprep.subr.bf16.mxu0 0
        %5640 = vmatpush1.bf16.msra.mxu0 0
        %5641 = vmatprep.mubr.bf16.mxu0 0
        %5642 = vmatmul.mubr.bf16.gmra.mrb[0].mxu0 %v5598
        %v5643 = vpop.f32.mrb[0].mxu0
        %v5644 = vadd.f32 0.0, %v5643
        %v5645 = vpop.f32.mrb[0].mxu0
        %v5646 = vpop.f32.mrb[0].mxu0
        %v5647 = vadd.f32 0.0, %v5646
        %v5648 = vpop.f32.mrb[0].mxu0
        %5649 = vmatprep.mubr.bf16.mxu0 0
        %5650 = vmatmul.mubr.bf16.gmra.mrb[0].mxu0 %v5601
        %v5651 = vpop.f32.mrb[0].mxu0
        %v5652 = vadd.f32 0.0, %v5651
        %v5653 = vpop.f32.mrb[0].mxu0
        %v5654 = vpop.f32.mrb[0].mxu0
        %v5655 = vadd.f32 0.0, %v5654
        %v5656 = vpop.f32.mrb[0].mxu0
        %5657 = vmatprep.mubr.bf16.mxu0 0
        %5658 = vmatmul.mubr.bf16.gmra.mrb[0].mxu0 %v5604
        %v5659 = vpop.f32.mrb[0].mxu0
        %v5660 = vadd.f32 0.0, %v5659
        %v5661 = vpop.f32.mrb[0].mxu0
        %v5662 = vpop.f32.mrb[0].mxu0
        %v5663 = vadd.f32 0.0, %v5662
        %v5664 = vpop.f32.mrb[0].mxu0
        %5665 = vmatprep.mubr.bf16.mxu0 0
        %5666 = vmatmul.mubr.bf16.gmra.mrb[0].mxu0 %v5607
        %v5667 = vpop.f32.mrb[0].mxu0
        %v5668 = vadd.f32 0.0, %v5667
        %v5669 = vpop.f32.mrb[0].mxu0
        %v5670 = vpop.f32.mrb[0].mxu0
        %v5671 = vadd.f32 0.0, %v5670
        %v5672 = vpop.f32.mrb[0].mxu0
        %5673 = vdwg.mxu0
        %v5674 = vadd.f32 %v4085, %v5644
        %v5675 = vadd.f32 %v4088, %v5647
        %v5676 = vadd.f32 %v4093, %v5652
        %v5677 = vadd.f32 %v4096, %v5655
        %v5678 = vadd.f32 %v4101, %v5660
        %v5679 = vadd.f32 %v4104, %v5663
        %v5680 = vadd.f32 %v4109, %v5668
        %v5681 = vadd.f32 %v4112, %v5671
        %s5682 = scalar_lea.vmem [#allocation24], 32
        %v5683 = vld [vmem:[%s5682] sm:$0xf]
        %v5684 = vld [vmem:[%s5682 + $0x4] sm:$0xf]
        %v5685 = vld [vmem:[%s5682 + $0x8] sm:$0xf]
        %v5686 = vld [vmem:[%s5682 + $0xc] sm:$0xf]
        %v5691 = vunpack.c.l.b16 %v5683
        %v5692 = vunpack.c.l.b16 %v5684
        %v5693 = vunpack.c.l.b16 %v5685
        %v5694 = vunpack.c.l.b16 %v5686
        %v5695 = vpack.c.b16 %v5692, %v5691
        %v5696 = vpack.c.b16 %v5694, %v5693
        %v5700 = vsel %vm1785, %v4688, 0
        %v5703 = vsel %vm1785, %v4689, 0
        %v5706 = vsel %vm1785, %v4690, 0
        %v5709 = vsel %vm1785, %v4691, 0
        %5711 = vmatprep.subr.bf16.mxu0 0
        %5712 = vmatpush1.bf16.msra.mxu0 %v5695
        %5713 = vmatprep.subr.bf16.mxu0 0
        %5714 = vmatpush1.bf16.msra.mxu0 %v5696
        %5715 = vmatprep.subr.bf16.mxu0 0
        %5716 = vmatpush1.bf16.msra.mxu0 0
        %5717 = vmatprep.subr.bf16.mxu0 0
        %5718 = vmatpush1.bf16.msra.mxu0 0
        %5719 = vmatprep.subr.bf16.mxu0 0
        %5720 = vmatpush1.bf16.msra.mxu0 0
        %5721 = vmatprep.subr.bf16.mxu0 0
        %5722 = vmatpush1.bf16.msra.mxu0 0
        %5723 = vmatprep.subr.bf16.mxu0 0
        %5724 = vmatpush1.bf16.msra.mxu0 0
        %5725 = vmatprep.subr.bf16.mxu0 0
        %5726 = vmatpush1.bf16.msra.mxu0 0
        %5727 = vmatprep.subr.bf16.mxu0 0
        %5728 = vmatpush1.bf16.msra.mxu0 0
        %5729 = vmatprep.subr.bf16.mxu0 0
        %5730 = vmatpush1.bf16.msra.mxu0 0
        %5731 = vmatprep.subr.bf16.mxu0 0
        %5732 = vmatpush1.bf16.msra.mxu0 0
        %5733 = vmatprep.subr.bf16.mxu0 0
        %5734 = vmatpush1.bf16.msra.mxu0 0
        %5735 = vmatprep.subr.bf16.mxu0 0
        %5736 = vmatpush1.bf16.msra.mxu0 0
        %5737 = vmatprep.subr.bf16.mxu0 0
        %5738 = vmatpush1.bf16.msra.mxu0 0
        %5739 = vmatprep.subr.bf16.mxu0 0
        %5740 = vmatpush1.bf16.msra.mxu0 0
        %5741 = vmatprep.subr.bf16.mxu0 0
        %5742 = vmatpush1.bf16.msra.mxu0 0
        %5743 = vmatprep.mubr.bf16.mxu0 0
        %5744 = vmatmul.mubr.bf16.gmra.mrb[0].mxu0 %v5700
        %v5745 = vpop.f32.mrb[0].mxu0
        %v5746 = vadd.f32 0.0, %v5745
        %v5747 = vpop.f32.mrb[0].mxu0
        %v5748 = vpop.f32.mrb[0].mxu0
        %v5749 = vadd.f32 0.0, %v5748
        %v5750 = vpop.f32.mrb[0].mxu0
        %5751 = vmatprep.mubr.bf16.mxu0 0
        %5752 = vmatmul.mubr.bf16.gmra.mrb[0].mxu0 %v5703
        %v5753 = vpop.f32.mrb[0].mxu0
        %v5754 = vadd.f32 0.0, %v5753
        %v5755 = vpop.f32.mrb[0].mxu0
        %v5756 = vpop.f32.mrb[0].mxu0
        %v5757 = vadd.f32 0.0, %v5756
        %v5758 = vpop.f32.mrb[0].mxu0
        %5759 = vmatprep.mubr.bf16.mxu0 0
        %5760 = vmatmul.mubr.bf16.gmra.mrb[0].mxu0 %v5706
        %v5761 = vpop.f32.mrb[0].mxu0
        %v5762 = vadd.f32 0.0, %v5761
        %v5763 = vpop.f32.mrb[0].mxu0
        %v5764 = vpop.f32.mrb[0].mxu0
        %v5765 = vadd.f32 0.0, %v5764
        %v5766 = vpop.f32.mrb[0].mxu0
        %5767 = vmatprep.mubr.bf16.mxu0 0
        %5768 = vmatmul.mubr.bf16.gmra.mrb[0].mxu0 %v5709
        %v5769 = vpop.f32.mrb[0].mxu0
        %v5770 = vadd.f32 0.0, %v5769
        %v5771 = vpop.f32.mrb[0].mxu0
        %v5772 = vpop.f32.mrb[0].mxu0
        %v5773 = vadd.f32 0.0, %v5772
        %v5774 = vpop.f32.mrb[0].mxu0
        %5775 = vdwg.mxu0
        %v5776 = vadd.f32 %v4268, %v5746
        %v5777 = vadd.f32 %v4271, %v5749
        %v5778 = vadd.f32 %v4276, %v5754
        %v5779 = vadd.f32 %v4279, %v5757
        %v5780 = vadd.f32 %v4284, %v5762
        %v5781 = vadd.f32 %v4287, %v5765
        %v5782 = vadd.f32 %v4292, %v5770
        %v5783 = vadd.f32 %v4295, %v5773
        %s5784 = scalar_lea.vmem [#allocation18], 192
        %v5785 = vld [vmem:[%s5784] sm:$0xf]
        %v5786 = vld [vmem:[%s5784 + $0x4] sm:$0xf]
        %v5787 = vld [vmem:[%s5784 + $0x8] sm:$0xf]
        %v5788 = vld [vmem:[%s5784 + $0xc] sm:$0xf]
        %v5789 = vld [vmem:[%s5784 + $0x10] sm:$0xf]
        %v5790 = vld [vmem:[%s5784 + $0x14] sm:$0xf]
        %v5791 = vld [vmem:[%s5784 + $0x18] sm:$0xf]
        %v5792 = vld [vmem:[%s5784 + $0x1c] sm:$0xf]
        %v5793 = vld [vmem:[%s5784 + $0x20] sm:$0xf]
        %v5794 = vld [vmem:[%s5784 + $0x24] sm:$0xf]
        %v5795 = vld [vmem:[%s5784 + $0x28] sm:$0xf]
        %v5796 = vld [vmem:[%s5784 + $0x2c] sm:$0xf]
        %v5797 = vld [vmem:[%s5784 + $0x30] sm:$0xf]
        %v5798 = vld [vmem:[%s5784 + $0x34] sm:$0xf]
        %v5799 = vld [vmem:[%s5784 + $0x38] sm:$0xf]
        %v5800 = vld [vmem:[%s5784 + $0x3c] sm:$0xf]
        %v5817 = vunpack.c.l.b16 %v5785
        %v5818 = vunpack.c.l.b16 %v5786
        %v5819 = vunpack.c.l.b16 %v5787
        %v5820 = vunpack.c.l.b16 %v5788
        %v5821 = vunpack.c.l.b16 %v5789
        %v5822 = vunpack.c.l.b16 %v5790
        %v5823 = vunpack.c.l.b16 %v5791
        %v5824 = vunpack.c.l.b16 %v5792
        %v5825 = vunpack.c.l.b16 %v5793
        %v5826 = vunpack.c.l.b16 %v5794
        %v5827 = vunpack.c.l.b16 %v5795
        %v5828 = vunpack.c.l.b16 %v5796
        %v5829 = vunpack.c.l.b16 %v5797
        %v5830 = vunpack.c.l.b16 %v5798
        %v5831 = vunpack.c.l.b16 %v5799
        %v5832 = vunpack.c.l.b16 %v5800
        %v5833 = vpack.c.b16 %v5818, %v5817
        %v5834 = vpack.c.b16 %v5820, %v5819
        %v5835 = vpack.c.b16 %v5822, %v5821
        %v5836 = vpack.c.b16 %v5824, %v5823
        %v5837 = vpack.c.b16 %v5826, %v5825
        %v5838 = vpack.c.b16 %v5828, %v5827
        %v5839 = vpack.c.b16 %v5830, %v5829
        %v5840 = vpack.c.b16 %v5832, %v5831
        %5849 = vmatprep.subr.bf16.mxu0 0
        %5850 = vmatpush1.bf16.msra.mxu0 %v5833
        %5851 = vmatprep.subr.bf16.mxu0 0
        %5852 = vmatpush1.bf16.msra.mxu0 %v5834
        %5853 = vmatprep.subr.bf16.mxu0 0
        %5854 = vmatpush1.bf16.msra.mxu0 %v5835
        %5855 = vmatprep.subr.bf16.mxu0 0
        %5856 = vmatpush1.bf16.msra.mxu0 %v5836
        %5857 = vmatprep.subr.bf16.mxu0 0
        %5858 = vmatpush1.bf16.msra.mxu0 %v5837
        %5859 = vmatprep.subr.bf16.mxu0 0
        %5860 = vmatpush1.bf16.msra.mxu0 %v5838
        %5861 = vmatprep.subr.bf16.mxu0 0
        %5862 = vmatpush1.bf16.msra.mxu0 %v5839
        %5863 = vmatprep.subr.bf16.mxu0 0
        %5864 = vmatpush1.bf16.msra.mxu0 %v5840
        %5865 = vmatprep.subr.bf16.mxu0 0
        %5866 = vmatpush1.bf16.msra.mxu0 0
        %5867 = vmatprep.subr.bf16.mxu0 0
        %5868 = vmatpush1.bf16.msra.mxu0 0
        %5869 = vmatprep.subr.bf16.mxu0 0
        %5870 = vmatpush1.bf16.msra.mxu0 0
        %5871 = vmatprep.subr.bf16.mxu0 0
        %5872 = vmatpush1.bf16.msra.mxu0 0
        %5873 = vmatprep.subr.bf16.mxu0 0
        %5874 = vmatpush1.bf16.msra.mxu0 0
        %5875 = vmatprep.subr.bf16.mxu0 0
        %5876 = vmatpush1.bf16.msra.mxu0 0
        %5877 = vmatprep.subr.bf16.mxu0 0
        %5878 = vmatpush1.bf16.msra.mxu0 0
        %5879 = vmatprep.subr.bf16.mxu0 0
        %5880 = vmatpush1.bf16.msra.mxu0 0
        %5881 = vmatprep.mubr.bf16.mxu0 0
        %5882 = vmatmul.mubr.bf16.gmra.mrb[0].mxu0 %v1341
        %v5883 = vpop.f32.mrb[0].mxu0
        %v5884 = vadd.f32 0.0, %v5883
        %v5885 = vpop.f32.mrb[0].mxu0
        %v5886 = vpop.f32.mrb[0].mxu0
        %v5887 = vadd.f32 0.0, %v5886
        %v5888 = vpop.f32.mrb[0].mxu0
        %5889 = vmatprep.mubr.bf16.mxu0 0
        %5890 = vmatmul.mubr.bf16.gmra.mrb[0].mxu0 %v1342
        %v5891 = vpop.f32.mrb[0].mxu0
        %v5892 = vadd.f32 0.0, %v5891
        %v5893 = vpop.f32.mrb[0].mxu0
        %v5894 = vpop.f32.mrb[0].mxu0
        %v5895 = vadd.f32 0.0, %v5894
        %v5896 = vpop.f32.mrb[0].mxu0
        %5897 = vmatprep.mubr.bf16.mxu0 0
        %5898 = vmatmul.mubr.bf16.gmra.mrb[0].mxu0 %v1343
        %v5899 = vpop.f32.mrb[0].mxu0
        %v5900 = vadd.f32 0.0, %v5899
        %v5901 = vpop.f32.mrb[0].mxu0
        %v5902 = vpop.f32.mrb[0].mxu0
        %v5903 = vadd.f32 0.0, %v5902
        %v5904 = vpop.f32.mrb[0].mxu0
        %5905 = vmatprep.mubr.bf16.mxu0 0
        %5906 = vmatmul.mubr.bf16.gmra.mrb[0].mxu0 %v1344
        %v5907 = vpop.f32.mrb[0].mxu0
        %v5908 = vadd.f32 0.0, %v5907
        %v5909 = vpop.f32.mrb[0].mxu0
        %v5910 = vpop.f32.mrb[0].mxu0
        %v5911 = vadd.f32 0.0, %v5910
        %v5912 = vpop.f32.mrb[0].mxu0
        %5913 = vdwg.mxu0
        %s5914 = scalar_lea.vmem [#allocation19], 192
        %v5915 = vld [vmem:[%s5914] sm:$0xf]
        %v5916 = vld [vmem:[%s5914 + $0x4] sm:$0xf]
        %v5917 = vld [vmem:[%s5914 + $0x8] sm:$0xf]
        %v5918 = vld [vmem:[%s5914 + $0xc] sm:$0xf]
        %v5919 = vld [vmem:[%s5914 + $0x10] sm:$0xf]
        %v5920 = vld [vmem:[%s5914 + $0x14] sm:$0xf]
        %v5921 = vld [vmem:[%s5914 + $0x18] sm:$0xf]
        %v5922 = vld [vmem:[%s5914 + $0x1c] sm:$0xf]
        %v5923 = vld [vmem:[%s5914 + $0x20] sm:$0xf]
        %v5924 = vld [vmem:[%s5914 + $0x24] sm:$0xf]
        %v5925 = vld [vmem:[%s5914 + $0x28] sm:$0xf]
        %v5926 = vld [vmem:[%s5914 + $0x2c] sm:$0xf]
        %v5927 = vld [vmem:[%s5914 + $0x30] sm:$0xf]
        %v5928 = vld [vmem:[%s5914 + $0x34] sm:$0xf]
        %v5929 = vld [vmem:[%s5914 + $0x38] sm:$0xf]
        %v5930 = vld [vmem:[%s5914 + $0x3c] sm:$0xf]
        %v5947 = vunpack.c.l.b16 %v5915
        %v5948 = vunpack.c.l.b16 %v5916
        %v5949 = vunpack.c.l.b16 %v5917
        %v5950 = vunpack.c.l.b16 %v5918
        %v5951 = vunpack.c.l.b16 %v5919
        %v5952 = vunpack.c.l.b16 %v5920
        %v5953 = vunpack.c.l.b16 %v5921
        %v5954 = vunpack.c.l.b16 %v5922
        %v5955 = vunpack.c.l.b16 %v5923
        %v5956 = vunpack.c.l.b16 %v5924
        %v5957 = vunpack.c.l.b16 %v5925
        %v5958 = vunpack.c.l.b16 %v5926
        %v5959 = vunpack.c.l.b16 %v5927
        %v5960 = vunpack.c.l.b16 %v5928
        %v5961 = vunpack.c.l.b16 %v5929
        %v5962 = vunpack.c.l.b16 %v5930
        %v5963 = vpack.c.b16 %v5948, %v5947
        %v5964 = vpack.c.b16 %v5950, %v5949
        %v5965 = vpack.c.b16 %v5952, %v5951
        %v5966 = vpack.c.b16 %v5954, %v5953
        %v5967 = vpack.c.b16 %v5956, %v5955
        %v5968 = vpack.c.b16 %v5958, %v5957
        %v5969 = vpack.c.b16 %v5960, %v5959
        %v5970 = vpack.c.b16 %v5962, %v5961
        %5979 = vmatprep.subr.bf16.mxu0 0
        %5980 = vmatpush1.bf16.msra.mxu0 %v5963
        %5981 = vmatprep.subr.bf16.mxu0 0
        %5982 = vmatpush1.bf16.msra.mxu0 %v5964
        %5983 = vmatprep.subr.bf16.mxu0 0
        %5984 = vmatpush1.bf16.msra.mxu0 %v5965
        %5985 = vmatprep.subr.bf16.mxu0 0
        %5986 = vmatpush1.bf16.msra.mxu0 %v5966
        %5987 = vmatprep.subr.bf16.mxu0 0
        %5988 = vmatpush1.bf16.msra.mxu0 %v5967
        %5989 = vmatprep.subr.bf16.mxu0 0
        %5990 = vmatpush1.bf16.msra.mxu0 %v5968
        %5991 = vmatprep.subr.bf16.mxu0 0
        %5992 = vmatpush1.bf16.msra.mxu0 %v5969
        %5993 = vmatprep.subr.bf16.mxu0 0
        %5994 = vmatpush1.bf16.msra.mxu0 %v5970
        %5995 = vmatprep.subr.bf16.mxu0 0
        %5996 = vmatpush1.bf16.msra.mxu0 0
        %5997 = vmatprep.subr.bf16.mxu0 0
        %5998 = vmatpush1.bf16.msra.mxu0 0
        %5999 = vmatprep.subr.bf16.mxu0 0
        %6000 = vmatpush1.bf16.msra.mxu0 0
        %6001 = vmatprep.subr.bf16.mxu0 0
        %6002 = vmatpush1.bf16.msra.mxu0 0
        %6003 = vmatprep.subr.bf16.mxu0 0
        %6004 = vmatpush1.bf16.msra.mxu0 0
        %6005 = vmatprep.subr.bf16.mxu0 0
        %6006 = vmatpush1.bf16.msra.mxu0 0
        %6007 = vmatprep.subr.bf16.mxu0 0
        %6008 = vmatpush1.bf16.msra.mxu0 0
        %6009 = vmatprep.subr.bf16.mxu0 0
        %6010 = vmatpush1.bf16.msra.mxu0 0
        %6011 = vmatprep.mubr.bf16.mxu0 0
        %6012 = vmatmul.mubr.bf16.gmra.mrb[0].mxu0 %v1345
        %v6013 = vpop.f32.mrb[0].mxu0
        %v6014 = vadd.f32 0.0, %v6013
        %v6015 = vpop.f32.mrb[0].mxu0
        %v6016 = vpop.f32.mrb[0].mxu0
        %v6017 = vadd.f32 0.0, %v6016
        %v6018 = vpop.f32.mrb[0].mxu0
        %6019 = vmatprep.mubr.bf16.mxu0 0
        %6020 = vmatmul.mubr.bf16.gmra.mrb[0].mxu0 %v1346
        %v6021 = vpop.f32.mrb[0].mxu0
        %v6022 = vadd.f32 0.0, %v6021
        %v6023 = vpop.f32.mrb[0].mxu0
        %v6024 = vpop.f32.mrb[0].mxu0
        %v6025 = vadd.f32 0.0, %v6024
        %v6026 = vpop.f32.mrb[0].mxu0
        %6027 = vmatprep.mubr.bf16.mxu0 0
        %6028 = vmatmul.mubr.bf16.gmra.mrb[0].mxu0 %v1347
        %v6029 = vpop.f32.mrb[0].mxu0
        %v6030 = vadd.f32 0.0, %v6029
        %v6031 = vpop.f32.mrb[0].mxu0
        %v6032 = vpop.f32.mrb[0].mxu0
        %v6033 = vadd.f32 0.0, %v6032
        %v6034 = vpop.f32.mrb[0].mxu0
        %6035 = vmatprep.mubr.bf16.mxu0 0
        %6036 = vmatmul.mubr.bf16.gmra.mrb[0].mxu0 %v1348
        %v6037 = vpop.f32.mrb[0].mxu0
        %v6038 = vadd.f32 0.0, %v6037
        %v6039 = vpop.f32.mrb[0].mxu0
        %v6040 = vpop.f32.mrb[0].mxu0
        %v6041 = vadd.f32 0.0, %v6040
        %v6042 = vpop.f32.mrb[0].mxu0
        %6043 = vdwg.mxu0
        %s6044 = scalar_lea.vmem [#allocation21], 192
        %v6045 = vld [vmem:[%s6044] sm:$0xf]
        %v6046 = vld [vmem:[%s6044 + $0x4] sm:$0xf]
        %v6047 = vld [vmem:[%s6044 + $0x8] sm:$0xf]
        %v6048 = vld [vmem:[%s6044 + $0xc] sm:$0xf]
        %v6049 = vld [vmem:[%s6044 + $0x10] sm:$0xf]
        %v6050 = vld [vmem:[%s6044 + $0x14] sm:$0xf]
        %v6051 = vld [vmem:[%s6044 + $0x18] sm:$0xf]
        %v6052 = vld [vmem:[%s6044 + $0x1c] sm:$0xf]
        %v6053 = vld [vmem:[%s6044 + $0x20] sm:$0xf]
        %v6054 = vld [vmem:[%s6044 + $0x24] sm:$0xf]
        %v6055 = vld [vmem:[%s6044 + $0x28] sm:$0xf]
        %v6056 = vld [vmem:[%s6044 + $0x2c] sm:$0xf]
        %v6057 = vld [vmem:[%s6044 + $0x30] sm:$0xf]
        %v6058 = vld [vmem:[%s6044 + $0x34] sm:$0xf]
        %v6059 = vld [vmem:[%s6044 + $0x38] sm:$0xf]
        %v6060 = vld [vmem:[%s6044 + $0x3c] sm:$0xf]
        %v6077 = vunpack.c.l.b16 %v6045
        %v6078 = vunpack.c.l.b16 %v6046
        %v6079 = vunpack.c.l.b16 %v6047
        %v6080 = vunpack.c.l.b16 %v6048
        %v6081 = vunpack.c.l.b16 %v6049
        %v6082 = vunpack.c.l.b16 %v6050
        %v6083 = vunpack.c.l.b16 %v6051
        %v6084 = vunpack.c.l.b16 %v6052
        %v6085 = vunpack.c.l.b16 %v6053
        %v6086 = vunpack.c.l.b16 %v6054
        %v6087 = vunpack.c.l.b16 %v6055
        %v6088 = vunpack.c.l.b16 %v6056
        %v6089 = vunpack.c.l.b16 %v6057
        %v6090 = vunpack.c.l.b16 %v6058
        %v6091 = vunpack.c.l.b16 %v6059
        %v6092 = vunpack.c.l.b16 %v6060
        %v6093 = vpack.c.b16 %v6078, %v6077
        %v6094 = vpack.c.b16 %v6080, %v6079
        %v6095 = vpack.c.b16 %v6082, %v6081
        %v6096 = vpack.c.b16 %v6084, %v6083
        %v6097 = vpack.c.b16 %v6086, %v6085
        %v6098 = vpack.c.b16 %v6088, %v6087
        %v6099 = vpack.c.b16 %v6090, %v6089
        %v6100 = vpack.c.b16 %v6092, %v6091
        %6109 = vmatprep.subr.bf16.mxu0 0
        %6110 = vmatpush1.bf16.msra.mxu0 %v6093
        %6111 = vmatprep.subr.bf16.mxu0 0
        %6112 = vmatpush1.bf16.msra.mxu0 %v6094
        %6113 = vmatprep.subr.bf16.mxu0 0
        %6114 = vmatpush1.bf16.msra.mxu0 %v6095
        %6115 = vmatprep.subr.bf16.mxu0 0
        %6116 = vmatpush1.bf16.msra.mxu0 %v6096
        %6117 = vmatprep.subr.bf16.mxu0 0
        %6118 = vmatpush1.bf16.msra.mxu0 %v6097
        %6119 = vmatprep.subr.bf16.mxu0 0
        %6120 = vmatpush1.bf16.msra.mxu0 %v6098
        %6121 = vmatprep.subr.bf16.mxu0 0
        %6122 = vmatpush1.bf16.msra.mxu0 %v6099
        %6123 = vmatprep.subr.bf16.mxu0 0
        %6124 = vmatpush1.bf16.msra.mxu0 %v6100
        %6125 = vmatprep.subr.bf16.mxu0 0
        %6126 = vmatpush1.bf16.msra.mxu0 0
        %6127 = vmatprep.subr.bf16.mxu0 0
        %6128 = vmatpush1.bf16.msra.mxu0 0
        %6129 = vmatprep.subr.bf16.mxu0 0
        %6130 = vmatpush1.bf16.msra.mxu0 0
        %6131 = vmatprep.subr.bf16.mxu0 0
        %6132 = vmatpush1.bf16.msra.mxu0 0
        %6133 = vmatprep.subr.bf16.mxu0 0
        %6134 = vmatpush1.bf16.msra.mxu0 0
        %6135 = vmatprep.subr.bf16.mxu0 0
        %6136 = vmatpush1.bf16.msra.mxu0 0
        %6137 = vmatprep.subr.bf16.mxu0 0
        %6138 = vmatpush1.bf16.msra.mxu0 0
        %6139 = vmatprep.subr.bf16.mxu0 0
        %6140 = vmatpush1.bf16.msra.mxu0 0
        %6141 = vmatprep.mubr.bf16.mxu0 0
        %6142 = vmatmul.mubr.bf16.gmra.mrb[0].mxu0 %v1349
        %v6143 = vpop.f32.mrb[0].mxu0
        %v6144 = vadd.f32 0.0, %v6143
        %v6145 = vpop.f32.mrb[0].mxu0
        %v6146 = vpop.f32.mrb[0].mxu0
        %v6147 = vadd.f32 0.0, %v6146
        %v6148 = vpop.f32.mrb[0].mxu0
        %6149 = vmatprep.mubr.bf16.mxu0 0
        %6150 = vmatmul.mubr.bf16.gmra.mrb[0].mxu0 %v1350
        %v6151 = vpop.f32.mrb[0].mxu0
        %v6152 = vadd.f32 0.0, %v6151
        %v6153 = vpop.f32.mrb[0].mxu0
        %v6154 = vpop.f32.mrb[0].mxu0
        %v6155 = vadd.f32 0.0, %v6154
        %v6156 = vpop.f32.mrb[0].mxu0
        %6157 = vmatprep.mubr.bf16.mxu0 0
        %6158 = vmatmul.mubr.bf16.gmra.mrb[0].mxu0 %v1351
        %v6159 = vpop.f32.mrb[0].mxu0
        %v6160 = vadd.f32 0.0, %v6159
        %v6161 = vpop.f32.mrb[0].mxu0
        %v6162 = vpop.f32.mrb[0].mxu0
        %v6163 = vadd.f32 0.0, %v6162
        %v6164 = vpop.f32.mrb[0].mxu0
        %6165 = vmatprep.mubr.bf16.mxu0 0
        %6166 = vmatmul.mubr.bf16.gmra.mrb[0].mxu0 %v1352
        %v6167 = vpop.f32.mrb[0].mxu0
        %v6168 = vadd.f32 0.0, %v6167
        %v6169 = vpop.f32.mrb[0].mxu0
        %v6170 = vpop.f32.mrb[0].mxu0
        %v6171 = vadd.f32 0.0, %v6170
        %v6172 = vpop.f32.mrb[0].mxu0
        %6173 = vdwg.mxu0
        %v6174 = vpack.c.bf16 %v6147, %v6144
        %v6175 = vpack.c.bf16 %v6155, %v6152
        %v6176 = vpack.c.bf16 %v6163, %v6160
        %v6177 = vpack.c.bf16 %v6171, %v6168
        %v6178 = vpack.c.bf16 %v5884, %v5884
        %v6179 = vpack.c.bf16 %v5887, %v5887
        %v6180 = vpack.c.bf16 %v5892, %v5892
        %v6181 = vpack.c.bf16 %v5895, %v5895
        %v6182 = vpack.c.bf16 %v5900, %v5900
        %v6183 = vpack.c.bf16 %v5903, %v5903
        %v6184 = vpack.c.bf16 %v5908, %v5908
        %v6185 = vpack.c.bf16 %v5911, %v5911
        %v6186 = vpack.c.bf16 %v6014, %v6014
        %v6187 = vpack.c.bf16 %v6017, %v6017
        %v6188 = vpack.c.bf16 %v6022, %v6022
        %v6189 = vpack.c.bf16 %v6025, %v6025
        %v6190 = vpack.c.bf16 %v6030, %v6030
        %v6191 = vpack.c.bf16 %v6033, %v6033
        %v6192 = vpack.c.bf16 %v6038, %v6038
        %v6193 = vpack.c.bf16 %v6041, %v6041
        %v6198 = vunpack.c.l.b16 %v6174
        %v6199 = vunpack.c.h.b16 %v6174
        %v6200 = vunpack.c.l.b16 %v6175
        %v6201 = vunpack.c.h.b16 %v6175
        %v6202 = vunpack.c.l.b16 %v6176
        %v6203 = vunpack.c.h.b16 %v6176
        %v6204 = vunpack.c.l.b16 %v6177
        %v6205 = vunpack.c.h.b16 %v6177
        %v6206 = vpack.c.b16 %v6198, %v6198
        %v6207 = vpack.c.b16 %v6199, %v6199
        %v6208 = vpack.c.b16 %v6200, %v6200
        %v6209 = vpack.c.b16 %v6201, %v6201
        %v6210 = vpack.c.b16 %v6202, %v6202
        %v6211 = vpack.c.b16 %v6203, %v6203
        %v6212 = vpack.c.b16 %v6204, %v6204
        %v6213 = vpack.c.b16 %v6205, %v6205
        %v6215 = vsel %vm1785, %v6178, 0
        %v6218 = vsel %vm1785, %v6186, 0
        %6220 = vmatprep.subr.bf16.mxu0 0
        %6221 = vmatpush1.bf16.xpose.msra.mxu0 %v6218
        %6222 = vmatprep.subr.bf16.mxu0 0
        %6223 = vmatpush1.bf16.xpose.msra.mxu0 0
        %6224 = vmatprep.subr.bf16.mxu0 0
        %6225 = vmatpush1.bf16.xpose.msra.mxu0 0
        %6226 = vmatprep.subr.bf16.mxu0 0
        %6227 = vmatpush1.bf16.xpose.msra.mxu0 0
        %6228 = vmatprep.subr.bf16.mxu0 0
        %6229 = vmatpush1.bf16.xpose.msra.mxu0 0
        %6230 = vmatprep.subr.bf16.mxu0 0
        %6231 = vmatpush1.bf16.xpose.msra.mxu0 0
        %6232 = vmatprep.subr.bf16.mxu0 0
        %6233 = vmatpush1.bf16.xpose.msra.mxu0 0
        %6234 = vmatprep.subr.bf16.mxu0 0
        %6235 = vmatpush1.bf16.xpose.msra.mxu0 0
        %6236 = vmatprep.subr.bf16.mxu0 0
        %6237 = vmatpush1.bf16.xpose.msra.mxu0 0
        %6238 = vmatprep.subr.bf16.mxu0 0
        %6239 = vmatpush1.bf16.xpose.msra.mxu0 0
        %6240 = vmatprep.subr.bf16.mxu0 0
        %6241 = vmatpush1.bf16.xpose.msra.mxu0 0
        %6242 = vmatprep.subr.bf16.mxu0 0
        %6243 = vmatpush1.bf16.xpose.msra.mxu0 0
        %6244 = vmatprep.subr.bf16.mxu0 0
        %6245 = vmatpush1.bf16.xpose.msra.mxu0 0
        %6246 = vmatprep.subr.bf16.mxu0 0
        %6247 = vmatpush1.bf16.xpose.msra.mxu0 0
        %6248 = vmatprep.subr.bf16.mxu0 0
        %6249 = vmatpush1.bf16.xpose.msra.mxu0 0
        %6250 = vmatprep.subr.bf16.mxu0 0
        %6251 = vmatpush1.bf16.xpose.msra.mxu0 0
        %6252 = vmatprep.mubr.bf16.mxu0 0
        %6253 = vmatmul.mubr.bf16.gmra.mrb[0].mxu0 %v6215
        %v6254 = vpop.f32.mrb[0].mxu0
        %v6255 = vadd.f32 0.0, %v6254
        %v6256 = vpop.f32.mrb[0].mxu0
        %v6257 = vpop.f32.mrb[0].mxu0
        %v6258 = vpop.f32.mrb[0].mxu0
        %6259 = vdwg.mxu0
        %v6261 = vsel %vm1785, %v6179, 0
        %v6264 = vsel %vm1785, %v6187, 0
        %6266 = vmatprep.subr.bf16.mxu0 0
        %6267 = vmatpush1.bf16.xpose.msra.mxu0 %v6264
        %6268 = vmatprep.subr.bf16.mxu0 0
        %6269 = vmatpush1.bf16.xpose.msra.mxu0 0
        %6270 = vmatprep.subr.bf16.mxu0 0
        %6271 = vmatpush1.bf16.xpose.msra.mxu0 0
        %6272 = vmatprep.subr.bf16.mxu0 0
        %6273 = vmatpush1.bf16.xpose.msra.mxu0 0
        %6274 = vmatprep.subr.bf16.mxu0 0
        %6275 = vmatpush1.bf16.xpose.msra.mxu0 0
        %6276 = vmatprep.subr.bf16.mxu0 0
        %6277 = vmatpush1.bf16.xpose.msra.mxu0 0
        %6278 = vmatprep.subr.bf16.mxu0 0
        %6279 = vmatpush1.bf16.xpose.msra.mxu0 0
        %6280 = vmatprep.subr.bf16.mxu0 0
        %6281 = vmatpush1.bf16.xpose.msra.mxu0 0
        %6282 = vmatprep.subr.bf16.mxu0 0
        %6283 = vmatpush1.bf16.xpose.msra.mxu0 0
        %6284 = vmatprep.subr.bf16.mxu0 0
        %6285 = vmatpush1.bf16.xpose.msra.mxu0 0
        %6286 = vmatprep.subr.bf16.mxu0 0
        %6287 = vmatpush1.bf16.xpose.msra.mxu0 0
        %6288 = vmatprep.subr.bf16.mxu0 0
        %6289 = vmatpush1.bf16.xpose.msra.mxu0 0
        %6290 = vmatprep.subr.bf16.mxu0 0
        %6291 = vmatpush1.bf16.xpose.msra.mxu0 0
        %6292 = vmatprep.subr.bf16.mxu0 0
        %6293 = vmatpush1.bf16.xpose.msra.mxu0 0
        %6294 = vmatprep.subr.bf16.mxu0 0
        %6295 = vmatpush1.bf16.xpose.msra.mxu0 0
        %6296 = vmatprep.subr.bf16.mxu0 0
        %6297 = vmatpush1.bf16.xpose.msra.mxu0 0
        %6298 = vmatprep.mubr.bf16.mxu0 0
        %6299 = vmatmul.mubr.bf16.gmra.mrb[0].mxu0 %v6261
        %v6300 = vpop.f32.mrb[0].mxu0
        %v6301 = vadd.f32 0.0, %v6300
        %v6302 = vpop.f32.mrb[0].mxu0
        %v6303 = vpop.f32.mrb[0].mxu0
        %v6304 = vpop.f32.mrb[0].mxu0
        %6305 = vdwg.mxu0
        %v6307 = vsel %vm1785, %v6180, 0
        %v6310 = vsel %vm1785, %v6188, 0
        %6312 = vmatprep.subr.bf16.mxu0 0
        %6313 = vmatpush1.bf16.xpose.msra.mxu0 %v6310
        %6314 = vmatprep.subr.bf16.mxu0 0
        %6315 = vmatpush1.bf16.xpose.msra.mxu0 0
        %6316 = vmatprep.subr.bf16.mxu0 0
        %6317 = vmatpush1.bf16.xpose.msra.mxu0 0
        %6318 = vmatprep.subr.bf16.mxu0 0
        %6319 = vmatpush1.bf16.xpose.msra.mxu0 0
        %6320 = vmatprep.subr.bf16.mxu0 0
        %6321 = vmatpush1.bf16.xpose.msra.mxu0 0
        %6322 = vmatprep.subr.bf16.mxu0 0
        %6323 = vmatpush1.bf16.xpose.msra.mxu0 0
        %6324 = vmatprep.subr.bf16.mxu0 0
        %6325 = vmatpush1.bf16.xpose.msra.mxu0 0
        %6326 = vmatprep.subr.bf16.mxu0 0
        %6327 = vmatpush1.bf16.xpose.msra.mxu0 0
        %6328 = vmatprep.subr.bf16.mxu0 0
        %6329 = vmatpush1.bf16.xpose.msra.mxu0 0
        %6330 = vmatprep.subr.bf16.mxu0 0
        %6331 = vmatpush1.bf16.xpose.msra.mxu0 0
        %6332 = vmatprep.subr.bf16.mxu0 0
        %6333 = vmatpush1.bf16.xpose.msra.mxu0 0
        %6334 = vmatprep.subr.bf16.mxu0 0
        %6335 = vmatpush1.bf16.xpose.msra.mxu0 0
        %6336 = vmatprep.subr.bf16.mxu0 0
        %6337 = vmatpush1.bf16.xpose.msra.mxu0 0
        %6338 = vmatprep.subr.bf16.mxu0 0
        %6339 = vmatpush1.bf16.xpose.msra.mxu0 0
        %6340 = vmatprep.subr.bf16.mxu0 0
        %6341 = vmatpush1.bf16.xpose.msra.mxu0 0
        %6342 = vmatprep.subr.bf16.mxu0 0
        %6343 = vmatpush1.bf16.xpose.msra.mxu0 0
        %6344 = vmatprep.mubr.bf16.mxu0 0
        %6345 = vmatmul.mubr.bf16.gmra.mrb[0].mxu0 %v6307
        %v6346 = vpop.f32.mrb[0].mxu0
        %v6347 = vadd.f32 0.0, %v6346
        %v6348 = vpop.f32.mrb[0].mxu0
        %v6349 = vpop.f32.mrb[0].mxu0
        %v6350 = vpop.f32.mrb[0].mxu0
        %6351 = vdwg.mxu0
        %v6353 = vsel %vm1785, %v6181, 0
        %v6356 = vsel %vm1785, %v6189, 0
        %6358 = vmatprep.subr.bf16.mxu0 0
        %6359 = vmatpush1.bf16.xpose.msra.mxu0 %v6356
        %6360 = vmatprep.subr.bf16.mxu0 0
        %6361 = vmatpush1.bf16.xpose.msra.mxu0 0
        %6362 = vmatprep.subr.bf16.mxu0 0
        %6363 = vmatpush1.bf16.xpose.msra.mxu0 0
        %6364 = vmatprep.subr.bf16.mxu0 0
        %6365 = vmatpush1.bf16.xpose.msra.mxu0 0
        %6366 = vmatprep.subr.bf16.mxu0 0
        %6367 = vmatpush1.bf16.xpose.msra.mxu0 0
        %6368 = vmatprep.subr.bf16.mxu0 0
        %6369 = vmatpush1.bf16.xpose.msra.mxu0 0
        %6370 = vmatprep.subr.bf16.mxu0 0
        %6371 = vmatpush1.bf16.xpose.msra.mxu0 0
        %6372 = vmatprep.subr.bf16.mxu0 0
        %6373 = vmatpush1.bf16.xpose.msra.mxu0 0
        %6374 = vmatprep.subr.bf16.mxu0 0
        %6375 = vmatpush1.bf16.xpose.msra.mxu0 0
        %6376 = vmatprep.subr.bf16.mxu0 0
        %6377 = vmatpush1.bf16.xpose.msra.mxu0 0
        %6378 = vmatprep.subr.bf16.mxu0 0
        %6379 = vmatpush1.bf16.xpose.msra.mxu0 0
        %6380 = vmatprep.subr.bf16.mxu0 0
        %6381 = vmatpush1.bf16.xpose.msra.mxu0 0
        %6382 = vmatprep.subr.bf16.mxu0 0
        %6383 = vmatpush1.bf16.xpose.msra.mxu0 0
        %6384 = vmatprep.subr.bf16.mxu0 0
        %6385 = vmatpush1.bf16.xpose.msra.mxu0 0
        %6386 = vmatprep.subr.bf16.mxu0 0
        %6387 = vmatpush1.bf16.xpose.msra.mxu0 0
        %6388 = vmatprep.subr.bf16.mxu0 0
        %6389 = vmatpush1.bf16.xpose.msra.mxu0 0
        %6390 = vmatprep.mubr.bf16.mxu0 0
        %6391 = vmatmul.mubr.bf16.gmra.mrb[0].mxu0 %v6353
        %v6392 = vpop.f32.mrb[0].mxu0
        %v6393 = vadd.f32 0.0, %v6392
        %v6394 = vpop.f32.mrb[0].mxu0
        %v6395 = vpop.f32.mrb[0].mxu0
        %v6396 = vpop.f32.mrb[0].mxu0
        %6397 = vdwg.mxu0
        %v6399 = vsel %vm1785, %v6182, 0
        %v6402 = vsel %vm1785, %v6190, 0
        %6404 = vmatprep.subr.bf16.mxu0 0
        %6405 = vmatpush1.bf16.xpose.msra.mxu0 %v6402
        %6406 = vmatprep.subr.bf16.mxu0 0
        %6407 = vmatpush1.bf16.xpose.msra.mxu0 0
        %6408 = vmatprep.subr.bf16.mxu0 0
        %6409 = vmatpush1.bf16.xpose.msra.mxu0 0
        %6410 = vmatprep.subr.bf16.mxu0 0
        %6411 = vmatpush1.bf16.xpose.msra.mxu0 0
        %6412 = vmatprep.subr.bf16.mxu0 0
        %6413 = vmatpush1.bf16.xpose.msra.mxu0 0
        %6414 = vmatprep.subr.bf16.mxu0 0
        %6415 = vmatpush1.bf16.xpose.msra.mxu0 0
        %6416 = vmatprep.subr.bf16.mxu0 0
        %6417 = vmatpush1.bf16.xpose.msra.mxu0 0
        %6418 = vmatprep.subr.bf16.mxu0 0
        %6419 = vmatpush1.bf16.xpose.msra.mxu0 0
        %6420 = vmatprep.subr.bf16.mxu0 0
        %6421 = vmatpush1.bf16.xpose.msra.mxu0 0
        %6422 = vmatprep.subr.bf16.mxu0 0
        %6423 = vmatpush1.bf16.xpose.msra.mxu0 0
        %6424 = vmatprep.subr.bf16.mxu0 0
        %6425 = vmatpush1.bf16.xpose.msra.mxu0 0
        %6426 = vmatprep.subr.bf16.mxu0 0
        %6427 = vmatpush1.bf16.xpose.msra.mxu0 0
        %6428 = vmatprep.subr.bf16.mxu0 0
        %6429 = vmatpush1.bf16.xpose.msra.mxu0 0
        %6430 = vmatprep.subr.bf16.mxu0 0
        %6431 = vmatpush1.bf16.xpose.msra.mxu0 0
        %6432 = vmatprep.subr.bf16.mxu0 0
        %6433 = vmatpush1.bf16.xpose.msra.mxu0 0
        %6434 = vmatprep.subr.bf16.mxu0 0
        %6435 = vmatpush1.bf16.xpose.msra.mxu0 0
        %6436 = vmatprep.mubr.bf16.mxu0 0
        %6437 = vmatmul.mubr.bf16.gmra.mrb[0].mxu0 %v6399
        %v6438 = vpop.f32.mrb[0].mxu0
        %v6439 = vadd.f32 0.0, %v6438
        %v6440 = vpop.f32.mrb[0].mxu0
        %v6441 = vpop.f32.mrb[0].mxu0
        %v6442 = vpop.f32.mrb[0].mxu0
        %6443 = vdwg.mxu0
        %v6445 = vsel %vm1785, %v6183, 0
        %v6448 = vsel %vm1785, %v6191, 0
        %6450 = vmatprep.subr.bf16.mxu0 0
        %6451 = vmatpush1.bf16.xpose.msra.mxu0 %v6448
        %6452 = vmatprep.subr.bf16.mxu0 0
        %6453 = vmatpush1.bf16.xpose.msra.mxu0 0
        %6454 = vmatprep.subr.bf16.mxu0 0
        %6455 = vmatpush1.bf16.xpose.msra.mxu0 0
        %6456 = vmatprep.subr.bf16.mxu0 0
        %6457 = vmatpush1.bf16.xpose.msra.mxu0 0
        %6458 = vmatprep.subr.bf16.mxu0 0
        %6459 = vmatpush1.bf16.xpose.msra.mxu0 0
        %6460 = vmatprep.subr.bf16.mxu0 0
        %6461 = vmatpush1.bf16.xpose.msra.mxu0 0
        %6462 = vmatprep.subr.bf16.mxu0 0
        %6463 = vmatpush1.bf16.xpose.msra.mxu0 0
        %6464 = vmatprep.subr.bf16.mxu0 0
        %6465 = vmatpush1.bf16.xpose.msra.mxu0 0
        %6466 = vmatprep.subr.bf16.mxu0 0
        %6467 = vmatpush1.bf16.xpose.msra.mxu0 0
        %6468 = vmatprep.subr.bf16.mxu0 0
        %6469 = vmatpush1.bf16.xpose.msra.mxu0 0
        %6470 = vmatprep.subr.bf16.mxu0 0
        %6471 = vmatpush1.bf16.xpose.msra.mxu0 0
        %6472 = vmatprep.subr.bf16.mxu0 0
        %6473 = vmatpush1.bf16.xpose.msra.mxu0 0
        %6474 = vmatprep.subr.bf16.mxu0 0
        %6475 = vmatpush1.bf16.xpose.msra.mxu0 0
        %6476 = vmatprep.subr.bf16.mxu0 0
        %6477 = vmatpush1.bf16.xpose.msra.mxu0 0
        %6478 = vmatprep.subr.bf16.mxu0 0
        %6479 = vmatpush1.bf16.xpose.msra.mxu0 0
        %6480 = vmatprep.subr.bf16.mxu0 0
        %6481 = vmatpush1.bf16.xpose.msra.mxu0 0
        %6482 = vmatprep.mubr.bf16.mxu0 0
        %6483 = vmatmul.mubr.bf16.gmra.mrb[0].mxu0 %v6445
        %v6484 = vpop.f32.mrb[0].mxu0
        %v6485 = vadd.f32 0.0, %v6484
        %v6486 = vpop.f32.mrb[0].mxu0
        %v6487 = vpop.f32.mrb[0].mxu0
        %v6488 = vpop.f32.mrb[0].mxu0
        %6489 = vdwg.mxu0
        %v6491 = vsel %vm1785, %v6184, 0
        %v6494 = vsel %vm1785, %v6192, 0
        %6496 = vmatprep.subr.bf16.mxu0 0
        %6497 = vmatpush1.bf16.xpose.msra.mxu0 %v6494
        %6498 = vmatprep.subr.bf16.mxu0 0
        %6499 = vmatpush1.bf16.xpose.msra.mxu0 0
        %6500 = vmatprep.subr.bf16.mxu0 0
        %6501 = vmatpush1.bf16.xpose.msra.mxu0 0
        %6502 = vmatprep.subr.bf16.mxu0 0
        %6503 = vmatpush1.bf16.xpose.msra.mxu0 0
        %6504 = vmatprep.subr.bf16.mxu0 0
        %6505 = vmatpush1.bf16.xpose.msra.mxu0 0
        %6506 = vmatprep.subr.bf16.mxu0 0
        %6507 = vmatpush1.bf16.xpose.msra.mxu0 0
        %6508 = vmatprep.subr.bf16.mxu0 0
        %6509 = vmatpush1.bf16.xpose.msra.mxu0 0
        %6510 = vmatprep.subr.bf16.mxu0 0
        %6511 = vmatpush1.bf16.xpose.msra.mxu0 0
        %6512 = vmatprep.subr.bf16.mxu0 0
        %6513 = vmatpush1.bf16.xpose.msra.mxu0 0
        %6514 = vmatprep.subr.bf16.mxu0 0
        %6515 = vmatpush1.bf16.xpose.msra.mxu0 0
        %6516 = vmatprep.subr.bf16.mxu0 0
        %6517 = vmatpush1.bf16.xpose.msra.mxu0 0
        %6518 = vmatprep.subr.bf16.mxu0 0
        %6519 = vmatpush1.bf16.xpose.msra.mxu0 0
        %6520 = vmatprep.subr.bf16.mxu0 0
        %6521 = vmatpush1.bf16.xpose.msra.mxu0 0
        %6522 = vmatprep.subr.bf16.mxu0 0
        %6523 = vmatpush1.bf16.xpose.msra.mxu0 0
        %6524 = vmatprep.subr.bf16.mxu0 0
        %6525 = vmatpush1.bf16.xpose.msra.mxu0 0
        %6526 = vmatprep.subr.bf16.mxu0 0
        %6527 = vmatpush1.bf16.xpose.msra.mxu0 0
        %6528 = vmatprep.mubr.bf16.mxu0 0
        %6529 = vmatmul.mubr.bf16.gmra.mrb[0].mxu0 %v6491
        %v6530 = vpop.f32.mrb[0].mxu0
        %v6531 = vadd.f32 0.0, %v6530
        %v6532 = vpop.f32.mrb[0].mxu0
        %v6533 = vpop.f32.mrb[0].mxu0
        %v6534 = vpop.f32.mrb[0].mxu0
        %6535 = vdwg.mxu0
        %v6537 = vsel %vm1785, %v6185, 0
        %v6540 = vsel %vm1785, %v6193, 0
        %6542 = vmatprep.subr.bf16.mxu0 0
        %6543 = vmatpush1.bf16.xpose.msra.mxu0 %v6540
        %6544 = vmatprep.subr.bf16.mxu0 0
        %6545 = vmatpush1.bf16.xpose.msra.mxu0 0
        %6546 = vmatprep.subr.bf16.mxu0 0
        %6547 = vmatpush1.bf16.xpose.msra.mxu0 0
        %6548 = vmatprep.subr.bf16.mxu0 0
        %6549 = vmatpush1.bf16.xpose.msra.mxu0 0
        %6550 = vmatprep.subr.bf16.mxu0 0
        %6551 = vmatpush1.bf16.xpose.msra.mxu0 0
        %6552 = vmatprep.subr.bf16.mxu0 0
        %6553 = vmatpush1.bf16.xpose.msra.mxu0 0
        %6554 = vmatprep.subr.bf16.mxu0 0
        %6555 = vmatpush1.bf16.xpose.msra.mxu0 0
        %6556 = vmatprep.subr.bf16.mxu0 0
        %6557 = vmatpush1.bf16.xpose.msra.mxu0 0
        %6558 = vmatprep.subr.bf16.mxu0 0
        %6559 = vmatpush1.bf16.xpose.msra.mxu0 0
        %6560 = vmatprep.subr.bf16.mxu0 0
        %6561 = vmatpush1.bf16.xpose.msra.mxu0 0
        %6562 = vmatprep.subr.bf16.mxu0 0
        %6563 = vmatpush1.bf16.xpose.msra.mxu0 0
        %6564 = vmatprep.subr.bf16.mxu0 0
        %6565 = vmatpush1.bf16.xpose.msra.mxu0 0
        %6566 = vmatprep.subr.bf16.mxu0 0
        %6567 = vmatpush1.bf16.xpose.msra.mxu0 0
        %6568 = vmatprep.subr.bf16.mxu0 0
        %6569 = vmatpush1.bf16.xpose.msra.mxu0 0
        %6570 = vmatprep.subr.bf16.mxu0 0
        %6571 = vmatpush1.bf16.xpose.msra.mxu0 0
        %6572 = vmatprep.subr.bf16.mxu0 0
        %6573 = vmatpush1.bf16.xpose.msra.mxu0 0
        %6574 = vmatprep.mubr.bf16.mxu0 0
        %6575 = vmatmul.mubr.bf16.gmra.mrb[0].mxu0 %v6537
        %v6576 = vpop.f32.mrb[0].mxu0
        %v6577 = vadd.f32 0.0, %v6576
        %v6578 = vpop.f32.mrb[0].mxu0
        %v6579 = vpop.f32.mrb[0].mxu0
        %v6580 = vpop.f32.mrb[0].mxu0
        %6581 = vdwg.mxu0
        %v6582 = vmul.f32 %v6255, 0.17677669
        %v6583 = vmul.f32 %v6301, 0.17677669
        %v6584 = vmul.f32 %v6347, 0.17677669
        %v6585 = vmul.f32 %v6393, 0.17677669
        %v6586 = vmul.f32 %v6439, 0.17677669
        %v6587 = vmul.f32 %v6485, 0.17677669
        %v6588 = vmul.f32 %v6531, 0.17677669
        %v6589 = vmul.f32 %v6577, 0.17677669
        %v6590 = vsel %vm2163, -1e+32, %v6582
        %v6591 = vsel %vm2163, -1e+32, %v6583
        %v6592 = vsel %vm2163, -1e+32, %v6584
        %v6593 = vsel %vm2163, -1e+32, %v6585
        %v6594 = vsel %vm2163, -1e+32, %v6586
        %v6595 = vsel %vm2163, -1e+32, %v6587
        %v6596 = vsel %vm2163, -1e+32, %v6588
        %v6597 = vsel %vm2163, -1e+32, %v6589
        %v6598 = vsel %vm2172, %v6590, -inf
        %6599 = vmax.xlane.f32.xlu0 %v6598
        %v6600 = vpop.xlane.xlu0 %6599
        %v6601 = vsel %vm2172, %v6591, -inf
        %6602 = vmax.xlane.f32.xlu0 %v6601
        %v6603 = vpop.xlane.xlu0 %6602
        %v6604 = vsel %vm2172, %v6592, -inf
        %6605 = vmax.xlane.f32.xlu0 %v6604
        %v6606 = vpop.xlane.xlu0 %6605
        %v6607 = vsel %vm2172, %v6593, -inf
        %6608 = vmax.xlane.f32.xlu0 %v6607
        %v6609 = vpop.xlane.xlu0 %6608
        %v6610 = vsel %vm2172, %v6594, -inf
        %6611 = vmax.xlane.f32.xlu0 %v6610
        %v6612 = vpop.xlane.xlu0 %6611
        %v6613 = vsel %vm2172, %v6595, -inf
        %6614 = vmax.xlane.f32.xlu0 %v6613
        %v6615 = vpop.xlane.xlu0 %6614
        %v6616 = vsel %vm2172, %v6596, -inf
        %6617 = vmax.xlane.f32.xlu0 %v6616
        %v6618 = vpop.xlane.xlu0 %6617
        %v6619 = vsel %vm2172, %v6597, -inf
        %6620 = vmax.xlane.f32.xlu0 %v6619
        %v6621 = vpop.xlane.xlu0 %6620
        %v6622 = vsub.f32 %v6590, %v6600
        %v6623 = vsub.f32 %v6591, %v6603
        %v6624 = vsub.f32 %v6592, %v6606
        %v6625 = vsub.f32 %v6593, %v6609
        %v6626 = vsub.f32 %v6594, %v6612
        %v6627 = vsub.f32 %v6595, %v6615
        %v6628 = vsub.f32 %v6596, %v6618
        %v6629 = vsub.f32 %v6597, %v6621
        %v6630 = vmul.f32 %v6622, 1.442695
        %v6631 = vpow.pop %v6630
        %v6632 = vmul.f32 %v6623, 1.442695
        %v6633 = vpow.pop %v6632
        %v6634 = vmul.f32 %v6624, 1.442695
        %v6635 = vpow.pop %v6634
        %v6636 = vmul.f32 %v6625, 1.442695
        %v6637 = vpow.pop %v6636
        %v6638 = vmul.f32 %v6626, 1.442695
        %v6639 = vpow.pop %v6638
        %v6640 = vmul.f32 %v6627, 1.442695
        %v6641 = vpow.pop %v6640
        %v6642 = vmul.f32 %v6628, 1.442695
        %v6643 = vpow.pop %v6642
        %v6644 = vmul.f32 %v6629, 1.442695
        %v6645 = vpow.pop %v6644
        %v6646 = vsel %vm2172, %v6631, 0.0
        %6647 = vadd.xlane.f32.xlu0 %v6646
        %v6648 = vpop.xlane.xlu0 %6647
        %v6649 = vsel %vm2172, %v6633, 0.0
        %6650 = vadd.xlane.f32.xlu0 %v6649
        %v6651 = vpop.xlane.xlu0 %6650
        %v6652 = vsel %vm2172, %v6635, 0.0
        %6653 = vadd.xlane.f32.xlu0 %v6652
        %v6654 = vpop.xlane.xlu0 %6653
        %v6655 = vsel %vm2172, %v6637, 0.0
        %6656 = vadd.xlane.f32.xlu0 %v6655
        %v6657 = vpop.xlane.xlu0 %6656
        %v6658 = vsel %vm2172, %v6639, 0.0
        %6659 = vadd.xlane.f32.xlu0 %v6658
        %v6660 = vpop.xlane.xlu0 %6659
        %v6661 = vsel %vm2172, %v6641, 0.0
        %6662 = vadd.xlane.f32.xlu0 %v6661
        %v6663 = vpop.xlane.xlu0 %6662
        %v6664 = vsel %vm2172, %v6643, 0.0
        %6665 = vadd.xlane.f32.xlu0 %v6664
        %v6666 = vpop.xlane.xlu0 %6665
        %v6667 = vsel %vm2172, %v6645, 0.0
        %6668 = vadd.xlane.f32.xlu0 %v6667
        %v6669 = vpop.xlane.xlu0 %6668
        %v6670 = vrcp.pop %v6648
        %v6671 = vrcp.pop %v6651
        %v6672 = vrcp.pop %v6654
        %v6673 = vrcp.pop %v6657
        %v6674 = vrcp.pop %v6660
        %v6675 = vrcp.pop %v6663
        %v6676 = vrcp.pop %v6666
        %v6677 = vrcp.pop %v6669
        %v6678 = vmul.f32 %v6631, %v6670
        %v6679 = vmul.f32 %v6633, %v6671
        %v6680 = vmul.f32 %v6635, %v6672
        %v6681 = vmul.f32 %v6637, %v6673
        %v6682 = vmul.f32 %v6639, %v6674
        %v6683 = vmul.f32 %v6641, %v6675
        %v6684 = vmul.f32 %v6643, %v6676
        %v6685 = vmul.f32 %v6645, %v6677
        %v6686 = vpack.c.bf16 %v6678, %v6678
        %v6687 = vpack.c.bf16 %v6679, %v6679
        %v6688 = vpack.c.bf16 %v6680, %v6680
        %v6689 = vpack.c.bf16 %v6681, %v6681
        %v6690 = vpack.c.bf16 %v6682, %v6682
        %v6691 = vpack.c.bf16 %v6683, %v6683
        %v6692 = vpack.c.bf16 %v6684, %v6684
        %v6693 = vpack.c.bf16 %v6685, %v6685
        %v6695 = vsel %vm2172, %v6686, 0
        %v6698 = vsel %vm2272, %v6206, 0
        %6700 = vmatprep.subr.bf16.mxu0 0
        %6701 = vmatpush1.bf16.msra.mxu0 %v6698
        %6702 = vmatprep.subr.bf16.mxu0 0
        %6703 = vmatpush1.bf16.msra.mxu0 0
        %6704 = vmatprep.subr.bf16.mxu0 0
        %6705 = vmatpush1.bf16.msra.mxu0 0
        %6706 = vmatprep.subr.bf16.mxu0 0
        %6707 = vmatpush1.bf16.msra.mxu0 0
        %6708 = vmatprep.subr.bf16.mxu0 0
        %6709 = vmatpush1.bf16.msra.mxu0 0
        %6710 = vmatprep.subr.bf16.mxu0 0
        %6711 = vmatpush1.bf16.msra.mxu0 0
        %6712 = vmatprep.subr.bf16.mxu0 0
        %6713 = vmatpush1.bf16.msra.mxu0 0
        %6714 = vmatprep.subr.bf16.mxu0 0
        %6715 = vmatpush1.bf16.msra.mxu0 0
        %6716 = vmatprep.subr.bf16.mxu0 0
        %6717 = vmatpush1.bf16.msra.mxu0 0
        %6718 = vmatprep.subr.bf16.mxu0 0
        %6719 = vmatpush1.bf16.msra.mxu0 0
        %6720 = vmatprep.subr.bf16.mxu0 0
        %6721 = vmatpush1.bf16.msra.mxu0 0
        %6722 = vmatprep.subr.bf16.mxu0 0
        %6723 = vmatpush1.bf16.msra.mxu0 0
        %6724 = vmatprep.subr.bf16.mxu0 0
        %6725 = vmatpush1.bf16.msra.mxu0 0
        %6726 = vmatprep.subr.bf16.mxu0 0
        %6727 = vmatpush1.bf16.msra.mxu0 0
        %6728 = vmatprep.subr.bf16.mxu0 0
        %6729 = vmatpush1.bf16.msra.mxu0 0
        %6730 = vmatprep.subr.bf16.mxu0 0
        %6731 = vmatpush1.bf16.msra.mxu0 0
        %6732 = vmatprep.mubr.bf16.mxu0 0
        %6733 = vmatmul.mubr.bf16.gmra.mrb[0].mxu0 %v6695
        %v6734 = vpop.f32.mrb[0].mxu0
        %v6735 = vadd.f32 0.0, %v6734
        %v6736 = vpop.f32.mrb[0].mxu0
        %v6737 = vpop.f32.mrb[0].mxu0
        %v6738 = vpop.f32.mrb[0].mxu0
        %6739 = vdwg.mxu0
        %v6741 = vsel %vm2172, %v6687, 0
        %v6744 = vsel %vm2272, %v6207, 0
        %6746 = vmatprep.subr.bf16.mxu0 0
        %6747 = vmatpush1.bf16.msra.mxu0 %v6744
        %6748 = vmatprep.subr.bf16.mxu0 0
        %6749 = vmatpush1.bf16.msra.mxu0 0
        %6750 = vmatprep.subr.bf16.mxu0 0
        %6751 = vmatpush1.bf16.msra.mxu0 0
        %6752 = vmatprep.subr.bf16.mxu0 0
        %6753 = vmatpush1.bf16.msra.mxu0 0
        %6754 = vmatprep.subr.bf16.mxu0 0
        %6755 = vmatpush1.bf16.msra.mxu0 0
        %6756 = vmatprep.subr.bf16.mxu0 0
        %6757 = vmatpush1.bf16.msra.mxu0 0
        %6758 = vmatprep.subr.bf16.mxu0 0
        %6759 = vmatpush1.bf16.msra.mxu0 0
        %6760 = vmatprep.subr.bf16.mxu0 0
        %6761 = vmatpush1.bf16.msra.mxu0 0
        %6762 = vmatprep.subr.bf16.mxu0 0
        %6763 = vmatpush1.bf16.msra.mxu0 0
        %6764 = vmatprep.subr.bf16.mxu0 0
        %6765 = vmatpush1.bf16.msra.mxu0 0
        %6766 = vmatprep.subr.bf16.mxu0 0
        %6767 = vmatpush1.bf16.msra.mxu0 0
        %6768 = vmatprep.subr.bf16.mxu0 0
        %6769 = vmatpush1.bf16.msra.mxu0 0
        %6770 = vmatprep.subr.bf16.mxu0 0
        %6771 = vmatpush1.bf16.msra.mxu0 0
        %6772 = vmatprep.subr.bf16.mxu0 0
        %6773 = vmatpush1.bf16.msra.mxu0 0
        %6774 = vmatprep.subr.bf16.mxu0 0
        %6775 = vmatpush1.bf16.msra.mxu0 0
        %6776 = vmatprep.subr.bf16.mxu0 0
        %6777 = vmatpush1.bf16.msra.mxu0 0
        %6778 = vmatprep.mubr.bf16.mxu0 0
        %6779 = vmatmul.mubr.bf16.gmra.mrb[0].mxu0 %v6741
        %v6780 = vpop.f32.mrb[0].mxu0
        %v6781 = vadd.f32 0.0, %v6780
        %v6782 = vpop.f32.mrb[0].mxu0
        %v6783 = vpop.f32.mrb[0].mxu0
        %v6784 = vpop.f32.mrb[0].mxu0
        %6785 = vdwg.mxu0
        %v6787 = vsel %vm2172, %v6688, 0
        %v6790 = vsel %vm2272, %v6208, 0
        %6792 = vmatprep.subr.bf16.mxu0 0
        %6793 = vmatpush1.bf16.msra.mxu0 %v6790
        %6794 = vmatprep.subr.bf16.mxu0 0
        %6795 = vmatpush1.bf16.msra.mxu0 0
        %6796 = vmatprep.subr.bf16.mxu0 0
        %6797 = vmatpush1.bf16.msra.mxu0 0
        %6798 = vmatprep.subr.bf16.mxu0 0
        %6799 = vmatpush1.bf16.msra.mxu0 0
        %6800 = vmatprep.subr.bf16.mxu0 0
        %6801 = vmatpush1.bf16.msra.mxu0 0
        %6802 = vmatprep.subr.bf16.mxu0 0
        %6803 = vmatpush1.bf16.msra.mxu0 0
        %6804 = vmatprep.subr.bf16.mxu0 0
        %6805 = vmatpush1.bf16.msra.mxu0 0
        %6806 = vmatprep.subr.bf16.mxu0 0
        %6807 = vmatpush1.bf16.msra.mxu0 0
        %6808 = vmatprep.subr.bf16.mxu0 0
        %6809 = vmatpush1.bf16.msra.mxu0 0
        %6810 = vmatprep.subr.bf16.mxu0 0
        %6811 = vmatpush1.bf16.msra.mxu0 0
        %6812 = vmatprep.subr.bf16.mxu0 0
        %6813 = vmatpush1.bf16.msra.mxu0 0
        %6814 = vmatprep.subr.bf16.mxu0 0
        %6815 = vmatpush1.bf16.msra.mxu0 0
        %6816 = vmatprep.subr.bf16.mxu0 0
        %6817 = vmatpush1.bf16.msra.mxu0 0
        %6818 = vmatprep.subr.bf16.mxu0 0
        %6819 = vmatpush1.bf16.msra.mxu0 0
        %6820 = vmatprep.subr.bf16.mxu0 0
        %6821 = vmatpush1.bf16.msra.mxu0 0
        %6822 = vmatprep.subr.bf16.mxu0 0
        %6823 = vmatpush1.bf16.msra.mxu0 0
        %6824 = vmatprep.mubr.bf16.mxu0 0
        %6825 = vmatmul.mubr.bf16.gmra.mrb[0].mxu0 %v6787
        %v6826 = vpop.f32.mrb[0].mxu0
        %v6827 = vadd.f32 0.0, %v6826
        %v6828 = vpop.f32.mrb[0].mxu0
        %v6829 = vpop.f32.mrb[0].mxu0
        %v6830 = vpop.f32.mrb[0].mxu0
        %6831 = vdwg.mxu0
        %v6833 = vsel %vm2172, %v6689, 0
        %v6836 = vsel %vm2272, %v6209, 0
        %6838 = vmatprep.subr.bf16.mxu0 0
        %6839 = vmatpush1.bf16.msra.mxu0 %v6836
        %6840 = vmatprep.subr.bf16.mxu0 0
        %6841 = vmatpush1.bf16.msra.mxu0 0
        %6842 = vmatprep.subr.bf16.mxu0 0
        %6843 = vmatpush1.bf16.msra.mxu0 0
        %6844 = vmatprep.subr.bf16.mxu0 0
        %6845 = vmatpush1.bf16.msra.mxu0 0
        %6846 = vmatprep.subr.bf16.mxu0 0
        %6847 = vmatpush1.bf16.msra.mxu0 0
        %6848 = vmatprep.subr.bf16.mxu0 0
        %6849 = vmatpush1.bf16.msra.mxu0 0
        %6850 = vmatprep.subr.bf16.mxu0 0
        %6851 = vmatpush1.bf16.msra.mxu0 0
        %6852 = vmatprep.subr.bf16.mxu0 0
        %6853 = vmatpush1.bf16.msra.mxu0 0
        %6854 = vmatprep.subr.bf16.mxu0 0
        %6855 = vmatpush1.bf16.msra.mxu0 0
        %6856 = vmatprep.subr.bf16.mxu0 0
        %6857 = vmatpush1.bf16.msra.mxu0 0
        %6858 = vmatprep.subr.bf16.mxu0 0
        %6859 = vmatpush1.bf16.msra.mxu0 0
        %6860 = vmatprep.subr.bf16.mxu0 0
        %6861 = vmatpush1.bf16.msra.mxu0 0
        %6862 = vmatprep.subr.bf16.mxu0 0
        %6863 = vmatpush1.bf16.msra.mxu0 0
        %6864 = vmatprep.subr.bf16.mxu0 0
        %6865 = vmatpush1.bf16.msra.mxu0 0
        %6866 = vmatprep.subr.bf16.mxu0 0
        %6867 = vmatpush1.bf16.msra.mxu0 0
        %6868 = vmatprep.subr.bf16.mxu0 0
        %6869 = vmatpush1.bf16.msra.mxu0 0
        %6870 = vmatprep.mubr.bf16.mxu0 0
        %6871 = vmatmul.mubr.bf16.gmra.mrb[0].mxu0 %v6833
        %v6872 = vpop.f32.mrb[0].mxu0
        %v6873 = vadd.f32 0.0, %v6872
        %v6874 = vpop.f32.mrb[0].mxu0
        %v6875 = vpop.f32.mrb[0].mxu0
        %v6876 = vpop.f32.mrb[0].mxu0
        %6877 = vdwg.mxu0
        %v6879 = vsel %vm2172, %v6690, 0
        %v6882 = vsel %vm2272, %v6210, 0
        %6884 = vmatprep.subr.bf16.mxu0 0
        %6885 = vmatpush1.bf16.msra.mxu0 %v6882
        %6886 = vmatprep.subr.bf16.mxu0 0
        %6887 = vmatpush1.bf16.msra.mxu0 0
        %6888 = vmatprep.subr.bf16.mxu0 0
        %6889 = vmatpush1.bf16.msra.mxu0 0
        %6890 = vmatprep.subr.bf16.mxu0 0
        %6891 = vmatpush1.bf16.msra.mxu0 0
        %6892 = vmatprep.subr.bf16.mxu0 0
        %6893 = vmatpush1.bf16.msra.mxu0 0
        %6894 = vmatprep.subr.bf16.mxu0 0
        %6895 = vmatpush1.bf16.msra.mxu0 0
        %6896 = vmatprep.subr.bf16.mxu0 0
        %6897 = vmatpush1.bf16.msra.mxu0 0
        %6898 = vmatprep.subr.bf16.mxu0 0
        %6899 = vmatpush1.bf16.msra.mxu0 0
        %6900 = vmatprep.subr.bf16.mxu0 0
        %6901 = vmatpush1.bf16.msra.mxu0 0
        %6902 = vmatprep.subr.bf16.mxu0 0
        %6903 = vmatpush1.bf16.msra.mxu0 0
        %6904 = vmatprep.subr.bf16.mxu0 0
        %6905 = vmatpush1.bf16.msra.mxu0 0
        %6906 = vmatprep.subr.bf16.mxu0 0
        %6907 = vmatpush1.bf16.msra.mxu0 0
        %6908 = vmatprep.subr.bf16.mxu0 0
        %6909 = vmatpush1.bf16.msra.mxu0 0
        %6910 = vmatprep.subr.bf16.mxu0 0
        %6911 = vmatpush1.bf16.msra.mxu0 0
        %6912 = vmatprep.subr.bf16.mxu0 0
        %6913 = vmatpush1.bf16.msra.mxu0 0
        %6914 = vmatprep.subr.bf16.mxu0 0
        %6915 = vmatpush1.bf16.msra.mxu0 0
        %6916 = vmatprep.mubr.bf16.mxu0 0
        %6917 = vmatmul.mubr.bf16.gmra.mrb[0].mxu0 %v6879
        %v6918 = vpop.f32.mrb[0].mxu0
        %v6919 = vadd.f32 0.0, %v6918
        %v6920 = vpop.f32.mrb[0].mxu0
        %v6921 = vpop.f32.mrb[0].mxu0
        %v6922 = vpop.f32.mrb[0].mxu0
        %6923 = vdwg.mxu0
        %v6925 = vsel %vm2172, %v6691, 0
        %v6928 = vsel %vm2272, %v6211, 0
        %6930 = vmatprep.subr.bf16.mxu0 0
        %6931 = vmatpush1.bf16.msra.mxu0 %v6928
        %6932 = vmatprep.subr.bf16.mxu0 0
        %6933 = vmatpush1.bf16.msra.mxu0 0
        %6934 = vmatprep.subr.bf16.mxu0 0
        %6935 = vmatpush1.bf16.msra.mxu0 0
        %6936 = vmatprep.subr.bf16.mxu0 0
        %6937 = vmatpush1.bf16.msra.mxu0 0
        %6938 = vmatprep.subr.bf16.mxu0 0
        %6939 = vmatpush1.bf16.msra.mxu0 0
        %6940 = vmatprep.subr.bf16.mxu0 0
        %6941 = vmatpush1.bf16.msra.mxu0 0
        %6942 = vmatprep.subr.bf16.mxu0 0
        %6943 = vmatpush1.bf16.msra.mxu0 0
        %6944 = vmatprep.subr.bf16.mxu0 0
        %6945 = vmatpush1.bf16.msra.mxu0 0
        %6946 = vmatprep.subr.bf16.mxu0 0
        %6947 = vmatpush1.bf16.msra.mxu0 0
        %6948 = vmatprep.subr.bf16.mxu0 0
        %6949 = vmatpush1.bf16.msra.mxu0 0
        %6950 = vmatprep.subr.bf16.mxu0 0
        %6951 = vmatpush1.bf16.msra.mxu0 0
        %6952 = vmatprep.subr.bf16.mxu0 0
        %6953 = vmatpush1.bf16.msra.mxu0 0
        %6954 = vmatprep.subr.bf16.mxu0 0
        %6955 = vmatpush1.bf16.msra.mxu0 0
        %6956 = vmatprep.subr.bf16.mxu0 0
        %6957 = vmatpush1.bf16.msra.mxu0 0
        %6958 = vmatprep.subr.bf16.mxu0 0
        %6959 = vmatpush1.bf16.msra.mxu0 0
        %6960 = vmatprep.subr.bf16.mxu0 0
        %6961 = vmatpush1.bf16.msra.mxu0 0
        %6962 = vmatprep.mubr.bf16.mxu0 0
        %6963 = vmatmul.mubr.bf16.gmra.mrb[0].mxu0 %v6925
        %v6964 = vpop.f32.mrb[0].mxu0
        %v6965 = vadd.f32 0.0, %v6964
        %v6966 = vpop.f32.mrb[0].mxu0
        %v6967 = vpop.f32.mrb[0].mxu0
        %v6968 = vpop.f32.mrb[0].mxu0
        %6969 = vdwg.mxu0
        %v6971 = vsel %vm2172, %v6692, 0
        %v6974 = vsel %vm2272, %v6212, 0
        %6976 = vmatprep.subr.bf16.mxu0 0
        %6977 = vmatpush1.bf16.msra.mxu0 %v6974
        %6978 = vmatprep.subr.bf16.mxu0 0
        %6979 = vmatpush1.bf16.msra.mxu0 0
        %6980 = vmatprep.subr.bf16.mxu0 0
        %6981 = vmatpush1.bf16.msra.mxu0 0
        %6982 = vmatprep.subr.bf16.mxu0 0
        %6983 = vmatpush1.bf16.msra.mxu0 0
        %6984 = vmatprep.subr.bf16.mxu0 0
        %6985 = vmatpush1.bf16.msra.mxu0 0
        %6986 = vmatprep.subr.bf16.mxu0 0
        %6987 = vmatpush1.bf16.msra.mxu0 0
        %6988 = vmatprep.subr.bf16.mxu0 0
        %6989 = vmatpush1.bf16.msra.mxu0 0
        %6990 = vmatprep.subr.bf16.mxu0 0
        %6991 = vmatpush1.bf16.msra.mxu0 0
        %6992 = vmatprep.subr.bf16.mxu0 0
        %6993 = vmatpush1.bf16.msra.mxu0 0
        %6994 = vmatprep.subr.bf16.mxu0 0
        %6995 = vmatpush1.bf16.msra.mxu0 0
        %6996 = vmatprep.subr.bf16.mxu0 0
        %6997 = vmatpush1.bf16.msra.mxu0 0
        %6998 = vmatprep.subr.bf16.mxu0 0
        %6999 = vmatpush1.bf16.msra.mxu0 0
        %7000 = vmatprep.subr.bf16.mxu0 0
        %7001 = vmatpush1.bf16.msra.mxu0 0
        %7002 = vmatprep.subr.bf16.mxu0 0
        %7003 = vmatpush1.bf16.msra.mxu0 0
        %7004 = vmatprep.subr.bf16.mxu0 0
        %7005 = vmatpush1.bf16.msra.mxu0 0
        %7006 = vmatprep.subr.bf16.mxu0 0
        %7007 = vmatpush1.bf16.msra.mxu0 0
        %7008 = vmatprep.mubr.bf16.mxu0 0
        %7009 = vmatmul.mubr.bf16.gmra.mrb[0].mxu0 %v6971
        %v7010 = vpop.f32.mrb[0].mxu0
        %v7011 = vadd.f32 0.0, %v7010
        %v7012 = vpop.f32.mrb[0].mxu0
        %v7013 = vpop.f32.mrb[0].mxu0
        %v7014 = vpop.f32.mrb[0].mxu0
        %7015 = vdwg.mxu0
        %v7017 = vsel %vm2172, %v6693, 0
        %v7020 = vsel %vm2272, %v6213, 0
        %7022 = vmatprep.subr.bf16.mxu0 0
        %7023 = vmatpush1.bf16.msra.mxu0 %v7020
        %7024 = vmatprep.subr.bf16.mxu0 0
        %7025 = vmatpush1.bf16.msra.mxu0 0
        %7026 = vmatprep.subr.bf16.mxu0 0
        %7027 = vmatpush1.bf16.msra.mxu0 0
        %7028 = vmatprep.subr.bf16.mxu0 0
        %7029 = vmatpush1.bf16.msra.mxu0 0
        %7030 = vmatprep.subr.bf16.mxu0 0
        %7031 = vmatpush1.bf16.msra.mxu0 0
        %7032 = vmatprep.subr.bf16.mxu0 0
        %7033 = vmatpush1.bf16.msra.mxu0 0
        %7034 = vmatprep.subr.bf16.mxu0 0
        %7035 = vmatpush1.bf16.msra.mxu0 0
        %7036 = vmatprep.subr.bf16.mxu0 0
        %7037 = vmatpush1.bf16.msra.mxu0 0
        %7038 = vmatprep.subr.bf16.mxu0 0
        %7039 = vmatpush1.bf16.msra.mxu0 0
        %7040 = vmatprep.subr.bf16.mxu0 0
        %7041 = vmatpush1.bf16.msra.mxu0 0
        %7042 = vmatprep.subr.bf16.mxu0 0
        %7043 = vmatpush1.bf16.msra.mxu0 0
        %7044 = vmatprep.subr.bf16.mxu0 0
        %7045 = vmatpush1.bf16.msra.mxu0 0
        %7046 = vmatprep.subr.bf16.mxu0 0
        %7047 = vmatpush1.bf16.msra.mxu0 0
        %7048 = vmatprep.subr.bf16.mxu0 0
        %7049 = vmatpush1.bf16.msra.mxu0 0
        %7050 = vmatprep.subr.bf16.mxu0 0
        %7051 = vmatpush1.bf16.msra.mxu0 0
        %7052 = vmatprep.subr.bf16.mxu0 0
        %7053 = vmatpush1.bf16.msra.mxu0 0
        %7054 = vmatprep.mubr.bf16.mxu0 0
        %7055 = vmatmul.mubr.bf16.gmra.mrb[0].mxu0 %v7017
        %v7056 = vpop.f32.mrb[0].mxu0
        %v7057 = vadd.f32 0.0, %v7056
        %v7058 = vpop.f32.mrb[0].mxu0
        %v7059 = vpop.f32.mrb[0].mxu0
        %v7060 = vpop.f32.mrb[0].mxu0
        %7061 = vdwg.mxu0
        %v7062 = vpack.c.bf16 %v6781, %v6735
        %v7063 = vpack.c.bf16 %v6873, %v6827
        %v7064 = vpack.c.bf16 %v6965, %v6919
        %v7065 = vpack.c.bf16 %v7057, %v7011
        %s7066 = scalar_lea.vmem [#allocation22], 48
        %v7067 = vld [vmem:[%s7066] sm:$0xf]
        %v7068 = vld [vmem:[%s7066 + $0x4] sm:$0xf]
        %v7069 = vld [vmem:[%s7066 + $0x8] sm:$0xf]
        %v7070 = vld [vmem:[%s7066 + $0xc] sm:$0xf]
        %v7075 = vunpack.c.l.b16 %v7067
        %v7076 = vunpack.c.l.b16 %v7068
        %v7077 = vunpack.c.l.b16 %v7069
        %v7078 = vunpack.c.l.b16 %v7070
        %v7079 = vpack.c.b16 %v7076, %v7075
        %v7080 = vpack.c.b16 %v7078, %v7077
        %v7084 = vsel %vm1785, %v7062, 0
        %v7087 = vsel %vm1785, %v7063, 0
        %v7090 = vsel %vm1785, %v7064, 0
        %v7093 = vsel %vm1785, %v7065, 0
        %7095 = vmatprep.subr.bf16.mxu0 0
        %7096 = vmatpush1.bf16.msra.mxu0 %v7079
        %7097 = vmatprep.subr.bf16.mxu0 0
        %7098 = vmatpush1.bf16.msra.mxu0 %v7080
        %7099 = vmatprep.subr.bf16.mxu0 0
        %7100 = vmatpush1.bf16.msra.mxu0 0
        %7101 = vmatprep.subr.bf16.mxu0 0
        %7102 = vmatpush1.bf16.msra.mxu0 0
        %7103 = vmatprep.subr.bf16.mxu0 0
        %7104 = vmatpush1.bf16.msra.mxu0 0
        %7105 = vmatprep.subr.bf16.mxu0 0
        %7106 = vmatpush1.bf16.msra.mxu0 0
        %7107 = vmatprep.subr.bf16.mxu0 0
        %7108 = vmatpush1.bf16.msra.mxu0 0
        %7109 = vmatprep.subr.bf16.mxu0 0
        %7110 = vmatpush1.bf16.msra.mxu0 0
        %7111 = vmatprep.subr.bf16.mxu0 0
        %7112 = vmatpush1.bf16.msra.mxu0 0
        %7113 = vmatprep.subr.bf16.mxu0 0
        %7114 = vmatpush1.bf16.msra.mxu0 0
        %7115 = vmatprep.subr.bf16.mxu0 0
        %7116 = vmatpush1.bf16.msra.mxu0 0
        %7117 = vmatprep.subr.bf16.mxu0 0
        %7118 = vmatpush1.bf16.msra.mxu0 0
        %7119 = vmatprep.subr.bf16.mxu0 0
        %7120 = vmatpush1.bf16.msra.mxu0 0
        %7121 = vmatprep.subr.bf16.mxu0 0
        %7122 = vmatpush1.bf16.msra.mxu0 0
        %7123 = vmatprep.subr.bf16.mxu0 0
        %7124 = vmatpush1.bf16.msra.mxu0 0
        %7125 = vmatprep.subr.bf16.mxu0 0
        %7126 = vmatpush1.bf16.msra.mxu0 0
        %7127 = vmatprep.mubr.bf16.mxu0 0
        %7128 = vmatmul.mubr.bf16.gmra.mrb[0].mxu0 %v7084
        %v7129 = vpop.f32.mrb[0].mxu0
        %v7130 = vadd.f32 0.0, %v7129
        %v7131 = vpop.f32.mrb[0].mxu0
        %v7132 = vpop.f32.mrb[0].mxu0
        %v7133 = vadd.f32 0.0, %v7132
        %v7134 = vpop.f32.mrb[0].mxu0
        %7135 = vmatprep.mubr.bf16.mxu0 0
        %7136 = vmatmul.mubr.bf16.gmra.mrb[0].mxu0 %v7087
        %v7137 = vpop.f32.mrb[0].mxu0
        %v7138 = vadd.f32 0.0, %v7137
        %v7139 = vpop.f32.mrb[0].mxu0
        %v7140 = vpop.f32.mrb[0].mxu0
        %v7141 = vadd.f32 0.0, %v7140
        %v7142 = vpop.f32.mrb[0].mxu0
        %7143 = vmatprep.mubr.bf16.mxu0 0
        %7144 = vmatmul.mubr.bf16.gmra.mrb[0].mxu0 %v7090
        %v7145 = vpop.f32.mrb[0].mxu0
        %v7146 = vadd.f32 0.0, %v7145
        %v7147 = vpop.f32.mrb[0].mxu0
        %v7148 = vpop.f32.mrb[0].mxu0
        %v7149 = vadd.f32 0.0, %v7148
        %v7150 = vpop.f32.mrb[0].mxu0
        %7151 = vmatprep.mubr.bf16.mxu0 0
        %7152 = vmatmul.mubr.bf16.gmra.mrb[0].mxu0 %v7093
        %v7153 = vpop.f32.mrb[0].mxu0
        %v7154 = vadd.f32 0.0, %v7153
        %v7155 = vpop.f32.mrb[0].mxu0
        %v7156 = vpop.f32.mrb[0].mxu0
        %v7157 = vadd.f32 0.0, %v7156
        %v7158 = vpop.f32.mrb[0].mxu0
        %7159 = vdwg.mxu0
        %v7160 = vadd.f32 %v5674, %v7130
        %v7161 = vadd.f32 %v5675, %v7133
        %v7162 = vadd.f32 %v5676, %v7138
        %v7163 = vadd.f32 %v5677, %v7141
        %v7164 = vadd.f32 %v5678, %v7146
        %v7165 = vadd.f32 %v5679, %v7149
        %v7166 = vadd.f32 %v5680, %v7154
        %v7167 = vadd.f32 %v5681, %v7157
        %s7168 = scalar_lea.vmem [#allocation24], 48
        %v7169 = vld [vmem:[%s7168] sm:$0xf]
        %v7170 = vld [vmem:[%s7168 + $0x4] sm:$0xf]
        %v7171 = vld [vmem:[%s7168 + $0x8] sm:$0xf]
        %v7172 = vld [vmem:[%s7168 + $0xc] sm:$0xf]
        %v7177 = vunpack.c.l.b16 %v7169
        %v7178 = vunpack.c.l.b16 %v7170
        %v7179 = vunpack.c.l.b16 %v7171
        %v7180 = vunpack.c.l.b16 %v7172
        %v7181 = vpack.c.b16 %v7178, %v7177
        %v7182 = vpack.c.b16 %v7180, %v7179
        %v7186 = vsel %vm1785, %v6174, 0
        %v7189 = vsel %vm1785, %v6175, 0
        %v7192 = vsel %vm1785, %v6176, 0
        %v7195 = vsel %vm1785, %v6177, 0
        %7197 = vmatprep.subr.bf16.mxu0 0
        %7198 = vmatpush1.bf16.msra.mxu0 %v7181
        %7199 = vmatprep.subr.bf16.mxu0 0
        %7200 = vmatpush1.bf16.msra.mxu0 %v7182
        %7201 = vmatprep.subr.bf16.mxu0 0
        %7202 = vmatpush1.bf16.msra.mxu0 0
        %7203 = vmatprep.subr.bf16.mxu0 0
        %7204 = vmatpush1.bf16.msra.mxu0 0
        %7205 = vmatprep.subr.bf16.mxu0 0
        %7206 = vmatpush1.bf16.msra.mxu0 0
        %7207 = vmatprep.subr.bf16.mxu0 0
        %7208 = vmatpush1.bf16.msra.mxu0 0
        %7209 = vmatprep.subr.bf16.mxu0 0
        %7210 = vmatpush1.bf16.msra.mxu0 0
        %7211 = vmatprep.subr.bf16.mxu0 0
        %7212 = vmatpush1.bf16.msra.mxu0 0
        %7213 = vmatprep.subr.bf16.mxu0 0
        %7214 = vmatpush1.bf16.msra.mxu0 0
        %7215 = vmatprep.subr.bf16.mxu0 0
        %7216 = vmatpush1.bf16.msra.mxu0 0
        %7217 = vmatprep.subr.bf16.mxu0 0
        %7218 = vmatpush1.bf16.msra.mxu0 0
        %7219 = vmatprep.subr.bf16.mxu0 0
        %7220 = vmatpush1.bf16.msra.mxu0 0
        %7221 = vmatprep.subr.bf16.mxu0 0
        %7222 = vmatpush1.bf16.msra.mxu0 0
        %7223 = vmatprep.subr.bf16.mxu0 0
        %7224 = vmatpush1.bf16.msra.mxu0 0
        %7225 = vmatprep.subr.bf16.mxu0 0
        %7226 = vmatpush1.bf16.msra.mxu0 0
        %7227 = vmatprep.subr.bf16.mxu0 0
        %7228 = vmatpush1.bf16.msra.mxu0 0
        %7229 = vmatprep.mubr.bf16.mxu0 0
        %7230 = vmatmul.mubr.bf16.gmra.mrb[0].mxu0 %v7186
        %v7231 = vpop.f32.mrb[0].mxu0
        %v7232 = vadd.f32 0.0, %v7231
        %v7233 = vpop.f32.mrb[0].mxu0
        %v7234 = vpop.f32.mrb[0].mxu0
        %v7235 = vadd.f32 0.0, %v7234
        %v7236 = vpop.f32.mrb[0].mxu0
        %7237 = vmatprep.mubr.bf16.mxu0 0
        %7238 = vmatmul.mubr.bf16.gmra.mrb[0].mxu0 %v7189
        %v7239 = vpop.f32.mrb[0].mxu0
        %v7240 = vadd.f32 0.0, %v7239
        %v7241 = vpop.f32.mrb[0].mxu0
        %v7242 = vpop.f32.mrb[0].mxu0
        %v7243 = vadd.f32 0.0, %v7242
        %v7244 = vpop.f32.mrb[0].mxu0
        %7245 = vmatprep.mubr.bf16.mxu0 0
        %7246 = vmatmul.mubr.bf16.gmra.mrb[0].mxu0 %v7192
        %v7247 = vpop.f32.mrb[0].mxu0
        %v7248 = vadd.f32 0.0, %v7247
        %v7249 = vpop.f32.mrb[0].mxu0
        %v7250 = vpop.f32.mrb[0].mxu0
        %v7251 = vadd.f32 0.0, %v7250
        %v7252 = vpop.f32.mrb[0].mxu0
        %7253 = vmatprep.mubr.bf16.mxu0 0
        %7254 = vmatmul.mubr.bf16.gmra.mrb[0].mxu0 %v7195
        %v7255 = vpop.f32.mrb[0].mxu0
        %v7256 = vadd.f32 0.0, %v7255
        %v7257 = vpop.f32.mrb[0].mxu0
        %v7258 = vpop.f32.mrb[0].mxu0
        %v7259 = vadd.f32 0.0, %v7258
        %v7260 = vpop.f32.mrb[0].mxu0
        %7261 = vdwg.mxu0
        %v7262 = vadd.f32 %v5776, %v7232
        %v7263 = vadd.f32 %v5777, %v7235
        %v7264 = vadd.f32 %v5778, %v7240
        %v7265 = vadd.f32 %v5779, %v7243
        %v7266 = vadd.f32 %v5780, %v7248
        %v7267 = vadd.f32 %v5781, %v7251
        %v7268 = vadd.f32 %v5782, %v7256
        %v7269 = vadd.f32 %v5783, %v7259
        %7271 = vset.pattern.permute.xlu0 0
        %7272 = vperm.xlu0 %7271, %v1146
        %v7273 = vpop.permute.xlu0 %7272
        %7276 = vset.pattern.permute.xlu0 0
        %7277 = vperm.xlu0 %7276, %v1147
        %v7278 = vpop.permute.xlu0 %7277
        %7281 = vset.pattern.permute.xlu0 0
        %7282 = vperm.xlu0 %7281, %v1148
        %v7283 = vpop.permute.xlu0 %7282
        %7286 = vset.pattern.permute.xlu0 0
        %7287 = vperm.xlu0 %7286, %v1149
        %v7288 = vpop.permute.xlu0 %7287
        %7291 = vset.pattern.permute.xlu0 0
        %7292 = vperm.xlu0 %7291, %v1150
        %v7293 = vpop.permute.xlu0 %7292
        %7296 = vset.pattern.permute.xlu0 0
        %7297 = vperm.xlu0 %7296, %v1151
        %v7298 = vpop.permute.xlu0 %7297
        %7301 = vset.pattern.permute.xlu0 0
        %7302 = vperm.xlu0 %7301, %v1152
        %v7303 = vpop.permute.xlu0 %7302
        %7306 = vset.pattern.permute.xlu0 0
        %7307 = vperm.xlu0 %7306, %v1153
        %v7308 = vpop.permute.xlu0 %7307
        %v7310 = vmul.f32 %v7160, %v7273
        %v7311 = vmul.f32 %v7161, %v7278
        %v7312 = vmul.f32 %v7162, %v7283
        %v7313 = vmul.f32 %v7163, %v7288
        %v7314 = vmul.f32 %v7164, %v7293
        %v7315 = vmul.f32 %v7165, %v7298
        %v7316 = vmul.f32 %v7166, %v7303
        %v7317 = vmul.f32 %v7167, %v7308
        %v7318 = vld [vmem:[#allocation25] sm:$0x1]
        %v7319 = vld [vmem:[#allocation27] sm:$0x1]
        %7320 = vadd.xlane.f32.xlu0 %v7310
        %v7321 = vpop.xlane.xlu0 %7320
        %7322 = vadd.xlane.f32.xlu0 %v7311
        %v7323 = vpop.xlane.xlu0 %7322
        %7324 = vadd.xlane.f32.xlu0 %v7312
        %v7325 = vpop.xlane.xlu0 %7324
        %7326 = vadd.xlane.f32.xlu0 %v7313
        %v7327 = vpop.xlane.xlu0 %7326
        %7328 = vadd.xlane.f32.xlu0 %v7314
        %v7329 = vpop.xlane.xlu0 %7328
        %7330 = vadd.xlane.f32.xlu0 %v7315
        %v7331 = vpop.xlane.xlu0 %7330
        %7332 = vadd.xlane.f32.xlu0 %v7316
        %v7333 = vpop.xlane.xlu0 %7332
        %7334 = vadd.xlane.f32.xlu0 %v7317
        %v7335 = vpop.xlane.xlu0 %7334
        %v7336 = vmul.f32 %v7321, %v1180
        %v7337 = vmul.f32 %v7323, %v1180
        %v7338 = vmul.f32 %v7325, %v1180
        %v7339 = vmul.f32 %v7327, %v1180
        %v7340 = vmul.f32 %v7329, %v1180
        %v7341 = vmul.f32 %v7331, %v1180
        %v7342 = vmul.f32 %v7333, %v1180
        %v7343 = vmul.f32 %v7335, %v1180
        %v7344 = vsub.f32 %v7310, %v7336
        %v7345 = vsub.f32 %v7311, %v7337
        %v7346 = vsub.f32 %v7312, %v7338
        %v7347 = vsub.f32 %v7313, %v7339
        %v7348 = vsub.f32 %v7314, %v7340
        %v7349 = vsub.f32 %v7315, %v7341
        %v7350 = vsub.f32 %v7316, %v7342
        %v7351 = vsub.f32 %v7317, %v7343
        %v7352 = vmul.f32 %v7344, %v7344
        %v7353 = vmul.f32 %v7345, %v7345
        %v7354 = vmul.f32 %v7346, %v7346
        %v7355 = vmul.f32 %v7347, %v7347
        %v7356 = vmul.f32 %v7348, %v7348
        %v7357 = vmul.f32 %v7349, %v7349
        %v7358 = vmul.f32 %v7350, %v7350
        %v7359 = vmul.f32 %v7351, %v7351
        %7360 = vadd.xlane.f32.xlu0 %v7352
        %v7361 = vpop.xlane.xlu0 %7360
        %7362 = vadd.xlane.f32.xlu0 %v7353
        %v7363 = vpop.xlane.xlu0 %7362
        %7364 = vadd.xlane.f32.xlu0 %v7354
        %v7365 = vpop.xlane.xlu0 %7364
        %7366 = vadd.xlane.f32.xlu0 %v7355
        %v7367 = vpop.xlane.xlu0 %7366
        %7368 = vadd.xlane.f32.xlu0 %v7356
        %v7369 = vpop.xlane.xlu0 %7368
        %7370 = vadd.xlane.f32.xlu0 %v7357
        %v7371 = vpop.xlane.xlu0 %7370
        %7372 = vadd.xlane.f32.xlu0 %v7358
        %v7373 = vpop.xlane.xlu0 %7372
        %7374 = vadd.xlane.f32.xlu0 %v7359
        %v7375 = vpop.xlane.xlu0 %7374
        %v7376 = vmul.f32 %v7361, %v1180
        %v7377 = vmul.f32 %v7363, %v1180
        %v7378 = vmul.f32 %v7365, %v1180
        %v7379 = vmul.f32 %v7367, %v1180
        %v7380 = vmul.f32 %v7369, %v1180
        %v7381 = vmul.f32 %v7371, %v1180
        %v7382 = vmul.f32 %v7373, %v1180
        %v7383 = vmul.f32 %v7375, %v1180
        %v7384 = vadd.f32 %v7376, 1e-05
        %v7385 = vadd.f32 %v7377, 1e-05
        %v7386 = vadd.f32 %v7378, 1e-05
        %v7387 = vadd.f32 %v7379, 1e-05
        %v7388 = vadd.f32 %v7380, 1e-05
        %v7389 = vadd.f32 %v7381, 1e-05
        %v7390 = vadd.f32 %v7382, 1e-05
        %v7391 = vadd.f32 %v7383, 1e-05
        %v7392 = vrsqrt.pop %v7384
        %v7393 = vrsqrt.pop %v7385
        %v7394 = vrsqrt.pop %v7386
        %v7395 = vrsqrt.pop %v7387
        %v7396 = vrsqrt.pop %v7388
        %v7397 = vrsqrt.pop %v7389
        %v7398 = vrsqrt.pop %v7390
        %v7399 = vrsqrt.pop %v7391
        %v7400 = vmul.f32 %v7344, %v7392
        %v7401 = vmul.f32 %v7345, %v7393
        %v7402 = vmul.f32 %v7346, %v7394
        %v7403 = vmul.f32 %v7347, %v7395
        %v7404 = vmul.f32 %v7348, %v7396
        %v7405 = vmul.f32 %v7349, %v7397
        %v7406 = vmul.f32 %v7350, %v7398
        %v7407 = vmul.f32 %v7351, %v7399
        %v7409 = vlaneseq
        %v7410 = vshrl.u32 %v7409, 7
        %v7411 = vsub.s32 0, %v7410
        %v7412 = vrot.slane %v7318, %v7411
        %v7414 = vmul.f32 %v7400, %v7412
        %v7415 = vmul.f32 %v7401, %v7412
        %v7416 = vmul.f32 %v7402, %v7412
        %v7417 = vmul.f32 %v7403, %v7412
        %v7418 = vmul.f32 %v7404, %v7412
        %v7419 = vmul.f32 %v7405, %v7412
        %v7420 = vmul.f32 %v7406, %v7412
        %v7421 = vmul.f32 %v7407, %v7412
        %v7423 = vlaneseq
        %v7424 = vshrl.u32 %v7423, 7
        %v7425 = vsub.s32 0, %v7424
        %v7426 = vrot.slane %v7319, %v7425
        %v7428 = vadd.f32 %v7414, %v7426
        %v7429 = vadd.f32 %v7415, %v7426
        %v7430 = vadd.f32 %v7416, %v7426
        %v7431 = vadd.f32 %v7417, %v7426
        %v7432 = vadd.f32 %v7418, %v7426
        %v7433 = vadd.f32 %v7419, %v7426
        %v7434 = vadd.f32 %v7420, %v7426
        %v7435 = vadd.f32 %v7421, %v7426
        %v7436 = vpack.c.bf16 %v7429, %v7428
        %v7437 = vpack.c.bf16 %v7431, %v7430
        %v7438 = vpack.c.bf16 %v7433, %v7432
        %v7439 = vpack.c.bf16 %v7435, %v7434
        %v7440 = vld [vmem:[#allocation28] sm:$0xf]
        %v7441 = vld [vmem:[#allocation28 + $0x4] sm:$0xf]
        %v7442 = vld [vmem:[#allocation28 + $0x8] sm:$0xf]
        %v7443 = vld [vmem:[#allocation28 + $0xc] sm:$0xf]
        %v7444 = vld [vmem:[#allocation28 + $0x10] sm:$0xf]
        %v7445 = vld [vmem:[#allocation28 + $0x14] sm:$0xf]
        %v7446 = vld [vmem:[#allocation28 + $0x18] sm:$0xf]
        %v7447 = vld [vmem:[#allocation28 + $0x1c] sm:$0xf]
        %v7448 = vld [vmem:[#allocation28 + $0x20] sm:$0xf]
        %v7449 = vld [vmem:[#allocation28 + $0x24] sm:$0xf]
        %v7450 = vld [vmem:[#allocation28 + $0x28] sm:$0xf]
        %v7451 = vld [vmem:[#allocation28 + $0x2c] sm:$0xf]
        %v7452 = vld [vmem:[#allocation28 + $0x30] sm:$0xf]
        %v7453 = vld [vmem:[#allocation28 + $0x34] sm:$0xf]
        %v7454 = vld [vmem:[#allocation28 + $0x38] sm:$0xf]
        %v7455 = vld [vmem:[#allocation28 + $0x3c] sm:$0xf]
        %v7456 = vld [vmem:[#allocation30] sm:$0x1]
        %v7458 = vlaneseq
        %v7459 = vshrl.u32 %v7458, 7
        %v7460 = vsub.s32 0, %v7459
        %v7461 = vrot.slane %v7456, %v7460
        %v7479 = vunpack.c.l.b16 %v7440
        %v7480 = vunpack.c.l.b16 %v7441
        %v7481 = vunpack.c.l.b16 %v7442
        %v7482 = vunpack.c.l.b16 %v7443
        %v7483 = vunpack.c.l.b16 %v7444
        %v7484 = vunpack.c.l.b16 %v7445
        %v7485 = vunpack.c.l.b16 %v7446
        %v7486 = vunpack.c.l.b16 %v7447
        %v7487 = vunpack.c.l.b16 %v7448
        %v7488 = vunpack.c.l.b16 %v7449
        %v7489 = vunpack.c.l.b16 %v7450
        %v7490 = vunpack.c.l.b16 %v7451
        %v7491 = vunpack.c.l.b16 %v7452
        %v7492 = vunpack.c.l.b16 %v7453
        %v7493 = vunpack.c.l.b16 %v7454
        %v7494 = vunpack.c.l.b16 %v7455
        %v7495 = vpack.c.b16 %v7480, %v7479
        %v7496 = vpack.c.b16 %v7482, %v7481
        %v7497 = vpack.c.b16 %v7484, %v7483
        %v7498 = vpack.c.b16 %v7486, %v7485
        %v7499 = vpack.c.b16 %v7488, %v7487
        %v7500 = vpack.c.b16 %v7490, %v7489
        %v7501 = vpack.c.b16 %v7492, %v7491
        %v7502 = vpack.c.b16 %v7494, %v7493
        %7511 = vmatprep.subr.bf16.mxu0 0
        %7512 = vmatpush1.bf16.msra.mxu0 %v7495
        %7513 = vmatprep.subr.bf16.mxu0 0
        %7514 = vmatpush1.bf16.msra.mxu0 %v7496
        %7515 = vmatprep.subr.bf16.mxu0 0
        %7516 = vmatpush1.bf16.msra.mxu0 %v7497
        %7517 = vmatprep.subr.bf16.mxu0 0
        %7518 = vmatpush1.bf16.msra.mxu0 %v7498
        %7519 = vmatprep.subr.bf16.mxu0 0
        %7520 = vmatpush1.bf16.msra.mxu0 %v7499
        %7521 = vmatprep.subr.bf16.mxu0 0
        %7522 = vmatpush1.bf16.msra.mxu0 %v7500
        %7523 = vmatprep.subr.bf16.mxu0 0
        %7524 = vmatpush1.bf16.msra.mxu0 %v7501
        %7525 = vmatprep.subr.bf16.mxu0 0
        %7526 = vmatpush1.bf16.msra.mxu0 %v7502
        %7527 = vmatprep.subr.bf16.mxu0 0
        %7528 = vmatpush1.bf16.msra.mxu0 0
        %7529 = vmatprep.subr.bf16.mxu0 0
        %7530 = vmatpush1.bf16.msra.mxu0 0
        %7531 = vmatprep.subr.bf16.mxu0 0
        %7532 = vmatpush1.bf16.msra.mxu0 0
        %7533 = vmatprep.subr.bf16.mxu0 0
        %7534 = vmatpush1.bf16.msra.mxu0 0
        %7535 = vmatprep.subr.bf16.mxu0 0
        %7536 = vmatpush1.bf16.msra.mxu0 0
        %7537 = vmatprep.subr.bf16.mxu0 0
        %7538 = vmatpush1.bf16.msra.mxu0 0
        %7539 = vmatprep.subr.bf16.mxu0 0
        %7540 = vmatpush1.bf16.msra.mxu0 0
        %7541 = vmatprep.subr.bf16.mxu0 0
        %7542 = vmatpush1.bf16.msra.mxu0 0
        %7543 = vmatprep.mubr.bf16.mxu0 0
        %7544 = vmatmul.mubr.bf16.gmra.mrb[0].mxu0 %v7436
        %v7545 = vpop.f32.mrb[0].mxu0
        %v7546 = vadd.f32 %v7461, %v7545
        %v7547 = vpop.f32.mrb[0].mxu0
        %v7548 = vpop.f32.mrb[0].mxu0
        %v7549 = vadd.f32 %v7461, %v7548
        %v7550 = vpop.f32.mrb[0].mxu0
        %7551 = vmatprep.mubr.bf16.mxu0 0
        %7552 = vmatmul.mubr.bf16.gmra.mrb[0].mxu0 %v7437
        %v7553 = vpop.f32.mrb[0].mxu0
        %v7554 = vadd.f32 %v7461, %v7553
        %v7555 = vpop.f32.mrb[0].mxu0
        %v7556 = vpop.f32.mrb[0].mxu0
        %v7557 = vadd.f32 %v7461, %v7556
        %v7558 = vpop.f32.mrb[0].mxu0
        %7559 = vmatprep.mubr.bf16.mxu0 0
        %7560 = vmatmul.mubr.bf16.gmra.mrb[0].mxu0 %v7438
        %v7561 = vpop.f32.mrb[0].mxu0
        %v7562 = vadd.f32 %v7461, %v7561
        %v7563 = vpop.f32.mrb[0].mxu0
        %v7564 = vpop.f32.mrb[0].mxu0
        %v7565 = vadd.f32 %v7461, %v7564
        %v7566 = vpop.f32.mrb[0].mxu0
        %7567 = vmatprep.mubr.bf16.mxu0 0
        %7568 = vmatmul.mubr.bf16.gmra.mrb[0].mxu0 %v7439
        %v7569 = vpop.f32.mrb[0].mxu0
        %v7570 = vadd.f32 %v7461, %v7569
        %v7571 = vpop.f32.mrb[0].mxu0
        %v7572 = vpop.f32.mrb[0].mxu0
        %v7573 = vadd.f32 %v7461, %v7572
        %v7574 = vpop.f32.mrb[0].mxu0
        %7575 = vdwg.mxu0
        %v7576 = vxor.u32 %v7546, 2147483648
        %v7577 = vxor.u32 %v7549, 2147483648
        %v7578 = vxor.u32 %v7554, 2147483648
        %v7579 = vxor.u32 %v7557, 2147483648
        %v7580 = vxor.u32 %v7562, 2147483648
        %v7581 = vxor.u32 %v7565, 2147483648
        %v7582 = vxor.u32 %v7570, 2147483648
        %v7583 = vxor.u32 %v7573, 2147483648
        %v7584 = vmul.f32 %v7576, 1.442695
        %v7585 = vpow.pop %v7584
        %v7586 = vmul.f32 %v7577, 1.442695
        %v7587 = vpow.pop %v7586
        %v7588 = vmul.f32 %v7578, 1.442695
        %v7589 = vpow.pop %v7588
        %v7590 = vmul.f32 %v7579, 1.442695
        %v7591 = vpow.pop %v7590
        %v7592 = vmul.f32 %v7580, 1.442695
        %v7593 = vpow.pop %v7592
        %v7594 = vmul.f32 %v7581, 1.442695
        %v7595 = vpow.pop %v7594
        %v7596 = vmul.f32 %v7582, 1.442695
        %v7597 = vpow.pop %v7596
        %v7598 = vmul.f32 %v7583, 1.442695
        %v7599 = vpow.pop %v7598
        %v7600 = vadd.f32 %v7585, 1.0
        %v7601 = vadd.f32 %v7587, 1.0
        %v7602 = vadd.f32 %v7589, 1.0
        %v7603 = vadd.f32 %v7591, 1.0
        %v7604 = vadd.f32 %v7593, 1.0
        %v7605 = vadd.f32 %v7595, 1.0
        %v7606 = vadd.f32 %v7597, 1.0
        %v7607 = vadd.f32 %v7599, 1.0
        %v7608 = vrcp.pop %v7600
        %v7609 = vmul.f32 1.0, %v7608
        %v7610 = vrcp.pop %v7601
        %v7611 = vmul.f32 1.0, %v7610
        %v7612 = vrcp.pop %v7602
        %v7613 = vmul.f32 1.0, %v7612
        %v7614 = vrcp.pop %v7603
        %v7615 = vmul.f32 1.0, %v7614
        %v7616 = vrcp.pop %v7604
        %v7617 = vmul.f32 1.0, %v7616
        %v7618 = vrcp.pop %v7605
        %v7619 = vmul.f32 1.0, %v7618
        %v7620 = vrcp.pop %v7606
        %v7621 = vmul.f32 1.0, %v7620
        %v7622 = vrcp.pop %v7607
        %v7623 = vmul.f32 1.0, %v7622
        %v7624 = vmul.f32 %v7546, %v7609
        %v7625 = vmul.f32 %v7549, %v7611
        %v7626 = vmul.f32 %v7554, %v7613
        %v7627 = vmul.f32 %v7557, %v7615
        %v7628 = vmul.f32 %v7562, %v7617
        %v7629 = vmul.f32 %v7565, %v7619
        %v7630 = vmul.f32 %v7570, %v7621
        %v7631 = vmul.f32 %v7573, %v7623
        %v7632 = vpack.c.bf16 %v7625, %v7624
        %v7633 = vpack.c.bf16 %v7627, %v7626
        %v7634 = vpack.c.bf16 %v7629, %v7628
        %v7635 = vpack.c.bf16 %v7631, %v7630
        %v7636 = vld [vmem:[#allocation31] sm:$0xf]
        %v7637 = vld [vmem:[#allocation31 + $0x4] sm:$0xf]
        %v7638 = vld [vmem:[#allocation31 + $0x8] sm:$0xf]
        %v7639 = vld [vmem:[#allocation31 + $0xc] sm:$0xf]
        %v7640 = vld [vmem:[#allocation31 + $0x10] sm:$0xf]
        %v7641 = vld [vmem:[#allocation31 + $0x14] sm:$0xf]
        %v7642 = vld [vmem:[#allocation31 + $0x18] sm:$0xf]
        %v7643 = vld [vmem:[#allocation31 + $0x1c] sm:$0xf]
        %v7644 = vld [vmem:[#allocation31 + $0x20] sm:$0xf]
        %v7645 = vld [vmem:[#allocation31 + $0x24] sm:$0xf]
        %v7646 = vld [vmem:[#allocation31 + $0x28] sm:$0xf]
        %v7647 = vld [vmem:[#allocation31 + $0x2c] sm:$0xf]
        %v7648 = vld [vmem:[#allocation31 + $0x30] sm:$0xf]
        %v7649 = vld [vmem:[#allocation31 + $0x34] sm:$0xf]
        %v7650 = vld [vmem:[#allocation31 + $0x38] sm:$0xf]
        %v7651 = vld [vmem:[#allocation31 + $0x3c] sm:$0xf]
        %v7652 = vld [vmem:[#allocation33] sm:$0x1]
        %v7654 = vlaneseq
        %v7655 = vshrl.u32 %v7654, 7
        %v7656 = vsub.s32 0, %v7655
        %v7657 = vrot.slane %v7652, %v7656
        %v7675 = vunpack.c.l.b16 %v7636
        %v7676 = vunpack.c.l.b16 %v7637
        %v7677 = vunpack.c.l.b16 %v7638
        %v7678 = vunpack.c.l.b16 %v7639
        %v7679 = vunpack.c.l.b16 %v7640
        %v7680 = vunpack.c.l.b16 %v7641
        %v7681 = vunpack.c.l.b16 %v7642
        %v7682 = vunpack.c.l.b16 %v7643
        %v7683 = vunpack.c.l.b16 %v7644
        %v7684 = vunpack.c.l.b16 %v7645
        %v7685 = vunpack.c.l.b16 %v7646
        %v7686 = vunpack.c.l.b16 %v7647
        %v7687 = vunpack.c.l.b16 %v7648
        %v7688 = vunpack.c.l.b16 %v7649
        %v7689 = vunpack.c.l.b16 %v7650
        %v7690 = vunpack.c.l.b16 %v7651
        %v7691 = vpack.c.b16 %v7676, %v7675
        %v7692 = vpack.c.b16 %v7678, %v7677
        %v7693 = vpack.c.b16 %v7680, %v7679
        %v7694 = vpack.c.b16 %v7682, %v7681
        %v7695 = vpack.c.b16 %v7684, %v7683
        %v7696 = vpack.c.b16 %v7686, %v7685
        %v7697 = vpack.c.b16 %v7688, %v7687
        %v7698 = vpack.c.b16 %v7690, %v7689
        %7707 = vmatprep.subr.bf16.mxu0 0
        %7708 = vmatpush1.bf16.msra.mxu0 %v7691
        %7709 = vmatprep.subr.bf16.mxu0 0
        %7710 = vmatpush1.bf16.msra.mxu0 %v7692
        %7711 = vmatprep.subr.bf16.mxu0 0
        %7712 = vmatpush1.bf16.msra.mxu0 %v7693
        %7713 = vmatprep.subr.bf16.mxu0 0
        %7714 = vmatpush1.bf16.msra.mxu0 %v7694
        %7715 = vmatprep.subr.bf16.mxu0 0
        %7716 = vmatpush1.bf16.msra.mxu0 %v7695
        %7717 = vmatprep.subr.bf16.mxu0 0
        %7718 = vmatpush1.bf16.msra.mxu0 %v7696
        %7719 = vmatprep.subr.bf16.mxu0 0
        %7720 = vmatpush1.bf16.msra.mxu0 %v7697
        %7721 = vmatprep.subr.bf16.mxu0 0
        %7722 = vmatpush1.bf16.msra.mxu0 %v7698
        %7723 = vmatprep.subr.bf16.mxu0 0
        %7724 = vmatpush1.bf16.msra.mxu0 0
        %7725 = vmatprep.subr.bf16.mxu0 0
        %7726 = vmatpush1.bf16.msra.mxu0 0
        %7727 = vmatprep.subr.bf16.mxu0 0
        %7728 = vmatpush1.bf16.msra.mxu0 0
        %7729 = vmatprep.subr.bf16.mxu0 0
        %7730 = vmatpush1.bf16.msra.mxu0 0
        %7731 = vmatprep.subr.bf16.mxu0 0
        %7732 = vmatpush1.bf16.msra.mxu0 0
        %7733 = vmatprep.subr.bf16.mxu0 0
        %7734 = vmatpush1.bf16.msra.mxu0 0
        %7735 = vmatprep.subr.bf16.mxu0 0
        %7736 = vmatpush1.bf16.msra.mxu0 0
        %7737 = vmatprep.subr.bf16.mxu0 0
        %7738 = vmatpush1.bf16.msra.mxu0 0
        %7739 = vmatprep.mubr.bf16.mxu0 0
        %7740 = vmatmul.mubr.bf16.gmra.mrb[0].mxu0 %v7632
        %v7741 = vpop.f32.mrb[0].mxu0
        %v7742 = vadd.f32 %v7657, %v7741
        %v7743 = vpop.f32.mrb[0].mxu0
        %v7744 = vpop.f32.mrb[0].mxu0
        %v7745 = vadd.f32 %v7657, %v7744
        %v7746 = vpop.f32.mrb[0].mxu0
        %7747 = vmatprep.mubr.bf16.mxu0 0
        %7748 = vmatmul.mubr.bf16.gmra.mrb[0].mxu0 %v7633
        %v7749 = vpop.f32.mrb[0].mxu0
        %v7750 = vadd.f32 %v7657, %v7749
        %v7751 = vpop.f32.mrb[0].mxu0
        %v7752 = vpop.f32.mrb[0].mxu0
        %v7753 = vadd.f32 %v7657, %v7752
        %v7754 = vpop.f32.mrb[0].mxu0
        %7755 = vmatprep.mubr.bf16.mxu0 0
        %7756 = vmatmul.mubr.bf16.gmra.mrb[0].mxu0 %v7634
        %v7757 = vpop.f32.mrb[0].mxu0
        %v7758 = vadd.f32 %v7657, %v7757
        %v7759 = vpop.f32.mrb[0].mxu0
        %v7760 = vpop.f32.mrb[0].mxu0
        %v7761 = vadd.f32 %v7657, %v7760
        %v7762 = vpop.f32.mrb[0].mxu0
        %7763 = vmatprep.mubr.bf16.mxu0 0
        %7764 = vmatmul.mubr.bf16.gmra.mrb[0].mxu0 %v7635
        %v7765 = vpop.f32.mrb[0].mxu0
        %v7766 = vadd.f32 %v7657, %v7765
        %v7767 = vpop.f32.mrb[0].mxu0
        %v7768 = vpop.f32.mrb[0].mxu0
        %v7769 = vadd.f32 %v7657, %v7768
        %v7770 = vpop.f32.mrb[0].mxu0
        %7771 = vdwg.mxu0
        %v7772 = vld [vmem:[#allocation2] sm:$0x1]
        %v7774 = vlaneseq
        %v7775 = vshrl.u32 %v7774, 7
        %v7776 = vsub.s32 0, %v7775
        %v7777 = vrot.slane %v7772, %v7776
        %7778 = vset.pattern.permute.xlu0 0
        %7779 = vperm.xlu0 %7778, %v7777
        %v7780 = vpop.permute.xlu0 %7779
        %v7782 = vmul.f32 %v7780, %v7742
        %v7783 = vmul.f32 %v7780, %v7745
        %v7784 = vmul.f32 %v7780, %v7750
        %v7785 = vmul.f32 %v7780, %v7753
        %v7786 = vmul.f32 %v7780, %v7758
        %v7787 = vmul.f32 %v7780, %v7761
        %v7788 = vmul.f32 %v7780, %v7766
        %v7789 = vmul.f32 %v7780, %v7769
        %v7790 = vadd.f32 %v7782, %v7310
        %v7791 = vadd.f32 %v7783, %v7311
        %v7792 = vadd.f32 %v7784, %v7312
        %v7793 = vadd.f32 %v7785, %v7313
        %v7794 = vadd.f32 %v7786, %v7314
        %v7795 = vadd.f32 %v7787, %v7315
        %v7796 = vadd.f32 %v7788, %v7316
        %v7797 = vadd.f32 %v7789, %v7317
        %v7798 = vmul.f32 %v7790, %v7273
        %v7799 = vmul.f32 %v7791, %v7278
        %v7800 = vmul.f32 %v7792, %v7283
        %v7801 = vmul.f32 %v7793, %v7288
        %v7802 = vmul.f32 %v7794, %v7293
        %v7803 = vmul.f32 %v7795, %v7298
        %v7804 = vmul.f32 %v7796, %v7303
        %v7805 = vmul.f32 %v7797, %v7308
        %v7806 = vld [vmem:[#allocation34] sm:$0x1]
        %v7807 = vld [vmem:[#allocation36] sm:$0x1]
        %7808 = vadd.xlane.f32.xlu0 %v7798
        %v7809 = vpop.xlane.xlu0 %7808
        %7810 = vadd.xlane.f32.xlu0 %v7799
        %v7811 = vpop.xlane.xlu0 %7810
        %7812 = vadd.xlane.f32.xlu0 %v7800
        %v7813 = vpop.xlane.xlu0 %7812
        %7814 = vadd.xlane.f32.xlu0 %v7801
        %v7815 = vpop.xlane.xlu0 %7814
        %7816 = vadd.xlane.f32.xlu0 %v7802
        %v7817 = vpop.xlane.xlu0 %7816
        %7818 = vadd.xlane.f32.xlu0 %v7803
        %v7819 = vpop.xlane.xlu0 %7818
        %7820 = vadd.xlane.f32.xlu0 %v7804
        %v7821 = vpop.xlane.xlu0 %7820
        %7822 = vadd.xlane.f32.xlu0 %v7805
        %v7823 = vpop.xlane.xlu0 %7822
        %v7824 = vmul.f32 %v7809, %v1180
        %v7825 = vmul.f32 %v7811, %v1180
        %v7826 = vmul.f32 %v7813, %v1180
        %v7827 = vmul.f32 %v7815, %v1180
        %v7828 = vmul.f32 %v7817, %v1180
        %v7829 = vmul.f32 %v7819, %v1180
        %v7830 = vmul.f32 %v7821, %v1180
        %v7831 = vmul.f32 %v7823, %v1180
        %v7832 = vsub.f32 %v7798, %v7824
        %v7833 = vsub.f32 %v7799, %v7825
        %v7834 = vsub.f32 %v7800, %v7826
        %v7835 = vsub.f32 %v7801, %v7827
        %v7836 = vsub.f32 %v7802, %v7828
        %v7837 = vsub.f32 %v7803, %v7829
        %v7838 = vsub.f32 %v7804, %v7830
        %v7839 = vsub.f32 %v7805, %v7831
        %v7840 = vmul.f32 %v7832, %v7832
        %v7841 = vmul.f32 %v7833, %v7833
        %v7842 = vmul.f32 %v7834, %v7834
        %v7843 = vmul.f32 %v7835, %v7835
        %v7844 = vmul.f32 %v7836, %v7836
        %v7845 = vmul.f32 %v7837, %v7837
        %v7846 = vmul.f32 %v7838, %v7838
        %v7847 = vmul.f32 %v7839, %v7839
        %7848 = vadd.xlane.f32.xlu0 %v7840
        %v7849 = vpop.xlane.xlu0 %7848
        %7850 = vadd.xlane.f32.xlu0 %v7841
        %v7851 = vpop.xlane.xlu0 %7850
        %7852 = vadd.xlane.f32.xlu0 %v7842
        %v7853 = vpop.xlane.xlu0 %7852
        %7854 = vadd.xlane.f32.xlu0 %v7843
        %v7855 = vpop.xlane.xlu0 %7854
        %7856 = vadd.xlane.f32.xlu0 %v7844
        %v7857 = vpop.xlane.xlu0 %7856
        %7858 = vadd.xlane.f32.xlu0 %v7845
        %v7859 = vpop.xlane.xlu0 %7858
        %7860 = vadd.xlane.f32.xlu0 %v7846
        %v7861 = vpop.xlane.xlu0 %7860
        %7862 = vadd.xlane.f32.xlu0 %v7847
        %v7863 = vpop.xlane.xlu0 %7862
        %v7864 = vmul.f32 %v7849, %v1180
        %v7865 = vmul.f32 %v7851, %v1180
        %v7866 = vmul.f32 %v7853, %v1180
        %v7867 = vmul.f32 %v7855, %v1180
        %v7868 = vmul.f32 %v7857, %v1180
        %v7869 = vmul.f32 %v7859, %v1180
        %v7870 = vmul.f32 %v7861, %v1180
        %v7871 = vmul.f32 %v7863, %v1180
        %v7872 = vadd.f32 %v7864, 1e-05
        %v7873 = vadd.f32 %v7865, 1e-05
        %v7874 = vadd.f32 %v7866, 1e-05
        %v7875 = vadd.f32 %v7867, 1e-05
        %v7876 = vadd.f32 %v7868, 1e-05
        %v7877 = vadd.f32 %v7869, 1e-05
        %v7878 = vadd.f32 %v7870, 1e-05
        %v7879 = vadd.f32 %v7871, 1e-05
        %v7880 = vrsqrt.pop %v7872
        %v7881 = vrsqrt.pop %v7873
        %v7882 = vrsqrt.pop %v7874
        %v7883 = vrsqrt.pop %v7875
        %v7884 = vrsqrt.pop %v7876
        %v7885 = vrsqrt.pop %v7877
        %v7886 = vrsqrt.pop %v7878
        %v7887 = vrsqrt.pop %v7879
        %v7888 = vmul.f32 %v7832, %v7880
        %v7889 = vmul.f32 %v7833, %v7881
        %v7890 = vmul.f32 %v7834, %v7882
        %v7891 = vmul.f32 %v7835, %v7883
        %v7892 = vmul.f32 %v7836, %v7884
        %v7893 = vmul.f32 %v7837, %v7885
        %v7894 = vmul.f32 %v7838, %v7886
        %v7895 = vmul.f32 %v7839, %v7887
        %v7897 = vlaneseq
        %v7898 = vshrl.u32 %v7897, 7
        %v7899 = vsub.s32 0, %v7898
        %v7900 = vrot.slane %v7806, %v7899
        %v7902 = vmul.f32 %v7888, %v7900
        %v7903 = vmul.f32 %v7889, %v7900
        %v7904 = vmul.f32 %v7890, %v7900
        %v7905 = vmul.f32 %v7891, %v7900
        %v7906 = vmul.f32 %v7892, %v7900
        %v7907 = vmul.f32 %v7893, %v7900
        %v7908 = vmul.f32 %v7894, %v7900
        %v7909 = vmul.f32 %v7895, %v7900
        %v7911 = vlaneseq
        %v7912 = vshrl.u32 %v7911, 7
        %v7913 = vsub.s32 0, %v7912
        %v7914 = vrot.slane %v7807, %v7913
        %v7916 = vadd.f32 %v7902, %v7914
        %v7917 = vadd.f32 %v7903, %v7914
        %v7918 = vadd.f32 %v7904, %v7914
        %v7919 = vadd.f32 %v7905, %v7914
        %v7920 = vadd.f32 %v7906, %v7914
        %v7921 = vadd.f32 %v7907, %v7914
        %v7922 = vadd.f32 %v7908, %v7914
        %v7923 = vadd.f32 %v7909, %v7914
        %v7924 = vld [vmem:[#allocation37] sm:$0x1]
        %v7925 = vld [vmem:[#allocation39] sm:$0x1]
        %7926 = vadd.xlane.f32.xlu0 %v7262
        %v7927 = vpop.xlane.xlu0 %7926
        %7928 = vadd.xlane.f32.xlu0 %v7263
        %v7929 = vpop.xlane.xlu0 %7928
        %7930 = vadd.xlane.f32.xlu0 %v7264
        %v7931 = vpop.xlane.xlu0 %7930
        %7932 = vadd.xlane.f32.xlu0 %v7265
        %v7933 = vpop.xlane.xlu0 %7932
        %7934 = vadd.xlane.f32.xlu0 %v7266
        %v7935 = vpop.xlane.xlu0 %7934
        %7936 = vadd.xlane.f32.xlu0 %v7267
        %v7937 = vpop.xlane.xlu0 %7936
        %7938 = vadd.xlane.f32.xlu0 %v7268
        %v7939 = vpop.xlane.xlu0 %7938
        %7940 = vadd.xlane.f32.xlu0 %v7269
        %v7941 = vpop.xlane.xlu0 %7940
        %v7942 = vmul.f32 %v7927, %v1180
        %v7943 = vmul.f32 %v7929, %v1180
        %v7944 = vmul.f32 %v7931, %v1180
        %v7945 = vmul.f32 %v7933, %v1180
        %v7946 = vmul.f32 %v7935, %v1180
        %v7947 = vmul.f32 %v7937, %v1180
        %v7948 = vmul.f32 %v7939, %v1180
        %v7949 = vmul.f32 %v7941, %v1180
        %v7950 = vsub.f32 %v7262, %v7942
        %v7951 = vsub.f32 %v7263, %v7943
        %v7952 = vsub.f32 %v7264, %v7944
        %v7953 = vsub.f32 %v7265, %v7945
        %v7954 = vsub.f32 %v7266, %v7946
        %v7955 = vsub.f32 %v7267, %v7947
        %v7956 = vsub.f32 %v7268, %v7948
        %v7957 = vsub.f32 %v7269, %v7949
        %v7958 = vmul.f32 %v7950, %v7950
        %v7959 = vmul.f32 %v7951, %v7951
        %v7960 = vmul.f32 %v7952, %v7952
        %v7961 = vmul.f32 %v7953, %v7953
        %v7962 = vmul.f32 %v7954, %v7954
        %v7963 = vmul.f32 %v7955, %v7955
        %v7964 = vmul.f32 %v7956, %v7956
        %v7965 = vmul.f32 %v7957, %v7957
        %7966 = vadd.xlane.f32.xlu0 %v7958
        %v7967 = vpop.xlane.xlu0 %7966
        %7968 = vadd.xlane.f32.xlu0 %v7959
        %v7969 = vpop.xlane.xlu0 %7968
        %7970 = vadd.xlane.f32.xlu0 %v7960
        %v7971 = vpop.xlane.xlu0 %7970
        %7972 = vadd.xlane.f32.xlu0 %v7961
        %v7973 = vpop.xlane.xlu0 %7972
        %7974 = vadd.xlane.f32.xlu0 %v7962
        %v7975 = vpop.xlane.xlu0 %7974
        %7976 = vadd.xlane.f32.xlu0 %v7963
        %v7977 = vpop.xlane.xlu0 %7976
        %7978 = vadd.xlane.f32.xlu0 %v7964
        %v7979 = vpop.xlane.xlu0 %7978
        %7980 = vadd.xlane.f32.xlu0 %v7965
        %v7981 = vpop.xlane.xlu0 %7980
        %v7982 = vmul.f32 %v7967, %v1180
        %v7983 = vmul.f32 %v7969, %v1180
        %v7984 = vmul.f32 %v7971, %v1180
        %v7985 = vmul.f32 %v7973, %v1180
        %v7986 = vmul.f32 %v7975, %v1180
        %v7987 = vmul.f32 %v7977, %v1180
        %v7988 = vmul.f32 %v7979, %v1180
        %v7989 = vmul.f32 %v7981, %v1180
        %v7990 = vadd.f32 %v7982, 1e-05
        %v7991 = vadd.f32 %v7983, 1e-05
        %v7992 = vadd.f32 %v7984, 1e-05
        %v7993 = vadd.f32 %v7985, 1e-05
        %v7994 = vadd.f32 %v7986, 1e-05
        %v7995 = vadd.f32 %v7987, 1e-05
        %v7996 = vadd.f32 %v7988, 1e-05
        %v7997 = vadd.f32 %v7989, 1e-05
        %v7998 = vrsqrt.pop %v7990
        %v7999 = vrsqrt.pop %v7991
        %v8000 = vrsqrt.pop %v7992
        %v8001 = vrsqrt.pop %v7993
        %v8002 = vrsqrt.pop %v7994
        %v8003 = vrsqrt.pop %v7995
        %v8004 = vrsqrt.pop %v7996
        %v8005 = vrsqrt.pop %v7997
        %v8006 = vmul.f32 %v7950, %v7998
        %v8007 = vmul.f32 %v7951, %v7999
        %v8008 = vmul.f32 %v7952, %v8000
        %v8009 = vmul.f32 %v7953, %v8001
        %v8010 = vmul.f32 %v7954, %v8002
        %v8011 = vmul.f32 %v7955, %v8003
        %v8012 = vmul.f32 %v7956, %v8004
        %v8013 = vmul.f32 %v7957, %v8005
        %v8015 = vlaneseq
        %v8016 = vshrl.u32 %v8015, 7
        %v8017 = vsub.s32 0, %v8016
        %v8018 = vrot.slane %v7924, %v8017
        %v8020 = vmul.f32 %v8006, %v8018
        %v8021 = vmul.f32 %v8007, %v8018
        %v8022 = vmul.f32 %v8008, %v8018
        %v8023 = vmul.f32 %v8009, %v8018
        %v8024 = vmul.f32 %v8010, %v8018
        %v8025 = vmul.f32 %v8011, %v8018
        %v8026 = vmul.f32 %v8012, %v8018
        %v8027 = vmul.f32 %v8013, %v8018
        %v8029 = vlaneseq
        %v8030 = vshrl.u32 %v8029, 7
        %v8031 = vsub.s32 0, %v8030
        %v8032 = vrot.slane %v7925, %v8031
        %v8034 = vadd.f32 %v8020, %v8032
        %v8035 = vadd.f32 %v8021, %v8032
        %v8036 = vadd.f32 %v8022, %v8032
        %v8037 = vadd.f32 %v8023, %v8032
        %v8038 = vadd.f32 %v8024, %v8032
        %v8039 = vadd.f32 %v8025, %v8032
        %v8040 = vadd.f32 %v8026, %v8032
        %v8041 = vadd.f32 %v8027, %v8032
        %v8042 = vsub.f32 %v7916, %v8034
        %v8043 = vsub.f32 %v7917, %v8035
        %v8044 = vsub.f32 %v7918, %v8036
        %v8045 = vsub.f32 %v7919, %v8037
        %v8046 = vsub.f32 %v7920, %v8038
        %v8047 = vsub.f32 %v7921, %v8039
        %v8048 = vsub.f32 %v7922, %v8040
        %v8049 = vsub.f32 %v7923, %v8041
        %v8050 = vmul.f32 %v8042, %v8042
        %v8051 = vmul.f32 %v8043, %v8043
        %v8052 = vmul.f32 %v8044, %v8044
        %v8053 = vmul.f32 %v8045, %v8045
        %v8054 = vmul.f32 %v8046, %v8046
        %v8055 = vmul.f32 %v8047, %v8047
        %v8056 = vmul.f32 %v8048, %v8048
        %v8057 = vmul.f32 %v8049, %v8049
        %v8058 = vld [vmem:[#allocation40] sm:$0x1]
        %v8060 = vlaneseq
        %v8061 = vshrl.u32 %v8060, 7
        %v8062 = vsub.s32 0, %v8061
        %v8063 = vrot.slane %v8058, %v8062
        %v8065 = vmul.f32 %v8050, %v8063
        %v8066 = vmul.f32 %v8051, %v8063
        %v8067 = vmul.f32 %v8052, %v8063
        %v8068 = vmul.f32 %v8053, %v8063
        %v8069 = vmul.f32 %v8054, %v8063
        %v8070 = vmul.f32 %v8055, %v8063
        %v8071 = vmul.f32 %v8056, %v8063
        %v8072 = vmul.f32 %v8057, %v8063
        %8073 = vadd.xlane.f32.xlu0 %v8065
        %v8074 = vpop.xlane.xlu0 %8073
        %8075 = vadd.xlane.f32.xlu0 %v8066
        %v8076 = vpop.xlane.xlu0 %8075
        %8077 = vadd.xlane.f32.xlu0 %v8067
        %v8078 = vpop.xlane.xlu0 %8077
        %8079 = vadd.xlane.f32.xlu0 %v8068
        %v8080 = vpop.xlane.xlu0 %8079
        %8081 = vadd.xlane.f32.xlu0 %v8069
        %v8082 = vpop.xlane.xlu0 %8081
        %8083 = vadd.xlane.f32.xlu0 %v8070
        %v8084 = vpop.xlane.xlu0 %8083
        %8085 = vadd.xlane.f32.xlu0 %v8071
        %v8086 = vpop.xlane.xlu0 %8085
        %8087 = vadd.xlane.f32.xlu0 %v8072
        %v8088 = vpop.xlane.xlu0 %8087
        %v8089 = vld [vmem:[#allocation3] sm:$0x1]
        %v8091 = vlaneseq
        %v8092 = vshrl.u32 %v8091, 7
        %v8093 = vsub.s32 0, %v8092
        %v8094 = vrot.slane %v8089, %v8093
        %v8096 = vadd.f32 %v8074, %v8094
        %v8097 = vadd.f32 %v8076, %v8094
        %v8098 = vadd.f32 %v8078, %v8094
        %v8099 = vadd.f32 %v8080, %v8094
        %v8100 = vadd.f32 %v8082, %v8094
        %v8101 = vadd.f32 %v8084, %v8094
        %v8102 = vadd.f32 %v8086, %v8094
        %v8103 = vadd.f32 %v8088, %v8094
        %v8104 = vmul.f32 %v8096, %v1146
        %v8105 = vmul.f32 %v8097, %v1147
        %v8106 = vmul.f32 %v8098, %v1148
        %v8107 = vmul.f32 %v8099, %v1149
        %v8108 = vmul.f32 %v8100, %v1150
        %v8109 = vmul.f32 %v8101, %v1151
        %v8110 = vmul.f32 %v8102, %v1152
        %v8111 = vmul.f32 %v8103, %v1153
        %vm8112 = vcmask 7168
        %v8113 = vsel %vm8112, %v8104, 0.0
        %v8114 = vrot.slane %v8113, 4
        %v8115 = vadd.f32 %v8113, %v8114
        %v8116 = vrot.slane %v8115, 2
        %v8117 = vadd.f32 %v8115, %v8116
        %v8118 = vrot.slane %v8117, 1
        %v8119 = vadd.f32 %v8117, %v8118
        %v8120 = vsel %vm8112, %v8105, 0.0
        %v8121 = vrot.slane %v8120, 4
        %v8122 = vadd.f32 %v8120, %v8121
        %v8123 = vrot.slane %v8122, 2
        %v8124 = vadd.f32 %v8122, %v8123
        %v8125 = vrot.slane %v8124, 1
        %v8126 = vadd.f32 %v8124, %v8125
        %v8127 = vsel %vm8112, %v8106, 0.0
        %v8128 = vrot.slane %v8127, 4
        %v8129 = vadd.f32 %v8127, %v8128
        %v8130 = vrot.slane %v8129, 2
        %v8131 = vadd.f32 %v8129, %v8130
        %v8132 = vrot.slane %v8131, 1
        %v8133 = vadd.f32 %v8131, %v8132
        %v8134 = vsel %vm8112, %v8107, 0.0
        %v8135 = vrot.slane %v8134, 4
        %v8136 = vadd.f32 %v8134, %v8135
        %v8137 = vrot.slane %v8136, 2
        %v8138 = vadd.f32 %v8136, %v8137
        %v8139 = vrot.slane %v8138, 1
        %v8140 = vadd.f32 %v8138, %v8139
        %v8141 = vsel %vm8112, %v8108, 0.0
        %v8142 = vrot.slane %v8141, 4
        %v8143 = vadd.f32 %v8141, %v8142
        %v8144 = vrot.slane %v8143, 2
        %v8145 = vadd.f32 %v8143, %v8144
        %v8146 = vrot.slane %v8145, 1
        %v8147 = vadd.f32 %v8145, %v8146
        %v8148 = vsel %vm8112, %v8109, 0.0
        %v8149 = vrot.slane %v8148, 4
        %v8150 = vadd.f32 %v8148, %v8149
        %v8151 = vrot.slane %v8150, 2
        %v8152 = vadd.f32 %v8150, %v8151
        %v8153 = vrot.slane %v8152, 1
        %v8154 = vadd.f32 %v8152, %v8153
        %v8155 = vsel %vm8112, %v8110, 0.0
        %v8156 = vrot.slane %v8155, 4
        %v8157 = vadd.f32 %v8155, %v8156
        %v8158 = vrot.slane %v8157, 2
        %v8159 = vadd.f32 %v8157, %v8158
        %v8160 = vrot.slane %v8159, 1
        %v8161 = vadd.f32 %v8159, %v8160
        %v8162 = vsel %vm8112, %v8111, 0.0
        %v8163 = vrot.slane %v8162, 4
        %v8164 = vadd.f32 %v8162, %v8163
        %v8165 = vrot.slane %v8164, 2
        %v8166 = vadd.f32 %v8164, %v8165
        %v8167 = vrot.slane %v8166, 1
        %v8168 = vadd.f32 %v8166, %v8167
        %vm8177 = vcmask 1041409
        %v8178 = vsel %vm8177, %v8126, %v8119
        %vm8179 = vcmask 1042434
        %v8180 = vsel %vm8179, %v8133, %v8178
        %vm8181 = vcmask 1043459
        %v8182 = vsel %vm8181, %v8140, %v8180
        %vm8183 = vcmask 1044484
        %v8184 = vsel %vm8183, %v8147, %v8182
        %vm8185 = vcmask 1045509
        %v8186 = vsel %vm8185, %v8154, %v8184
        %vm8187 = vcmask 1046534
        %v8188 = vsel %vm8187, %v8161, %v8186
        %vm8189 = vcmask 1047559
        %v8190 = vsel %vm8189, %v8168, %v8188
        %8192 = vst.msk [vmem:[%s1142] sm:$0xff] %vm8112, %v8190
        %s8193 = sand.u32 %s625, 1
        %s8194 = scalar_lea.sflag [#allocation6], %s8193
        %s8195 = sand.u32 %s625, 1
        %s8196 = smul.addr %s8195, 8
        %s8197 = scalar_lea.vmem [#allocation42], %s8196
        // Predicated region
        $region221: #{tpu_custom_call.1} parent=123 // pred_check
          %p8198 = pneg %p635
        $region222: #{tpu_custom_call.1} parent=123 // pred_check_branch
          %8200 = sbr.rel (%p8198) target = $region224
        $region223: #{tpu_custom_call.1} parent=123 // pred_region
          %s8202 = ssub.s32 128, 128
          %8203 = vsyncadd %s8194, %s8202
          %s8204 = smul.addr %s61, 128
          %s8205 = scalar_lea.hbm %s26, %s8204
          %s8207 = sshll.u32 %s8197, 4
          %s8208 = int_to_ptr.vmem [resolvable:$true] %s8207
          %8210 = dma.vmem_to_hbm [thread:$0]  %s8208, 128, %s8205, %s8194
        $region224: #{tpu_custom_call.1} parent=123 // pred_fallthru
          _
      $region124: #{tpu_custom_call.1} parent=5 // pred_fallthru
        _
      %p8211 = scmp.le.s32.totalorder 2, %s56
      // Predicated region
      $region225: #{tpu_custom_call.1} parent=5 // pred_check
        %p8212 = pneg %p8211
      $region226: #{tpu_custom_call.1} parent=5 // pred_check_branch
        %8214 = sbr.rel (%p8212) target = $region228
      $region227: #{tpu_custom_call.1} parent=5 // pred_region
        %s8215 = ssub.s32 %s56, 2
        // Predicated region
        $region229: #{tpu_custom_call.1} parent=227 // pred_check
          %p8216 = pneg %p641
        $region230: #{tpu_custom_call.1} parent=227 // pred_check_branch
          %8218 = sbr.rel (%p8216) target = $region232
        $region231: #{tpu_custom_call.1} parent=227 // pred_region
          %s8219 = sand.u32 %s626, 1
          %s8220 = scalar_lea.sflag [#allocation6], %s8219
          %s8221 = sand.u32 %s626, 1
          %s8222 = smul.addr %s8221, 8
          %s8223 = scalar_lea.vmem [#allocation42], %s8222
          %8224 = dma.done %s8220, 128
        $region232: #{tpu_custom_call.1} parent=227 // pred_fallthru
          _
      $region228: #{tpu_custom_call.1} parent=5 // pred_fallthru
        _
    $region6: #{tpu_custom_call.1} parent=1 // loop_footer
      %s60 = sadd.s32 1, %s56
    $region7: #{tpu_custom_call.1} parent=1 // loop_footer_branch
      %55 = sbr.rel target = $region3
    $region8: #{tpu_custom_call.1} parent=1 // loop_exit
      _
    %8225 = vsyncpa [#allocation5], 1
    %s8226 = scalar_lea.sflag [#allocation5], 1
    %8227 = vsyncpa %s8226, 1
    %8228 = vsyncpa [#allocation8], 1
    %s8229 = scalar_lea.sflag [#allocation8], 1
    %8230 = vsyncpa %s8229, 1
    %8231 = vsyncpa [#allocation11], 1
    %8232 = vsyncpa [#allocation14], 1
    %8233 = vsyncpa [#allocation17], 1
    %8234 = vsyncpa [#allocation20], 1
    %8235 = vsyncpa [#allocation23], 1
    %8236 = vsyncpa [#allocation26], 1
    %8237 = vsyncpa [#allocation29], 1
    %8238 = vsyncpa [#allocation32], 1
    %8239 = vsyncpa [#allocation35], 1
    %8240 = vsyncpa [#allocation38], 1
    %8241 = vsyncpa [#allocation41], 1
    %8242 = vsyncpa [#allocation6], 1
    %s8243 = scalar_lea.sflag [#allocation6], 1
    %8244 = vsyncpa %s8243, 1

</llo_original>
